<compile_context>
chip_gen: v5e
topology: v5e:2x2
jax: 0.10.0
libtpu: 0.0.40
codegen_flags: <defaults>
</compile_context>

<pallas_src>
import math
import functools

import jax
import jax.numpy as jnp
from jax.experimental import pallas as pl
from jax.experimental.pallas import tpu as pltpu

_NEG_INF = -1e30                   # finite "masked" score (avoids exp(-inf - -inf) = nan)


def _default_vmem_limit():
    """3/4 of physical VMEM, capped at 96 MiB (=> 48 MiB on v7x, 96 MiB on v5e/v6e)."""
    try:
        cap = int(pltpu.get_tpu_info().vmem_capacity_bytes)
    except Exception:
        cap = 64 << 20
    return max(32 << 20, min(96 << 20, (cap * 3) // 4))


_VMEM_LIMIT = _default_vmem_limit()


def _pick_tile(dim, target, step, min_blocks=1):
    """Largest tile <= target that divides `dim` and is a multiple of `step`; optionally capped
    so the axis gets >= min_blocks blocks (v7x: 2 TCs).  Falls back to the full dim."""
    if min_blocks > 1:
        target = min(target, max(step, dim // min_blocks))
    if dim <= target:
        return dim
    t = (target // step) * step
    while t >= step:
        if dim % t == 0:
            return t
        t -= step
    return dim


# ----------------------------- Pallas kernels --------------------------------

def _mm_bias_kernel(x_ref, w_ref, b_ref, o_ref, acc_ref, *, relu):
    """Tiled y = x @ w + b (optional ReLU).  Grid = (M/tm, N/tn, K/tk), K innermost."""
    k = pl.program_id(2)

    @pl.when(k == 0)
    def _():
        acc_ref[...] = jnp.zeros_like(acc_ref)

    acc_ref[...] += jnp.dot(x_ref[...], w_ref[...],
                            preferred_element_type=jnp.float32)

    @pl.when(k == pl.num_programs(2) - 1)
    def _():
        y = acc_ref[...] + b_ref[...].astype(jnp.float32)
        if relu:
            y = jnp.maximum(y, 0.0)
        o_ref[...] = y.astype(o_ref.dtype)


def _mm_bias_res_ln_kernel(x_ref, w_ref, b_ref, r_ref, g_ref, bt_ref,
                           o_ref, acc_ref, *, eps):
    """Tiled y = LayerNorm(residual + x @ w + b).  Grid = (M/tm, K/tk); the output
    N dim (= d_model) is kept as one lane-dense tile so LN sees complete rows."""
    k = pl.program_id(1)

    @pl.when(k == 0)
    def _():
        acc_ref[...] = jnp.zeros_like(acc_ref)

    acc_ref[...] += jnp.dot(x_ref[...], w_ref[...],
                            preferred_element_type=jnp.float32)

    @pl.when(k == pl.num_programs(1) - 1)
    def _():
        y = (acc_ref[...] + b_ref[...].astype(jnp.float32)
             + r_ref[...].astype(jnp.float32))
        mean = jnp.mean(y, axis=-1, keepdims=True)
        yc = y - mean
        var = jnp.mean(yc * yc, axis=-1, keepdims=True)     # biased variance (PyTorch LN)
        yn = yc * jax.lax.rsqrt(var + eps)
        o_ref[...] = (yn * g_ref[...].astype(jnp.float32)
                      + bt_ref[...].astype(jnp.float32)).astype(o_ref.dtype)


def _flash_attn_kernel(flags_ref, m_ref, q_ref, k_ref, v_ref, o_ref,
                       m_sc, l_sc, acc_sc, *, num_heads, d_head, scale):
    """Flash-style masked MHA.  Grid = (B, Sq/tq, Skv/tkv); all heads of one (b, q-tile) are
    processed together so every load/store is a lane-dense (tq, H*dk) slab.  Online-softmax
    stats live compactly in (tq, 128) scratch (head h -> lane h); per-head updates are written
    in place.  Fully-masked KV tiles are skipped via a scalar-prefetched flag."""
    b, qi, ki = pl.program_id(0), pl.program_id(1), pl.program_id(2)
    nq, nk = pl.num_programs(1), pl.num_programs(2)

    @pl.when(ki == 0)
    def _():
        m_sc[...] = jnp.full_like(m_sc, _NEG_INF)
        l_sc[...] = jnp.zeros_like(l_sc)
        acc_sc[...] = jnp.zeros_like(acc_sc)

    tile_live = flags_ref[(b * nq + qi) * nk + ki] != 0

    @pl.when(tile_live)
    def _():
        mask = m_ref[0] != 0                  # (tq, tkv) bool, shared by all heads
        q_all = q_ref[0]                      # (tq,  H*dk) bf16
        k_all = k_ref[0]                      # (tkv, H*dk) bf16
        v_all = v_ref[0]

        for h in range(num_heads):            # static loop over heads within the slab
            sl = slice(h * d_head, (h + 1) * d_head)
            s = jax.lax.dot_general(q_all[:, sl], k_all[:, sl],
                                    (((1,), (1,)), ((), ())),
                                    preferred_element_type=jnp.float32) * scale
            s = jnp.where(mask, s, _NEG_INF)
            m_p = m_sc[:, h:h + 1]            # (tq, 1)
            m_n = jnp.maximum(m_p, jnp.max(s, axis=-1, keepdims=True))
            alpha = jnp.exp(m_p - m_n)
            p = jnp.exp(s - m_n)
            l_sc[:, h:h + 1] = alpha * l_sc[:, h:h + 1] + jnp.sum(p, axis=-1, keepdims=True)
            acc_sc[:, sl] = alpha * acc_sc[:, sl] + jnp.dot(
                p.astype(v_all.dtype), v_all[:, sl],
                preferred_element_type=jnp.float32)
            m_sc[:, h:h + 1] = m_n

    @pl.when(ki == nk - 1)
    def _():
        # NOTE: fully-masked query rows fall back to a uniform/zero output (fine for causal
        # masks where the diagonal always attends).
        parts = []
        for h in range(num_heads):
            sl = slice(h * d_head, (h + 1) * d_head)
            inv = pl.reciprocal(jnp.maximum(l_sc[:, h:h + 1], 1e-30), approx=False)
            parts.append(acc_sc[:, sl] * inv)
        o_ref[0] = jnp.concatenate(parts, axis=-1).astype(o_ref.dtype)


# ----------------------------- kernel wrappers --------------------------------

def matmul_bias(x, w, b, *, relu=False, out_dtype=None, tm=512, tn=512, tk=1024):
    M, K = x.shape
    _, N = w.shape
    tm = _pick_tile(M, tm, 16, min_blocks=2)      # bf16 sublane pack = 16; >=2 blocks for 2 TCs
    tn = _pick_tile(N, tn, 128)
    tk = _pick_tile(K, tk, 128)
    out_dtype = out_dtype or x.dtype
    grid = (M // tm, N // tn, K // tk)
    return pl.pallas_call(
        functools.partial(_mm_bias_kernel, relu=relu),
        out_shape=jax.ShapeDtypeStruct((M, N), out_dtype),
        grid=grid,
        in_specs=[
            pl.BlockSpec((tm, tk), lambda i, j, k: (i, k)),
            pl.BlockSpec((tk, tn), lambda i, j, k: (k, j)),
            pl.BlockSpec((1, tn), lambda i, j, k: (0, j)),
        ],
        out_specs=pl.BlockSpec((tm, tn), lambda i, j, k: (i, j)),
        scratch_shapes=[pltpu.VMEM((tm, tn), jnp.float32)],
        compiler_params=pltpu.CompilerParams(
            dimension_semantics=("parallel", "parallel", "arbitrary"),
            vmem_limit_bytes=_VMEM_LIMIT),
    )(x, w, b.reshape(1, -1))


def matmul_bias_res_ln(x, w, b, res, gamma, beta, *, eps=1e-5,
                       out_dtype=None, tm=256, tk=512):
    M, K = x.shape
    _, N = w.shape                     # N = d_model (single lane-dense tile for row-wise LN)
    tm = _pick_tile(M, tm, 16, min_blocks=2)      # tm <= 256: full-N acc stays VMEM-safe on v7x
    tk = _pick_tile(K, tk, 128)
    out_dtype = out_dtype or x.dtype
    grid = (M // tm, K // tk)
    return pl.pallas_call(
        functools.partial(_mm_bias_res_ln_kernel, eps=eps),
        out_shape=jax.ShapeDtypeStruct((M, N), out_dtype),
        grid=grid,
        in_specs=[
            pl.BlockSpec((tm, tk), lambda i, k: (i, k)),
            pl.BlockSpec((tk, N), lambda i, k: (k, 0)),
            pl.BlockSpec((1, N), lambda i, k: (0, 0)),
            pl.BlockSpec((tm, N), lambda i, k: (i, 0)),      # residual
            pl.BlockSpec((1, N), lambda i, k: (0, 0)),       # gamma
            pl.BlockSpec((1, N), lambda i, k: (0, 0)),       # beta
        ],
        out_specs=pl.BlockSpec((tm, N), lambda i, k: (i, 0)),
        scratch_shapes=[pltpu.VMEM((tm, N), jnp.float32)],
        compiler_params=pltpu.CompilerParams(
            dimension_semantics=("parallel", "arbitrary"),
            vmem_limit_bytes=_VMEM_LIMIT),
    )(x, w, b.reshape(1, -1), res, gamma.reshape(1, -1), beta.reshape(1, -1))


def flash_attention(qkv, mask_i8, num_heads, *, tq=128, tkv=256):
    """qkv: (B, S, 3*D) bf16 with columns [Q | K | V], head-contiguous inside each;
    mask_i8: (B, S, S) int8 (1 = attend).  Returns (B, S, D) in combine-heads layout."""
    B, S, three_d = qkv.shape
    D = three_d // 3
    d_head = D // num_heads
    tq = _pick_tile(S, tq, 16)
    tkv = _pick_tile(S, tkv, 128)
    nq, nk = S // tq, S // tkv
    scale = 1.0 / math.sqrt(d_head)    # flex_attention default scale
    grid = (B, nq, nk)

    # per-(b, q-tile, kv-tile) liveness flags -> skip fully-masked KV tiles inside the kernel
    flags = (mask_i8.reshape(B, nq, tq, nk, tkv) != 0).any(axis=(2, 4))
    flags = flags.reshape(-1).astype(jnp.int32)

    stat_lanes = max(128, ((num_heads + 127) // 128) * 128)   # head h -> lane h

    q_spec = pl.BlockSpec((1, tq, D), lambda b, qi, ki, f: (b, qi, 0))
    k_spec = pl.BlockSpec((1, tkv, D), lambda b, qi, ki, f: (b, ki, 1))
    v_spec = pl.BlockSpec((1, tkv, D), lambda b, qi, ki, f: (b, ki, 2))
    m_spec = pl.BlockSpec((1, tq, tkv), lambda b, qi, ki, f: (b, qi, ki))
    o_spec = pl.BlockSpec((1, tq, D), lambda b, qi, ki, f: (b, qi, 0))

    return pl.pallas_call(
        functools.partial(_flash_attn_kernel, num_heads=num_heads,
                          d_head=d_head, scale=scale),
        out_shape=jax.ShapeDtypeStruct((B, S, D), qkv.dtype),
        grid_spec=pltpu.PrefetchScalarGridSpec(
            num_scalar_prefetch=1,
            grid=grid,
            in_specs=[m_spec, q_spec, k_spec, v_spec],
            out_specs=o_spec,
            scratch_shapes=[pltpu.VMEM((tq, stat_lanes), jnp.float32),   # m
                            pltpu.VMEM((tq, stat_lanes), jnp.float32),   # l
                            pltpu.VMEM((tq, D), jnp.float32)]),          # acc
        compiler_params=pltpu.CompilerParams(
            dimension_semantics=("parallel", "parallel", "arbitrary"),
            vmem_limit_bytes=_VMEM_LIMIT),
    )(flags, mask_i8, qkv, qkv, qkv)


# ----------------------------- model (params + forward) ------------------------

def sinusoidal_positional_encoding(length, d_model):
    position = jnp.arange(length, dtype=jnp.float32)[:, None]
    div_term = jnp.exp(jnp.arange(0, d_model, 2, dtype=jnp.float32)
                       * (-math.log(10000.0) / d_model))
    pe = jnp.zeros((length, d_model), dtype=jnp.float32)
    pe = pe.at[:, 0::2].set(jnp.sin(position * div_term))
    pe = pe.at[:, 1::2].set(jnp.cos(position * div_term))
    return pe


def init_params(key, vocab_size, max_seq_length, d_model, num_heads, num_layers, d_ff):
    assert d_model % num_heads == 0
    keys = iter(jax.random.split(key, 4 + num_layers * 16))

    def linear(din, dout):
        bound = 1.0 / math.sqrt(din)
        w = jax.random.uniform(next(keys), (din, dout), jnp.float32, -bound, bound)
        b = jax.random.uniform(next(keys), (dout,), jnp.float32, -bound, bound)
        return w.astype(jnp.bfloat16), b          # bf16 weights (MXU inputs), f32 bias

    params = {
        "embedding": jax.random.normal(next(keys), (vocab_size, d_model), jnp.float32),
        "pe": sinusoidal_positional_encoding(max_seq_length, d_model),
        "layers": [],
    }
    for _ in range(num_layers):
        wq, bq = linear(d_model, d_model)
        wk, bk = linear(d_model, d_model)
        wv, bv = linear(d_model, d_model)
        layer = {
            # fused QKV projection (mathematically identical to separate W_q/W_k/W_v)
            "Wqkv": (jnp.concatenate([wq, wk, wv], axis=1),
                     jnp.concatenate([bq, bk, bv], axis=0)),
            "Wo": linear(d_model, d_model),
            "fc1": linear(d_model, d_ff),
            "fc2": linear(d_ff, d_model),
            "ln1_g": jnp.ones((d_model,), jnp.float32),
            "ln1_b": jnp.zeros((d_model,), jnp.float32),
            "ln2_g": jnp.ones((d_model,), jnp.float32),
            "ln2_b": jnp.zeros((d_model,), jnp.float32),
        }
        params["layers"].append(layer)
    params["fc"] = linear(d_model, vocab_size)
    return params


def transformer_forward(params, tokens, attention_mask, num_heads):
    """tokens: (B, S) int32; attention_mask: (B, S, S) bool -> logits (B, S, vocab) f32."""
    assert tokens.ndim == 2 and attention_mask.ndim == 3
    B, S = tokens.shape
    d_model = params["embedding"].shape[1]

    # embedding + positional encoding (glue); dropout = identity in eval mode
    # TODO(synk): dropout is a no-op here (eval mode); training-mode RNG dropout not implemented.
    x = params["embedding"][tokens] + params["pe"][:S][None, :, :]
    x = x.astype(jnp.bfloat16)
    mask_i8 = attention_mask.astype(jnp.int8)     # 4x less mask DMA than f32

    x2d = x.reshape(B * S, d_model)
    for layer in params["layers"]:
        # fused QKV projection: one HBM pass over x2d, head-contiguous output columns
        qkv = matmul_bias(x2d, *layer["Wqkv"])                        # (B*S, 3D) bf16
        attn = flash_attention(qkv.reshape(B, S, 3 * d_model), mask_i8, num_heads)
        # W_o projection with fused residual-add + LayerNorm epilogue
        x2d = matmul_bias_res_ln(attn.reshape(B * S, d_model), *layer["Wo"],
                                 x2d, layer["ln1_g"], layer["ln1_b"])
        # position-wise FFN: fc1 (+ReLU) then fc2 (+residual +LayerNorm), d_ff fully tiled
        h = matmul_bias(x2d, *layer["fc1"], relu=True)                # (B*S, d_ff)
        x2d = matmul_bias_res_ln(h, *layer["fc2"],
                                 x2d, layer["ln2_g"], layer["ln2_b"])

    logits = matmul_bias(x2d, *params["fc"], out_dtype=jnp.float32)   # lane-dense vocab tiles
    return logits.reshape(B, S, -1)


# ----------------------------- pure-JAX reference ------------------------------

def _layer_norm_ref(x, g, b, eps=1e-5):
    m = jnp.mean(x, axis=-1, keepdims=True)
    v = jnp.mean((x - m) ** 2, axis=-1, keepdims=True)
    return (x - m) * jax.lax.rsqrt(v + eps) * g + b


def reference_forward(params, tokens, attention_mask, num_heads):
    B, S = tokens.shape
    d_model = params["embedding"].shape[1]
    d_head = d_model // num_heads
    x = params["embedding"][tokens] + params["pe"][:S][None, :, :]
    mask = attention_mask[:, None, :, :]
    for layer in params["layers"]:
        wqkv, bqkv = layer["Wqkv"]
        qkv = x @ wqkv.astype(jnp.float32) + bqkv
        q, k, v = jnp.split(qkv, 3, axis=-1)

        def split(t):
            return t.reshape(B, S, num_heads, d_head).transpose(0, 2, 1, 3)

        q, k, v = split(q), split(k), split(v)
        s = jnp.einsum("bhqd,bhkd->bhqk", q, k) / math.sqrt(d_head)
        s = jnp.where(mask, s, _NEG_INF)
        a = jnp.einsum("bhqk,bhkd->bhqd", jax.nn.softmax(s, axis=-1), v)
        a = a.transpose(0, 2, 1, 3).reshape(B, S, d_model)
        wo, bo = layer["Wo"]
        x = _layer_norm_ref(x + a @ wo.astype(jnp.float32) + bo,
                            layer["ln1_g"], layer["ln1_b"])
        w1, b1 = layer["fc1"]
        w2, b2 = layer["fc2"]
        h = jnp.maximum(x @ w1.astype(jnp.float32) + b1, 0.0)
        x = _layer_norm_ref(x + h @ w2.astype(jnp.float32) + b2,
                            layer["ln2_g"], layer["ln2_b"])
    wfc, bfc = params["fc"]
    return x @ wfc.astype(jnp.float32) + bfc


# ----------------------------------- main -------------------------------------

if __name__ == "__main__":
    # small shapes; d_model is a multiple of 128 so all attention tiles are lane-dense
    VOCAB, MAX_SEQ, D_MODEL, HEADS, LAYERS, D_FF = 128, 32, 128, 4, 2, 256
    B, S = 2, 16

    key = jax.random.PRNGKey(0)
    pkey, tkey = jax.random.split(key)
    params = init_params(pkey, VOCAB, MAX_SEQ, D_MODEL, HEADS, LAYERS, D_FF)

    tokens = jax.random.randint(tkey, (B, S), 0, VOCAB, dtype=jnp.int32)
    attention_mask = jnp.broadcast_to(jnp.tril(jnp.ones((S, S), dtype=bool)), (B, S, S))

    fwd = jax.jit(functools.partial(transformer_forward, num_heads=HEADS))
    logits = fwd(params, tokens, attention_mask)
    jax.block_until_ready(logits)

    assert logits.shape == (B, S, VOCAB)
    assert bool(jnp.all(jnp.isfinite(logits)))

    # loose numerical check against a pure-JAX f32 reference (kernel runs bf16 activations)
    ref = reference_forward(params, tokens, attention_mask, HEADS)
    max_err = float(jnp.max(jnp.abs(logits - ref)))
    assert max_err < 0.5, f"kernel vs reference mismatch: {max_err}"

    # TODO(synk): autoregressive_inference (host-side token-by-token decode while-loop) is
    # control flow outside the kernelized forward pass and is not implemented here.
    print("KERNEL_OK")
</pallas_src>

<mosaic_0001>
module attributes {stable_mosaic.version = 11 : i64} {
  func.func @_mm_bias_res_ln_kernel(%arg0: i32, %arg1: i32, %arg2: memref<16x128xbf16, #tpu.memory_space<vmem>>, %arg3: memref<128x128xbf16, #tpu.memory_space<vmem>>, %arg4: memref<1x128xf32, #tpu.memory_space<vmem>>, %arg5: memref<16x128xbf16, #tpu.memory_space<vmem>>, %arg6: memref<1x128xf32, #tpu.memory_space<vmem>>, %arg7: memref<1x128xf32, #tpu.memory_space<vmem>>, %arg8: memref<16x128xbf16, #tpu.memory_space<vmem>>, %arg9: memref<16x128xf32, #tpu.memory_space<vmem>>) attributes {dimension_semantics = [#tpu.dimension_semantics<parallel>, #tpu.dimension_semantics<arbitrary>], iteration_bounds = array<i64: 2, 1>, scalar_prefetch = 0 : i64, scratch_operands = 1 : i64, tpu.core_type = #tpu.core_type<tc>, window_params = [{transform_indices = @transform_0, window_bounds = array<i64: 16, 128>}, {transform_indices = @transform_1, window_bounds = array<i64: 128, 128>}, {pipeline_mode = #tpu.pipeline_mode<synchronous>, transform_indices = @transform_2, window_bounds = array<i64: 1, 128>}, {transform_indices = @transform_3, window_bounds = array<i64: 16, 128>}, {pipeline_mode = #tpu.pipeline_mode<synchronous>, transform_indices = @transform_4, window_bounds = array<i64: 1, 128>}, {pipeline_mode = #tpu.pipeline_mode<synchronous>, transform_indices = @transform_5, window_bounds = array<i64: 1, 128>}, {transform_indices = @transform_6, window_bounds = array<i64: 16, 128>}]} {
    %c0_i32 = arith.constant 0 : i32
    %0 = arith.cmpi eq, %arg1, %c0_i32 : i32
    %1 = arith.extui %0 : i1 to i32
    %c0_i32_0 = arith.constant 0 : i32
    %2 = arith.cmpi ne, %1, %c0_i32_0 : i32
    scf.if %2 {
      %cst_10 = arith.constant 0.000000e+00 : f32
      %12 = vector.broadcast %cst_10 : f32 to vector<16x128xf32>
      %c0_11 = arith.constant 0 : index
      %c0_12 = arith.constant 0 : index
      %13 = vector.load %arg9[%c0_11, %c0_12] : memref<16x128xf32, #tpu.memory_space<vmem>>, vector<16x128xf32>
      tpu.vector_store %arg9[%c0_11, %c0_12], %12 {strides = array<i32>} : memref<16x128xf32, #tpu.memory_space<vmem>>, vector<16x128xf32>,
    } else {
    }
    %c0 = arith.constant 0 : index
    %c0_1 = arith.constant 0 : index
    %3 = vector.load %arg9[%c0, %c0_1] : memref<16x128xf32, #tpu.memory_space<vmem>>, vector<16x128xf32>
    %c0_2 = arith.constant 0 : index
    %c0_3 = arith.constant 0 : index
    %4 = vector.load %arg2[%c0_2, %c0_3] : memref<16x128xbf16, #tpu.memory_space<vmem>>, vector<16x128xbf16>
    %c0_4 = arith.constant 0 : index
    %c0_5 = arith.constant 0 : index
    %5 = vector.load %arg3[%c0_4, %c0_5] : memref<128x128xbf16, #tpu.memory_space<vmem>>, vector<128x128xbf16>
    %cst = arith.constant dense<0.000000e+00> : vector<16x128xf32>
    %6 = tpu.matmul %4, %5, %cst {dimension_numbers = #tpu.dot_dimension_numbers<[1], [0], [0], [1], [0, 0, 1, 1], [], []>} : vector<16x128xbf16>, vector<128x128xbf16>, vector<16x128xf32> -> vector<16x128xf32>
    %7 = arith.addf %3, %6 : vector<16x128xf32>
    %c0_6 = arith.constant 0 : index
    %c0_7 = arith.constant 0 : index
    %8 = vector.load %arg9[%c0_6, %c0_7] : memref<16x128xf32, #tpu.memory_space<vmem>>, vector<16x128xf32>
    tpu.vector_store %arg9[%c0_6, %c0_7], %7 {strides = array<i32>} : memref<16x128xf32, #tpu.memory_space<vmem>>, vector<16x128xf32>,
    %c0_i32_8 = arith.constant 0 : i32
    %9 = arith.cmpi eq, %arg1, %c0_i32_8 : i32
    %10 = arith.extui %9 : i1 to i32
    %c0_i32_9 = arith.constant 0 : i32
    %11 = arith.cmpi ne, %10, %c0_i32_9 : i32
    scf.if %11 {
      %c0_10 = arith.constant 0 : index
      %c0_11 = arith.constant 0 : index
      %12 = vector.load %arg9[%c0_10, %c0_11] : memref<16x128xf32, #tpu.memory_space<vmem>>, vector<16x128xf32>
      %c0_12 = arith.constant 0 : index
      %c0_13 = arith.constant 0 : index
      %13 = vector.load %arg4[%c0_12, %c0_13] : memref<1x128xf32, #tpu.memory_space<vmem>>, vector<1x128xf32>
      %14 = vector.broadcast %13 : vector<1x128xf32> to vector<16x128xf32>
      %15 = arith.addf %12, %14 : vector<16x128xf32>
      %c0_14 = arith.constant 0 : index
      %c0_15 = arith.constant 0 : index
      %16 = vector.load %arg5[%c0_14, %c0_15] : memref<16x128xbf16, #tpu.memory_space<vmem>>, vector<16x128xbf16>
      %17 = arith.extf %16 : vector<16x128xbf16> to vector<16x128xf32>
      %18 = arith.addf %15, %17 : vector<16x128xf32>
      %cst_16 = arith.constant dense<0.000000e+00> : vector<16xf32>
      %19 = vector.multi_reduction <add>, %18, %cst_16 [1] : vector<16x128xf32> to vector<16xf32>
      %20 = vector.shape_cast %19 : vector<16xf32> to vector<16x1xf32>
      %cst_17 = arith.constant 1.280000e+02 : f32
      %21 = vector.broadcast %cst_17 : f32 to vector<16x1xf32>
      %22 = arith.divf %20, %21 : vector<16x1xf32>
      %23 = vector.broadcast %22 : vector<16x1xf32> to vector<16x128xf32>
      %24 = arith.subf %18, %23 : vector<16x128xf32>
      %25 = arith.mulf %24, %24 : vector<16x128xf32>
      %cst_18 = arith.constant dense<0.000000e+00> : vector<16xf32>
      %26 = vector.multi_reduction <add>, %25, %cst_18 [1] : vector<16x128xf32> to vector<16xf32>
      %27 = vector.shape_cast %26 : vector<16xf32> to vector<16x1xf32>
      %cst_19 = arith.constant 1.280000e+02 : f32
      %28 = vector.broadcast %cst_19 : f32 to vector<16x1xf32>
      %29 = arith.divf %27, %28 : vector<16x1xf32>
      %cst_20 = arith.constant 9.99999974E-6 : f32
      %30 = vector.broadcast %cst_20 : f32 to vector<16x1xf32>
      %31 = arith.addf %29, %30 : vector<16x1xf32>
      %32 = math.rsqrt %31 : vector<16x1xf32>
      %33 = vector.broadcast %32 : vector<16x1xf32> to vector<16x128xf32>
      %34 = arith.mulf %24, %33 : vector<16x128xf32>
      %c0_21 = arith.constant 0 : index
      %c0_22 = arith.constant 0 : index
      %35 = vector.load %arg6[%c0_21, %c0_22] : memref<1x128xf32, #tpu.memory_space<vmem>>, vector<1x128xf32>
      %36 = vector.broadcast %35 : vector<1x128xf32> to vector<16x128xf32>
      %37 = arith.mulf %34, %36 : vector<16x128xf32>
      %c0_23 = arith.constant 0 : index
      %c0_24 = arith.constant 0 : index
      %38 = vector.load %arg7[%c0_23, %c0_24] : memref<1x128xf32, #tpu.memory_space<vmem>>, vector<1x128xf32>
      %39 = vector.broadcast %38 : vector<1x128xf32> to vector<16x128xf32>
      %40 = arith.addf %37, %39 : vector<16x128xf32>
      %41 = arith.truncf %40 : vector<16x128xf32> to vector<16x128xbf16>
      %c0_25 = arith.constant 0 : index
      %c0_26 = arith.constant 0 : index
      %42 = vector.load %arg8[%c0_25, %c0_26] : memref<16x128xbf16, #tpu.memory_space<vmem>>, vector<16x128xbf16>
      tpu.vector_store %arg8[%c0_25, %c0_26], %41 {strides = array<i32>} : memref<16x128xbf16, #tpu.memory_space<vmem>>, vector<16x128xbf16>,
    } else {
    }
    return
  }
  func.func @transform_0(%arg0: i32, %arg1: i32) -> (i32, i32) {
    %c0_i32 = arith.constant 0 : i32
    return %arg0, %arg1 : i32, i32
  }
  func.func @transform_1(%arg0: i32, %arg1: i32) -> (i32, i32) {
    %c0_i32 = arith.constant 0 : i32
    %c0_i32_0 = arith.constant 0 : i32
    return %arg1, %c0_i32 : i32, i32
  }
  func.func @transform_2(%arg0: i32, %arg1: i32) -> (i32, i32) {
    %c0_i32 = arith.constant 0 : i32
    %c0_i32_0 = arith.constant 0 : i32
    %c0_i32_1 = arith.constant 0 : i32
    return %c0_i32, %c0_i32_0 : i32, i32
  }
  func.func @transform_3(%arg0: i32, %arg1: i32) -> (i32, i32) {
    %c0_i32 = arith.constant 0 : i32
    %c0_i32_0 = arith.constant 0 : i32
    return %arg0, %c0_i32 : i32, i32
  }
  func.func @transform_4(%arg0: i32, %arg1: i32) -> (i32, i32) {
    %c0_i32 = arith.constant 0 : i32
    %c0_i32_0 = arith.constant 0 : i32
    %c0_i32_1 = arith.constant 0 : i32
    return %c0_i32, %c0_i32_0 : i32, i32
  }
  func.func @transform_5(%arg0: i32, %arg1: i32) -> (i32, i32) {
    %c0_i32 = arith.constant 0 : i32
    %c0_i32_0 = arith.constant 0 : i32
    %c0_i32_1 = arith.constant 0 : i32
    return %c0_i32, %c0_i32_0 : i32, i32
  }
  func.func @transform_6(%arg0: i32, %arg1: i32) -> (i32, i32) {
    %c0_i32 = arith.constant 0 : i32
    %c0_i32_0 = arith.constant 0 : i32
    return %arg0, %c0_i32 : i32, i32
  }
}

module attributes {stable_mosaic.version = 11 : i64} {
  func.func @_mm_bias_kernel(%arg0: i32, %arg1: i32, %arg2: i32, %arg3: memref<16x128xbf16, #tpu.memory_space<vmem>>, %arg4: memref<128x384xbf16, #tpu.memory_space<vmem>>, %arg5: memref<1x384xf32, #tpu.memory_space<vmem>>, %arg6: memref<16x384xbf16, #tpu.memory_space<vmem>>, %arg7: memref<16x384xf32, #tpu.memory_space<vmem>>) attributes {dimension_semantics = [#tpu.dimension_semantics<parallel>, #tpu.dimension_semantics<parallel>, #tpu.dimension_semantics<arbitrary>], iteration_bounds = array<i64: 2, 1, 1>, scalar_prefetch = 0 : i64, scratch_operands = 1 : i64, tpu.core_type = #tpu.core_type<tc>, window_params = [{transform_indices = @transform_0, window_bounds = array<i64: 16, 128>}, {transform_indices = @transform_1, window_bounds = array<i64: 128, 384>}, {transform_indices = @transform_2, window_bounds = array<i64: 1, 384>}, {transform_indices = @transform_3, window_bounds = array<i64: 16, 384>}]} {
    %c0_i32 = arith.constant 0 : i32
    %0 = arith.cmpi eq, %arg2, %c0_i32 : i32
    %1 = arith.extui %0 : i1 to i32
    %c0_i32_0 = arith.constant 0 : i32
    %2 = arith.cmpi ne, %1, %c0_i32_0 : i32
    scf.if %2 {
      %cst_10 = arith.constant 0.000000e+00 : f32
      %12 = vector.broadcast %cst_10 : f32 to vector<16x384xf32>
      %c0_11 = arith.constant 0 : index
      %c0_12 = arith.constant 0 : index
      %13 = vector.load %arg7[%c0_11, %c0_12] : memref<16x384xf32, #tpu.memory_space<vmem>>, vector<16x384xf32>
      tpu.vector_store %arg7[%c0_11, %c0_12], %12 {strides = array<i32>} : memref<16x384xf32, #tpu.memory_space<vmem>>, vector<16x384xf32>,
    } else {
    }
    %c0 = arith.constant 0 : index
    %c0_1 = arith.constant 0 : index
    %3 = vector.load %arg7[%c0, %c0_1] : memref<16x384xf32, #tpu.memory_space<vmem>>, vector<16x384xf32>
    %c0_2 = arith.constant 0 : index
    %c0_3 = arith.constant 0 : index
    %4 = vector.load %arg3[%c0_2, %c0_3] : memref<16x128xbf16, #tpu.memory_space<vmem>>, vector<16x128xbf16>
    %c0_4 = arith.constant 0 : index
    %c0_5 = arith.constant 0 : index
    %5 = vector.load %arg4[%c0_4, %c0_5] : memref<128x384xbf16, #tpu.memory_space<vmem>>, vector<128x384xbf16>
    %cst = arith.constant dense<0.000000e+00> : vector<16x384xf32>
    %6 = tpu.matmul %4, %5, %cst {dimension_numbers = #tpu.dot_dimension_numbers<[1], [0], [0], [1], [0, 0, 1, 1], [], []>} : vector<16x128xbf16>, vector<128x384xbf16>, vector<16x384xf32> -> vector<16x384xf32>
    %7 = arith.addf %3, %6 : vector<16x384xf32>
    %c0_6 = arith.constant 0 : index
    %c0_7 = arith.constant 0 : index
    %8 = vector.load %arg7[%c0_6, %c0_7] : memref<16x384xf32, #tpu.memory_space<vmem>>, vector<16x384xf32>
    tpu.vector_store %arg7[%c0_6, %c0_7], %7 {strides = array<i32>} : memref<16x384xf32, #tpu.memory_space<vmem>>, vector<16x384xf32>,
    %c0_i32_8 = arith.constant 0 : i32
    %9 = arith.cmpi eq, %arg2, %c0_i32_8 : i32
    %10 = arith.extui %9 : i1 to i32
    %c0_i32_9 = arith.constant 0 : i32
    %11 = arith.cmpi ne, %10, %c0_i32_9 : i32
    scf.if %11 {
      %c0_10 = arith.constant 0 : index
      %c0_11 = arith.constant 0 : index
      %12 = vector.load %arg7[%c0_10, %c0_11] : memref<16x384xf32, #tpu.memory_space<vmem>>, vector<16x384xf32>
      %c0_12 = arith.constant 0 : index
      %c0_13 = arith.constant 0 : index
      %13 = vector.load %arg5[%c0_12, %c0_13] : memref<1x384xf32, #tpu.memory_space<vmem>>, vector<1x384xf32>
      %14 = vector.broadcast %13 : vector<1x384xf32> to vector<16x384xf32>
      %15 = arith.addf %12, %14 : vector<16x384xf32>
      %16 = arith.truncf %15 : vector<16x384xf32> to vector<16x384xbf16>
      %c0_14 = arith.constant 0 : index
      %c0_15 = arith.constant 0 : index
      %17 = vector.load %arg6[%c0_14, %c0_15] : memref<16x384xbf16, #tpu.memory_space<vmem>>, vector<16x384xbf16>
      tpu.vector_store %arg6[%c0_14, %c0_15], %16 {strides = array<i32>} : memref<16x384xbf16, #tpu.memory_space<vmem>>, vector<16x384xbf16>,
    } else {
    }
    return
  }
  func.func @transform_0(%arg0: i32, %arg1: i32, %arg2: i32) -> (i32, i32) {
    %c0_i32 = arith.constant 0 : i32
    return %arg0, %arg2 : i32, i32
  }
  func.func @transform_1(%arg0: i32, %arg1: i32, %arg2: i32) -> (i32, i32) {
    %c0_i32 = arith.constant 0 : i32
    return %arg2, %arg1 : i32, i32
  }
  func.func @transform_2(%arg0: i32, %arg1: i32, %arg2: i32) -> (i32, i32) {
    %c0_i32 = arith.constant 0 : i32
    %c0_i32_0 = arith.constant 0 : i32
    return %c0_i32, %arg1 : i32, i32
  }
  func.func @transform_3(%arg0: i32, %arg1: i32, %arg2: i32) -> (i32, i32) {
    %c0_i32 = arith.constant 0 : i32
    return %arg0, %arg1 : i32, i32
  }
}

module attributes {stable_mosaic.version = 11 : i64} {
  func.func @_mm_bias_kernel(%arg0: i32, %arg1: i32, %arg2: i32, %arg3: memref<16x128xbf16, #tpu.memory_space<vmem>>, %arg4: memref<128x256xbf16, #tpu.memory_space<vmem>>, %arg5: memref<1x256xf32, #tpu.memory_space<vmem>>, %arg6: memref<16x256xbf16, #tpu.memory_space<vmem>>, %arg7: memref<16x256xf32, #tpu.memory_space<vmem>>) attributes {dimension_semantics = [#tpu.dimension_semantics<parallel>, #tpu.dimension_semantics<parallel>, #tpu.dimension_semantics<arbitrary>], iteration_bounds = array<i64: 2, 1, 1>, scalar_prefetch = 0 : i64, scratch_operands = 1 : i64, tpu.core_type = #tpu.core_type<tc>, window_params = [{transform_indices = @transform_0, window_bounds = array<i64: 16, 128>}, {transform_indices = @transform_1, window_bounds = array<i64: 128, 256>}, {transform_indices = @transform_2, window_bounds = array<i64: 1, 256>}, {transform_indices = @transform_3, window_bounds = array<i64: 16, 256>}]} {
    %c0_i32 = arith.constant 0 : i32
    %0 = arith.cmpi eq, %arg2, %c0_i32 : i32
    %1 = arith.extui %0 : i1 to i32
    %c0_i32_0 = arith.constant 0 : i32
    %2 = arith.cmpi ne, %1, %c0_i32_0 : i32
    scf.if %2 {
      %cst_10 = arith.constant 0.000000e+00 : f32
      %12 = vector.broadcast %cst_10 : f32 to vector<16x256xf32>
      %c0_11 = arith.constant 0 : index
      %c0_12 = arith.constant 0 : index
      %13 = vector.load %arg7[%c0_11, %c0_12] : memref<16x256xf32, #tpu.memory_space<vmem>>, vector<16x256xf32>
      tpu.vector_store %arg7[%c0_11, %c0_12], %12 {strides = array<i32>} : memref<16x256xf32, #tpu.memory_space<vmem>>, vector<16x256xf32>,
    } else {
    }
    %c0 = arith.constant 0 : index
    %c0_1 = arith.constant 0 : index
    %3 = vector.load %arg7[%c0, %c0_1] : memref<16x256xf32, #tpu.memory_space<vmem>>, vector<16x256xf32>
    %c0_2 = arith.constant 0 : index
    %c0_3 = arith.constant 0 : index
    %4 = vector.load %arg3[%c0_2, %c0_3] : memref<16x128xbf16, #tpu.memory_space<vmem>>, vector<16x128xbf16>
    %c0_4 = arith.constant 0 : index
    %c0_5 = arith.constant 0 : index
    %5 = vector.load %arg4[%c0_4, %c0_5] : memref<128x256xbf16, #tpu.memory_space<vmem>>, vector<128x256xbf16>
    %cst = arith.constant dense<0.000000e+00> : vector<16x256xf32>
    %6 = tpu.matmul %4, %5, %cst {dimension_numbers = #tpu.dot_dimension_numbers<[1], [0], [0], [1], [0, 0, 1, 1], [], []>} : vector<16x128xbf16>, vector<128x256xbf16>, vector<16x256xf32> -> vector<16x256xf32>
    %7 = arith.addf %3, %6 : vector<16x256xf32>
    %c0_6 = arith.constant 0 : index
    %c0_7 = arith.constant 0 : index
    %8 = vector.load %arg7[%c0_6, %c0_7] : memref<16x256xf32, #tpu.memory_space<vmem>>, vector<16x256xf32>
    tpu.vector_store %arg7[%c0_6, %c0_7], %7 {strides = array<i32>} : memref<16x256xf32, #tpu.memory_space<vmem>>, vector<16x256xf32>,
    %c0_i32_8 = arith.constant 0 : i32
    %9 = arith.cmpi eq, %arg2, %c0_i32_8 : i32
    %10 = arith.extui %9 : i1 to i32
    %c0_i32_9 = arith.constant 0 : i32
    %11 = arith.cmpi ne, %10, %c0_i32_9 : i32
    scf.if %11 {
      %c0_10 = arith.constant 0 : index
      %c0_11 = arith.constant 0 : index
      %12 = vector.load %arg7[%c0_10, %c0_11] : memref<16x256xf32, #tpu.memory_space<vmem>>, vector<16x256xf32>
      %c0_12 = arith.constant 0 : index
      %c0_13 = arith.constant 0 : index
      %13 = vector.load %arg5[%c0_12, %c0_13] : memref<1x256xf32, #tpu.memory_space<vmem>>, vector<1x256xf32>
      %14 = vector.broadcast %13 : vector<1x256xf32> to vector<16x256xf32>
      %15 = arith.addf %12, %14 : vector<16x256xf32>
      %cst_14 = arith.constant 0.000000e+00 : f32
      %16 = vector.broadcast %cst_14 : f32 to vector<16x256xf32>
      %17 = arith.maximumf %15, %16 : vector<16x256xf32>
      %18 = arith.truncf %17 : vector<16x256xf32> to vector<16x256xbf16>
      %c0_15 = arith.constant 0 : index
      %c0_16 = arith.constant 0 : index
      %19 = vector.load %arg6[%c0_15, %c0_16] : memref<16x256xbf16, #tpu.memory_space<vmem>>, vector<16x256xbf16>
      tpu.vector_store %arg6[%c0_15, %c0_16], %18 {strides = array<i32>} : memref<16x256xbf16, #tpu.memory_space<vmem>>, vector<16x256xbf16>,
    } else {
    }
    return
  }
  func.func @transform_0(%arg0: i32, %arg1: i32, %arg2: i32) -> (i32, i32) {
    %c0_i32 = arith.constant 0 : i32
    return %arg0, %arg2 : i32, i32
  }
  func.func @transform_1(%arg0: i32, %arg1: i32, %arg2: i32) -> (i32, i32) {
    %c0_i32 = arith.constant 0 : i32
    return %arg2, %arg1 : i32, i32
  }
  func.func @transform_2(%arg0: i32, %arg1: i32, %arg2: i32) -> (i32, i32) {
    %c0_i32 = arith.constant 0 : i32
    %c0_i32_0 = arith.constant 0 : i32
    return %c0_i32, %arg1 : i32, i32
  }
  func.func @transform_3(%arg0: i32, %arg1: i32, %arg2: i32) -> (i32, i32) {
    %c0_i32 = arith.constant 0 : i32
    return %arg0, %arg1 : i32, i32
  }
}

module attributes {stable_mosaic.version = 11 : i64} {
  func.func @_flash_attn_kernel(%arg0: i32, %arg1: i32, %arg2: i32, %arg3: memref<2xi32, #tpu.memory_space<smem>>, %arg4: memref<1x16x16xi8, #tpu.memory_space<vmem>>, %arg5: memref<1x16x128xbf16, #tpu.memory_space<vmem>>, %arg6: memref<1x16x128xbf16, #tpu.memory_space<vmem>>, %arg7: memref<1x16x128xbf16, #tpu.memory_space<vmem>>, %arg8: memref<1x16x128xbf16, #tpu.memory_space<vmem>>, %arg9: memref<16x128xf32, #tpu.memory_space<vmem>>, %arg10: memref<16x128xf32, #tpu.memory_space<vmem>>, %arg11: memref<16x128xf32, #tpu.memory_space<vmem>>) attributes {dimension_semantics = [#tpu.dimension_semantics<parallel>, #tpu.dimension_semantics<parallel>, #tpu.dimension_semantics<arbitrary>], iteration_bounds = array<i64: 2, 1, 1>, scalar_prefetch = 1 : i64, scratch_operands = 3 : i64, tpu.core_type = #tpu.core_type<tc>, window_params = [{transform_indices = @transform_0, window_bounds = array<i64: 1, 16, 16>}, {transform_indices = @transform_1, window_bounds = array<i64: 1, 16, 128>}, {transform_indices = @transform_2, window_bounds = array<i64: 1, 16, 128>}, {transform_indices = @transform_3, window_bounds = array<i64: 1, 16, 128>}, {transform_indices = @transform_4, window_bounds = array<i64: 1, 16, 128>}]} {
    %c0_i32 = arith.constant 0 : i32
    %0 = arith.cmpi eq, %arg2, %c0_i32 : i32
    %1 = arith.extui %0 : i1 to i32
    %c0_i32_0 = arith.constant 0 : i32
    %2 = arith.cmpi ne, %1, %c0_i32_0 : i32
    scf.if %2 {
      %cst = arith.constant -1.000000e+30 : f32
      %15 = vector.broadcast %cst : f32 to vector<16x128xf32>
      %c0 = arith.constant 0 : index
      %c0_6 = arith.constant 0 : index
      %16 = vector.load %arg9[%c0, %c0_6] : memref<16x128xf32, #tpu.memory_space<vmem>>, vector<16x128xf32>
      tpu.vector_store %arg9[%c0, %c0_6], %15 {strides = array<i32>} : memref<16x128xf32, #tpu.memory_space<vmem>>, vector<16x128xf32>,
      %cst_7 = arith.constant 0.000000e+00 : f32
      %17 = vector.broadcast %cst_7 : f32 to vector<16x128xf32>
      %c0_8 = arith.constant 0 : index
      %c0_9 = arith.constant 0 : index
      %18 = vector.load %arg10[%c0_8, %c0_9] : memref<16x128xf32, #tpu.memory_space<vmem>>, vector<16x128xf32>
      tpu.vector_store %arg10[%c0_8, %c0_9], %17 {strides = array<i32>} : memref<16x128xf32, #tpu.memory_space<vmem>>, vector<16x128xf32>,
      %cst_10 = arith.constant 0.000000e+00 : f32
      %19 = vector.broadcast %cst_10 : f32 to vector<16x128xf32>
      %c0_11 = arith.constant 0 : index
      %c0_12 = arith.constant 0 : index
      %20 = vector.load %arg11[%c0_11, %c0_12] : memref<16x128xf32, #tpu.memory_space<vmem>>, vector<16x128xf32>
      tpu.vector_store %arg11[%c0_11, %c0_12], %19 {strides = array<i32>} : memref<16x128xf32, #tpu.memory_space<vmem>>, vector<16x128xf32>,
    } else {
    }
    %c1_i32 = arith.constant 1 : i32
    %3 = arith.muli %arg0, %c1_i32 : i32
    %4 = arith.addi %3, %arg1 : i32
    %c1_i32_1 = arith.constant 1 : i32
    %5 = arith.muli %4, %c1_i32_1 : i32
    %6 = arith.addi %5, %arg2 : i32
    %7 = arith.index_cast %6 : i32 to index
    %8 = memref.load %arg3[%7] : memref<2xi32, #tpu.memory_space<smem>>
    %c0_i32_2 = arith.constant 0 : i32
    %9 = arith.cmpi ne, %8, %c0_i32_2 : i32
    %10 = arith.extui %9 : i1 to i32
    %c0_i32_3 = arith.constant 0 : i32
    %11 = arith.cmpi ne, %10, %c0_i32_3 : i32
    scf.if %11 {
      %c0 = arith.constant 0 : index
      %c0_6 = arith.constant 0 : index
      %c0_7 = arith.constant 0 : index
      %15 = vector.load %arg4[%c0, %c0_6, %c0_7] : memref<1x16x16xi8, #tpu.memory_space<vmem>>, vector<1x16x16xi8>
      %16 = vector.shape_cast %15 : vector<1x16x16xi8> to vector<16x16xi8>
      %c0_i8 = arith.constant 0 : i8
      %17 = vector.broadcast %c0_i8 : i8 to vector<16x16xi8>
      %18 = arith.cmpi ne, %16, %17 : vector<16x16xi8>
      %c0_8 = arith.constant 0 : index
      %c0_9 = arith.constant 0 : index
      %c0_10 = arith.constant 0 : index
      %19 = vector.load %arg5[%c0_8, %c0_9, %c0_10] : memref<1x16x128xbf16, #tpu.memory_space<vmem>>, vector<1x16x128xbf16>
      %20 = vector.shape_cast %19 : vector<1x16x128xbf16> to vector<16x128xbf16>
      %c0_11 = arith.constant 0 : index
      %c0_12 = arith.constant 0 : index
      %c0_13 = arith.constant 0 : index
      %21 = vector.load %arg6[%c0_11, %c0_12, %c0_13] : memref<1x16x128xbf16, #tpu.memory_space<vmem>>, vector<1x16x128xbf16>
      %22 = vector.shape_cast %21 : vector<1x16x128xbf16> to vector<16x128xbf16>
      %c0_14 = arith.constant 0 : index
      %c0_15 = arith.constant 0 : index
      %c0_16 = arith.constant 0 : index
      %23 = vector.load %arg7[%c0_14, %c0_15, %c0_16] : memref<1x16x128xbf16, #tpu.memory_space<vmem>>, vector<1x16x128xbf16>
      %24 = vector.shape_cast %23 : vector<1x16x128xbf16> to vector<16x128xbf16>
      %25 = vector.extract_strided_slice %20 {offsets = [0, 0], sizes = [16, 32], strides = [1, 1]} : vector<16x128xbf16> to vector<16x32xbf16>
      %26 = vector.extract_strided_slice %22 {offsets = [0, 0], sizes = [16, 32], strides = [1, 1]} : vector<16x128xbf16> to vector<16x32xbf16>
      %cst = arith.constant dense<0.000000e+00> : vector<16x16xf32>
      %27 = tpu.matmul %25, %26, %cst {dimension_numbers = #tpu.dot_dimension_numbers<[1], [1], [0], [0], [0, 0, 1, 0], [], []>} : vector<16x32xbf16>, vector<16x32xbf16>, vector<16x16xf32> -> vector<16x16xf32>
      %cst_17 = arith.constant 0.176776692 : f32
      %28 = vector.broadcast %cst_17 : f32 to vector<16x16xf32>
      %29 = arith.mulf %27, %28 : vector<16x16xf32>
      %cst_18 = arith.constant -1.000000e+30 : f32
      %30 = vector.broadcast %cst_18 : f32 to vector<16x16xf32>
      %31 = arith.select %18, %29, %30 : vector<16x16xi1>, vector<16x16xf32>
      %c0_19 = arith.constant 0 : index
      %c0_20 = arith.constant 0 : index
      %32 = vector.load %arg9[%c0_19, %c0_20] : memref<16x128xf32, #tpu.memory_space<vmem>>, vector<16x1xf32>
      %cst_21 = arith.constant dense<0xFF800000> : vector<16xf32>
      %33 = vector.multi_reduction <maximumf>, %31, %cst_21 [1] : vector<16x16xf32> to vector<16xf32>
      %34 = vector.shape_cast %33 : vector<16xf32> to vector<16x1xf32>
      %35 = arith.maximumf %32, %34 : vector<16x1xf32>
      %36 = arith.subf %32, %35 : vector<16x1xf32>
      %37 = math.exp %36 : vector<16x1xf32>
      %38 = vector.broadcast %35 : vector<16x1xf32> to vector<16x16xf32>
      %39 = arith.subf %31, %38 : vector<16x16xf32>
      %40 = math.exp %39 : vector<16x16xf32>
      %c0_22 = arith.constant 0 : index
      %c0_23 = arith.constant 0 : index
      %41 = vector.load %arg10[%c0_22, %c0_23] : memref<16x128xf32, #tpu.memory_space<vmem>>, vector<16x1xf32>
      %42 = arith.mulf %37, %41 : vector<16x1xf32>
      %cst_24 = arith.constant dense<0.000000e+00> : vector<16xf32>
      %43 = vector.multi_reduction <add>, %40, %cst_24 [1] : vector<16x16xf32> to vector<16xf32>
      %44 = vector.shape_cast %43 : vector<16xf32> to vector<16x1xf32>
      %45 = arith.addf %42, %44 : vector<16x1xf32>
      %c0_25 = arith.constant 0 : index
      %c0_26 = arith.constant 0 : index
      %46 = vector.load %arg10[%c0_25, %c0_26] : memref<16x128xf32, #tpu.memory_space<vmem>>, vector<16x1xf32>
      tpu.vector_store %arg10[%c0_25, %c0_26], %45 {strides = array<i32>} : memref<16x128xf32, #tpu.memory_space<vmem>>, vector<16x1xf32>,
      %c0_27 = arith.constant 0 : index
      %c0_28 = arith.constant 0 : index
      %47 = vector.load %arg11[%c0_27, %c0_28] : memref<16x128xf32, #tpu.memory_space<vmem>>, vector<16x32xf32>
      %48 = vector.broadcast %37 : vector<16x1xf32> to vector<16x32xf32>
      %49 = arith.mulf %48, %47 : vector<16x32xf32>
      %50 = arith.truncf %40 : vector<16x16xf32> to vector<16x16xbf16>
      %51 = vector.extract_strided_slice %24 {offsets = [0, 0], sizes = [16, 32], strides = [1, 1]} : vector<16x128xbf16> to vector<16x32xbf16>
      %cst_29 = arith.constant dense<0.000000e+00> : vector<16x32xf32>
      %52 = tpu.matmul %50, %51, %cst_29 {dimension_numbers = #tpu.dot_dimension_numbers<[1], [0], [0], [1], [0, 0, 1, 1], [], []>} : vector<16x16xbf16>, vector<16x32xbf16>, vector<16x32xf32> -> vector<16x32xf32>
      %53 = arith.addf %49, %52 : vector<16x32xf32>
      %c0_30 = arith.constant 0 : index
      %c0_31 = arith.constant 0 : index
      %54 = vector.load %arg11[%c0_30, %c0_31] : memref<16x128xf32, #tpu.memory_space<vmem>>, vector<16x32xf32>
      tpu.vector_store %arg11[%c0_30, %c0_31], %53 {strides = array<i32>} : memref<16x128xf32, #tpu.memory_space<vmem>>, vector<16x32xf32>,
      %c0_32 = arith.constant 0 : index
      %c0_33 = arith.constant 0 : index
      %55 = vector.load %arg9[%c0_32, %c0_33] : memref<16x128xf32, #tpu.memory_space<vmem>>, vector<16x1xf32>
      tpu.vector_store %arg9[%c0_32, %c0_33], %35 {strides = array<i32>} : memref<16x128xf32, #tpu.memory_space<vmem>>, vector<16x1xf32>,
      %56 = vector.extract_strided_slice %20 {offsets = [0, 32], sizes = [16, 32], strides = [1, 1]} : vector<16x128xbf16> to vector<16x32xbf16>
      %57 = vector.extract_strided_slice %22 {offsets = [0, 32], sizes = [16, 32], strides = [1, 1]} : vector<16x128xbf16> to vector<16x32xbf16>
      %cst_34 = arith.constant dense<0.000000e+00> : vector<16x16xf32>
      %58 = tpu.matmul %56, %57, %cst_34 {dimension_numbers = #tpu.dot_dimension_numbers<[1], [1], [0], [0], [0, 0, 1, 0], [], []>} : vector<16x32xbf16>, vector<16x32xbf16>, vector<16x16xf32> -> vector<16x16xf32>
      %cst_35 = arith.constant 0.176776692 : f32
      %59 = vector.broadcast %cst_35 : f32 to vector<16x16xf32>
      %60 = arith.mulf %58, %59 : vector<16x16xf32>
      %cst_36 = arith.constant -1.000000e+30 : f32
      %61 = vector.broadcast %cst_36 : f32 to vector<16x16xf32>
      %62 = arith.select %18, %60, %61 : vector<16x16xi1>, vector<16x16xf32>
      %c0_37 = arith.constant 0 : index
      %c1 = arith.constant 1 : index
      %63 = vector.load %arg9[%c0_37, %c1] : memref<16x128xf32, #tpu.memory_space<vmem>>, vector<16x1xf32>
      %cst_38 = arith.constant dense<0xFF800000> : vector<16xf32>
      %64 = vector.multi_reduction <maximumf>, %62, %cst_38 [1] : vector<16x16xf32> to vector<16xf32>
      %65 = vector.shape_cast %64 : vector<16xf32> to vector<16x1xf32>
      %66 = arith.maximumf %63, %65 : vector<16x1xf32>
      %67 = arith.subf %63, %66 : vector<16x1xf32>
      %68 = math.exp %67 : vector<16x1xf32>
      %69 = vector.broadcast %66 : vector<16x1xf32> to vector<16x16xf32>
      %70 = arith.subf %62, %69 : vector<16x16xf32>
      %71 = math.exp %70 : vector<16x16xf32>
      %c0_39 = arith.constant 0 : index
      %c1_40 = arith.constant 1 : index
      %72 = vector.load %arg10[%c0_39, %c1_40] : memref<16x128xf32, #tpu.memory_space<vmem>>, vector<16x1xf32>
      %73 = arith.mulf %68, %72 : vector<16x1xf32>
      %cst_41 = arith.constant dense<0.000000e+00> : vector<16xf32>
      %74 = vector.multi_reduction <add>, %71, %cst_41 [1] : vector<16x16xf32> to vector<16xf32>
      %75 = vector.shape_cast %74 : vector<16xf32> to vector<16x1xf32>
      %76 = arith.addf %73, %75 : vector<16x1xf32>
      %c0_42 = arith.constant 0 : index
      %c1_43 = arith.constant 1 : index
      %77 = vector.load %arg10[%c0_42, %c1_43] : memref<16x128xf32, #tpu.memory_space<vmem>>, vector<16x1xf32>
      tpu.vector_store %arg10[%c0_42, %c1_43], %76 {strides = array<i32>} : memref<16x128xf32, #tpu.memory_space<vmem>>, vector<16x1xf32>,
      %c0_44 = arith.constant 0 : index
      %c32 = arith.constant 32 : index
      %78 = vector.load %arg11[%c0_44, %c32] : memref<16x128xf32, #tpu.memory_space<vmem>>, vector<16x32xf32>
      %79 = vector.broadcast %68 : vector<16x1xf32> to vector<16x32xf32>
      %80 = arith.mulf %79, %78 : vector<16x32xf32>
      %81 = arith.truncf %71 : vector<16x16xf32> to vector<16x16xbf16>
      %82 = vector.extract_strided_slice %24 {offsets = [0, 32], sizes = [16, 32], strides = [1, 1]} : vector<16x128xbf16> to vector<16x32xbf16>
      %cst_45 = arith.constant dense<0.000000e+00> : vector<16x32xf32>
      %83 = tpu.matmul %81, %82, %cst_45 {dimension_numbers = #tpu.dot_dimension_numbers<[1], [0], [0], [1], [0, 0, 1, 1], [], []>} : vector<16x16xbf16>, vector<16x32xbf16>, vector<16x32xf32> -> vector<16x32xf32>
      %84 = arith.addf %80, %83 : vector<16x32xf32>
      %c0_46 = arith.constant 0 : index
      %c32_47 = arith.constant 32 : index
      %85 = vector.load %arg11[%c0_46, %c32_47] : memref<16x128xf32, #tpu.memory_space<vmem>>, vector<16x32xf32>
      tpu.vector_store %arg11[%c0_46, %c32_47], %84 {strides = array<i32>} : memref<16x128xf32, #tpu.memory_space<vmem>>, vector<16x32xf32>,
      %c0_48 = arith.constant 0 : index
      %c1_49 = arith.constant 1 : index
      %86 = vector.load %arg9[%c0_48, %c1_49] : memref<16x128xf32, #tpu.memory_space<vmem>>, vector<16x1xf32>
      tpu.vector_store %arg9[%c0_48, %c1_49], %66 {strides = array<i32>} : memref<16x128xf32, #tpu.memory_space<vmem>>, vector<16x1xf32>,
      %87 = vector.extract_strided_slice %20 {offsets = [0, 64], sizes = [16, 32], strides = [1, 1]} : vector<16x128xbf16> to vector<16x32xbf16>
      %88 = vector.extract_strided_slice %22 {offsets = [0, 64], sizes = [16, 32], strides = [1, 1]} : vector<16x128xbf16> to vector<16x32xbf16>
      %cst_50 = arith.constant dense<0.000000e+00> : vector<16x16xf32>
      %89 = tpu.matmul %87, %88, %cst_50 {dimension_numbers = #tpu.dot_dimension_numbers<[1], [1], [0], [0], [0, 0, 1, 0], [], []>} : vector<16x32xbf16>, vector<16x32xbf16>, vector<16x16xf32> -> vector<16x16xf32>
      %cst_51 = arith.constant 0.176776692 : f32
      %90 = vector.broadcast %cst_51 : f32 to vector<16x16xf32>
      %91 = arith.mulf %89, %90 : vector<16x16xf32>
      %cst_52 = arith.constant -1.000000e+30 : f32
      %92 = vector.broadcast %cst_52 : f32 to vector<16x16xf32>
      %93 = arith.select %18, %91, %92 : vector<16x16xi1>, vector<16x16xf32>
      %c0_53 = arith.constant 0 : index
      %c2 = arith.constant 2 : index
      %94 = vector.load %arg9[%c0_53, %c2] : memref<16x128xf32, #tpu.memory_space<vmem>>, vector<16x1xf32>
      %cst_54 = arith.constant dense<0xFF800000> : vector<16xf32>
      %95 = vector.multi_reduction <maximumf>, %93, %cst_54 [1] : vector<16x16xf32> to vector<16xf32>
      %96 = vector.shape_cast %95 : vector<16xf32> to vector<16x1xf32>
      %97 = arith.maximumf %94, %96 : vector<16x1xf32>
      %98 = arith.subf %94, %97 : vector<16x1xf32>
      %99 = math.exp %98 : vector<16x1xf32>
      %100 = vector.broadcast %97 : vector<16x1xf32> to vector<16x16xf32>
      %101 = arith.subf %93, %100 : vector<16x16xf32>
      %102 = math.exp %101 : vector<16x16xf32>
      %c0_55 = arith.constant 0 : index
      %c2_56 = arith.constant 2 : index
      %103 = vector.load %arg10[%c0_55, %c2_56] : memref<16x128xf32, #tpu.memory_space<vmem>>, vector<16x1xf32>
      %104 = arith.mulf %99, %103 : vector<16x1xf32>
      %cst_57 = arith.constant dense<0.000000e+00> : vector<16xf32>
      %105 = vector.multi_reduction <add>, %102, %cst_57 [1] : vector<16x16xf32> to vector<16xf32>
      %106 = vector.shape_cast %105 : vector<16xf32> to vector<16x1xf32>
      %107 = arith.addf %104, %106 : vector<16x1xf32>
      %c0_58 = arith.constant 0 : index
      %c2_59 = arith.constant 2 : index
      %108 = vector.load %arg10[%c0_58, %c2_59] : memref<16x128xf32, #tpu.memory_space<vmem>>, vector<16x1xf32>
      tpu.vector_store %arg10[%c0_58, %c2_59], %107 {strides = array<i32>} : memref<16x128xf32, #tpu.memory_space<vmem>>, vector<16x1xf32>,
      %c0_60 = arith.constant 0 : index
      %c64 = arith.constant 64 : index
      %109 = vector.load %arg11[%c0_60, %c64] : memref<16x128xf32, #tpu.memory_space<vmem>>, vector<16x32xf32>
      %110 = vector.broadcast %99 : vector<16x1xf32> to vector<16x32xf32>
      %111 = arith.mulf %110, %109 : vector<16x32xf32>
      %112 = arith.truncf %102 : vector<16x16xf32> to vector<16x16xbf16>
      %113 = vector.extract_strided_slice %24 {offsets = [0, 64], sizes = [16, 32], strides = [1, 1]} : vector<16x128xbf16> to vector<16x32xbf16>
      %cst_61 = arith.constant dense<0.000000e+00> : vector<16x32xf32>
      %114 = tpu.matmul %112, %113, %cst_61 {dimension_numbers = #tpu.dot_dimension_numbers<[1], [0], [0], [1], [0, 0, 1, 1], [], []>} : vector<16x16xbf16>, vector<16x32xbf16>, vector<16x32xf32> -> vector<16x32xf32>
      %115 = arith.addf %111, %114 : vector<16x32xf32>
      %c0_62 = arith.constant 0 : index
      %c64_63 = arith.constant 64 : index
      %116 = vector.load %arg11[%c0_62, %c64_63] : memref<16x128xf32, #tpu.memory_space<vmem>>, vector<16x32xf32>
      tpu.vector_store %arg11[%c0_62, %c64_63], %115 {strides = array<i32>} : memref<16x128xf32, #tpu.memory_space<vmem>>, vector<16x32xf32>,
      %c0_64 = arith.constant 0 : index
      %c2_65 = arith.constant 2 : index
      %117 = vector.load %arg9[%c0_64, %c2_65] : memref<16x128xf32, #tpu.memory_space<vmem>>, vector<16x1xf32>
      tpu.vector_store %arg9[%c0_64, %c2_65], %97 {strides = array<i32>} : memref<16x128xf32, #tpu.memory_space<vmem>>, vector<16x1xf32>,
      %118 = vector.extract_strided_slice %20 {offsets = [0, 96], sizes = [16, 32], strides = [1, 1]} : vector<16x128xbf16> to vector<16x32xbf16>
      %119 = vector.extract_strided_slice %22 {offsets = [0, 96], sizes = [16, 32], strides = [1, 1]} : vector<16x128xbf16> to vector<16x32xbf16>
      %cst_66 = arith.constant dense<0.000000e+00> : vector<16x16xf32>
      %120 = tpu.matmul %118, %119, %cst_66 {dimension_numbers = #tpu.dot_dimension_numbers<[1], [1], [0], [0], [0, 0, 1, 0], [], []>} : vector<16x32xbf16>, vector<16x32xbf16>, vector<16x16xf32> -> vector<16x16xf32>
      %cst_67 = arith.constant 0.176776692 : f32
      %121 = vector.broadcast %cst_67 : f32 to vector<16x16xf32>
      %122 = arith.mulf %120, %121 : vector<16x16xf32>
      %cst_68 = arith.constant -1.000000e+30 : f32
      %123 = vector.broadcast %cst_68 : f32 to vector<16x16xf32>
      %124 = arith.select %18, %122, %123 : vector<16x16xi1>, vector<16x16xf32>
      %c0_69 = arith.constant 0 : index
      %c3 = arith.constant 3 : index
      %125 = vector.load %arg9[%c0_69, %c3] : memref<16x128xf32, #tpu.memory_space<vmem>>, vector<16x1xf32>
      %cst_70 = arith.constant dense<0xFF800000> : vector<16xf32>
      %126 = vector.multi_reduction <maximumf>, %124, %cst_70 [1] : vector<16x16xf32> to vector<16xf32>
      %127 = vector.shape_cast %126 : vector<16xf32> to vector<16x1xf32>
      %128 = arith.maximumf %125, %127 : vector<16x1xf32>
      %129 = arith.subf %125, %128 : vector<16x1xf32>
      %130 = math.exp %129 : vector<16x1xf32>
      %131 = vector.broadcast %128 : vector<16x1xf32> to vector<16x16xf32>
      %132 = arith.subf %124, %131 : vector<16x16xf32>
      %133 = math.exp %132 : vector<16x16xf32>
      %c0_71 = arith.constant 0 : index
      %c3_72 = arith.constant 3 : index
      %134 = vector.load %arg10[%c0_71, %c3_72] : memref<16x128xf32, #tpu.memory_space<vmem>>, vector<16x1xf32>
      %135 = arith.mulf %130, %134 : vector<16x1xf32>
      %cst_73 = arith.constant dense<0.000000e+00> : vector<16xf32>
      %136 = vector.multi_reduction <add>, %133, %cst_73 [1] : vector<16x16xf32> to vector<16xf32>
      %137 = vector.shape_cast %136 : vector<16xf32> to vector<16x1xf32>
      %138 = arith.addf %135, %137 : vector<16x1xf32>
      %c0_74 = arith.constant 0 : index
      %c3_75 = arith.constant 3 : index
      %139 = vector.load %arg10[%c0_74, %c3_75] : memref<16x128xf32, #tpu.memory_space<vmem>>, vector<16x1xf32>
      tpu.vector_store %arg10[%c0_74, %c3_75], %138 {strides = array<i32>} : memref<16x128xf32, #tpu.memory_space<vmem>>, vector<16x1xf32>,
      %c0_76 = arith.constant 0 : index
      %c96 = arith.constant 96 : index
      %140 = vector.load %arg11[%c0_76, %c96] : memref<16x128xf32, #tpu.memory_space<vmem>>, vector<16x32xf32>
      %141 = vector.broadcast %130 : vector<16x1xf32> to vector<16x32xf32>
      %142 = arith.mulf %141, %140 : vector<16x32xf32>
      %143 = arith.truncf %133 : vector<16x16xf32> to vector<16x16xbf16>
      %144 = vector.extract_strided_slice %24 {offsets = [0, 96], sizes = [16, 32], strides = [1, 1]} : vector<16x128xbf16> to vector<16x32xbf16>
      %cst_77 = arith.constant dense<0.000000e+00> : vector<16x32xf32>
      %145 = tpu.matmul %143, %144, %cst_77 {dimension_numbers = #tpu.dot_dimension_numbers<[1], [0], [0], [1], [0, 0, 1, 1], [], []>} : vector<16x16xbf16>, vector<16x32xbf16>, vector<16x32xf32> -> vector<16x32xf32>
      %146 = arith.addf %142, %145 : vector<16x32xf32>
      %c0_78 = arith.constant 0 : index
      %c96_79 = arith.constant 96 : index
      %147 = vector.load %arg11[%c0_78, %c96_79] : memref<16x128xf32, #tpu.memory_space<vmem>>, vector<16x32xf32>
      tpu.vector_store %arg11[%c0_78, %c96_79], %146 {strides = array<i32>} : memref<16x128xf32, #tpu.memory_space<vmem>>, vector<16x32xf32>,
      %c0_80 = arith.constant 0 : index
      %c3_81 = arith.constant 3 : index
      %148 = vector.load %arg9[%c0_80, %c3_81] : memref<16x128xf32, #tpu.memory_space<vmem>>, vector<16x1xf32>
      tpu.vector_store %arg9[%c0_80, %c3_81], %128 {strides = array<i32>} : memref<16x128xf32, #tpu.memory_space<vmem>>, vector<16x1xf32>,
    } else {
    }
    %c0_i32_4 = arith.constant 0 : i32
    %12 = arith.cmpi eq, %arg2, %c0_i32_4 : i32
    %13 = arith.extui %12 : i1 to i32
    %c0_i32_5 = arith.constant 0 : i32
    %14 = arith.cmpi ne, %13, %c0_i32_5 : i32
    scf.if %14 {
      %c0 = arith.constant 0 : index
      %c0_6 = arith.constant 0 : index
      %15 = vector.load %arg10[%c0, %c0_6] : memref<16x128xf32, #tpu.memory_space<vmem>>, vector<16x1xf32>
      %cst = arith.constant 1.000000e-30 : f32
      %16 = vector.broadcast %cst : f32 to vector<16x1xf32>
      %17 = arith.maximumf %15, %16 : vector<16x1xf32>
      %18 = tpu.reciprocal %17 : vector<16x1xf32> -> vector<16x1xf32>
      %c0_7 = arith.constant 0 : index
      %c0_8 = arith.constant 0 : index
      %19 = vector.load %arg11[%c0_7, %c0_8] : memref<16x128xf32, #tpu.memory_space<vmem>>, vector<16x32xf32>
      %20 = vector.broadcast %18 : vector<16x1xf32> to vector<16x32xf32>
      %21 = arith.mulf %19, %20 : vector<16x32xf32>
      %c0_9 = arith.constant 0 : index
      %c1 = arith.constant 1 : index
      %22 = vector.load %arg10[%c0_9, %c1] : memref<16x128xf32, #tpu.memory_space<vmem>>, vector<16x1xf32>
      %cst_10 = arith.constant 1.000000e-30 : f32
      %23 = vector.broadcast %cst_10 : f32 to vector<16x1xf32>
      %24 = arith.maximumf %22, %23 : vector<16x1xf32>
      %25 = tpu.reciprocal %24 : vector<16x1xf32> -> vector<16x1xf32>
      %c0_11 = arith.constant 0 : index
      %c32 = arith.constant 32 : index
      %26 = vector.load %arg11[%c0_11, %c32] : memref<16x128xf32, #tpu.memory_space<vmem>>, vector<16x32xf32>
      %27 = vector.broadcast %25 : vector<16x1xf32> to vector<16x32xf32>
      %28 = arith.mulf %26, %27 : vector<16x32xf32>
      %c0_12 = arith.constant 0 : index
      %c2 = arith.constant 2 : index
      %29 = vector.load %arg10[%c0_12, %c2] : memref<16x128xf32, #tpu.memory_space<vmem>>, vector<16x1xf32>
      %cst_13 = arith.constant 1.000000e-30 : f32
      %30 = vector.broadcast %cst_13 : f32 to vector<16x1xf32>
      %31 = arith.maximumf %29, %30 : vector<16x1xf32>
      %32 = tpu.reciprocal %31 : vector<16x1xf32> -> vector<16x1xf32>
      %c0_14 = arith.constant 0 : index
      %c64 = arith.constant 64 : index
      %33 = vector.load %arg11[%c0_14, %c64] : memref<16x128xf32, #tpu.memory_space<vmem>>, vector<16x32xf32>
      %34 = vector.broadcast %32 : vector<16x1xf32> to vector<16x32xf32>
      %35 = arith.mulf %33, %34 : vector<16x32xf32>
      %c0_15 = arith.constant 0 : index
      %c3 = arith.constant 3 : index
      %36 = vector.load %arg10[%c0_15, %c3] : memref<16x128xf32, #tpu.memory_space<vmem>>, vector<16x1xf32>
      %cst_16 = arith.constant 1.000000e-30 : f32
      %37 = vector.broadcast %cst_16 : f32 to vector<16x1xf32>
      %38 = arith.maximumf %36, %37 : vector<16x1xf32>
      %39 = tpu.reciprocal %38 : vector<16x1xf32> -> vector<16x1xf32>
      %c0_17 = arith.constant 0 : index
      %c96 = arith.constant 96 : index
      %40 = vector.load %arg11[%c0_17, %c96] : memref<16x128xf32, #tpu.memory_space<vmem>>, vector<16x32xf32>
      %41 = vector.broadcast %39 : vector<16x1xf32> to vector<16x32xf32>
      %42 = arith.mulf %40, %41 : vector<16x32xf32>
      %43 = tpu.concatenate %21, %28, %35, %42 in 1 : vector<16x32xf32>, vector<16x32xf32>, vector<16x32xf32>, vector<16x32xf32> -> vector<16x128xf32>
      %44 = arith.truncf %43 : vector<16x128xf32> to vector<16x128xbf16>
      %c0_18 = arith.constant 0 : index
      %c0_19 = arith.constant 0 : index
      %c0_20 = arith.constant 0 : index
      %45 = vector.load %arg8[%c0_18, %c0_19, %c0_20] : memref<1x16x128xbf16, #tpu.memory_space<vmem>>, vector<1x16x128xbf16>
      %46 = vector.shape_cast %45 : vector<1x16x128xbf16> to vector<16x128xbf16>
      %47 = vector.shape_cast %44 : vector<16x128xbf16> to vector<1x16x128xbf16>
      tpu.vector_store %arg8[%c0_18, %c0_19, %c0_20], %47 {strides = array<i32>} : memref<1x16x128xbf16, #tpu.memory_space<vmem>>, vector<1x16x128xbf16>,
    } else {
    }
    return
  }
  func.func @transform_0(%arg0: i32, %arg1: i32, %arg2: i32, %arg3: memref<2xi32, #tpu.memory_space<smem>>) -> (i32, i32, i32) {
    %c0_i32 = arith.constant 0 : i32
    return %arg0, %arg1, %arg2 : i32, i32, i32
  }
  func.func @transform_1(%arg0: i32, %arg1: i32, %arg2: i32, %arg3: memref<2xi32, #tpu.memory_space<smem>>) -> (i32, i32, i32) {
    %c0_i32 = arith.constant 0 : i32
    %c0_i32_0 = arith.constant 0 : i32
    return %arg0, %arg1, %c0_i32 : i32, i32, i32
  }
  func.func @transform_2(%arg0: i32, %arg1: i32, %arg2: i32, %arg3: memref<2xi32, #tpu.memory_space<smem>>) -> (i32, i32, i32) {
    %c1_i32 = arith.constant 1 : i32
    %c0_i32 = arith.constant 0 : i32
    return %arg0, %arg2, %c1_i32 : i32, i32, i32
  }
  func.func @transform_3(%arg0: i32, %arg1: i32, %arg2: i32, %arg3: memref<2xi32, #tpu.memory_space<smem>>) -> (i32, i32, i32) {
    %c2_i32 = arith.constant 2 : i32
    %c0_i32 = arith.constant 0 : i32
    return %arg0, %arg2, %c2_i32 : i32, i32, i32
  }
  func.func @transform_4(%arg0: i32, %arg1: i32, %arg2: i32, %arg3: memref<2xi32, #tpu.memory_space<smem>>) -> (i32, i32, i32) {
    %c0_i32 = arith.constant 0 : i32
    %c0_i32_0 = arith.constant 0 : i32
    return %arg0, %arg1, %c0_i32 : i32, i32, i32
  }
}

module attributes {stable_mosaic.version = 11 : i64} {
  func.func @_mm_bias_res_ln_kernel(%arg0: i32, %arg1: i32, %arg2: memref<16x256xbf16, #tpu.memory_space<vmem>>, %arg3: memref<256x128xbf16, #tpu.memory_space<vmem>>, %arg4: memref<1x128xf32, #tpu.memory_space<vmem>>, %arg5: memref<16x128xbf16, #tpu.memory_space<vmem>>, %arg6: memref<1x128xf32, #tpu.memory_space<vmem>>, %arg7: memref<1x128xf32, #tpu.memory_space<vmem>>, %arg8: memref<16x128xbf16, #tpu.memory_space<vmem>>, %arg9: memref<16x128xf32, #tpu.memory_space<vmem>>) attributes {dimension_semantics = [#tpu.dimension_semantics<parallel>, #tpu.dimension_semantics<arbitrary>], iteration_bounds = array<i64: 2, 1>, scalar_prefetch = 0 : i64, scratch_operands = 1 : i64, tpu.core_type = #tpu.core_type<tc>, window_params = [{transform_indices = @transform_0, window_bounds = array<i64: 16, 256>}, {transform_indices = @transform_1, window_bounds = array<i64: 256, 128>}, {pipeline_mode = #tpu.pipeline_mode<synchronous>, transform_indices = @transform_2, window_bounds = array<i64: 1, 128>}, {transform_indices = @transform_3, window_bounds = array<i64: 16, 128>}, {pipeline_mode = #tpu.pipeline_mode<synchronous>, transform_indices = @transform_4, window_bounds = array<i64: 1, 128>}, {pipeline_mode = #tpu.pipeline_mode<synchronous>, transform_indices = @transform_5, window_bounds = array<i64: 1, 128>}, {transform_indices = @transform_6, window_bounds = array<i64: 16, 128>}]} {
    %c0_i32 = arith.constant 0 : i32
    %0 = arith.cmpi eq, %arg1, %c0_i32 : i32
    %1 = arith.extui %0 : i1 to i32
    %c0_i32_0 = arith.constant 0 : i32
    %2 = arith.cmpi ne, %1, %c0_i32_0 : i32
    scf.if %2 {
      %cst_10 = arith.constant 0.000000e+00 : f32
      %12 = vector.broadcast %cst_10 : f32 to vector<16x128xf32>
      %c0_11 = arith.constant 0 : index
      %c0_12 = arith.constant 0 : index
      %13 = vector.load %arg9[%c0_11, %c0_12] : memref<16x128xf32, #tpu.memory_space<vmem>>, vector<16x128xf32>
      tpu.vector_store %arg9[%c0_11, %c0_12], %12 {strides = array<i32>} : memref<16x128xf32, #tpu.memory_space<vmem>>, vector<16x128xf32>,
    } else {
    }
    %c0 = arith.constant 0 : index
    %c0_1 = arith.constant 0 : index
    %3 = vector.load %arg9[%c0, %c0_1] : memref<16x128xf32, #tpu.memory_space<vmem>>, vector<16x128xf32>
    %c0_2 = arith.constant 0 : index
    %c0_3 = arith.constant 0 : index
    %4 = vector.load %arg2[%c0_2, %c0_3] : memref<16x256xbf16, #tpu.memory_space<vmem>>, vector<16x256xbf16>
    %c0_4 = arith.constant 0 : index
    %c0_5 = arith.constant 0 : index
    %5 = vector.load %arg3[%c0_4, %c0_5] : memref<256x128xbf16, #tpu.memory_space<vmem>>, vector<256x128xbf16>
    %cst = arith.constant dense<0.000000e+00> : vector<16x128xf32>
    %6 = tpu.matmul %4, %5, %cst {dimension_numbers = #tpu.dot_dimension_numbers<[1], [0], [0], [1], [0, 0, 1, 1], [], []>} : vector<16x256xbf16>, vector<256x128xbf16>, vector<16x128xf32> -> vector<16x128xf32>
    %7 = arith.addf %3, %6 : vector<16x128xf32>
    %c0_6 = arith.constant 0 : index
    %c0_7 = arith.constant 0 : index
    %8 = vector.load %arg9[%c0_6, %c0_7] : memref<16x128xf32, #tpu.memory_space<vmem>>, vector<16x128xf32>
    tpu.vector_store %arg9[%c0_6, %c0_7], %7 {strides = array<i32>} : memref<16x128xf32, #tpu.memory_space<vmem>>, vector<16x128xf32>,
    %c0_i32_8 = arith.constant 0 : i32
    %9 = arith.cmpi eq, %arg1, %c0_i32_8 : i32
    %10 = arith.extui %9 : i1 to i32
    %c0_i32_9 = arith.constant 0 : i32
    %11 = arith.cmpi ne, %10, %c0_i32_9 : i32
    scf.if %11 {
      %c0_10 = arith.constant 0 : index
      %c0_11 = arith.constant 0 : index
      %12 = vector.load %arg9[%c0_10, %c0_11] : memref<16x128xf32, #tpu.memory_space<vmem>>, vector<16x128xf32>
      %c0_12 = arith.constant 0 : index
      %c0_13 = arith.constant 0 : index
      %13 = vector.load %arg4[%c0_12, %c0_13] : memref<1x128xf32, #tpu.memory_space<vmem>>, vector<1x128xf32>
      %14 = vector.broadcast %13 : vector<1x128xf32> to vector<16x128xf32>
      %15 = arith.addf %12, %14 : vector<16x128xf32>
      %c0_14 = arith.constant 0 : index
      %c0_15 = arith.constant 0 : index
      %16 = vector.load %arg5[%c0_14, %c0_15] : memref<16x128xbf16, #tpu.memory_space<vmem>>, vector<16x128xbf16>
      %17 = arith.extf %16 : vector<16x128xbf16> to vector<16x128xf32>
      %18 = arith.addf %15, %17 : vector<16x128xf32>
      %cst_16 = arith.constant dense<0.000000e+00> : vector<16xf32>
      %19 = vector.multi_reduction <add>, %18, %cst_16 [1] : vector<16x128xf32> to vector<16xf32>
      %20 = vector.shape_cast %19 : vector<16xf32> to vector<16x1xf32>
      %cst_17 = arith.constant 1.280000e+02 : f32
      %21 = vector.broadcast %cst_17 : f32 to vector<16x1xf32>
      %22 = arith.divf %20, %21 : vector<16x1xf32>
      %23 = vector.broadcast %22 : vector<16x1xf32> to vector<16x128xf32>
      %24 = arith.subf %18, %23 : vector<16x128xf32>
      %25 = arith.mulf %24, %24 : vector<16x128xf32>
      %cst_18 = arith.constant dense<0.000000e+00> : vector<16xf32>
      %26 = vector.multi_reduction <add>, %25, %cst_18 [1] : vector<16x128xf32> to vector<16xf32>
      %27 = vector.shape_cast %26 : vector<16xf32> to vector<16x1xf32>
      %cst_19 = arith.constant 1.280000e+02 : f32
      %28 = vector.broadcast %cst_19 : f32 to vector<16x1xf32>
      %29 = arith.divf %27, %28 : vector<16x1xf32>
      %cst_20 = arith.constant 9.99999974E-6 : f32
      %30 = vector.broadcast %cst_20 : f32 to vector<16x1xf32>
      %31 = arith.addf %29, %30 : vector<16x1xf32>
      %32 = math.rsqrt %31 : vector<16x1xf32>
      %33 = vector.broadcast %32 : vector<16x1xf32> to vector<16x128xf32>
      %34 = arith.mulf %24, %33 : vector<16x128xf32>
      %c0_21 = arith.constant 0 : index
      %c0_22 = arith.constant 0 : index
      %35 = vector.load %arg6[%c0_21, %c0_22] : memref<1x128xf32, #tpu.memory_space<vmem>>, vector<1x128xf32>
      %36 = vector.broadcast %35 : vector<1x128xf32> to vector<16x128xf32>
      %37 = arith.mulf %34, %36 : vector<16x128xf32>
      %c0_23 = arith.constant 0 : index
      %c0_24 = arith.constant 0 : index
      %38 = vector.load %arg7[%c0_23, %c0_24] : memref<1x128xf32, #tpu.memory_space<vmem>>, vector<1x128xf32>
      %39 = vector.broadcast %38 : vector<1x128xf32> to vector<16x128xf32>
      %40 = arith.addf %37, %39 : vector<16x128xf32>
      %41 = arith.truncf %40 : vector<16x128xf32> to vector<16x128xbf16>
      %c0_25 = arith.constant 0 : index
      %c0_26 = arith.constant 0 : index
      %42 = vector.load %arg8[%c0_25, %c0_26] : memref<16x128xbf16, #tpu.memory_space<vmem>>, vector<16x128xbf16>
      tpu.vector_store %arg8[%c0_25, %c0_26], %41 {strides = array<i32>} : memref<16x128xbf16, #tpu.memory_space<vmem>>, vector<16x128xbf16>,
    } else {
    }
    return
  }
  func.func @transform_0(%arg0: i32, %arg1: i32) -> (i32, i32) {
    %c0_i32 = arith.constant 0 : i32
    return %arg0, %arg1 : i32, i32
  }
  func.func @transform_1(%arg0: i32, %arg1: i32) -> (i32, i32) {
    %c0_i32 = arith.constant 0 : i32
    %c0_i32_0 = arith.constant 0 : i32
    return %arg1, %c0_i32 : i32, i32
  }
  func.func @transform_2(%arg0: i32, %arg1: i32) -> (i32, i32) {
    %c0_i32 = arith.constant 0 : i32
    %c0_i32_0 = arith.constant 0 : i32
    %c0_i32_1 = arith.constant 0 : i32
    return %c0_i32, %c0_i32_0 : i32, i32
  }
  func.func @transform_3(%arg0: i32, %arg1: i32) -> (i32, i32) {
    %c0_i32 = arith.constant 0 : i32
    %c0_i32_0 = arith.constant 0 : i32
    return %arg0, %c0_i32 : i32, i32
  }
  func.func @transform_4(%arg0: i32, %arg1: i32) -> (i32, i32) {
    %c0_i32 = arith.constant 0 : i32
    %c0_i32_0 = arith.constant 0 : i32
    %c0_i32_1 = arith.constant 0 : i32
    return %c0_i32, %c0_i32_0 : i32, i32
  }
  func.func @transform_5(%arg0: i32, %arg1: i32) -> (i32, i32) {
    %c0_i32 = arith.constant 0 : i32
    %c0_i32_0 = arith.constant 0 : i32
    %c0_i32_1 = arith.constant 0 : i32
    return %c0_i32, %c0_i32_0 : i32, i32
  }
  func.func @transform_6(%arg0: i32, %arg1: i32) -> (i32, i32) {
    %c0_i32 = arith.constant 0 : i32
    %c0_i32_0 = arith.constant 0 : i32
    return %arg0, %c0_i32 : i32, i32
  }
}

module attributes {stable_mosaic.version = 11 : i64} {
  func.func @_mm_bias_kernel(%arg0: i32, %arg1: i32, %arg2: i32, %arg3: memref<16x128xbf16, #tpu.memory_space<vmem>>, %arg4: memref<128x384xbf16, #tpu.memory_space<vmem>>, %arg5: memref<1x384xf32, #tpu.memory_space<vmem>>, %arg6: memref<16x384xbf16, #tpu.memory_space<vmem>>, %arg7: memref<16x384xf32, #tpu.memory_space<vmem>>) attributes {dimension_semantics = [#tpu.dimension_semantics<parallel>, #tpu.dimension_semantics<parallel>, #tpu.dimension_semantics<arbitrary>], iteration_bounds = array<i64: 2, 1, 1>, scalar_prefetch = 0 : i64, scratch_operands = 1 : i64, tpu.core_type = #tpu.core_type<tc>, window_params = [{transform_indices = @transform_0, window_bounds = array<i64: 16, 128>}, {transform_indices = @transform_1, window_bounds = array<i64: 128, 384>}, {transform_indices = @transform_2, window_bounds = array<i64: 1, 384>}, {transform_indices = @transform_3, window_bounds = array<i64: 16, 384>}]} {
    %c0_i32 = arith.constant 0 : i32
    %0 = arith.cmpi eq, %arg2, %c0_i32 : i32
    %1 = arith.extui %0 : i1 to i32
    %c0_i32_0 = arith.constant 0 : i32
    %2 = arith.cmpi ne, %1, %c0_i32_0 : i32
    scf.if %2 {
      %cst_10 = arith.constant 0.000000e+00 : f32
      %12 = vector.broadcast %cst_10 : f32 to vector<16x384xf32>
      %c0_11 = arith.constant 0 : index
      %c0_12 = arith.constant 0 : index
      %13 = vector.load %arg7[%c0_11, %c0_12] : memref<16x384xf32, #tpu.memory_space<vmem>>, vector<16x384xf32>
      tpu.vector_store %arg7[%c0_11, %c0_12], %12 {strides = array<i32>} : memref<16x384xf32, #tpu.memory_space<vmem>>, vector<16x384xf32>,
    } else {
    }
    %c0 = arith.constant 0 : index
    %c0_1 = arith.constant 0 : index
    %3 = vector.load %arg7[%c0, %c0_1] : memref<16x384xf32, #tpu.memory_space<vmem>>, vector<16x384xf32>
    %c0_2 = arith.constant 0 : index
    %c0_3 = arith.constant 0 : index
    %4 = vector.load %arg3[%c0_2, %c0_3] : memref<16x128xbf16, #tpu.memory_space<vmem>>, vector<16x128xbf16>
    %c0_4 = arith.constant 0 : index
    %c0_5 = arith.constant 0 : index
    %5 = vector.load %arg4[%c0_4, %c0_5] : memref<128x384xbf16, #tpu.memory_space<vmem>>, vector<128x384xbf16>
    %cst = arith.constant dense<0.000000e+00> : vector<16x384xf32>
    %6 = tpu.matmul %4, %5, %cst {dimension_numbers = #tpu.dot_dimension_numbers<[1], [0], [0], [1], [0, 0, 1, 1], [], []>} : vector<16x128xbf16>, vector<128x384xbf16>, vector<16x384xf32> -> vector<16x384xf32>
    %7 = arith.addf %3, %6 : vector<16x384xf32>
    %c0_6 = arith.constant 0 : index
    %c0_7 = arith.constant 0 : index
    %8 = vector.load %arg7[%c0_6, %c0_7] : memref<16x384xf32, #tpu.memory_space<vmem>>, vector<16x384xf32>
    tpu.vector_store %arg7[%c0_6, %c0_7], %7 {strides = array<i32>} : memref<16x384xf32, #tpu.memory_space<vmem>>, vector<16x384xf32>,
    %c0_i32_8 = arith.constant 0 : i32
    %9 = arith.cmpi eq, %arg2, %c0_i32_8 : i32
    %10 = arith.extui %9 : i1 to i32
    %c0_i32_9 = arith.constant 0 : i32
    %11 = arith.cmpi ne, %10, %c0_i32_9 : i32
    scf.if %11 {
      %c0_10 = arith.constant 0 : index
      %c0_11 = arith.constant 0 : index
      %12 = vector.load %arg7[%c0_10, %c0_11] : memref<16x384xf32, #tpu.memory_space<vmem>>, vector<16x384xf32>
      %c0_12 = arith.constant 0 : index
      %c0_13 = arith.constant 0 : index
      %13 = vector.load %arg5[%c0_12, %c0_13] : memref<1x384xf32, #tpu.memory_space<vmem>>, vector<1x384xf32>
      %14 = vector.broadcast %13 : vector<1x384xf32> to vector<16x384xf32>
      %15 = arith.addf %12, %14 : vector<16x384xf32>
      %16 = arith.truncf %15 : vector<16x384xf32> to vector<16x384xbf16>
      %c0_14 = arith.constant 0 : index
      %c0_15 = arith.constant 0 : index
      %17 = vector.load %arg6[%c0_14, %c0_15] : memref<16x384xbf16, #tpu.memory_space<vmem>>, vector<16x384xbf16>
      tpu.vector_store %arg6[%c0_14, %c0_15], %16 {strides = array<i32>} : memref<16x384xbf16, #tpu.memory_space<vmem>>, vector<16x384xbf16>,
    } else {
    }
    return
  }
  func.func @transform_0(%arg0: i32, %arg1: i32, %arg2: i32) -> (i32, i32) {
    %c0_i32 = arith.constant 0 : i32
    return %arg0, %arg2 : i32, i32
  }
  func.func @transform_1(%arg0: i32, %arg1: i32, %arg2: i32) -> (i32, i32) {
    %c0_i32 = arith.constant 0 : i32
    return %arg2, %arg1 : i32, i32
  }
  func.func @transform_2(%arg0: i32, %arg1: i32, %arg2: i32) -> (i32, i32) {
    %c0_i32 = arith.constant 0 : i32
    %c0_i32_0 = arith.constant 0 : i32
    return %c0_i32, %arg1 : i32, i32
  }
  func.func @transform_3(%arg0: i32, %arg1: i32, %arg2: i32) -> (i32, i32) {
    %c0_i32 = arith.constant 0 : i32
    return %arg0, %arg1 : i32, i32
  }
}

module attributes {stable_mosaic.version = 11 : i64} {
  func.func @_mm_bias_res_ln_kernel(%arg0: i32, %arg1: i32, %arg2: memref<16x128xbf16, #tpu.memory_space<vmem>>, %arg3: memref<128x128xbf16, #tpu.memory_space<vmem>>, %arg4: memref<1x128xf32, #tpu.memory_space<vmem>>, %arg5: memref<16x128xbf16, #tpu.memory_space<vmem>>, %arg6: memref<1x128xf32, #tpu.memory_space<vmem>>, %arg7: memref<1x128xf32, #tpu.memory_space<vmem>>, %arg8: memref<16x128xbf16, #tpu.memory_space<vmem>>, %arg9: memref<16x128xf32, #tpu.memory_space<vmem>>) attributes {dimension_semantics = [#tpu.dimension_semantics<parallel>, #tpu.dimension_semantics<arbitrary>], iteration_bounds = array<i64: 2, 1>, scalar_prefetch = 0 : i64, scratch_operands = 1 : i64, tpu.core_type = #tpu.core_type<tc>, window_params = [{transform_indices = @transform_0, window_bounds = array<i64: 16, 128>}, {transform_indices = @transform_1, window_bounds = array<i64: 128, 128>}, {pipeline_mode = #tpu.pipeline_mode<synchronous>, transform_indices = @transform_2, window_bounds = array<i64: 1, 128>}, {transform_indices = @transform_3, window_bounds = array<i64: 16, 128>}, {pipeline_mode = #tpu.pipeline_mode<synchronous>, transform_indices = @transform_4, window_bounds = array<i64: 1, 128>}, {pipeline_mode = #tpu.pipeline_mode<synchronous>, transform_indices = @transform_5, window_bounds = array<i64: 1, 128>}, {transform_indices = @transform_6, window_bounds = array<i64: 16, 128>}]} {
    %c0_i32 = arith.constant 0 : i32
    %0 = arith.cmpi eq, %arg1, %c0_i32 : i32
    %1 = arith.extui %0 : i1 to i32
    %c0_i32_0 = arith.constant 0 : i32
    %2 = arith.cmpi ne, %1, %c0_i32_0 : i32
    scf.if %2 {
      %cst_10 = arith.constant 0.000000e+00 : f32
      %12 = vector.broadcast %cst_10 : f32 to vector<16x128xf32>
      %c0_11 = arith.constant 0 : index
      %c0_12 = arith.constant 0 : index
      %13 = vector.load %arg9[%c0_11, %c0_12] : memref<16x128xf32, #tpu.memory_space<vmem>>, vector<16x128xf32>
      tpu.vector_store %arg9[%c0_11, %c0_12], %12 {strides = array<i32>} : memref<16x128xf32, #tpu.memory_space<vmem>>, vector<16x128xf32>,
    } else {
    }
    %c0 = arith.constant 0 : index
    %c0_1 = arith.constant 0 : index
    %3 = vector.load %arg9[%c0, %c0_1] : memref<16x128xf32, #tpu.memory_space<vmem>>, vector<16x128xf32>
    %c0_2 = arith.constant 0 : index
    %c0_3 = arith.constant 0 : index
    %4 = vector.load %arg2[%c0_2, %c0_3] : memref<16x128xbf16, #tpu.memory_space<vmem>>, vector<16x128xbf16>
    %c0_4 = arith.constant 0 : index
    %c0_5 = arith.constant 0 : index
    %5 = vector.load %arg3[%c0_4, %c0_5] : memref<128x128xbf16, #tpu.memory_space<vmem>>, vector<128x128xbf16>
    %cst = arith.constant dense<0.000000e+00> : vector<16x128xf32>
    %6 = tpu.matmul %4, %5, %cst {dimension_numbers = #tpu.dot_dimension_numbers<[1], [0], [0], [1], [0, 0, 1, 1], [], []>} : vector<16x128xbf16>, vector<128x128xbf16>, vector<16x128xf32> -> vector<16x128xf32>
    %7 = arith.addf %3, %6 : vector<16x128xf32>
    %c0_6 = arith.constant 0 : index
    %c0_7 = arith.constant 0 : index
    %8 = vector.load %arg9[%c0_6, %c0_7] : memref<16x128xf32, #tpu.memory_space<vmem>>, vector<16x128xf32>
    tpu.vector_store %arg9[%c0_6, %c0_7], %7 {strides = array<i32>} : memref<16x128xf32, #tpu.memory_space<vmem>>, vector<16x128xf32>,
    %c0_i32_8 = arith.constant 0 : i32
    %9 = arith.cmpi eq, %arg1, %c0_i32_8 : i32
    %10 = arith.extui %9 : i1 to i32
    %c0_i32_9 = arith.constant 0 : i32
    %11 = arith.cmpi ne, %10, %c0_i32_9 : i32
    scf.if %11 {
      %c0_10 = arith.constant 0 : index
      %c0_11 = arith.constant 0 : index
      %12 = vector.load %arg9[%c0_10, %c0_11] : memref<16x128xf32, #tpu.memory_space<vmem>>, vector<16x128xf32>
      %c0_12 = arith.constant 0 : index
      %c0_13 = arith.constant 0 : index
      %13 = vector.load %arg4[%c0_12, %c0_13] : memref<1x128xf32, #tpu.memory_space<vmem>>, vector<1x128xf32>
      %14 = vector.broadcast %13 : vector<1x128xf32> to vector<16x128xf32>
      %15 = arith.addf %12, %14 : vector<16x128xf32>
      %c0_14 = arith.constant 0 : index
      %c0_15 = arith.constant 0 : index
      %16 = vector.load %arg5[%c0_14, %c0_15] : memref<16x128xbf16, #tpu.memory_space<vmem>>, vector<16x128xbf16>
      %17 = arith.extf %16 : vector<16x128xbf16> to vector<16x128xf32>
      %18 = arith.addf %15, %17 : vector<16x128xf32>
      %cst_16 = arith.constant dense<0.000000e+00> : vector<16xf32>
      %19 = vector.multi_reduction <add>, %18, %cst_16 [1] : vector<16x128xf32> to vector<16xf32>
      %20 = vector.shape_cast %19 : vector<16xf32> to vector<16x1xf32>
      %cst_17 = arith.constant 1.280000e+02 : f32
      %21 = vector.broadcast %cst_17 : f32 to vector<16x1xf32>
      %22 = arith.divf %20, %21 : vector<16x1xf32>
      %23 = vector.broadcast %22 : vector<16x1xf32> to vector<16x128xf32>
      %24 = arith.subf %18, %23 : vector<16x128xf32>
      %25 = arith.mulf %24, %24 : vector<16x128xf32>
      %cst_18 = arith.constant dense<0.000000e+00> : vector<16xf32>
      %26 = vector.multi_reduction <add>, %25, %cst_18 [1] : vector<16x128xf32> to vector<16xf32>
      %27 = vector.shape_cast %26 : vector<16xf32> to vector<16x1xf32>
      %cst_19 = arith.constant 1.280000e+02 : f32
      %28 = vector.broadcast %cst_19 : f32 to vector<16x1xf32>
      %29 = arith.divf %27, %28 : vector<16x1xf32>
      %cst_20 = arith.constant 9.99999974E-6 : f32
      %30 = vector.broadcast %cst_20 : f32 to vector<16x1xf32>
      %31 = arith.addf %29, %30 : vector<16x1xf32>
      %32 = math.rsqrt %31 : vector<16x1xf32>
      %33 = vector.broadcast %32 : vector<16x1xf32> to vector<16x128xf32>
      %34 = arith.mulf %24, %33 : vector<16x128xf32>
      %c0_21 = arith.constant 0 : index
      %c0_22 = arith.constant 0 : index
      %35 = vector.load %arg6[%c0_21, %c0_22] : memref<1x128xf32, #tpu.memory_space<vmem>>, vector<1x128xf32>
      %36 = vector.broadcast %35 : vector<1x128xf32> to vector<16x128xf32>
      %37 = arith.mulf %34, %36 : vector<16x128xf32>
      %c0_23 = arith.constant 0 : index
      %c0_24 = arith.constant 0 : index
      %38 = vector.load %arg7[%c0_23, %c0_24] : memref<1x128xf32, #tpu.memory_space<vmem>>, vector<1x128xf32>
      %39 = vector.broadcast %38 : vector<1x128xf32> to vector<16x128xf32>
      %40 = arith.addf %37, %39 : vector<16x128xf32>
      %41 = arith.truncf %40 : vector<16x128xf32> to vector<16x128xbf16>
      %c0_25 = arith.constant 0 : index
      %c0_26 = arith.constant 0 : index
      %42 = vector.load %arg8[%c0_25, %c0_26] : memref<16x128xbf16, #tpu.memory_space<vmem>>, vector<16x128xbf16>
      tpu.vector_store %arg8[%c0_25, %c0_26], %41 {strides = array<i32>} : memref<16x128xbf16, #tpu.memory_space<vmem>>, vector<16x128xbf16>,
    } else {
    }
    return
  }
  func.func @transform_0(%arg0: i32, %arg1: i32) -> (i32, i32) {
    %c0_i32 = arith.constant 0 : i32
    return %arg0, %arg1 : i32, i32
  }
  func.func @transform_1(%arg0: i32, %arg1: i32) -> (i32, i32) {
    %c0_i32 = arith.constant 0 : i32
    %c0_i32_0 = arith.constant 0 : i32
    return %arg1, %c0_i32 : i32, i32
  }
  func.func @transform_2(%arg0: i32, %arg1: i32) -> (i32, i32) {
    %c0_i32 = arith.constant 0 : i32
    %c0_i32_0 = arith.constant 0 : i32
    %c0_i32_1 = arith.constant 0 : i32
    return %c0_i32, %c0_i32_0 : i32, i32
  }
  func.func @transform_3(%arg0: i32, %arg1: i32) -> (i32, i32) {
    %c0_i32 = arith.constant 0 : i32
    %c0_i32_0 = arith.constant 0 : i32
    return %arg0, %c0_i32 : i32, i32
  }
  func.func @transform_4(%arg0: i32, %arg1: i32) -> (i32, i32) {
    %c0_i32 = arith.constant 0 : i32
    %c0_i32_0 = arith.constant 0 : i32
    %c0_i32_1 = arith.constant 0 : i32
    return %c0_i32, %c0_i32_0 : i32, i32
  }
  func.func @transform_5(%arg0: i32, %arg1: i32) -> (i32, i32) {
    %c0_i32 = arith.constant 0 : i32
    %c0_i32_0 = arith.constant 0 : i32
    %c0_i32_1 = arith.constant 0 : i32
    return %c0_i32, %c0_i32_0 : i32, i32
  }
  func.func @transform_6(%arg0: i32, %arg1: i32) -> (i32, i32) {
    %c0_i32 = arith.constant 0 : i32
    %c0_i32_0 = arith.constant 0 : i32
    return %arg0, %c0_i32 : i32, i32
  }
}

module attributes {stable_mosaic.version = 11 : i64} {
  func.func @_mm_bias_kernel(%arg0: i32, %arg1: i32, %arg2: i32, %arg3: memref<16x128xbf16, #tpu.memory_space<vmem>>, %arg4: memref<128x256xbf16, #tpu.memory_space<vmem>>, %arg5: memref<1x256xf32, #tpu.memory_space<vmem>>, %arg6: memref<16x256xbf16, #tpu.memory_space<vmem>>, %arg7: memref<16x256xf32, #tpu.memory_space<vmem>>) attributes {dimension_semantics = [#tpu.dimension_semantics<parallel>, #tpu.dimension_semantics<parallel>, #tpu.dimension_semantics<arbitrary>], iteration_bounds = array<i64: 2, 1, 1>, scalar_prefetch = 0 : i64, scratch_operands = 1 : i64, tpu.core_type = #tpu.core_type<tc>, window_params = [{transform_indices = @transform_0, window_bounds = array<i64: 16, 128>}, {transform_indices = @transform_1, window_bounds = array<i64: 128, 256>}, {transform_indices = @transform_2, window_bounds = array<i64: 1, 256>}, {transform_indices = @transform_3, window_bounds = array<i64: 16, 256>}]} {
    %c0_i32 = arith.constant 0 : i32
    %0 = arith.cmpi eq, %arg2, %c0_i32 : i32
    %1 = arith.extui %0 : i1 to i32
    %c0_i32_0 = arith.constant 0 : i32
    %2 = arith.cmpi ne, %1, %c0_i32_0 : i32
    scf.if %2 {
      %cst_10 = arith.constant 0.000000e+00 : f32
      %12 = vector.broadcast %cst_10 : f32 to vector<16x256xf32>
      %c0_11 = arith.constant 0 : index
      %c0_12 = arith.constant 0 : index
      %13 = vector.load %arg7[%c0_11, %c0_12] : memref<16x256xf32, #tpu.memory_space<vmem>>, vector<16x256xf32>
      tpu.vector_store %arg7[%c0_11, %c0_12], %12 {strides = array<i32>} : memref<16x256xf32, #tpu.memory_space<vmem>>, vector<16x256xf32>,
    } else {
    }
    %c0 = arith.constant 0 : index
    %c0_1 = arith.constant 0 : index
    %3 = vector.load %arg7[%c0, %c0_1] : memref<16x256xf32, #tpu.memory_space<vmem>>, vector<16x256xf32>
    %c0_2 = arith.constant 0 : index
    %c0_3 = arith.constant 0 : index
    %4 = vector.load %arg3[%c0_2, %c0_3] : memref<16x128xbf16, #tpu.memory_space<vmem>>, vector<16x128xbf16>
    %c0_4 = arith.constant 0 : index
    %c0_5 = arith.constant 0 : index
    %5 = vector.load %arg4[%c0_4, %c0_5] : memref<128x256xbf16, #tpu.memory_space<vmem>>, vector<128x256xbf16>
    %cst = arith.constant dense<0.000000e+00> : vector<16x256xf32>
    %6 = tpu.matmul %4, %5, %cst {dimension_numbers = #tpu.dot_dimension_numbers<[1], [0], [0], [1], [0, 0, 1, 1], [], []>} : vector<16x128xbf16>, vector<128x256xbf16>, vector<16x256xf32> -> vector<16x256xf32>
    %7 = arith.addf %3, %6 : vector<16x256xf32>
    %c0_6 = arith.constant 0 : index
    %c0_7 = arith.constant 0 : index
    %8 = vector.load %arg7[%c0_6, %c0_7] : memref<16x256xf32, #tpu.memory_space<vmem>>, vector<16x256xf32>
    tpu.vector_store %arg7[%c0_6, %c0_7], %7 {strides = array<i32>} : memref<16x256xf32, #tpu.memory_space<vmem>>, vector<16x256xf32>,
    %c0_i32_8 = arith.constant 0 : i32
    %9 = arith.cmpi eq, %arg2, %c0_i32_8 : i32
    %10 = arith.extui %9 : i1 to i32
    %c0_i32_9 = arith.constant 0 : i32
    %11 = arith.cmpi ne, %10, %c0_i32_9 : i32
    scf.if %11 {
      %c0_10 = arith.constant 0 : index
      %c0_11 = arith.constant 0 : index
      %12 = vector.load %arg7[%c0_10, %c0_11] : memref<16x256xf32, #tpu.memory_space<vmem>>, vector<16x256xf32>
      %c0_12 = arith.constant 0 : index
      %c0_13 = arith.constant 0 : index
      %13 = vector.load %arg5[%c0_12, %c0_13] : memref<1x256xf32, #tpu.memory_space<vmem>>, vector<1x256xf32>
      %14 = vector.broadcast %13 : vector<1x256xf32> to vector<16x256xf32>
      %15 = arith.addf %12, %14 : vector<16x256xf32>
      %cst_14 = arith.constant 0.000000e+00 : f32
      %16 = vector.broadcast %cst_14 : f32 to vector<16x256xf32>
      %17 = arith.maximumf %15, %16 : vector<16x256xf32>
      %18 = arith.truncf %17 : vector<16x256xf32> to vector<16x256xbf16>
      %c0_15 = arith.constant 0 : index
      %c0_16 = arith.constant 0 : index
      %19 = vector.load %arg6[%c0_15, %c0_16] : memref<16x256xbf16, #tpu.memory_space<vmem>>, vector<16x256xbf16>
      tpu.vector_store %arg6[%c0_15, %c0_16], %18 {strides = array<i32>} : memref<16x256xbf16, #tpu.memory_space<vmem>>, vector<16x256xbf16>,
    } else {
    }
    return
  }
  func.func @transform_0(%arg0: i32, %arg1: i32, %arg2: i32) -> (i32, i32) {
    %c0_i32 = arith.constant 0 : i32
    return %arg0, %arg2 : i32, i32
  }
  func.func @transform_1(%arg0: i32, %arg1: i32, %arg2: i32) -> (i32, i32) {
    %c0_i32 = arith.constant 0 : i32
    return %arg2, %arg1 : i32, i32
  }
  func.func @transform_2(%arg0: i32, %arg1: i32, %arg2: i32) -> (i32, i32) {
    %c0_i32 = arith.constant 0 : i32
    %c0_i32_0 = arith.constant 0 : i32
    return %c0_i32, %arg1 : i32, i32
  }
  func.func @transform_3(%arg0: i32, %arg1: i32, %arg2: i32) -> (i32, i32) {
    %c0_i32 = arith.constant 0 : i32
    return %arg0, %arg1 : i32, i32
  }
}

module attributes {stable_mosaic.version = 11 : i64} {
  func.func @_mm_bias_kernel(%arg0: i32, %arg1: i32, %arg2: i32, %arg3: memref<16x128xbf16, #tpu.memory_space<vmem>>, %arg4: memref<128x128xbf16, #tpu.memory_space<vmem>>, %arg5: memref<1x128xf32, #tpu.memory_space<vmem>>, %arg6: memref<16x128xf32, #tpu.memory_space<vmem>>, %arg7: memref<16x128xf32, #tpu.memory_space<vmem>>) attributes {dimension_semantics = [#tpu.dimension_semantics<parallel>, #tpu.dimension_semantics<parallel>, #tpu.dimension_semantics<arbitrary>], iteration_bounds = array<i64: 2, 1, 1>, scalar_prefetch = 0 : i64, scratch_operands = 1 : i64, tpu.core_type = #tpu.core_type<tc>, window_params = [{transform_indices = @transform_0, window_bounds = array<i64: 16, 128>}, {transform_indices = @transform_1, window_bounds = array<i64: 128, 128>}, {transform_indices = @transform_2, window_bounds = array<i64: 1, 128>}, {transform_indices = @transform_3, window_bounds = array<i64: 16, 128>}]} {
    %c0_i32 = arith.constant 0 : i32
    %0 = arith.cmpi eq, %arg2, %c0_i32 : i32
    %1 = arith.extui %0 : i1 to i32
    %c0_i32_0 = arith.constant 0 : i32
    %2 = arith.cmpi ne, %1, %c0_i32_0 : i32
    scf.if %2 {
      %cst_10 = arith.constant 0.000000e+00 : f32
      %12 = vector.broadcast %cst_10 : f32 to vector<16x128xf32>
      %c0_11 = arith.constant 0 : index
      %c0_12 = arith.constant 0 : index
      %13 = vector.load %arg7[%c0_11, %c0_12] : memref<16x128xf32, #tpu.memory_space<vmem>>, vector<16x128xf32>
      tpu.vector_store %arg7[%c0_11, %c0_12], %12 {strides = array<i32>} : memref<16x128xf32, #tpu.memory_space<vmem>>, vector<16x128xf32>,
    } else {
    }
    %c0 = arith.constant 0 : index
    %c0_1 = arith.constant 0 : index
    %3 = vector.load %arg7[%c0, %c0_1] : memref<16x128xf32, #tpu.memory_space<vmem>>, vector<16x128xf32>
    %c0_2 = arith.constant 0 : index
    %c0_3 = arith.constant 0 : index
    %4 = vector.load %arg3[%c0_2, %c0_3] : memref<16x128xbf16, #tpu.memory_space<vmem>>, vector<16x128xbf16>
    %c0_4 = arith.constant 0 : index
    %c0_5 = arith.constant 0 : index
    %5 = vector.load %arg4[%c0_4, %c0_5] : memref<128x128xbf16, #tpu.memory_space<vmem>>, vector<128x128xbf16>
    %cst = arith.constant dense<0.000000e+00> : vector<16x128xf32>
    %6 = tpu.matmul %4, %5, %cst {dimension_numbers = #tpu.dot_dimension_numbers<[1], [0], [0], [1], [0, 0, 1, 1], [], []>} : vector<16x128xbf16>, vector<128x128xbf16>, vector<16x128xf32> -> vector<16x128xf32>
    %7 = arith.addf %3, %6 : vector<16x128xf32>
    %c0_6 = arith.constant 0 : index
    %c0_7 = arith.constant 0 : index
    %8 = vector.load %arg7[%c0_6, %c0_7] : memref<16x128xf32, #tpu.memory_space<vmem>>, vector<16x128xf32>
    tpu.vector_store %arg7[%c0_6, %c0_7], %7 {strides = array<i32>} : memref<16x128xf32, #tpu.memory_space<vmem>>, vector<16x128xf32>,
    %c0_i32_8 = arith.constant 0 : i32
    %9 = arith.cmpi eq, %arg2, %c0_i32_8 : i32
    %10 = arith.extui %9 : i1 to i32
    %c0_i32_9 = arith.constant 0 : i32
    %11 = arith.cmpi ne, %10, %c0_i32_9 : i32
    scf.if %11 {
      %c0_10 = arith.constant 0 : index
      %c0_11 = arith.constant 0 : index
      %12 = vector.load %arg7[%c0_10, %c0_11] : memref<16x128xf32, #tpu.memory_space<vmem>>, vector<16x128xf32>
      %c0_12 = arith.constant 0 : index
      %c0_13 = arith.constant 0 : index
      %13 = vector.load %arg5[%c0_12, %c0_13] : memref<1x128xf32, #tpu.memory_space<vmem>>, vector<1x128xf32>
      %14 = vector.broadcast %13 : vector<1x128xf32> to vector<16x128xf32>
      %15 = arith.addf %12, %14 : vector<16x128xf32>
      %c0_14 = arith.constant 0 : index
      %c0_15 = arith.constant 0 : index
      %16 = vector.load %arg6[%c0_14, %c0_15] : memref<16x128xf32, #tpu.memory_space<vmem>>, vector<16x128xf32>
      tpu.vector_store %arg6[%c0_14, %c0_15], %15 {strides = array<i32>} : memref<16x128xf32, #tpu.memory_space<vmem>>, vector<16x128xf32>,
    } else {
    }
    return
  }
  func.func @transform_0(%arg0: i32, %arg1: i32, %arg2: i32) -> (i32, i32) {
    %c0_i32 = arith.constant 0 : i32
    return %arg0, %arg2 : i32, i32
  }
  func.func @transform_1(%arg0: i32, %arg1: i32, %arg2: i32) -> (i32, i32) {
    %c0_i32 = arith.constant 0 : i32
    return %arg2, %arg1 : i32, i32
  }
  func.func @transform_2(%arg0: i32, %arg1: i32, %arg2: i32) -> (i32, i32) {
    %c0_i32 = arith.constant 0 : i32
    %c0_i32_0 = arith.constant 0 : i32
    return %c0_i32, %arg1 : i32, i32
  }
  func.func @transform_3(%arg0: i32, %arg1: i32, %arg2: i32) -> (i32, i32) {
    %c0_i32 = arith.constant 0 : i32
    return %arg0, %arg1 : i32, i32
  }
}

</mosaic_0001>

<llo_original>
// kernel: transformer_forward.13
$region0: #{transformer_forward.13}
  #allocation0 [shape = 'u32[]', space=smem, size = 0x4, offset = 0x4, fixed_abs, tag = 'smem constant byte address 0x4 - core index']
  #allocation1 [shape = 'u32[72,128]{1,0:T(1,128)}', space=vmem, size = 0x9000, scoped, tag = 'internal scratch']
  #allocation2 [shape = 'f32[16,128]{1,0:T(8,128)}', space=vmem, size = 0x2000, scoped, tag = 'scratch operand']
  %s0 = inlined_call_operand.vmem [shape: bf16[32,128], index: 0, kind: input, shape index: {}]
  %s1 = inlined_call_operand.vmem [shape: bf16[128,128], index: 1, kind: input, shape index: {}]
  %s2 = inlined_call_operand.vmem [shape: f32[1,128], index: 2, kind: input, shape index: {}]
  %s3 = inlined_call_operand.vmem [shape: bf16[32,128], index: 3, kind: input, shape index: {}]
  %s4 = inlined_call_operand.vmem [shape: f32[1,128], index: 4, kind: input, shape index: {}]
  %s5 = inlined_call_operand.vmem [shape: f32[1,128], index: 5, kind: input, shape index: {}]
  %s6 = inlined_call_operand.vmem [shape: bf16[32,128], index: 6, kind: output, shape index: {}]
  %s7 = sld [smem:[#allocation0]]
  $region65: #{transformer_forward.13} parent=0
    _
  %s9 = ssub.s32 1, %s7
  %s10 = scalar_select 0, %s9, %s7
  loop: start=0, step=1, limit=4
  $region2: #{transformer_forward.13} parent=0 // loop_pre_header
    _
  $region3: #{transformer_forward.13} parent=0 // loop_header
    %s12 = sphi 0, %s16
    %p13 = scmp.ge.s32.totalorder %s12, 4
    %s19 = sphi 0, %s31
    %s20 = sphi 0, %s27
    %s21 = sphi 0, %s19
    %s22 = sphi 0, %s20
    %s23 = sphi 0, %s21
    %s24 = sphi 0, %s22
    %s36 = sphi 0, %s38
    %s39 = sphi 0, %s36
    %s40 = sphi 0, %s39
    %s56 = sphi 0, %s40
    %s62 = sphi 0, %s64
    %s65 = sphi 0, %s62
    %s66 = sphi 0, %s65
    %s82 = sphi 0, %s66
    %s86 = sphi 0, %s86
    %s88 = sphi 0, %s86
    %s89 = sphi 0, %s88
    %s103 = sphi 0, %s89
    %s109 = sphi 0, %s111
    %s112 = sphi 0, %s109
    %s113 = sphi 0, %s112
    %s129 = sphi 0, %s113
    %s133 = sphi 0, %s133
    %s135 = sphi 0, %s133
    %s136 = sphi 0, %s135
    %s150 = sphi 0, %s136
    %s154 = sphi 0, %s154
    %s156 = sphi 0, %s154
    %s157 = sphi 0, %s156
    %s171 = sphi 0, %s157
    %s177 = sphi 0, %s179
    %s180 = sphi 0, %s177
    %s181 = sphi 0, %s180
    %s197 = sphi 0, %s181
  $region4: #{transformer_forward.13} parent=0 // loop_header_branch
    %15 = sbr.rel (%p13) target = $region8
  $region5: #{transformer_forward.13} parent=0 // loop_body
    %s17 = ssub.s32 %s12, 1
    %s18 = ssub.s32 %s12, 2
    %s25 = sadd.s32 1, %s20
    %p26 = scmp.ge.s32.totalorder %s25, 1
    %s27 = scalar_select %p26, 0, %s25
    %s28 = sadd.s32 1, %s19
    %s29 = scalar_select %p26, %s28, %s19
    %p30 = scmp.ge.s32.totalorder %s29, 2
    %s31 = scalar_select %p30, 0, %s29
    %s32 = ssub.s32 %s19, %s31
    %s33 = ssub.s32 %s20, %s27
    %s34 = sor.u32 %s32, %s33
    %p35 = scmp.eq.s32.totalorder %s34, 0
    %s37 = sadd.s32 %s36, 1
    %s38 = scalar_select %p35, %s36, %s37
    %p41 = pneg %p35
    %p42 = scmp.eq.s32.totalorder %s12, 1
    %p43 = por %p41, %p42
    %p44 = scmp.ne.s32.totalorder %s36, %s39
    %p45 = scmp.eq.s32.totalorder %s12, 0
    %p46 = por %p44, %p45
    %p47 = scmp.ne.s32.totalorder %s36, %s39
    %p48 = scmp.eq.s32.totalorder %s17, 1
    %p49 = por %p47, %p48
    %p50 = scmp.ne.s32.totalorder %s39, %s40
    %p51 = scmp.eq.s32.totalorder %s17, 0
    %p52 = por %p50, %p51
    %p53 = scmp.ne.s32.totalorder %s39, %s40
    %p54 = scmp.eq.s32.totalorder %s18, 1
    %p55 = por %p53, %p54
    %p57 = scmp.ne.s32.totalorder %s40, %s56
    %p58 = scmp.eq.s32.totalorder %s18, 0
    %p59 = por %p57, %p58
    %s60 = ssub.s32 %s20, %s27
    %p61 = scmp.eq.s32.totalorder %s60, 0
    %s63 = sadd.s32 %s62, 1
    %s64 = scalar_select %p61, %s62, %s63
    %p67 = pneg %p61
    %p68 = scmp.eq.s32.totalorder %s12, 1
    %p69 = por %p67, %p68
    %p70 = scmp.ne.s32.totalorder %s62, %s65
    %p71 = scmp.eq.s32.totalorder %s12, 0
    %p72 = por %p70, %p71
    %p73 = scmp.ne.s32.totalorder %s62, %s65
    %p74 = scmp.eq.s32.totalorder %s17, 1
    %p75 = por %p73, %p74
    %p76 = scmp.ne.s32.totalorder %s65, %s66
    %p77 = scmp.eq.s32.totalorder %s17, 0
    %p78 = por %p76, %p77
    %p79 = scmp.ne.s32.totalorder %s65, %s66
    %p80 = scmp.eq.s32.totalorder %s18, 1
    %p81 = por %p79, %p80
    %p83 = scmp.ne.s32.totalorder %s66, %s82
    %p84 = scmp.eq.s32.totalorder %s18, 0
    %p85 = por %p83, %p84
    %s87 = sadd.s32 %s86, 1
    %p90 = scmp.eq.s32.totalorder %s12, 1
    %p91 = scmp.ne.s32.totalorder %s86, %s88
    %p92 = scmp.eq.s32.totalorder %s12, 0
    %p93 = por %p91, %p92
    %p94 = scmp.ne.s32.totalorder %s86, %s88
    %p95 = scmp.eq.s32.totalorder %s17, 1
    %p96 = por %p94, %p95
    %p97 = scmp.ne.s32.totalorder %s88, %s89
    %p98 = scmp.eq.s32.totalorder %s17, 0
    %p99 = por %p97, %p98
    %p100 = scmp.ne.s32.totalorder %s88, %s89
    %p101 = scmp.eq.s32.totalorder %s18, 1
    %p102 = por %p100, %p101
    %p104 = scmp.ne.s32.totalorder %s89, %s103
    %p105 = scmp.eq.s32.totalorder %s18, 0
    %p106 = por %p104, %p105
    %s107 = ssub.s32 %s19, %s31
    %p108 = scmp.eq.s32.totalorder %s107, 0
    %s110 = sadd.s32 %s109, 1
    %s111 = scalar_select %p108, %s109, %s110
    %p114 = pneg %p108
    %p115 = scmp.eq.s32.totalorder %s12, 1
    %p116 = por %p114, %p115
    %p117 = scmp.ne.s32.totalorder %s109, %s112
    %p118 = scmp.eq.s32.totalorder %s12, 0
    %p119 = por %p117, %p118
    %p120 = scmp.ne.s32.totalorder %s109, %s112
    %p121 = scmp.eq.s32.totalorder %s17, 1
    %p122 = por %p120, %p121
    %p123 = scmp.ne.s32.totalorder %s112, %s113
    %p124 = scmp.eq.s32.totalorder %s17, 0
    %p125 = por %p123, %p124
    %p126 = scmp.ne.s32.totalorder %s112, %s113
    %p127 = scmp.eq.s32.totalorder %s18, 1
    %p128 = por %p126, %p127
    %p130 = scmp.ne.s32.totalorder %s113, %s129
    %p131 = scmp.eq.s32.totalorder %s18, 0
    %p132 = por %p130, %p131
    %s134 = sadd.s32 %s133, 1
    %p137 = scmp.eq.s32.totalorder %s12, 1
    %p138 = scmp.ne.s32.totalorder %s133, %s135
    %p139 = scmp.eq.s32.totalorder %s12, 0
    %p140 = por %p138, %p139
    %p141 = scmp.ne.s32.totalorder %s133, %s135
    %p142 = scmp.eq.s32.totalorder %s17, 1
    %p143 = por %p141, %p142
    %p144 = scmp.ne.s32.totalorder %s135, %s136
    %p145 = scmp.eq.s32.totalorder %s17, 0
    %p146 = por %p144, %p145
    %p147 = scmp.ne.s32.totalorder %s135, %s136
    %p148 = scmp.eq.s32.totalorder %s18, 1
    %p149 = por %p147, %p148
    %p151 = scmp.ne.s32.totalorder %s136, %s150
    %p152 = scmp.eq.s32.totalorder %s18, 0
    %p153 = por %p151, %p152
    %s155 = sadd.s32 %s154, 1
    %p158 = scmp.eq.s32.totalorder %s12, 1
    %p159 = scmp.ne.s32.totalorder %s154, %s156
    %p160 = scmp.eq.s32.totalorder %s12, 0
    %p161 = por %p159, %p160
    %p162 = scmp.ne.s32.totalorder %s154, %s156
    %p163 = scmp.eq.s32.totalorder %s17, 1
    %p164 = por %p162, %p163
    %p165 = scmp.ne.s32.totalorder %s156, %s157
    %p166 = scmp.eq.s32.totalorder %s17, 0
    %p167 = por %p165, %p166
    %p168 = scmp.ne.s32.totalorder %s156, %s157
    %p169 = scmp.eq.s32.totalorder %s18, 1
    %p170 = por %p168, %p169
    %p172 = scmp.ne.s32.totalorder %s157, %s171
    %p173 = scmp.eq.s32.totalorder %s18, 0
    %p174 = por %p172, %p173
    %s175 = ssub.s32 %s19, %s31
    %p176 = scmp.eq.s32.totalorder %s175, 0
    %s178 = sadd.s32 %s177, 1
    %s179 = scalar_select %p176, %s177, %s178
    %p182 = pneg %p176
    %p183 = scmp.eq.s32.totalorder %s12, 1
    %p184 = por %p182, %p183
    %p185 = scmp.ne.s32.totalorder %s177, %s180
    %p186 = scmp.eq.s32.totalorder %s12, 0
    %p187 = por %p185, %p186
    %p188 = scmp.ne.s32.totalorder %s177, %s180
    %p189 = scmp.eq.s32.totalorder %s17, 1
    %p190 = por %p188, %p189
    %p191 = scmp.ne.s32.totalorder %s180, %s181
    %p192 = scmp.eq.s32.totalorder %s17, 0
    %p193 = por %p191, %p192
    %p194 = scmp.ne.s32.totalorder %s180, %s181
    %p195 = scmp.eq.s32.totalorder %s18, 1
    %p196 = por %p194, %p195
    %p198 = scmp.ne.s32.totalorder %s181, %s197
    %p199 = scmp.eq.s32.totalorder %s18, 0
    %p200 = por %p198, %p199
    %p201 = scmp.le.s32.totalorder 1, %s12
    %p202 = scmp.lt.s32.totalorder %s12, 3
    %p203 = pnand %p201, %p202
    %p204 = pneg %p203
    // Predicated region
    $region9: #{transformer_forward.13} parent=5 // pred_check
      _
    $region10: #{transformer_forward.13} parent=5 // pred_check_branch
      %206 = sbr.rel (%p203) target = $region12
    $region11: #{transformer_forward.13} parent=5 // pred_region
      %s207 = ssub.s32 %s12, 1
      // Predicated region
      $region13: #{transformer_forward.13} parent=11 // pred_check
        %p208 = pneg %p78
      $region14: #{transformer_forward.13} parent=11 // pred_check_branch
        %210 = sbr.rel (%p208) target = $region16
      $region15: #{transformer_forward.13} parent=11 // pred_region
        %s211 = smul.u32 16, %s22
        %p212 = scmp.lt.s32.totalorder %s211, 15
        %s213 = scalar_select %p212, %s211, 15
        %s214 = smul.addr %s213, 4
        %s215 = scalar_lea.vmem %s1, %s214
        %s216 = smul.u32 16, %s22
      $region16: #{transformer_forward.13} parent=11 // pred_fallthru
        _
      // Predicated region
      $region17: #{transformer_forward.13} parent=11 // pred_check
        %p217 = pneg %p99
      $region18: #{transformer_forward.13} parent=11 // pred_check_branch
        %219 = sbr.rel (%p217) target = $region20
      $region19: #{transformer_forward.13} parent=11 // pred_region
        _
      $region20: #{transformer_forward.13} parent=11 // pred_fallthru
        _
      // Predicated region
      $region21: #{transformer_forward.13} parent=11 // pred_check
        %p220 = pneg %p146
      $region22: #{transformer_forward.13} parent=11 // pred_check_branch
        %222 = sbr.rel (%p220) target = $region24
      $region23: #{transformer_forward.13} parent=11 // pred_region
        _
      $region24: #{transformer_forward.13} parent=11 // pred_fallthru
        _
      // Predicated region
      $region25: #{transformer_forward.13} parent=11 // pred_check
        %p223 = pneg %p167
      $region26: #{transformer_forward.13} parent=11 // pred_check_branch
        %225 = sbr.rel (%p223) target = $region28
      $region27: #{transformer_forward.13} parent=11 // pred_region
        _
      $region28: #{transformer_forward.13} parent=11 // pred_fallthru
        _
    $region12: #{transformer_forward.13} parent=5 // pred_fallthru
      _
    %p226 = scmp.lt.s32.totalorder %s12, 2
    // Predicated region
    $region29: #{transformer_forward.13} parent=5 // pred_check
      %p227 = pneg %p226
    $region30: #{transformer_forward.13} parent=5 // pred_check_branch
      %229 = sbr.rel (%p227) target = $region32
    $region31: #{transformer_forward.13} parent=5 // pred_region
      // Predicated region
      $region33: #{transformer_forward.13} parent=31 // pred_check
        %p230 = pneg %p46
      $region34: #{transformer_forward.13} parent=31 // pred_check_branch
        %232 = sbr.rel (%p230) target = $region36
      $region35: #{transformer_forward.13} parent=31 // pred_region
        %s233 = smul.u32 2, %s19
        %p234 = scmp.lt.s32.totalorder %s233, 3
        %s235 = scalar_select %p234, %s233, 3
        %p236 = scmp.lt.s32.totalorder %s20, 0
        %s237 = scalar_select %p236, %s20, 0
        %s238 = sadd.s32 %s237, %s235
        %s239 = smul.addr %s238, 4
        %s240 = scalar_lea.vmem %s0, %s239
        %s241 = smul.u32 2, %s19
      $region36: #{transformer_forward.13} parent=31 // pred_fallthru
        _
      // Predicated region
      $region37: #{transformer_forward.13} parent=31 // pred_check
        %p242 = pneg %p119
      $region38: #{transformer_forward.13} parent=31 // pred_check_branch
        %244 = sbr.rel (%p242) target = $region40
      $region39: #{transformer_forward.13} parent=31 // pred_region
        %s245 = smul.u32 2, %s19
        %p246 = scmp.lt.s32.totalorder %s245, 3
        %s247 = scalar_select %p246, %s245, 3
        %s248 = smul.addr %s247, 4
        %s249 = scalar_lea.vmem %s3, %s248
        %s250 = smul.u32 2, %s19
      $region40: #{transformer_forward.13} parent=31 // pred_fallthru
        _
    $region32: #{transformer_forward.13} parent=5 // pred_fallthru
      _
    %p251 = scmp.le.s32.totalorder 1, %s12
    %p252 = scmp.lt.s32.totalorder %s12, 3
    %p253 = pnand %p251, %p252
    %p254 = pneg %p253
    // Predicated region
    $region41: #{transformer_forward.13} parent=5 // pred_check
      _
    $region42: #{transformer_forward.13} parent=5 // pred_check_branch
      %256 = sbr.rel (%p253) target = $region44
    $region43: #{transformer_forward.13} parent=5 // pred_region
      %s257 = ssub.s32 %s12, 1
      %s258 = smul.u32 2, %s21
      %p259 = scmp.lt.s32.totalorder %s258, 3
      %s260 = scalar_select %p259, %s258, 3
      %p261 = scmp.lt.s32.totalorder %s22, 0
      %s262 = scalar_select %p261, %s22, 0
      %s263 = sadd.s32 %s262, %s260
      %s264 = smul.addr %s263, 4
      %s265 = scalar_lea.vmem %s0, %s264
      %p266 = pneg %p52
      %p267 = pneg %p49
      %s268 = smul.u32 16, %s22
      %p269 = scmp.lt.s32.totalorder %s268, 15
      %s270 = scalar_select %p269, %s268, 15
      %s271 = smul.addr %s270, 4
      %s272 = scalar_lea.vmem %s1, %s271
      %p273 = pneg %p78
      %p274 = pneg %p75
      %p275 = pneg %p99
      %p276 = pneg %p96
      %s277 = smul.u32 2, %s21
      %p278 = scmp.lt.s32.totalorder %s277, 3
      %s279 = scalar_select %p278, %s277, 3
      %s280 = smul.addr %s279, 4
      %s281 = scalar_lea.vmem %s3, %s280
      %p282 = pneg %p125
      %p283 = pneg %p122
      %p284 = pneg %p146
      %p285 = pneg %p143
      %p286 = pneg %p167
      %p287 = pneg %p164
      %p288 = pneg %p193
      %p289 = pneg %p190
      %s290 = smul.u32 2, %s21
      %p291 = scmp.lt.s32.totalorder %s290, 3
      %s292 = scalar_select %p291, %s290, 3
      %s293 = smul.addr %s292, 4
      %s294 = scalar_lea.vmem %s6, %s293
      %s295 = smul.u32 2, %s21
      %p296 = scmp.lt.s32.totalorder %s295, 3
      %s297 = scalar_select %p296, %s295, 3
      %p298 = scmp.lt.s32.totalorder %s22, 0
      %s299 = scalar_select %p298, %s22, 0
      %s300 = sadd.s32 %s299, %s297
      %s301 = smul.addr %s300, 4
      %s302 = scalar_lea.vmem %s0, %s301
      %s303 = smul.u32 2, %s21
      %s304 = smul.u32 16, %s22
      %p305 = scmp.lt.s32.totalorder %s304, 15
      %s306 = scalar_select %p305, %s304, 15
      %s307 = smul.addr %s306, 4
      %s308 = scalar_lea.vmem %s1, %s307
      %s309 = smul.u32 16, %s22
      %s310 = smul.u32 2, %s21
      %p311 = scmp.lt.s32.totalorder %s310, 3
      %s312 = scalar_select %p311, %s310, 3
      %s313 = smul.addr %s312, 4
      %s314 = scalar_lea.vmem %s3, %s313
      %s315 = smul.u32 2, %s21
      %s316 = smul.u32 2, %s21
      %p317 = scmp.lt.s32.totalorder %s316, 3
      %s318 = scalar_select %p317, %s316, 3
      %s319 = smul.addr %s318, 4
      %s320 = scalar_lea.vmem %s6, %s319
      %s321 = smul.u32 2, %s21
      %p322 = scmp.eq.s32.totalorder %s22, 0
      // Predicated region
      $region45: #{transformer_forward.13} parent=43 // pred_check
        %p323 = pneg %p322
      $region46: #{transformer_forward.13} parent=43 // pred_check_branch
        %325 = sbr.rel (%p323) target = $region48
      $region47: #{transformer_forward.13} parent=43 // pred_region
        %326 = vst [vmem:[#allocation2] sm:$0xff] 0.0
        %327 = vst [vmem:[#allocation2 + $0x8] sm:$0xff] 0.0
      $region48: #{transformer_forward.13} parent=43 // pred_fallthru
        _
      %v328 = vld [vmem:[#allocation2] sm:$0xff]
      %v329 = vld [vmem:[#allocation2 + $0x8] sm:$0xff]
      %v330 = vld [vmem:[%s302] sm:$0xf]
      %v331 = vld [vmem:[%s302 + $0x4] sm:$0xf]
      %v332 = vld [vmem:[%s308] sm:$0xf]
      %v333 = vld [vmem:[%s308 + $0x4] sm:$0xf]
      %v334 = vld [vmem:[%s308 + $0x8] sm:$0xf]
      %v335 = vld [vmem:[%s308 + $0xc] sm:$0xf]
      %v336 = vld [vmem:[%s308 + $0x10] sm:$0xf]
      %v337 = vld [vmem:[%s308 + $0x14] sm:$0xf]
      %v338 = vld [vmem:[%s308 + $0x18] sm:$0xf]
      %v339 = vld [vmem:[%s308 + $0x1c] sm:$0xf]
      %v340 = vld [vmem:[%s308 + $0x20] sm:$0xf]
      %v341 = vld [vmem:[%s308 + $0x24] sm:$0xf]
      %v342 = vld [vmem:[%s308 + $0x28] sm:$0xf]
      %v343 = vld [vmem:[%s308 + $0x2c] sm:$0xf]
      %v344 = vld [vmem:[%s308 + $0x30] sm:$0xf]
      %v345 = vld [vmem:[%s308 + $0x34] sm:$0xf]
      %v346 = vld [vmem:[%s308 + $0x38] sm:$0xf]
      %v347 = vld [vmem:[%s308 + $0x3c] sm:$0xf]
      %v350 = vunpack.c.l.b16 %v330
      %v351 = vunpack.c.l.b16 %v331
      %v352 = vpack.c.b16 %v351, %v350
      %v370 = vunpack.c.l.b16 %v332
      %v371 = vunpack.c.l.b16 %v333
      %v372 = vunpack.c.l.b16 %v334
      %v373 = vunpack.c.l.b16 %v335
      %v374 = vunpack.c.l.b16 %v336
      %v375 = vunpack.c.l.b16 %v337
      %v376 = vunpack.c.l.b16 %v338
      %v377 = vunpack.c.l.b16 %v339
      %v378 = vunpack.c.l.b16 %v340
      %v379 = vunpack.c.l.b16 %v341
      %v380 = vunpack.c.l.b16 %v342
      %v381 = vunpack.c.l.b16 %v343
      %v382 = vunpack.c.l.b16 %v344
      %v383 = vunpack.c.l.b16 %v345
      %v384 = vunpack.c.l.b16 %v346
      %v385 = vunpack.c.l.b16 %v347
      %v386 = vpack.c.b16 %v371, %v370
      %v387 = vpack.c.b16 %v373, %v372
      %v388 = vpack.c.b16 %v375, %v374
      %v389 = vpack.c.b16 %v377, %v376
      %v390 = vpack.c.b16 %v379, %v378
      %v391 = vpack.c.b16 %v381, %v380
      %v392 = vpack.c.b16 %v383, %v382
      %v393 = vpack.c.b16 %v385, %v384
      %402 = vmatpush.bf16.msra.mxu0 %v393
      %403 = vmatpush.bf16.msra.mxu0 %v392
      %404 = vmatpush.bf16.msra.mxu0 %v391
      %405 = vmatpush.bf16.msra.mxu0 %v390
      %406 = vmatpush.bf16.msra.mxu0 %v389
      %407 = vmatpush.bf16.msra.mxu0 %v388
      %408 = vmatpush.bf16.msra.mxu0 %v387
      %409 = vmatpush.bf16.msra.mxu0 %v386
      %410 = vmatmul.bf16.gmra.mxu0 %v352
      %v411 = vpop.f32.mrf.mxu0
      %v412 = vadd.f32 0.0, %v411
      %v413 = vpop.f32.mrf.mxu0
      %v414 = vadd.f32 0.0, %v413
      %415 = vdwg.mxu0
      %v416 = vadd.f32 %v328, %v412
      %v417 = vadd.f32 %v329, %v414
      %418 = vst [vmem:[#allocation2] sm:$0xff] %v416
      %419 = vst [vmem:[#allocation2 + $0x8] sm:$0xff] %v417
      // Predicated region
      $region49: #{transformer_forward.13} parent=43 // pred_check
        %p420 = pneg %p322
      $region50: #{transformer_forward.13} parent=43 // pred_check_branch
        %422 = sbr.rel (%p420) target = $region52
      $region51: #{transformer_forward.13} parent=43 // pred_region
        %v423 = vld [vmem:[#allocation2] sm:$0xff]
        %v424 = vld [vmem:[#allocation2 + $0x8] sm:$0xff]
        %v425 = vld [vmem:[%s2] sm:$0x1]
        %v427 = vperm.slane %v425, 0
        %v429 = vadd.f32 %v423, %v427
        %v430 = vadd.f32 %v424, %v427
        %v431 = vld [vmem:[%s314] sm:$0xf]
        %v432 = vld [vmem:[%s314 + $0x4] sm:$0xf]
        %v433 = vunpack.c.l.bf16 %v431
        %v434 = vunpack.c.l.bf16 %v432
        %v435 = vadd.f32 %v429, %v433
        %v436 = vadd.f32 %v430, %v434
        %437 = vadd.xlane.f32.xlu0 %v435
        %v438 = vpop.xlane.xlu0 %437
        %439 = vadd.xlane.f32.xlu0 %v436
        %v440 = vpop.xlane.xlu0 %439
        %v441 = vrcp.pop 128.0
        %v442 = vmul.f32 128.0, %v441
        %v443 = vsub.f32 1.0, %v442
        %v444 = vmul.f32 %v441, %v443
        %v445 = vadd.f32 %v441, %v444
        %vm446 = vweird.f32 %v441
        %v447 = vsel %vm446, %v441, %v445
        %v448 = vmul.f32 %v438, %v447
        %v449 = vmul.f32 %v440, %v447
        %v450 = vsub.f32 %v435, %v448
        %v451 = vsub.f32 %v436, %v449
        %v452 = vmul.f32 %v450, %v450
        %v453 = vmul.f32 %v451, %v451
        %454 = vadd.xlane.f32.xlu0 %v452
        %v455 = vpop.xlane.xlu0 %454
        %456 = vadd.xlane.f32.xlu0 %v453
        %v457 = vpop.xlane.xlu0 %456
        %v458 = vmul.f32 %v455, %v447
        %v459 = vmul.f32 %v457, %v447
        %v460 = vadd.f32 %v458, 1e-05
        %v461 = vadd.f32 %v459, 1e-05
        %v462 = vrsqrt.pop %v460
        %v463 = vmul.f32 %v462, %v460
        %v464 = vmul.f32 %v463, %v462
        %v465 = vmul.f32 0.5, %v464
        %v466 = vsub.f32 1.5, %v465
        %v467 = vmul.f32 %v462, %v466
        %vm468 = vweird.f32 %v460
        %vm469 = vweird.f32 %v462
        %vm470 = vmor %vm468, %vm469
        %v471 = vsel %vm470, %v462, %v467
        %v472 = vrsqrt.pop %v461
        %v473 = vmul.f32 %v472, %v461
        %v474 = vmul.f32 %v473, %v472
        %v475 = vmul.f32 0.5, %v474
        %v476 = vsub.f32 1.5, %v475
        %v477 = vmul.f32 %v472, %v476
        %vm478 = vweird.f32 %v461
        %vm479 = vweird.f32 %v472
        %vm480 = vmor %vm478, %vm479
        %v481 = vsel %vm480, %v472, %v477
        %v482 = vmul.f32 %v450, %v471
        %v483 = vmul.f32 %v451, %v481
        %v484 = vld [vmem:[%s4] sm:$0x1]
        %v486 = vperm.slane %v484, 0
        %v488 = vmul.f32 %v482, %v486
        %v489 = vmul.f32 %v483, %v486
        %v490 = vld [vmem:[%s5] sm:$0x1]
        %v492 = vperm.slane %v490, 0
        %v494 = vadd.f32 %v488, %v492
        %v495 = vadd.f32 %v489, %v492
        %v496 = vpack.c.bf16 %v494, %v494
        %v497 = vpack.c.bf16 %v495, %v495
        %498 = vst [vmem:[%s320] sm:$0xf] %v496
        %499 = vst [vmem:[%s320 + $0x4] sm:$0xf] %v497
      $region52: #{transformer_forward.13} parent=43 // pred_fallthru
        _
      %s500 = smul.u32 2, %s21
      %p501 = scmp.lt.s32.totalorder %s500, 3
      %s502 = scalar_select %p501, %s500, 3
      %s503 = smul.addr %s502, 4
      %s504 = scalar_lea.vmem %s6, %s503
      // Predicated region
      $region53: #{transformer_forward.13} parent=43 // pred_check
        %p505 = pneg %p190
      $region54: #{transformer_forward.13} parent=43 // pred_check_branch
        %507 = sbr.rel (%p505) target = $region56
      $region55: #{transformer_forward.13} parent=43 // pred_region
        %s508 = smul.u32 2, %s21
      $region56: #{transformer_forward.13} parent=43 // pred_fallthru
        _
    $region44: #{transformer_forward.13} parent=5 // pred_fallthru
      _
    %p509 = scmp.le.s32.totalorder 2, %s12
    // Predicated region
    $region57: #{transformer_forward.13} parent=5 // pred_check
      %p510 = pneg %p509
    $region58: #{transformer_forward.13} parent=5 // pred_check_branch
      %512 = sbr.rel (%p510) target = $region60
    $region59: #{transformer_forward.13} parent=5 // pred_region
      %s513 = ssub.s32 %s12, 2
      // Predicated region
      $region61: #{transformer_forward.13} parent=59 // pred_check
        %p514 = pneg %p196
      $region62: #{transformer_forward.13} parent=59 // pred_check_branch
        %516 = sbr.rel (%p514) target = $region64
      $region63: #{transformer_forward.13} parent=59 // pred_region
        %s517 = smul.u32 2, %s23
        %p518 = scmp.lt.s32.totalorder %s517, 3
        %s519 = scalar_select %p518, %s517, 3
        %s520 = smul.addr %s519, 4
        %s521 = scalar_lea.vmem %s6, %s520
      $region64: #{transformer_forward.13} parent=59 // pred_fallthru
        _
    $region60: #{transformer_forward.13} parent=5 // pred_fallthru
      _
  $region6: #{transformer_forward.13} parent=0 // loop_footer
    %s16 = sadd.s32 1, %s12
  $region7: #{transformer_forward.13} parent=0 // loop_footer_branch
    %11 = sbr.rel target = $region3
  $region8: #{transformer_forward.13} parent=0 // loop_exit
    _

// kernel: transformer_forward.11
$region0: #{transformer_forward.11}
  #allocation0 [shape = 'u32[]', space=smem, size = 0x4, offset = 0x4, fixed_abs, tag = 'smem constant byte address 0x4 - core index']
  #allocation1 [shape = 'u32[72,128]{1,0:T(1,128)}', space=vmem, size = 0x9000, scoped, tag = 'internal scratch']
  #allocation2 [shape = 'f32[16,384]{1,0:T(8,128)}', space=vmem, size = 0x6000, scoped, tag = 'scratch operand']
  %s0 = inlined_call_operand.vmem [shape: bf16[32,128], index: 0, kind: input, shape index: {}]
  %s1 = inlined_call_operand.vmem [shape: bf16[128,384], index: 1, kind: input, shape index: {}]
  %s2 = inlined_call_operand.vmem [shape: f32[1,384], index: 2, kind: input, shape index: {}]
  %s3 = inlined_call_operand.vmem [shape: bf16[32,384], index: 3, kind: output, shape index: {}]
  %s4 = sld [smem:[#allocation0]]
  $region53: #{transformer_forward.11} parent=0
    _
  %s6 = ssub.s32 1, %s4
  %s7 = scalar_select 0, %s6, %s4
  loop: start=0, step=1, limit=4
  $region2: #{transformer_forward.11} parent=0 // loop_pre_header
    _
  $region3: #{transformer_forward.11} parent=0 // loop_header
    %s9 = sphi 0, %s13
    %p10 = scmp.ge.s32.totalorder %s9, 4
    %s16 = sphi 0, %s35
    %s17 = sphi 0, %s31
    %s18 = sphi 0, %s27
    %s19 = sphi 0, %s16
    %s20 = sphi 0, %s17
    %s21 = sphi 0, %s18
    %s22 = sphi 0, %s19
    %s23 = sphi 0, %s20
    %s24 = sphi 0, %s21
    %s40 = sphi 0, %s42
    %s43 = sphi 0, %s40
    %s44 = sphi 0, %s43
    %s60 = sphi 0, %s44
    %s68 = sphi 0, %s70
    %s71 = sphi 0, %s68
    %s72 = sphi 0, %s71
    %s88 = sphi 0, %s72
    %s94 = sphi 0, %s96
    %s97 = sphi 0, %s94
    %s98 = sphi 0, %s97
    %s114 = sphi 0, %s98
    %s122 = sphi 0, %s124
    %s125 = sphi 0, %s122
    %s126 = sphi 0, %s125
    %s142 = sphi 0, %s126
  $region4: #{transformer_forward.11} parent=0 // loop_header_branch
    %12 = sbr.rel (%p10) target = $region8
  $region5: #{transformer_forward.11} parent=0 // loop_body
    %s14 = ssub.s32 %s9, 1
    %s15 = ssub.s32 %s9, 2
    %s25 = sadd.s32 1, %s18
    %p26 = scmp.ge.s32.totalorder %s25, 1
    %s27 = scalar_select %p26, 0, %s25
    %s28 = sadd.s32 1, %s17
    %s29 = scalar_select %p26, %s28, %s17
    %p30 = scmp.ge.s32.totalorder %s29, 1
    %s31 = scalar_select %p30, 0, %s29
    %s32 = sadd.s32 1, %s16
    %s33 = scalar_select %p30, %s32, %s16
    %p34 = scmp.ge.s32.totalorder %s33, 2
    %s35 = scalar_select %p34, 0, %s33
    %s36 = ssub.s32 %s16, %s35
    %s37 = ssub.s32 %s18, %s27
    %s38 = sor.u32 %s36, %s37
    %p39 = scmp.eq.s32.totalorder %s38, 0
    %s41 = sadd.s32 %s40, 1
    %s42 = scalar_select %p39, %s40, %s41
    %p45 = pneg %p39
    %p46 = scmp.eq.s32.totalorder %s9, 1
    %p47 = por %p45, %p46
    %p48 = scmp.ne.s32.totalorder %s40, %s43
    %p49 = scmp.eq.s32.totalorder %s9, 0
    %p50 = por %p48, %p49
    %p51 = scmp.ne.s32.totalorder %s40, %s43
    %p52 = scmp.eq.s32.totalorder %s14, 1
    %p53 = por %p51, %p52
    %p54 = scmp.ne.s32.totalorder %s43, %s44
    %p55 = scmp.eq.s32.totalorder %s14, 0
    %p56 = por %p54, %p55
    %p57 = scmp.ne.s32.totalorder %s43, %s44
    %p58 = scmp.eq.s32.totalorder %s15, 1
    %p59 = por %p57, %p58
    %p61 = scmp.ne.s32.totalorder %s44, %s60
    %p62 = scmp.eq.s32.totalorder %s15, 0
    %p63 = por %p61, %p62
    %s64 = ssub.s32 %s18, %s27
    %s65 = ssub.s32 %s17, %s31
    %s66 = sor.u32 %s64, %s65
    %p67 = scmp.eq.s32.totalorder %s66, 0
    %s69 = sadd.s32 %s68, 1
    %s70 = scalar_select %p67, %s68, %s69
    %p73 = pneg %p67
    %p74 = scmp.eq.s32.totalorder %s9, 1
    %p75 = por %p73, %p74
    %p76 = scmp.ne.s32.totalorder %s68, %s71
    %p77 = scmp.eq.s32.totalorder %s9, 0
    %p78 = por %p76, %p77
    %p79 = scmp.ne.s32.totalorder %s68, %s71
    %p80 = scmp.eq.s32.totalorder %s14, 1
    %p81 = por %p79, %p80
    %p82 = scmp.ne.s32.totalorder %s71, %s72
    %p83 = scmp.eq.s32.totalorder %s14, 0
    %p84 = por %p82, %p83
    %p85 = scmp.ne.s32.totalorder %s71, %s72
    %p86 = scmp.eq.s32.totalorder %s15, 1
    %p87 = por %p85, %p86
    %p89 = scmp.ne.s32.totalorder %s72, %s88
    %p90 = scmp.eq.s32.totalorder %s15, 0
    %p91 = por %p89, %p90
    %s92 = ssub.s32 %s17, %s31
    %p93 = scmp.eq.s32.totalorder %s92, 0
    %s95 = sadd.s32 %s94, 1
    %s96 = scalar_select %p93, %s94, %s95
    %p99 = pneg %p93
    %p100 = scmp.eq.s32.totalorder %s9, 1
    %p101 = por %p99, %p100
    %p102 = scmp.ne.s32.totalorder %s94, %s97
    %p103 = scmp.eq.s32.totalorder %s9, 0
    %p104 = por %p102, %p103
    %p105 = scmp.ne.s32.totalorder %s94, %s97
    %p106 = scmp.eq.s32.totalorder %s14, 1
    %p107 = por %p105, %p106
    %p108 = scmp.ne.s32.totalorder %s97, %s98
    %p109 = scmp.eq.s32.totalorder %s14, 0
    %p110 = por %p108, %p109
    %p111 = scmp.ne.s32.totalorder %s97, %s98
    %p112 = scmp.eq.s32.totalorder %s15, 1
    %p113 = por %p111, %p112
    %p115 = scmp.ne.s32.totalorder %s98, %s114
    %p116 = scmp.eq.s32.totalorder %s15, 0
    %p117 = por %p115, %p116
    %s118 = ssub.s32 %s16, %s35
    %s119 = ssub.s32 %s17, %s31
    %s120 = sor.u32 %s118, %s119
    %p121 = scmp.eq.s32.totalorder %s120, 0
    %s123 = sadd.s32 %s122, 1
    %s124 = scalar_select %p121, %s122, %s123
    %p127 = pneg %p121
    %p128 = scmp.eq.s32.totalorder %s9, 1
    %p129 = por %p127, %p128
    %p130 = scmp.ne.s32.totalorder %s122, %s125
    %p131 = scmp.eq.s32.totalorder %s9, 0
    %p132 = por %p130, %p131
    %p133 = scmp.ne.s32.totalorder %s122, %s125
    %p134 = scmp.eq.s32.totalorder %s14, 1
    %p135 = por %p133, %p134
    %p136 = scmp.ne.s32.totalorder %s125, %s126
    %p137 = scmp.eq.s32.totalorder %s14, 0
    %p138 = por %p136, %p137
    %p139 = scmp.ne.s32.totalorder %s125, %s126
    %p140 = scmp.eq.s32.totalorder %s15, 1
    %p141 = por %p139, %p140
    %p143 = scmp.ne.s32.totalorder %s126, %s142
    %p144 = scmp.eq.s32.totalorder %s15, 0
    %p145 = por %p143, %p144
    %p146 = scmp.le.s32.totalorder 1, %s9
    %p147 = scmp.lt.s32.totalorder %s9, 3
    %p148 = pnand %p146, %p147
    %p149 = pneg %p148
    // Predicated region
    $region9: #{transformer_forward.11} parent=5 // pred_check
      _
    $region10: #{transformer_forward.11} parent=5 // pred_check_branch
      %151 = sbr.rel (%p148) target = $region12
    $region11: #{transformer_forward.11} parent=5 // pred_region
      %s152 = ssub.s32 %s9, 1
      // Predicated region
      $region13: #{transformer_forward.11} parent=11 // pred_check
        %p153 = pneg %p84
      $region14: #{transformer_forward.11} parent=11 // pred_check_branch
        %155 = sbr.rel (%p153) target = $region16
      $region15: #{transformer_forward.11} parent=11 // pred_region
        %s156 = smul.u32 16, %s21
        %s157 = smul.u32 3, %s20
        %p158 = scmp.lt.s32.totalorder %s156, 15
        %s159 = scalar_select %p158, %s156, 15
        %p160 = scmp.lt.s32.totalorder %s157, 2
        %s161 = scalar_select %p160, %s157, 2
        %s162 = smul.addr %s159, 3
        %s163 = sadd.s32 %s161, %s162
        %s164 = smul.addr %s163, 4
        %s165 = scalar_lea.vmem %s1, %s164
        %s166 = smul.u32 16, %s21
        %s167 = smul.u32 3, %s20
      $region16: #{transformer_forward.11} parent=11 // pred_fallthru
        _
      // Predicated region
      $region17: #{transformer_forward.11} parent=11 // pred_check
        %p168 = pneg %p110
      $region18: #{transformer_forward.11} parent=11 // pred_check_branch
        %170 = sbr.rel (%p168) target = $region20
      $region19: #{transformer_forward.11} parent=11 // pred_region
        %s171 = smul.u32 3, %s20
        %p172 = scmp.lt.s32.totalorder %s171, 2
        %s173 = scalar_select %p172, %s171, 2
        %s174 = scalar_lea.vmem %s2, %s173
        %s175 = smul.u32 3, %s20
      $region20: #{transformer_forward.11} parent=11 // pred_fallthru
        _
    $region12: #{transformer_forward.11} parent=5 // pred_fallthru
      _
    %p176 = scmp.lt.s32.totalorder %s9, 2
    // Predicated region
    $region21: #{transformer_forward.11} parent=5 // pred_check
      %p177 = pneg %p176
    $region22: #{transformer_forward.11} parent=5 // pred_check_branch
      %179 = sbr.rel (%p177) target = $region24
    $region23: #{transformer_forward.11} parent=5 // pred_region
      // Predicated region
      $region25: #{transformer_forward.11} parent=23 // pred_check
        %p180 = pneg %p50
      $region26: #{transformer_forward.11} parent=23 // pred_check_branch
        %182 = sbr.rel (%p180) target = $region28
      $region27: #{transformer_forward.11} parent=23 // pred_region
        %s183 = smul.u32 2, %s16
        %p184 = scmp.lt.s32.totalorder %s183, 3
        %s185 = scalar_select %p184, %s183, 3
        %p186 = scmp.lt.s32.totalorder %s18, 0
        %s187 = scalar_select %p186, %s18, 0
        %s188 = sadd.s32 %s187, %s185
        %s189 = smul.addr %s188, 4
        %s190 = scalar_lea.vmem %s0, %s189
        %s191 = smul.u32 2, %s16
      $region28: #{transformer_forward.11} parent=23 // pred_fallthru
        _
    $region24: #{transformer_forward.11} parent=5 // pred_fallthru
      _
    %p192 = scmp.le.s32.totalorder 1, %s9
    %p193 = scmp.lt.s32.totalorder %s9, 3
    %p194 = pnand %p192, %p193
    %p195 = pneg %p194
    // Predicated region
    $region29: #{transformer_forward.11} parent=5 // pred_check
      _
    $region30: #{transformer_forward.11} parent=5 // pred_check_branch
      %197 = sbr.rel (%p194) target = $region32
    $region31: #{transformer_forward.11} parent=5 // pred_region
      %s198 = ssub.s32 %s9, 1
      %s199 = smul.u32 2, %s19
      %p200 = scmp.lt.s32.totalorder %s199, 3
      %s201 = scalar_select %p200, %s199, 3
      %p202 = scmp.lt.s32.totalorder %s21, 0
      %s203 = scalar_select %p202, %s21, 0
      %s204 = sadd.s32 %s203, %s201
      %s205 = smul.addr %s204, 4
      %s206 = scalar_lea.vmem %s0, %s205
      %p207 = pneg %p56
      %p208 = pneg %p53
      %s209 = smul.u32 16, %s21
      %s210 = smul.u32 3, %s20
      %p211 = scmp.lt.s32.totalorder %s209, 15
      %s212 = scalar_select %p211, %s209, 15
      %p213 = scmp.lt.s32.totalorder %s210, 2
      %s214 = scalar_select %p213, %s210, 2
      %s215 = smul.addr %s212, 3
      %s216 = sadd.s32 %s214, %s215
      %s217 = smul.addr %s216, 4
      %s218 = scalar_lea.vmem %s1, %s217
      %p219 = pneg %p84
      %p220 = pneg %p81
      %s221 = smul.u32 3, %s20
      %p222 = scmp.lt.s32.totalorder %s221, 2
      %s223 = scalar_select %p222, %s221, 2
      %s224 = scalar_lea.vmem %s2, %s223
      %p225 = pneg %p110
      %p226 = pneg %p107
      %p227 = pneg %p138
      %p228 = pneg %p135
      %s229 = smul.u32 2, %s19
      %s230 = smul.u32 3, %s20
      %p231 = scmp.lt.s32.totalorder %s229, 3
      %s232 = scalar_select %p231, %s229, 3
      %p233 = scmp.lt.s32.totalorder %s230, 2
      %s234 = scalar_select %p233, %s230, 2
      %s235 = smul.addr %s232, 3
      %s236 = sadd.s32 %s234, %s235
      %s237 = smul.addr %s236, 4
      %s238 = scalar_lea.vmem %s3, %s237
      %s239 = smul.u32 2, %s19
      %p240 = scmp.lt.s32.totalorder %s239, 3
      %s241 = scalar_select %p240, %s239, 3
      %p242 = scmp.lt.s32.totalorder %s21, 0
      %s243 = scalar_select %p242, %s21, 0
      %s244 = sadd.s32 %s243, %s241
      %s245 = smul.addr %s244, 4
      %s246 = scalar_lea.vmem %s0, %s245
      %s247 = smul.u32 2, %s19
      %s248 = smul.u32 16, %s21
      %s249 = smul.u32 3, %s20
      %p250 = scmp.lt.s32.totalorder %s248, 15
      %s251 = scalar_select %p250, %s248, 15
      %p252 = scmp.lt.s32.totalorder %s249, 2
      %s253 = scalar_select %p252, %s249, 2
      %s254 = smul.addr %s251, 3
      %s255 = sadd.s32 %s253, %s254
      %s256 = smul.addr %s255, 4
      %s257 = scalar_lea.vmem %s1, %s256
      %s258 = smul.u32 16, %s21
      %s259 = smul.u32 3, %s20
      %s260 = smul.u32 3, %s20
      %p261 = scmp.lt.s32.totalorder %s260, 2
      %s262 = scalar_select %p261, %s260, 2
      %s263 = scalar_lea.vmem %s2, %s262
      %s264 = smul.u32 3, %s20
      %s265 = smul.u32 2, %s19
      %s266 = smul.u32 3, %s20
      %p267 = scmp.lt.s32.totalorder %s265, 3
      %s268 = scalar_select %p267, %s265, 3
      %p269 = scmp.lt.s32.totalorder %s266, 2
      %s270 = scalar_select %p269, %s266, 2
      %s271 = smul.addr %s268, 3
      %s272 = sadd.s32 %s270, %s271
      %s273 = smul.addr %s272, 4
      %s274 = scalar_lea.vmem %s3, %s273
      %s275 = smul.u32 2, %s19
      %s276 = smul.u32 3, %s20
      %p277 = scmp.eq.s32.totalorder %s21, 0
      // Predicated region
      $region33: #{transformer_forward.11} parent=31 // pred_check
        %p278 = pneg %p277
      $region34: #{transformer_forward.11} parent=31 // pred_check_branch
        %280 = sbr.rel (%p278) target = $region36
      $region35: #{transformer_forward.11} parent=31 // pred_region
        %281 = vst [vmem:[#allocation2] sm:$0xff] 0.0
        %282 = vst [vmem:[#allocation2 + $0x8] sm:$0xff] 0.0
        %283 = vst [vmem:[#allocation2 + $0x10] sm:$0xff] 0.0
        %284 = vst [vmem:[#allocation2 + $0x18] sm:$0xff] 0.0
        %285 = vst [vmem:[#allocation2 + $0x20] sm:$0xff] 0.0
        %286 = vst [vmem:[#allocation2 + $0x28] sm:$0xff] 0.0
      $region36: #{transformer_forward.11} parent=31 // pred_fallthru
        _
      %v287 = vld [vmem:[#allocation2] sm:$0xff]
      %v288 = vld [vmem:[#allocation2 + $0x8] sm:$0xff]
      %v289 = vld [vmem:[#allocation2 + $0x10] sm:$0xff]
      %v290 = vld [vmem:[#allocation2 + $0x18] sm:$0xff]
      %v291 = vld [vmem:[#allocation2 + $0x20] sm:$0xff]
      %v292 = vld [vmem:[#allocation2 + $0x28] sm:$0xff]
      %v293 = vld [vmem:[%s246] sm:$0xf]
      %v294 = vld [vmem:[%s246 + $0x4] sm:$0xf]
      %v295 = vld [vmem:[%s257] sm:$0xff]
      %v296 = vld [vmem:[%s257 + $0x8] sm:$0xf]
      %v297 = vld [vmem:[%s257 + $0xc] sm:$0xff]
      %v298 = vld [vmem:[%s257 + $0x14] sm:$0xf]
      %v299 = vld [vmem:[%s257 + $0x18] sm:$0xff]
      %v300 = vld [vmem:[%s257 + $0x20] sm:$0xf]
      %v301 = vld [vmem:[%s257 + $0x24] sm:$0xff]
      %v302 = vld [vmem:[%s257 + $0x2c] sm:$0xf]
      %v303 = vld [vmem:[%s257 + $0x30] sm:$0xff]
      %v304 = vld [vmem:[%s257 + $0x38] sm:$0xf]
      %v305 = vld [vmem:[%s257 + $0x3c] sm:$0xff]
      %v306 = vld [vmem:[%s257 + $0x44] sm:$0xf]
      %v307 = vld [vmem:[%s257 + $0x48] sm:$0xff]
      %v308 = vld [vmem:[%s257 + $0x50] sm:$0xf]
      %v309 = vld [vmem:[%s257 + $0x54] sm:$0xff]
      %v310 = vld [vmem:[%s257 + $0x5c] sm:$0xf]
      %v311 = vld [vmem:[%s257 + $0x60] sm:$0xff]
      %v312 = vld [vmem:[%s257 + $0x68] sm:$0xf]
      %v313 = vld [vmem:[%s257 + $0x6c] sm:$0xff]
      %v314 = vld [vmem:[%s257 + $0x74] sm:$0xf]
      %v315 = vld [vmem:[%s257 + $0x78] sm:$0xff]
      %v316 = vld [vmem:[%s257 + $0x80] sm:$0xf]
      %v317 = vld [vmem:[%s257 + $0x84] sm:$0xff]
      %v318 = vld [vmem:[%s257 + $0x8c] sm:$0xf]
      %v319 = vld [vmem:[%s257 + $0x90] sm:$0xff]
      %v320 = vld [vmem:[%s257 + $0x98] sm:$0xf]
      %v321 = vld [vmem:[%s257 + $0x9c] sm:$0xff]
      %v322 = vld [vmem:[%s257 + $0xa4] sm:$0xf]
      %v323 = vld [vmem:[%s257 + $0xa8] sm:$0xff]
      %v324 = vld [vmem:[%s257 + $0xb0] sm:$0xf]
      %v325 = vld [vmem:[%s257 + $0xb4] sm:$0xff]
      %v326 = vld [vmem:[%s257 + $0xbc] sm:$0xf]
      %v329 = vunpack.c.l.b16 %v293
      %v330 = vunpack.c.l.b16 %v294
      %v331 = vpack.c.b16 %v330, %v329
      %v365 = vunpack.c.l.b16 %v295
      %v366 = vunpack.c.h.b16 %v295
      %v367 = vunpack.c.l.b16 %v296
      %v368 = vunpack.c.l.b16 %v297
      %v369 = vunpack.c.h.b16 %v297
      %v370 = vunpack.c.l.b16 %v298
      %v371 = vunpack.c.l.b16 %v299
      %v372 = vunpack.c.h.b16 %v299
      %v373 = vunpack.c.l.b16 %v300
      %v374 = vunpack.c.l.b16 %v301
      %v375 = vunpack.c.h.b16 %v301
      %v376 = vunpack.c.l.b16 %v302
      %v377 = vunpack.c.l.b16 %v303
      %v378 = vunpack.c.h.b16 %v303
      %v379 = vunpack.c.l.b16 %v304
      %v380 = vunpack.c.l.b16 %v305
      %v381 = vunpack.c.h.b16 %v305
      %v382 = vunpack.c.l.b16 %v306
      %v383 = vunpack.c.l.b16 %v307
      %v384 = vunpack.c.h.b16 %v307
      %v385 = vunpack.c.l.b16 %v308
      %v386 = vunpack.c.l.b16 %v309
      %v387 = vunpack.c.h.b16 %v309
      %v388 = vunpack.c.l.b16 %v310
      %v389 = vunpack.c.l.b16 %v311
      %v390 = vunpack.c.h.b16 %v311
      %v391 = vunpack.c.l.b16 %v312
      %v392 = vunpack.c.l.b16 %v313
      %v393 = vunpack.c.h.b16 %v313
      %v394 = vunpack.c.l.b16 %v314
      %v395 = vunpack.c.l.b16 %v315
      %v396 = vunpack.c.h.b16 %v315
      %v397 = vunpack.c.l.b16 %v316
      %v398 = vunpack.c.l.b16 %v317
      %v399 = vunpack.c.h.b16 %v317
      %v400 = vunpack.c.l.b16 %v318
      %v401 = vunpack.c.l.b16 %v319
      %v402 = vunpack.c.h.b16 %v319
      %v403 = vunpack.c.l.b16 %v320
      %v404 = vunpack.c.l.b16 %v321
      %v405 = vunpack.c.h.b16 %v321
      %v406 = vunpack.c.l.b16 %v322
      %v407 = vunpack.c.l.b16 %v323
      %v408 = vunpack.c.h.b16 %v323
      %v409 = vunpack.c.l.b16 %v324
      %v410 = vunpack.c.l.b16 %v325
      %v411 = vunpack.c.h.b16 %v325
      %v412 = vunpack.c.l.b16 %v326
      %v413 = vpack.c.b16 %v368, %v365
      %v414 = vpack.c.b16 %v369, %v366
      %v415 = vpack.c.b16 %v370, %v367
      %v416 = vpack.c.b16 %v374, %v371
      %v417 = vpack.c.b16 %v375, %v372
      %v418 = vpack.c.b16 %v376, %v373
      %v419 = vpack.c.b16 %v380, %v377
      %v420 = vpack.c.b16 %v381, %v378
      %v421 = vpack.c.b16 %v382, %v379
      %v422 = vpack.c.b16 %v386, %v383
      %v423 = vpack.c.b16 %v387, %v384
      %v424 = vpack.c.b16 %v388, %v385
      %v425 = vpack.c.b16 %v392, %v389
      %v426 = vpack.c.b16 %v393, %v390
      %v427 = vpack.c.b16 %v394, %v391
      %v428 = vpack.c.b16 %v398, %v395
      %v429 = vpack.c.b16 %v399, %v396
      %v430 = vpack.c.b16 %v400, %v397
      %v431 = vpack.c.b16 %v404, %v401
      %v432 = vpack.c.b16 %v405, %v402
      %v433 = vpack.c.b16 %v406, %v403
      %v434 = vpack.c.b16 %v410, %v407
      %v435 = vpack.c.b16 %v411, %v408
      %v436 = vpack.c.b16 %v412, %v409
      %461 = vmatpush.bf16.msra.mxu0 %v434
      %462 = vmatpush.bf16.msra.mxu0 %v431
      %463 = vmatpush.bf16.msra.mxu0 %v428
      %464 = vmatpush.bf16.msra.mxu0 %v425
      %465 = vmatpush.bf16.msra.mxu0 %v422
      %466 = vmatpush.bf16.msra.mxu0 %v419
      %467 = vmatpush.bf16.msra.mxu0 %v416
      %468 = vmatpush.bf16.msra.mxu0 %v413
      %469 = vmatmul.bf16.gmra.mxu0 %v331
      %v470 = vpop.f32.mrf.mxu0
      %v471 = vadd.f32 0.0, %v470
      %v472 = vpop.f32.mrf.mxu0
      %v473 = vadd.f32 0.0, %v472
      %474 = vdwg.mxu0
      %475 = vmatpush.bf16.msra.mxu0 %v435
      %476 = vmatpush.bf16.msra.mxu0 %v432
      %477 = vmatpush.bf16.msra.mxu0 %v429
      %478 = vmatpush.bf16.msra.mxu0 %v426
      %479 = vmatpush.bf16.msra.mxu0 %v423
      %480 = vmatpush.bf16.msra.mxu0 %v420
      %481 = vmatpush.bf16.msra.mxu0 %v417
      %482 = vmatpush.bf16.msra.mxu0 %v414
      %483 = vmatmul.bf16.gmra.mxu0 %v331
      %v484 = vpop.f32.mrf.mxu0
      %v485 = vadd.f32 0.0, %v484
      %v486 = vpop.f32.mrf.mxu0
      %v487 = vadd.f32 0.0, %v486
      %488 = vdwg.mxu0
      %489 = vmatpush.bf16.msra.mxu0 %v436
      %490 = vmatpush.bf16.msra.mxu0 %v433
      %491 = vmatpush.bf16.msra.mxu0 %v430
      %492 = vmatpush.bf16.msra.mxu0 %v427
      %493 = vmatpush.bf16.msra.mxu0 %v424
      %494 = vmatpush.bf16.msra.mxu0 %v421
      %495 = vmatpush.bf16.msra.mxu0 %v418
      %496 = vmatpush.bf16.msra.mxu0 %v415
      %497 = vmatmul.bf16.gmra.mxu0 %v331
      %v498 = vpop.f32.mrf.mxu0
      %v499 = vadd.f32 0.0, %v498
      %v500 = vpop.f32.mrf.mxu0
      %v501 = vadd.f32 0.0, %v500
      %502 = vdwg.mxu0
      %v503 = vadd.f32 %v287, %v471
      %v504 = vadd.f32 %v288, %v485
      %v505 = vadd.f32 %v289, %v499
      %v506 = vadd.f32 %v290, %v473
      %v507 = vadd.f32 %v291, %v487
      %v508 = vadd.f32 %v292, %v501
      %509 = vst [vmem:[#allocation2] sm:$0xff] %v503
      %510 = vst [vmem:[#allocation2 + $0x8] sm:$0xff] %v504
      %511 = vst [vmem:[#allocation2 + $0x10] sm:$0xff] %v505
      %512 = vst [vmem:[#allocation2 + $0x18] sm:$0xff] %v506
      %513 = vst [vmem:[#allocation2 + $0x20] sm:$0xff] %v507
      %514 = vst [vmem:[#allocation2 + $0x28] sm:$0xff] %v508
      // Predicated region
      $region37: #{transformer_forward.11} parent=31 // pred_check
        %p515 = pneg %p277
      $region38: #{transformer_forward.11} parent=31 // pred_check_branch
        %517 = sbr.rel (%p515) target = $region40
      $region39: #{transformer_forward.11} parent=31 // pred_region
        %v518 = vld [vmem:[#allocation2] sm:$0xff]
        %v519 = vld [vmem:[#allocation2 + $0x8] sm:$0xff]
        %v520 = vld [vmem:[#allocation2 + $0x10] sm:$0xff]
        %v521 = vld [vmem:[#allocation2 + $0x18] sm:$0xff]
        %v522 = vld [vmem:[#allocation2 + $0x20] sm:$0xff]
        %v523 = vld [vmem:[#allocation2 + $0x28] sm:$0xff]
        %v524 = vld [vmem:[%s263] sm:$0x7]
        %v526 = vperm.slane %v524, 0
        %v527 = vperm.slane %v524, 1
        %v528 = vperm.slane %v524, 2
        %v532 = vadd.f32 %v518, %v526
        %v533 = vadd.f32 %v519, %v527
        %v534 = vadd.f32 %v520, %v528
        %v535 = vadd.f32 %v521, %v526
        %v536 = vadd.f32 %v522, %v527
        %v537 = vadd.f32 %v523, %v528
        %v538 = vpack.c.bf16 %v533, %v532
        %v539 = vpack.c.bf16 %v534, %v534
        %v540 = vpack.c.bf16 %v536, %v535
        %v541 = vpack.c.bf16 %v537, %v537
        %542 = vst [vmem:[%s274] sm:$0xff] %v538
        %543 = vst [vmem:[%s274 + $0x8] sm:$0xf] %v539
        %544 = vst [vmem:[%s274 + $0xc] sm:$0xff] %v540
        %545 = vst [vmem:[%s274 + $0x14] sm:$0xf] %v541
      $region40: #{transformer_forward.11} parent=31 // pred_fallthru
        _
      %s546 = smul.u32 2, %s19
      %s547 = smul.u32 3, %s20
      %p548 = scmp.lt.s32.totalorder %s546, 3
      %s549 = scalar_select %p548, %s546, 3
      %p550 = scmp.lt.s32.totalorder %s547, 2
      %s551 = scalar_select %p550, %s547, 2
      %s552 = smul.addr %s549, 3
      %s553 = sadd.s32 %s551, %s552
      %s554 = smul.addr %s553, 4
      %s555 = scalar_lea.vmem %s3, %s554
      // Predicated region
      $region41: #{transformer_forward.11} parent=31 // pred_check
        %p556 = pneg %p135
      $region42: #{transformer_forward.11} parent=31 // pred_check_branch
        %558 = sbr.rel (%p556) target = $region44
      $region43: #{transformer_forward.11} parent=31 // pred_region
        %s559 = smul.u32 2, %s19
        %s560 = smul.u32 3, %s20
      $region44: #{transformer_forward.11} parent=31 // pred_fallthru
        _
    $region32: #{transformer_forward.11} parent=5 // pred_fallthru
      _
    %p561 = scmp.le.s32.totalorder 2, %s9
    // Predicated region
    $region45: #{transformer_forward.11} parent=5 // pred_check
      %p562 = pneg %p561
    $region46: #{transformer_forward.11} parent=5 // pred_check_branch
      %564 = sbr.rel (%p562) target = $region48
    $region47: #{transformer_forward.11} parent=5 // pred_region
      %s565 = ssub.s32 %s9, 2
      // Predicated region
      $region49: #{transformer_forward.11} parent=47 // pred_check
        %p566 = pneg %p141
      $region50: #{transformer_forward.11} parent=47 // pred_check_branch
        %568 = sbr.rel (%p566) target = $region52
      $region51: #{transformer_forward.11} parent=47 // pred_region
        %s569 = smul.u32 2, %s22
        %s570 = smul.u32 3, %s23
        %p571 = scmp.lt.s32.totalorder %s569, 3
        %s572 = scalar_select %p571, %s569, 3
        %p573 = scmp.lt.s32.totalorder %s570, 2
        %s574 = scalar_select %p573, %s570, 2
        %s575 = smul.addr %s572, 3
        %s576 = sadd.s32 %s574, %s575
        %s577 = smul.addr %s576, 4
        %s578 = scalar_lea.vmem %s3, %s577
      $region52: #{transformer_forward.11} parent=47 // pred_fallthru
        _
    $region48: #{transformer_forward.11} parent=5 // pred_fallthru
      _
  $region6: #{transformer_forward.11} parent=0 // loop_footer
    %s13 = sadd.s32 1, %s9
  $region7: #{transformer_forward.11} parent=0 // loop_footer_branch
    %8 = sbr.rel target = $region3
  $region8: #{transformer_forward.11} parent=0 // loop_exit
    _

// kernel: transformer_forward.14
$region0: #{transformer_forward.14}
  #allocation0 [shape = 'u32[]', space=smem, size = 0x4, offset = 0x4, fixed_abs, tag = 'smem constant byte address 0x4 - core index']
  #allocation1 [shape = 'u32[72,128]{1,0:T(1,128)}', space=vmem, size = 0x9000, scoped, tag = 'internal scratch']
  #allocation2 [shape = 'f32[16,256]{1,0:T(8,128)}', space=vmem, size = 0x4000, scoped, tag = 'scratch operand']
  %s0 = inlined_call_operand.vmem [shape: bf16[32,128], index: 0, kind: input, shape index: {}]
  %s1 = inlined_call_operand.vmem [shape: bf16[128,256], index: 1, kind: input, shape index: {}]
  %s2 = inlined_call_operand.vmem [shape: f32[1,256], index: 2, kind: input, shape index: {}]
  %s3 = inlined_call_operand.vmem [shape: bf16[32,256], index: 3, kind: output, shape index: {}]
  %s4 = sld [smem:[#allocation0]]
  $region53: #{transformer_forward.14} parent=0
    _
  %s6 = ssub.s32 1, %s4
  %s7 = scalar_select 0, %s6, %s4
  loop: start=0, step=1, limit=4
  $region2: #{transformer_forward.14} parent=0 // loop_pre_header
    _
  $region3: #{transformer_forward.14} parent=0 // loop_header
    %s9 = sphi 0, %s13
    %p10 = scmp.ge.s32.totalorder %s9, 4
    %s16 = sphi 0, %s35
    %s17 = sphi 0, %s31
    %s18 = sphi 0, %s27
    %s19 = sphi 0, %s16
    %s20 = sphi 0, %s17
    %s21 = sphi 0, %s18
    %s22 = sphi 0, %s19
    %s23 = sphi 0, %s20
    %s24 = sphi 0, %s21
    %s40 = sphi 0, %s42
    %s43 = sphi 0, %s40
    %s44 = sphi 0, %s43
    %s60 = sphi 0, %s44
    %s68 = sphi 0, %s70
    %s71 = sphi 0, %s68
    %s72 = sphi 0, %s71
    %s88 = sphi 0, %s72
    %s94 = sphi 0, %s96
    %s97 = sphi 0, %s94
    %s98 = sphi 0, %s97
    %s114 = sphi 0, %s98
    %s122 = sphi 0, %s124
    %s125 = sphi 0, %s122
    %s126 = sphi 0, %s125
    %s142 = sphi 0, %s126
  $region4: #{transformer_forward.14} parent=0 // loop_header_branch
    %12 = sbr.rel (%p10) target = $region8
  $region5: #{transformer_forward.14} parent=0 // loop_body
    %s14 = ssub.s32 %s9, 1
    %s15 = ssub.s32 %s9, 2
    %s25 = sadd.s32 1, %s18
    %p26 = scmp.ge.s32.totalorder %s25, 1
    %s27 = scalar_select %p26, 0, %s25
    %s28 = sadd.s32 1, %s17
    %s29 = scalar_select %p26, %s28, %s17
    %p30 = scmp.ge.s32.totalorder %s29, 1
    %s31 = scalar_select %p30, 0, %s29
    %s32 = sadd.s32 1, %s16
    %s33 = scalar_select %p30, %s32, %s16
    %p34 = scmp.ge.s32.totalorder %s33, 2
    %s35 = scalar_select %p34, 0, %s33
    %s36 = ssub.s32 %s16, %s35
    %s37 = ssub.s32 %s18, %s27
    %s38 = sor.u32 %s36, %s37
    %p39 = scmp.eq.s32.totalorder %s38, 0
    %s41 = sadd.s32 %s40, 1
    %s42 = scalar_select %p39, %s40, %s41
    %p45 = pneg %p39
    %p46 = scmp.eq.s32.totalorder %s9, 1
    %p47 = por %p45, %p46
    %p48 = scmp.ne.s32.totalorder %s40, %s43
    %p49 = scmp.eq.s32.totalorder %s9, 0
    %p50 = por %p48, %p49
    %p51 = scmp.ne.s32.totalorder %s40, %s43
    %p52 = scmp.eq.s32.totalorder %s14, 1
    %p53 = por %p51, %p52
    %p54 = scmp.ne.s32.totalorder %s43, %s44
    %p55 = scmp.eq.s32.totalorder %s14, 0
    %p56 = por %p54, %p55
    %p57 = scmp.ne.s32.totalorder %s43, %s44
    %p58 = scmp.eq.s32.totalorder %s15, 1
    %p59 = por %p57, %p58
    %p61 = scmp.ne.s32.totalorder %s44, %s60
    %p62 = scmp.eq.s32.totalorder %s15, 0
    %p63 = por %p61, %p62
    %s64 = ssub.s32 %s18, %s27
    %s65 = ssub.s32 %s17, %s31
    %s66 = sor.u32 %s64, %s65
    %p67 = scmp.eq.s32.totalorder %s66, 0
    %s69 = sadd.s32 %s68, 1
    %s70 = scalar_select %p67, %s68, %s69
    %p73 = pneg %p67
    %p74 = scmp.eq.s32.totalorder %s9, 1
    %p75 = por %p73, %p74
    %p76 = scmp.ne.s32.totalorder %s68, %s71
    %p77 = scmp.eq.s32.totalorder %s9, 0
    %p78 = por %p76, %p77
    %p79 = scmp.ne.s32.totalorder %s68, %s71
    %p80 = scmp.eq.s32.totalorder %s14, 1
    %p81 = por %p79, %p80
    %p82 = scmp.ne.s32.totalorder %s71, %s72
    %p83 = scmp.eq.s32.totalorder %s14, 0
    %p84 = por %p82, %p83
    %p85 = scmp.ne.s32.totalorder %s71, %s72
    %p86 = scmp.eq.s32.totalorder %s15, 1
    %p87 = por %p85, %p86
    %p89 = scmp.ne.s32.totalorder %s72, %s88
    %p90 = scmp.eq.s32.totalorder %s15, 0
    %p91 = por %p89, %p90
    %s92 = ssub.s32 %s17, %s31
    %p93 = scmp.eq.s32.totalorder %s92, 0
    %s95 = sadd.s32 %s94, 1
    %s96 = scalar_select %p93, %s94, %s95
    %p99 = pneg %p93
    %p100 = scmp.eq.s32.totalorder %s9, 1
    %p101 = por %p99, %p100
    %p102 = scmp.ne.s32.totalorder %s94, %s97
    %p103 = scmp.eq.s32.totalorder %s9, 0
    %p104 = por %p102, %p103
    %p105 = scmp.ne.s32.totalorder %s94, %s97
    %p106 = scmp.eq.s32.totalorder %s14, 1
    %p107 = por %p105, %p106
    %p108 = scmp.ne.s32.totalorder %s97, %s98
    %p109 = scmp.eq.s32.totalorder %s14, 0
    %p110 = por %p108, %p109
    %p111 = scmp.ne.s32.totalorder %s97, %s98
    %p112 = scmp.eq.s32.totalorder %s15, 1
    %p113 = por %p111, %p112
    %p115 = scmp.ne.s32.totalorder %s98, %s114
    %p116 = scmp.eq.s32.totalorder %s15, 0
    %p117 = por %p115, %p116
    %s118 = ssub.s32 %s16, %s35
    %s119 = ssub.s32 %s17, %s31
    %s120 = sor.u32 %s118, %s119
    %p121 = scmp.eq.s32.totalorder %s120, 0
    %s123 = sadd.s32 %s122, 1
    %s124 = scalar_select %p121, %s122, %s123
    %p127 = pneg %p121
    %p128 = scmp.eq.s32.totalorder %s9, 1
    %p129 = por %p127, %p128
    %p130 = scmp.ne.s32.totalorder %s122, %s125
    %p131 = scmp.eq.s32.totalorder %s9, 0
    %p132 = por %p130, %p131
    %p133 = scmp.ne.s32.totalorder %s122, %s125
    %p134 = scmp.eq.s32.totalorder %s14, 1
    %p135 = por %p133, %p134
    %p136 = scmp.ne.s32.totalorder %s125, %s126
    %p137 = scmp.eq.s32.totalorder %s14, 0
    %p138 = por %p136, %p137
    %p139 = scmp.ne.s32.totalorder %s125, %s126
    %p140 = scmp.eq.s32.totalorder %s15, 1
    %p141 = por %p139, %p140
    %p143 = scmp.ne.s32.totalorder %s126, %s142
    %p144 = scmp.eq.s32.totalorder %s15, 0
    %p145 = por %p143, %p144
    %p146 = scmp.le.s32.totalorder 1, %s9
    %p147 = scmp.lt.s32.totalorder %s9, 3
    %p148 = pnand %p146, %p147
    %p149 = pneg %p148
    // Predicated region
    $region9: #{transformer_forward.14} parent=5 // pred_check
      _
    $region10: #{transformer_forward.14} parent=5 // pred_check_branch
      %151 = sbr.rel (%p148) target = $region12
    $region11: #{transformer_forward.14} parent=5 // pred_region
      %s152 = ssub.s32 %s9, 1
      // Predicated region
      $region13: #{transformer_forward.14} parent=11 // pred_check
        %p153 = pneg %p84
      $region14: #{transformer_forward.14} parent=11 // pred_check_branch
        %155 = sbr.rel (%p153) target = $region16
      $region15: #{transformer_forward.14} parent=11 // pred_region
        %s156 = smul.u32 16, %s21
        %s157 = smul.u32 2, %s20
        %p158 = scmp.lt.s32.totalorder %s156, 15
        %s159 = scalar_select %p158, %s156, 15
        %p160 = scmp.lt.s32.totalorder %s157, 1
        %s161 = scalar_select %p160, %s157, 1
        %s162 = smul.addr %s159, 2
        %s163 = sadd.s32 %s161, %s162
        %s164 = smul.addr %s163, 4
        %s165 = scalar_lea.vmem %s1, %s164
        %s166 = smul.u32 16, %s21
        %s167 = smul.u32 2, %s20
      $region16: #{transformer_forward.14} parent=11 // pred_fallthru
        _
      // Predicated region
      $region17: #{transformer_forward.14} parent=11 // pred_check
        %p168 = pneg %p110
      $region18: #{transformer_forward.14} parent=11 // pred_check_branch
        %170 = sbr.rel (%p168) target = $region20
      $region19: #{transformer_forward.14} parent=11 // pred_region
        %s171 = smul.u32 2, %s20
        %p172 = scmp.lt.s32.totalorder %s171, 1
        %s173 = scalar_select %p172, %s171, 1
        %s174 = scalar_lea.vmem %s2, %s173
        %s175 = smul.u32 2, %s20
      $region20: #{transformer_forward.14} parent=11 // pred_fallthru
        _
    $region12: #{transformer_forward.14} parent=5 // pred_fallthru
      _
    %p176 = scmp.lt.s32.totalorder %s9, 2
    // Predicated region
    $region21: #{transformer_forward.14} parent=5 // pred_check
      %p177 = pneg %p176
    $region22: #{transformer_forward.14} parent=5 // pred_check_branch
      %179 = sbr.rel (%p177) target = $region24
    $region23: #{transformer_forward.14} parent=5 // pred_region
      // Predicated region
      $region25: #{transformer_forward.14} parent=23 // pred_check
        %p180 = pneg %p50
      $region26: #{transformer_forward.14} parent=23 // pred_check_branch
        %182 = sbr.rel (%p180) target = $region28
      $region27: #{transformer_forward.14} parent=23 // pred_region
        %s183 = smul.u32 2, %s16
        %p184 = scmp.lt.s32.totalorder %s183, 3
        %s185 = scalar_select %p184, %s183, 3
        %p186 = scmp.lt.s32.totalorder %s18, 0
        %s187 = scalar_select %p186, %s18, 0
        %s188 = sadd.s32 %s187, %s185
        %s189 = smul.addr %s188, 4
        %s190 = scalar_lea.vmem %s0, %s189
        %s191 = smul.u32 2, %s16
      $region28: #{transformer_forward.14} parent=23 // pred_fallthru
        _
    $region24: #{transformer_forward.14} parent=5 // pred_fallthru
      _
    %p192 = scmp.le.s32.totalorder 1, %s9
    %p193 = scmp.lt.s32.totalorder %s9, 3
    %p194 = pnand %p192, %p193
    %p195 = pneg %p194
    // Predicated region
    $region29: #{transformer_forward.14} parent=5 // pred_check
      _
    $region30: #{transformer_forward.14} parent=5 // pred_check_branch
      %197 = sbr.rel (%p194) target = $region32
    $region31: #{transformer_forward.14} parent=5 // pred_region
      %s198 = ssub.s32 %s9, 1
      %s199 = smul.u32 2, %s19
      %p200 = scmp.lt.s32.totalorder %s199, 3
      %s201 = scalar_select %p200, %s199, 3
      %p202 = scmp.lt.s32.totalorder %s21, 0
      %s203 = scalar_select %p202, %s21, 0
      %s204 = sadd.s32 %s203, %s201
      %s205 = smul.addr %s204, 4
      %s206 = scalar_lea.vmem %s0, %s205
      %p207 = pneg %p56
      %p208 = pneg %p53
      %s209 = smul.u32 16, %s21
      %s210 = smul.u32 2, %s20
      %p211 = scmp.lt.s32.totalorder %s209, 15
      %s212 = scalar_select %p211, %s209, 15
      %p213 = scmp.lt.s32.totalorder %s210, 1
      %s214 = scalar_select %p213, %s210, 1
      %s215 = smul.addr %s212, 2
      %s216 = sadd.s32 %s214, %s215
      %s217 = smul.addr %s216, 4
      %s218 = scalar_lea.vmem %s1, %s217
      %p219 = pneg %p84
      %p220 = pneg %p81
      %s221 = smul.u32 2, %s20
      %p222 = scmp.lt.s32.totalorder %s221, 1
      %s223 = scalar_select %p222, %s221, 1
      %s224 = scalar_lea.vmem %s2, %s223
      %p225 = pneg %p110
      %p226 = pneg %p107
      %p227 = pneg %p138
      %p228 = pneg %p135
      %s229 = smul.u32 2, %s19
      %s230 = smul.u32 2, %s20
      %p231 = scmp.lt.s32.totalorder %s229, 3
      %s232 = scalar_select %p231, %s229, 3
      %p233 = scmp.lt.s32.totalorder %s230, 1
      %s234 = scalar_select %p233, %s230, 1
      %s235 = smul.addr %s232, 2
      %s236 = sadd.s32 %s234, %s235
      %s237 = smul.addr %s236, 4
      %s238 = scalar_lea.vmem %s3, %s237
      %s239 = smul.u32 2, %s19
      %p240 = scmp.lt.s32.totalorder %s239, 3
      %s241 = scalar_select %p240, %s239, 3
      %p242 = scmp.lt.s32.totalorder %s21, 0
      %s243 = scalar_select %p242, %s21, 0
      %s244 = sadd.s32 %s243, %s241
      %s245 = smul.addr %s244, 4
      %s246 = scalar_lea.vmem %s0, %s245
      %s247 = smul.u32 2, %s19
      %s248 = smul.u32 16, %s21
      %s249 = smul.u32 2, %s20
      %p250 = scmp.lt.s32.totalorder %s248, 15
      %s251 = scalar_select %p250, %s248, 15
      %p252 = scmp.lt.s32.totalorder %s249, 1
      %s253 = scalar_select %p252, %s249, 1
      %s254 = smul.addr %s251, 2
      %s255 = sadd.s32 %s253, %s254
      %s256 = smul.addr %s255, 4
      %s257 = scalar_lea.vmem %s1, %s256
      %s258 = smul.u32 16, %s21
      %s259 = smul.u32 2, %s20
      %s260 = smul.u32 2, %s20
      %p261 = scmp.lt.s32.totalorder %s260, 1
      %s262 = scalar_select %p261, %s260, 1
      %s263 = scalar_lea.vmem %s2, %s262
      %s264 = smul.u32 2, %s20
      %s265 = smul.u32 2, %s19
      %s266 = smul.u32 2, %s20
      %p267 = scmp.lt.s32.totalorder %s265, 3
      %s268 = scalar_select %p267, %s265, 3
      %p269 = scmp.lt.s32.totalorder %s266, 1
      %s270 = scalar_select %p269, %s266, 1
      %s271 = smul.addr %s268, 2
      %s272 = sadd.s32 %s270, %s271
      %s273 = smul.addr %s272, 4
      %s274 = scalar_lea.vmem %s3, %s273
      %s275 = smul.u32 2, %s19
      %s276 = smul.u32 2, %s20
      %p277 = scmp.eq.s32.totalorder %s21, 0
      // Predicated region
      $region33: #{transformer_forward.14} parent=31 // pred_check
        %p278 = pneg %p277
      $region34: #{transformer_forward.14} parent=31 // pred_check_branch
        %280 = sbr.rel (%p278) target = $region36
      $region35: #{transformer_forward.14} parent=31 // pred_region
        %281 = vst [vmem:[#allocation2] sm:$0xff] 0.0
        %282 = vst [vmem:[#allocation2 + $0x8] sm:$0xff] 0.0
        %283 = vst [vmem:[#allocation2 + $0x10] sm:$0xff] 0.0
        %284 = vst [vmem:[#allocation2 + $0x18] sm:$0xff] 0.0
      $region36: #{transformer_forward.14} parent=31 // pred_fallthru
        _
      %v285 = vld [vmem:[#allocation2] sm:$0xff]
      %v286 = vld [vmem:[#allocation2 + $0x8] sm:$0xff]
      %v287 = vld [vmem:[#allocation2 + $0x10] sm:$0xff]
      %v288 = vld [vmem:[#allocation2 + $0x18] sm:$0xff]
      %v289 = vld [vmem:[%s246] sm:$0xf]
      %v290 = vld [vmem:[%s246 + $0x4] sm:$0xf]
      %v291 = vld [vmem:[%s257] sm:$0xff]
      %v292 = vld [vmem:[%s257 + $0x8] sm:$0xff]
      %v293 = vld [vmem:[%s257 + $0x10] sm:$0xff]
      %v294 = vld [vmem:[%s257 + $0x18] sm:$0xff]
      %v295 = vld [vmem:[%s257 + $0x20] sm:$0xff]
      %v296 = vld [vmem:[%s257 + $0x28] sm:$0xff]
      %v297 = vld [vmem:[%s257 + $0x30] sm:$0xff]
      %v298 = vld [vmem:[%s257 + $0x38] sm:$0xff]
      %v299 = vld [vmem:[%s257 + $0x40] sm:$0xff]
      %v300 = vld [vmem:[%s257 + $0x48] sm:$0xff]
      %v301 = vld [vmem:[%s257 + $0x50] sm:$0xff]
      %v302 = vld [vmem:[%s257 + $0x58] sm:$0xff]
      %v303 = vld [vmem:[%s257 + $0x60] sm:$0xff]
      %v304 = vld [vmem:[%s257 + $0x68] sm:$0xff]
      %v305 = vld [vmem:[%s257 + $0x70] sm:$0xff]
      %v306 = vld [vmem:[%s257 + $0x78] sm:$0xff]
      %v309 = vunpack.c.l.b16 %v289
      %v310 = vunpack.c.l.b16 %v290
      %v311 = vpack.c.b16 %v310, %v309
      %v329 = vunpack.c.l.b16 %v291
      %v330 = vunpack.c.h.b16 %v291
      %v331 = vunpack.c.l.b16 %v292
      %v332 = vunpack.c.h.b16 %v292
      %v333 = vunpack.c.l.b16 %v293
      %v334 = vunpack.c.h.b16 %v293
      %v335 = vunpack.c.l.b16 %v294
      %v336 = vunpack.c.h.b16 %v294
      %v337 = vunpack.c.l.b16 %v295
      %v338 = vunpack.c.h.b16 %v295
      %v339 = vunpack.c.l.b16 %v296
      %v340 = vunpack.c.h.b16 %v296
      %v341 = vunpack.c.l.b16 %v297
      %v342 = vunpack.c.h.b16 %v297
      %v343 = vunpack.c.l.b16 %v298
      %v344 = vunpack.c.h.b16 %v298
      %v345 = vunpack.c.l.b16 %v299
      %v346 = vunpack.c.h.b16 %v299
      %v347 = vunpack.c.l.b16 %v300
      %v348 = vunpack.c.h.b16 %v300
      %v349 = vunpack.c.l.b16 %v301
      %v350 = vunpack.c.h.b16 %v301
      %v351 = vunpack.c.l.b16 %v302
      %v352 = vunpack.c.h.b16 %v302
      %v353 = vunpack.c.l.b16 %v303
      %v354 = vunpack.c.h.b16 %v303
      %v355 = vunpack.c.l.b16 %v304
      %v356 = vunpack.c.h.b16 %v304
      %v357 = vunpack.c.l.b16 %v305
      %v358 = vunpack.c.h.b16 %v305
      %v359 = vunpack.c.l.b16 %v306
      %v360 = vunpack.c.h.b16 %v306
      %v361 = vpack.c.b16 %v331, %v329
      %v362 = vpack.c.b16 %v332, %v330
      %v363 = vpack.c.b16 %v335, %v333
      %v364 = vpack.c.b16 %v336, %v334
      %v365 = vpack.c.b16 %v339, %v337
      %v366 = vpack.c.b16 %v340, %v338
      %v367 = vpack.c.b16 %v343, %v341
      %v368 = vpack.c.b16 %v344, %v342
      %v369 = vpack.c.b16 %v347, %v345
      %v370 = vpack.c.b16 %v348, %v346
      %v371 = vpack.c.b16 %v351, %v349
      %v372 = vpack.c.b16 %v352, %v350
      %v373 = vpack.c.b16 %v355, %v353
      %v374 = vpack.c.b16 %v356, %v354
      %v375 = vpack.c.b16 %v359, %v357
      %v376 = vpack.c.b16 %v360, %v358
      %393 = vmatpush.bf16.msra.mxu0 %v375
      %394 = vmatpush.bf16.msra.mxu0 %v373
      %395 = vmatpush.bf16.msra.mxu0 %v371
      %396 = vmatpush.bf16.msra.mxu0 %v369
      %397 = vmatpush.bf16.msra.mxu0 %v367
      %398 = vmatpush.bf16.msra.mxu0 %v365
      %399 = vmatpush.bf16.msra.mxu0 %v363
      %400 = vmatpush.bf16.msra.mxu0 %v361
      %401 = vmatmul.bf16.gmra.mxu0 %v311
      %v402 = vpop.f32.mrf.mxu0
      %v403 = vadd.f32 0.0, %v402
      %v404 = vpop.f32.mrf.mxu0
      %v405 = vadd.f32 0.0, %v404
      %406 = vdwg.mxu0
      %407 = vmatpush.bf16.msra.mxu0 %v376
      %408 = vmatpush.bf16.msra.mxu0 %v374
      %409 = vmatpush.bf16.msra.mxu0 %v372
      %410 = vmatpush.bf16.msra.mxu0 %v370
      %411 = vmatpush.bf16.msra.mxu0 %v368
      %412 = vmatpush.bf16.msra.mxu0 %v366
      %413 = vmatpush.bf16.msra.mxu0 %v364
      %414 = vmatpush.bf16.msra.mxu0 %v362
      %415 = vmatmul.bf16.gmra.mxu0 %v311
      %v416 = vpop.f32.mrf.mxu0
      %v417 = vadd.f32 0.0, %v416
      %v418 = vpop.f32.mrf.mxu0
      %v419 = vadd.f32 0.0, %v418
      %420 = vdwg.mxu0
      %v421 = vadd.f32 %v285, %v403
      %v422 = vadd.f32 %v286, %v417
      %v423 = vadd.f32 %v287, %v405
      %v424 = vadd.f32 %v288, %v419
      %425 = vst [vmem:[#allocation2] sm:$0xff] %v421
      %426 = vst [vmem:[#allocation2 + $0x8] sm:$0xff] %v422
      %427 = vst [vmem:[#allocation2 + $0x10] sm:$0xff] %v423
      %428 = vst [vmem:[#allocation2 + $0x18] sm:$0xff] %v424
      // Predicated region
      $region37: #{transformer_forward.14} parent=31 // pred_check
        %p429 = pneg %p277
      $region38: #{transformer_forward.14} parent=31 // pred_check_branch
        %431 = sbr.rel (%p429) target = $region40
      $region39: #{transformer_forward.14} parent=31 // pred_region
        %v432 = vld [vmem:[#allocation2] sm:$0xff]
        %v433 = vld [vmem:[#allocation2 + $0x8] sm:$0xff]
        %v434 = vld [vmem:[#allocation2 + $0x10] sm:$0xff]
        %v435 = vld [vmem:[#allocation2 + $0x18] sm:$0xff]
        %v436 = vld [vmem:[%s263] sm:$0x3]
        %v438 = vperm.slane %v436, 0
        %v439 = vperm.slane %v436, 1
        %v442 = vadd.f32 %v432, %v438
        %v443 = vadd.f32 %v433, %v439
        %v444 = vadd.f32 %v434, %v438
        %v445 = vadd.f32 %v435, %v439
        %v446 = vmax.f32 %v442, 0.0
        %v447 = vmax.f32 %v443, 0.0
        %v448 = vmax.f32 %v444, 0.0
        %v449 = vmax.f32 %v445, 0.0
        %v450 = vpack.c.bf16 %v447, %v446
        %v451 = vpack.c.bf16 %v449, %v448
        %452 = vst [vmem:[%s274] sm:$0xff] %v450
        %453 = vst [vmem:[%s274 + $0x8] sm:$0xff] %v451
      $region40: #{transformer_forward.14} parent=31 // pred_fallthru
        _
      %s454 = smul.u32 2, %s19
      %s455 = smul.u32 2, %s20
      %p456 = scmp.lt.s32.totalorder %s454, 3
      %s457 = scalar_select %p456, %s454, 3
      %p458 = scmp.lt.s32.totalorder %s455, 1
      %s459 = scalar_select %p458, %s455, 1
      %s460 = smul.addr %s457, 2
      %s461 = sadd.s32 %s459, %s460
      %s462 = smul.addr %s461, 4
      %s463 = scalar_lea.vmem %s3, %s462
      // Predicated region
      $region41: #{transformer_forward.14} parent=31 // pred_check
        %p464 = pneg %p135
      $region42: #{transformer_forward.14} parent=31 // pred_check_branch
        %466 = sbr.rel (%p464) target = $region44
      $region43: #{transformer_forward.14} parent=31 // pred_region
        %s467 = smul.u32 2, %s19
        %s468 = smul.u32 2, %s20
      $region44: #{transformer_forward.14} parent=31 // pred_fallthru
        _
    $region32: #{transformer_forward.14} parent=5 // pred_fallthru
      _
    %p469 = scmp.le.s32.totalorder 2, %s9
    // Predicated region
    $region45: #{transformer_forward.14} parent=5 // pred_check
      %p470 = pneg %p469
    $region46: #{transformer_forward.14} parent=5 // pred_check_branch
      %472 = sbr.rel (%p470) target = $region48
    $region47: #{transformer_forward.14} parent=5 // pred_region
      %s473 = ssub.s32 %s9, 2
      // Predicated region
      $region49: #{transformer_forward.14} parent=47 // pred_check
        %p474 = pneg %p141
      $region50: #{transformer_forward.14} parent=47 // pred_check_branch
        %476 = sbr.rel (%p474) target = $region52
      $region51: #{transformer_forward.14} parent=47 // pred_region
        %s477 = smul.u32 2, %s22
        %s478 = smul.u32 2, %s23
        %p479 = scmp.lt.s32.totalorder %s477, 3
        %s480 = scalar_select %p479, %s477, 3
        %p481 = scmp.lt.s32.totalorder %s478, 1
        %s482 = scalar_select %p481, %s478, 1
        %s483 = smul.addr %s480, 2
        %s484 = sadd.s32 %s482, %s483
        %s485 = smul.addr %s484, 4
        %s486 = scalar_lea.vmem %s3, %s485
      $region52: #{transformer_forward.14} parent=47 // pred_fallthru
        _
    $region48: #{transformer_forward.14} parent=5 // pred_fallthru
      _
  $region6: #{transformer_forward.14} parent=0 // loop_footer
    %s13 = sadd.s32 1, %s9
  $region7: #{transformer_forward.14} parent=0 // loop_footer_branch
    %8 = sbr.rel target = $region3
  $region8: #{transformer_forward.14} parent=0 // loop_exit
    _

// kernel: transformer_forward.12
$region0: #{transformer_forward.12}
  #allocation0 [shape = 'u32[]', space=smem, size = 0x4, offset = 0x4, fixed_abs, tag = 'smem constant byte address 0x4 - core index']
  #allocation1 [shape = 'u32[72,128]{1,0:T(1,128)}', space=vmem, size = 0x9000, scoped, tag = 'internal scratch']
  #allocation2 [shape = 'f32[16,128]{1,0:T(8,128)}', space=vmem, size = 0x2000, scoped, tag = 'scratch operand']
  #allocation3 [shape = 'f32[16,128]{1,0:T(8,128)}', space=vmem, size = 0x2000, scoped, tag = 'scratch operand']
  #allocation4 [shape = 'f32[16,128]{1,0:T(8,128)}', space=vmem, size = 0x2000, scoped, tag = 'scratch operand']
  #allocation5 [shape = 's32[1]{0}', space=sflag, size = 0x4, scoped, tag = 'scoped memory for transformer_forward.12']
  #allocation6 [shape = 'u8[512]{0}', space=smem, size = 0x200, scoped, tag = 'prefetched SMEM operand 0']
  %s0 = inlined_call_operand.vmem [shape: s32[2], index: 0, kind: input, shape index: {}]
  %s1 = inlined_call_operand.vmem [shape: s8[2,16,16], index: 1, kind: input, shape index: {}]
  %s2 = inlined_call_operand.vmem [shape: bf16[2,16,384], index: 2, kind: input, shape index: {}, may-alias: {2,3,4}]
  %s3 = inlined_call_operand.vmem [shape: bf16[2,16,384], index: 3, kind: input, shape index: {}, may-alias: {2,3,4}]
  %s4 = inlined_call_operand.vmem [shape: bf16[2,16,384], index: 4, kind: input, shape index: {}, may-alias: {2,3,4}]
  %s5 = inlined_call_operand.vmem [shape: bf16[2,16,128], index: 5, kind: output, shape index: {}]
  %s6 = sld [smem:[#allocation0]]
  $region184: #{transformer_forward.12} parent=0
    _
  %s8 = ssub.s32 1, %s6
  %s9 = scalar_select 0, %s8, %s6
  %s11 = sshll.u32 %s0, 4
  %s12 = int_to_ptr.vmem [resolvable:$true] %s11
  %14 = dma.vmem_to_smem %s12, 16, [#allocation6], [#allocation5]
  %16 = dma.done [#allocation5], 16
  %17 = sfence
  $region1: #{transformer_forward.12} parent=0
    #allocation7 [shape = 'u8[8192]{0}', space=vmem, size = 0x2000, scoped, tag = 'input window, operand 2']
    #allocation8 [shape = 'u8[8192]{0}', space=vmem, size = 0x2000, scoped, tag = 'input window, operand 3']
    #allocation9 [shape = 'u8[8192]{0}', space=vmem, size = 0x2000, scoped, tag = 'input window, operand 4']
    loop: start=0, step=1, limit=4
    $region2: #{transformer_forward.12} parent=1 // loop_pre_header
      _
    $region3: #{transformer_forward.12} parent=1 // loop_header
      %s19 = sphi 0, %s23
      %p20 = scmp.ge.s32.totalorder %s19, 4
      %s26 = sphi 0, %s45
      %s27 = sphi 0, %s41
      %s28 = sphi 0, %s37
      %s29 = sphi 0, %s26
      %s30 = sphi 0, %s27
      %s31 = sphi 0, %s28
      %s32 = sphi 0, %s29
      %s33 = sphi 0, %s30
      %s34 = sphi 0, %s31
      %s52 = sphi 0, %s54
      %s55 = sphi 0, %s52
      %s56 = sphi 0, %s55
      %s72 = sphi 0, %s56
      %s80 = sphi 0, %s82
      %s83 = sphi 0, %s80
      %s84 = sphi 0, %s83
      %s100 = sphi 0, %s84
      %s108 = sphi 0, %s110
      %s111 = sphi 0, %s108
      %s112 = sphi 0, %s111
      %s128 = sphi 0, %s112
      %s136 = sphi 0, %s138
      %s139 = sphi 0, %s136
      %s140 = sphi 0, %s139
      %s156 = sphi 0, %s140
      %s164 = sphi 0, %s166
      %s167 = sphi 0, %s164
      %s168 = sphi 0, %s167
      %s184 = sphi 0, %s168
    $region4: #{transformer_forward.12} parent=1 // loop_header_branch
      %22 = sbr.rel (%p20) target = $region8
    $region5: #{transformer_forward.12} parent=1 // loop_body
      %s24 = ssub.s32 %s19, 1
      %s25 = ssub.s32 %s19, 2
      %s35 = sadd.s32 1, %s28
      %p36 = scmp.ge.s32.totalorder %s35, 1
      %s37 = scalar_select %p36, 0, %s35
      %s38 = sadd.s32 1, %s27
      %s39 = scalar_select %p36, %s38, %s27
      %p40 = scmp.ge.s32.totalorder %s39, 1
      %s41 = scalar_select %p40, 0, %s39
      %s42 = sadd.s32 1, %s26
      %s43 = scalar_select %p40, %s42, %s26
      %p44 = scmp.ge.s32.totalorder %s43, 2
      %s45 = scalar_select %p44, 0, %s43
      %s46 = ssub.s32 %s26, %s45
      %s47 = ssub.s32 %s27, %s41
      %s48 = sor.u32 %s46, %s47
      %s49 = ssub.s32 %s28, %s37
      %s50 = sor.u32 %s48, %s49
      %p51 = scmp.eq.s32.totalorder %s50, 0
      %s53 = sadd.s32 %s52, 1
      %s54 = scalar_select %p51, %s52, %s53
      %p57 = pneg %p51
      %p58 = scmp.eq.s32.totalorder %s19, 1
      %p59 = por %p57, %p58
      %p60 = scmp.ne.s32.totalorder %s52, %s55
      %p61 = scmp.eq.s32.totalorder %s19, 0
      %p62 = por %p60, %p61
      %p63 = scmp.ne.s32.totalorder %s52, %s55
      %p64 = scmp.eq.s32.totalorder %s24, 1
      %p65 = por %p63, %p64
      %p66 = scmp.ne.s32.totalorder %s55, %s56
      %p67 = scmp.eq.s32.totalorder %s24, 0
      %p68 = por %p66, %p67
      %p69 = scmp.ne.s32.totalorder %s55, %s56
      %p70 = scmp.eq.s32.totalorder %s25, 1
      %p71 = por %p69, %p70
      %p73 = scmp.ne.s32.totalorder %s56, %s72
      %p74 = scmp.eq.s32.totalorder %s25, 0
      %p75 = por %p73, %p74
      %s76 = ssub.s32 %s26, %s45
      %s77 = ssub.s32 %s27, %s41
      %s78 = sor.u32 %s76, %s77
      %p79 = scmp.eq.s32.totalorder %s78, 0
      %s81 = sadd.s32 %s80, 1
      %s82 = scalar_select %p79, %s80, %s81
      %p85 = pneg %p79
      %p86 = scmp.eq.s32.totalorder %s19, 1
      %p87 = por %p85, %p86
      %p88 = scmp.ne.s32.totalorder %s80, %s83
      %p89 = scmp.eq.s32.totalorder %s19, 0
      %p90 = por %p88, %p89
      %p91 = scmp.ne.s32.totalorder %s80, %s83
      %p92 = scmp.eq.s32.totalorder %s24, 1
      %p93 = por %p91, %p92
      %p94 = scmp.ne.s32.totalorder %s83, %s84
      %p95 = scmp.eq.s32.totalorder %s24, 0
      %p96 = por %p94, %p95
      %p97 = scmp.ne.s32.totalorder %s83, %s84
      %p98 = scmp.eq.s32.totalorder %s25, 1
      %p99 = por %p97, %p98
      %p101 = scmp.ne.s32.totalorder %s84, %s100
      %p102 = scmp.eq.s32.totalorder %s25, 0
      %p103 = por %p101, %p102
      %s104 = ssub.s32 %s26, %s45
      %s105 = ssub.s32 %s28, %s37
      %s106 = sor.u32 %s104, %s105
      %p107 = scmp.eq.s32.totalorder %s106, 0
      %s109 = sadd.s32 %s108, 1
      %s110 = scalar_select %p107, %s108, %s109
      %p113 = pneg %p107
      %p114 = scmp.eq.s32.totalorder %s19, 1
      %p115 = por %p113, %p114
      %p116 = scmp.ne.s32.totalorder %s108, %s111
      %p117 = scmp.eq.s32.totalorder %s19, 0
      %p118 = por %p116, %p117
      %p119 = scmp.ne.s32.totalorder %s108, %s111
      %p120 = scmp.eq.s32.totalorder %s24, 1
      %p121 = por %p119, %p120
      %p122 = scmp.ne.s32.totalorder %s111, %s112
      %p123 = scmp.eq.s32.totalorder %s24, 0
      %p124 = por %p122, %p123
      %p125 = scmp.ne.s32.totalorder %s111, %s112
      %p126 = scmp.eq.s32.totalorder %s25, 1
      %p127 = por %p125, %p126
      %p129 = scmp.ne.s32.totalorder %s112, %s128
      %p130 = scmp.eq.s32.totalorder %s25, 0
      %p131 = por %p129, %p130
      %s132 = ssub.s32 %s26, %s45
      %s133 = ssub.s32 %s28, %s37
      %s134 = sor.u32 %s132, %s133
      %p135 = scmp.eq.s32.totalorder %s134, 0
      %s137 = sadd.s32 %s136, 1
      %s138 = scalar_select %p135, %s136, %s137
      %p141 = pneg %p135
      %p142 = scmp.eq.s32.totalorder %s19, 1
      %p143 = por %p141, %p142
      %p144 = scmp.ne.s32.totalorder %s136, %s139
      %p145 = scmp.eq.s32.totalorder %s19, 0
      %p146 = por %p144, %p145
      %p147 = scmp.ne.s32.totalorder %s136, %s139
      %p148 = scmp.eq.s32.totalorder %s24, 1
      %p149 = por %p147, %p148
      %p150 = scmp.ne.s32.totalorder %s139, %s140
      %p151 = scmp.eq.s32.totalorder %s24, 0
      %p152 = por %p150, %p151
      %p153 = scmp.ne.s32.totalorder %s139, %s140
      %p154 = scmp.eq.s32.totalorder %s25, 1
      %p155 = por %p153, %p154
      %p157 = scmp.ne.s32.totalorder %s140, %s156
      %p158 = scmp.eq.s32.totalorder %s25, 0
      %p159 = por %p157, %p158
      %s160 = ssub.s32 %s26, %s45
      %s161 = ssub.s32 %s27, %s41
      %s162 = sor.u32 %s160, %s161
      %p163 = scmp.eq.s32.totalorder %s162, 0
      %s165 = sadd.s32 %s164, 1
      %s166 = scalar_select %p163, %s164, %s165
      %p169 = pneg %p163
      %p170 = scmp.eq.s32.totalorder %s19, 1
      %p171 = por %p169, %p170
      %p172 = scmp.ne.s32.totalorder %s164, %s167
      %p173 = scmp.eq.s32.totalorder %s19, 0
      %p174 = por %p172, %p173
      %p175 = scmp.ne.s32.totalorder %s164, %s167
      %p176 = scmp.eq.s32.totalorder %s24, 1
      %p177 = por %p175, %p176
      %p178 = scmp.ne.s32.totalorder %s167, %s168
      %p179 = scmp.eq.s32.totalorder %s24, 0
      %p180 = por %p178, %p179
      %p181 = scmp.ne.s32.totalorder %s167, %s168
      %p182 = scmp.eq.s32.totalorder %s25, 1
      %p183 = por %p181, %p182
      %p185 = scmp.ne.s32.totalorder %s168, %s184
      %p186 = scmp.eq.s32.totalorder %s25, 0
      %p187 = por %p185, %p186
      %p188 = scmp.le.s32.totalorder 1, %s19
      %p189 = scmp.lt.s32.totalorder %s19, 3
      %p190 = pnand %p188, %p189
      %p191 = pneg %p190
      // Predicated region
      $region9: #{transformer_forward.12} parent=5 // pred_check
        _
      $region10: #{transformer_forward.12} parent=5 // pred_check_branch
        %193 = sbr.rel (%p190) target = $region12
      $region11: #{transformer_forward.12} parent=5 // pred_region
        %s194 = ssub.s32 %s19, 1
      $region12: #{transformer_forward.12} parent=5 // pred_fallthru
        _
      %p195 = scmp.lt.s32.totalorder %s19, 2
      // Predicated region
      $region13: #{transformer_forward.12} parent=5 // pred_check
        %p196 = pneg %p195
      $region14: #{transformer_forward.12} parent=5 // pred_check_branch
        %198 = sbr.rel (%p196) target = $region16
      $region15: #{transformer_forward.12} parent=5 // pred_region
        // Predicated region
        $region17: #{transformer_forward.12} parent=15 // pred_check
          %p199 = pneg %p62
        $region18: #{transformer_forward.12} parent=15 // pred_check_branch
          %201 = sbr.rel (%p199) target = $region20
        $region19: #{transformer_forward.12} parent=15 // pred_region
          %s202 = smul.u32 2, %s27
          %p203 = scmp.lt.s32.totalorder %s26, 1
          %s204 = scalar_select %p203, %s26, 1
          %p205 = scmp.lt.s32.totalorder %s202, 1
          %s206 = scalar_select %p205, %s202, 1
          %p207 = scmp.lt.s32.totalorder %s28, 0
          %s208 = scalar_select %p207, %s28, 0
          %s209 = sadd.s32 %s208, %s206
          %s210 = smul.addr %s204, 2
          %s211 = sadd.s32 %s209, %s210
          %s212 = smul.addr %s211, 2
          %s213 = scalar_lea.vmem %s1, %s212
          %s214 = smul.u32 2, %s27
        $region20: #{transformer_forward.12} parent=15 // pred_fallthru
          _
        // Predicated region
        $region21: #{transformer_forward.12} parent=15 // pred_check
          %p215 = pneg %p90
        $region22: #{transformer_forward.12} parent=15 // pred_check_branch
          %217 = sbr.rel (%p215) target = $region24
        $region23: #{transformer_forward.12} parent=15 // pred_region
          %s218 = sand.u32 %s80, 1
          %s219 = sand.u32 %s80, 1
          %s220 = smul.addr %s219, 8
          %s221 = scalar_lea.vmem [#allocation7], %s220
          %s222 = smul.u32 2, %s27
          %s223 = smul.addr %s222, 3
          %s224 = smul.addr %s26, 6
          %s225 = sadd.s32 %s223, %s224
          %s226 = smul.addr %s225, 4
          %s227 = scalar_lea.vmem %s2, %s226
          // Predicated region
          $region25: #{transformer_forward.12} parent=23 // pred_check
            _
          $region26: #{transformer_forward.12} parent=23 // pred_check_branch
            %229 = sbr.rel (0) target = $region28
          $region27: #{transformer_forward.12} parent=23 // pred_region
            // Predicated region
            $region29: #{transformer_forward.12} parent=27 // pred_check
              _
            $region30: #{transformer_forward.12} parent=27 // pred_check_branch
              %231 = sbr.rel target = $region32
            $region31: #{transformer_forward.12} parent=27 // pred_region
              // Predicated region
              $region44: #{transformer_forward.12} parent=31 // pred_check
                _
              $region45: #{transformer_forward.12} parent=31 // pred_check_branch
                %249 = sbr.rel (0) target = $region47
              $region46: #{transformer_forward.12} parent=31 // pred_region
                loop: start=0, step=1, limit=1
                $region48: #{transformer_forward.12} parent=46 // loop_pre_header
                  _
                $region49: #{transformer_forward.12} parent=46 // loop_header
                  %s251 = sphi 0, %s255
                  %p252 = scmp.ge.s32.totalorder %s251, 1
                  %s256 = sphi %s227, %s227
                  %s257 = sphi %s221, %s221
                $region50: #{transformer_forward.12} parent=46 // loop_header_branch
                  %254 = sbr.rel (%p252) target = $region54
                $region51: #{transformer_forward.12} parent=46 // loop_body
                  _
                $region52: #{transformer_forward.12} parent=46 // loop_footer
                  %s255 = sadd.s32 1, %s251
                $region53: #{transformer_forward.12} parent=46 // loop_footer_branch
                  %250 = sbr.rel target = $region49
                $region54: #{transformer_forward.12} parent=46 // loop_exit
                  _
                %s259 = ssub.s32 16, 1
                loop: start=0, step=1, limit=1
                $region55: #{transformer_forward.12} parent=46 // loop_pre_header
                  _
                $region56: #{transformer_forward.12} parent=46 // loop_header
                  %s261 = sphi 0, %s265
                  %p262 = scmp.ge.s32.totalorder %s261, 1
                  %s266 = sphi %s227, %s227
                  %s267 = sphi %s221, %s221
                $region57: #{transformer_forward.12} parent=46 // loop_header_branch
                  %264 = sbr.rel (%p262) target = $region61
                $region58: #{transformer_forward.12} parent=46 // loop_body
                  %v268 = vld [vmem:[%s266] sm:%s259]
                  %269 = vst [vmem:[%s267] sm:%s259] %v268
                  %v270 = vld [vmem:[%s266 + $0xc] sm:%s259]
                  %271 = vst [vmem:[%s267 + $0x4] sm:%s259] %v270
                $region59: #{transformer_forward.12} parent=46 // loop_footer
                  %s265 = sadd.s32 1, %s261
                $region60: #{transformer_forward.12} parent=46 // loop_footer_branch
                  %260 = sbr.rel target = $region56
                $region61: #{transformer_forward.12} parent=46 // loop_exit
                  _
              $region47: #{transformer_forward.12} parent=31 // pred_fallthru
                _
            $region32: #{transformer_forward.12} parent=27 // pred_fallthru
              _
            // Predicated region
            $region33: #{transformer_forward.12} parent=27 // pred_check
              _
            $region34: #{transformer_forward.12} parent=27 // pred_check_branch
              %233 = sbr.rel (0) target = $region36
            $region35: #{transformer_forward.12} parent=27 // pred_region
              %s235 = ssub.s32 16, 1
              loop: start=0, step=1, limit=1
              $region37: #{transformer_forward.12} parent=35 // loop_pre_header
                _
              $region38: #{transformer_forward.12} parent=35 // loop_header
                %s237 = sphi 0, %s241
                %p238 = scmp.ge.s32.totalorder %s237, 1
                %s242 = sphi %s227, %s227
                %s243 = sphi %s221, %s221
              $region39: #{transformer_forward.12} parent=35 // loop_header_branch
                %240 = sbr.rel (%p238) target = $region43
              $region40: #{transformer_forward.12} parent=35 // loop_body
                %v244 = vld [vmem:[%s242] sm:%s235]
                %245 = vst [vmem:[%s243] sm:%s235] %v244
                %v246 = vld [vmem:[%s242 + $0xc] sm:%s235]
                %247 = vst [vmem:[%s243 + $0x4] sm:%s235] %v246
              $region41: #{transformer_forward.12} parent=35 // loop_footer
                %s241 = sadd.s32 1, %s237
              $region42: #{transformer_forward.12} parent=35 // loop_footer_branch
                %236 = sbr.rel target = $region38
              $region43: #{transformer_forward.12} parent=35 // loop_exit
                _
            $region36: #{transformer_forward.12} parent=27 // pred_fallthru
              _
          $region28: #{transformer_forward.12} parent=23 // pred_fallthru
            _
          %272 = vnop
        $region24: #{transformer_forward.12} parent=15 // pred_fallthru
          _
        // Predicated region
        $region62: #{transformer_forward.12} parent=15 // pred_check
          %p273 = pneg %p118
        $region63: #{transformer_forward.12} parent=15 // pred_check_branch
          %275 = sbr.rel (%p273) target = $region65
        $region64: #{transformer_forward.12} parent=15 // pred_region
          %s276 = sand.u32 %s108, 1
          %s277 = sand.u32 %s108, 1
          %s278 = smul.addr %s277, 8
          %s279 = scalar_lea.vmem [#allocation8], %s278
          %s280 = smul.u32 2, %s28
          %s281 = smul.addr %s280, 3
          %s282 = sadd.s32 1, %s281
          %s283 = smul.addr %s26, 6
          %s284 = sadd.s32 %s282, %s283
          %s285 = smul.addr %s284, 4
          %s286 = scalar_lea.vmem %s3, %s285
          // Predicated region
          $region66: #{transformer_forward.12} parent=64 // pred_check
            _
          $region67: #{transformer_forward.12} parent=64 // pred_check_branch
            %288 = sbr.rel (0) target = $region69
          $region68: #{transformer_forward.12} parent=64 // pred_region
            // Predicated region
            $region70: #{transformer_forward.12} parent=68 // pred_check
              _
            $region71: #{transformer_forward.12} parent=68 // pred_check_branch
              %290 = sbr.rel target = $region73
            $region72: #{transformer_forward.12} parent=68 // pred_region
              // Predicated region
              $region85: #{transformer_forward.12} parent=72 // pred_check
                _
              $region86: #{transformer_forward.12} parent=72 // pred_check_branch
                %308 = sbr.rel (0) target = $region88
              $region87: #{transformer_forward.12} parent=72 // pred_region
                loop: start=0, step=1, limit=1
                $region89: #{transformer_forward.12} parent=87 // loop_pre_header
                  _
                $region90: #{transformer_forward.12} parent=87 // loop_header
                  %s310 = sphi 0, %s314
                  %p311 = scmp.ge.s32.totalorder %s310, 1
                  %s315 = sphi %s286, %s286
                  %s316 = sphi %s279, %s279
                $region91: #{transformer_forward.12} parent=87 // loop_header_branch
                  %313 = sbr.rel (%p311) target = $region95
                $region92: #{transformer_forward.12} parent=87 // loop_body
                  _
                $region93: #{transformer_forward.12} parent=87 // loop_footer
                  %s314 = sadd.s32 1, %s310
                $region94: #{transformer_forward.12} parent=87 // loop_footer_branch
                  %309 = sbr.rel target = $region90
                $region95: #{transformer_forward.12} parent=87 // loop_exit
                  _
                %s318 = ssub.s32 16, 1
                loop: start=0, step=1, limit=1
                $region96: #{transformer_forward.12} parent=87 // loop_pre_header
                  _
                $region97: #{transformer_forward.12} parent=87 // loop_header
                  %s320 = sphi 0, %s324
                  %p321 = scmp.ge.s32.totalorder %s320, 1
                  %s325 = sphi %s286, %s286
                  %s326 = sphi %s279, %s279
                $region98: #{transformer_forward.12} parent=87 // loop_header_branch
                  %323 = sbr.rel (%p321) target = $region102
                $region99: #{transformer_forward.12} parent=87 // loop_body
                  %v327 = vld [vmem:[%s325] sm:%s318]
                  %328 = vst [vmem:[%s326] sm:%s318] %v327
                  %v329 = vld [vmem:[%s325 + $0xc] sm:%s318]
                  %330 = vst [vmem:[%s326 + $0x4] sm:%s318] %v329
                $region100: #{transformer_forward.12} parent=87 // loop_footer
                  %s324 = sadd.s32 1, %s320
                $region101: #{transformer_forward.12} parent=87 // loop_footer_branch
                  %319 = sbr.rel target = $region97
                $region102: #{transformer_forward.12} parent=87 // loop_exit
                  _
              $region88: #{transformer_forward.12} parent=72 // pred_fallthru
                _
            $region73: #{transformer_forward.12} parent=68 // pred_fallthru
              _
            // Predicated region
            $region74: #{transformer_forward.12} parent=68 // pred_check
              _
            $region75: #{transformer_forward.12} parent=68 // pred_check_branch
              %292 = sbr.rel (0) target = $region77
            $region76: #{transformer_forward.12} parent=68 // pred_region
              %s294 = ssub.s32 16, 1
              loop: start=0, step=1, limit=1
              $region78: #{transformer_forward.12} parent=76 // loop_pre_header
                _
              $region79: #{transformer_forward.12} parent=76 // loop_header
                %s296 = sphi 0, %s300
                %p297 = scmp.ge.s32.totalorder %s296, 1
                %s301 = sphi %s286, %s286
                %s302 = sphi %s279, %s279
              $region80: #{transformer_forward.12} parent=76 // loop_header_branch
                %299 = sbr.rel (%p297) target = $region84
              $region81: #{transformer_forward.12} parent=76 // loop_body
                %v303 = vld [vmem:[%s301] sm:%s294]
                %304 = vst [vmem:[%s302] sm:%s294] %v303
                %v305 = vld [vmem:[%s301 + $0xc] sm:%s294]
                %306 = vst [vmem:[%s302 + $0x4] sm:%s294] %v305
              $region82: #{transformer_forward.12} parent=76 // loop_footer
                %s300 = sadd.s32 1, %s296
              $region83: #{transformer_forward.12} parent=76 // loop_footer_branch
                %295 = sbr.rel target = $region79
              $region84: #{transformer_forward.12} parent=76 // loop_exit
                _
            $region77: #{transformer_forward.12} parent=68 // pred_fallthru
              _
          $region69: #{transformer_forward.12} parent=64 // pred_fallthru
            _
          %331 = vnop
        $region65: #{transformer_forward.12} parent=15 // pred_fallthru
          _
        // Predicated region
        $region103: #{transformer_forward.12} parent=15 // pred_check
          %p332 = pneg %p146
        $region104: #{transformer_forward.12} parent=15 // pred_check_branch
          %334 = sbr.rel (%p332) target = $region106
        $region105: #{transformer_forward.12} parent=15 // pred_region
          %s335 = sand.u32 %s136, 1
          %s336 = sand.u32 %s136, 1
          %s337 = smul.addr %s336, 8
          %s338 = scalar_lea.vmem [#allocation9], %s337
          %s339 = smul.u32 2, %s28
          %s340 = smul.addr %s339, 3
          %s341 = sadd.s32 2, %s340
          %s342 = smul.addr %s26, 6
          %s343 = sadd.s32 %s341, %s342
          %s344 = smul.addr %s343, 4
          %s345 = scalar_lea.vmem %s4, %s344
          // Predicated region
          $region107: #{transformer_forward.12} parent=105 // pred_check
            _
          $region108: #{transformer_forward.12} parent=105 // pred_check_branch
            %347 = sbr.rel (0) target = $region110
          $region109: #{transformer_forward.12} parent=105 // pred_region
            // Predicated region
            $region111: #{transformer_forward.12} parent=109 // pred_check
              _
            $region112: #{transformer_forward.12} parent=109 // pred_check_branch
              %349 = sbr.rel target = $region114
            $region113: #{transformer_forward.12} parent=109 // pred_region
              // Predicated region
              $region126: #{transformer_forward.12} parent=113 // pred_check
                _
              $region127: #{transformer_forward.12} parent=113 // pred_check_branch
                %367 = sbr.rel (0) target = $region129
              $region128: #{transformer_forward.12} parent=113 // pred_region
                loop: start=0, step=1, limit=1
                $region130: #{transformer_forward.12} parent=128 // loop_pre_header
                  _
                $region131: #{transformer_forward.12} parent=128 // loop_header
                  %s369 = sphi 0, %s373
                  %p370 = scmp.ge.s32.totalorder %s369, 1
                  %s374 = sphi %s345, %s345
                  %s375 = sphi %s338, %s338
                $region132: #{transformer_forward.12} parent=128 // loop_header_branch
                  %372 = sbr.rel (%p370) target = $region136
                $region133: #{transformer_forward.12} parent=128 // loop_body
                  _
                $region134: #{transformer_forward.12} parent=128 // loop_footer
                  %s373 = sadd.s32 1, %s369
                $region135: #{transformer_forward.12} parent=128 // loop_footer_branch
                  %368 = sbr.rel target = $region131
                $region136: #{transformer_forward.12} parent=128 // loop_exit
                  _
                %s377 = ssub.s32 16, 1
                loop: start=0, step=1, limit=1
                $region137: #{transformer_forward.12} parent=128 // loop_pre_header
                  _
                $region138: #{transformer_forward.12} parent=128 // loop_header
                  %s379 = sphi 0, %s383
                  %p380 = scmp.ge.s32.totalorder %s379, 1
                  %s384 = sphi %s345, %s345
                  %s385 = sphi %s338, %s338
                $region139: #{transformer_forward.12} parent=128 // loop_header_branch
                  %382 = sbr.rel (%p380) target = $region143
                $region140: #{transformer_forward.12} parent=128 // loop_body
                  %v386 = vld [vmem:[%s384] sm:%s377]
                  %387 = vst [vmem:[%s385] sm:%s377] %v386
                  %v388 = vld [vmem:[%s384 + $0xc] sm:%s377]
                  %389 = vst [vmem:[%s385 + $0x4] sm:%s377] %v388
                $region141: #{transformer_forward.12} parent=128 // loop_footer
                  %s383 = sadd.s32 1, %s379
                $region142: #{transformer_forward.12} parent=128 // loop_footer_branch
                  %378 = sbr.rel target = $region138
                $region143: #{transformer_forward.12} parent=128 // loop_exit
                  _
              $region129: #{transformer_forward.12} parent=113 // pred_fallthru
                _
            $region114: #{transformer_forward.12} parent=109 // pred_fallthru
              _
            // Predicated region
            $region115: #{transformer_forward.12} parent=109 // pred_check
              _
            $region116: #{transformer_forward.12} parent=109 // pred_check_branch
              %351 = sbr.rel (0) target = $region118
            $region117: #{transformer_forward.12} parent=109 // pred_region
              %s353 = ssub.s32 16, 1
              loop: start=0, step=1, limit=1
              $region119: #{transformer_forward.12} parent=117 // loop_pre_header
                _
              $region120: #{transformer_forward.12} parent=117 // loop_header
                %s355 = sphi 0, %s359
                %p356 = scmp.ge.s32.totalorder %s355, 1
                %s360 = sphi %s345, %s345
                %s361 = sphi %s338, %s338
              $region121: #{transformer_forward.12} parent=117 // loop_header_branch
                %358 = sbr.rel (%p356) target = $region125
              $region122: #{transformer_forward.12} parent=117 // loop_body
                %v362 = vld [vmem:[%s360] sm:%s353]
                %363 = vst [vmem:[%s361] sm:%s353] %v362
                %v364 = vld [vmem:[%s360 + $0xc] sm:%s353]
                %365 = vst [vmem:[%s361 + $0x4] sm:%s353] %v364
              $region123: #{transformer_forward.12} parent=117 // loop_footer
                %s359 = sadd.s32 1, %s355
              $region124: #{transformer_forward.12} parent=117 // loop_footer_branch
                %354 = sbr.rel target = $region120
              $region125: #{transformer_forward.12} parent=117 // loop_exit
                _
            $region118: #{transformer_forward.12} parent=109 // pred_fallthru
              _
          $region110: #{transformer_forward.12} parent=105 // pred_fallthru
            _
          %390 = vnop
        $region106: #{transformer_forward.12} parent=15 // pred_fallthru
          _
      $region16: #{transformer_forward.12} parent=5 // pred_fallthru
        _
      %p391 = scmp.le.s32.totalorder 1, %s19
      %p392 = scmp.lt.s32.totalorder %s19, 3
      %p393 = pnand %p391, %p392
      %p394 = pneg %p393
      // Predicated region
      $region144: #{transformer_forward.12} parent=5 // pred_check
        _
      $region145: #{transformer_forward.12} parent=5 // pred_check_branch
        %396 = sbr.rel (%p393) target = $region147
      $region146: #{transformer_forward.12} parent=5 // pred_region
        %s397 = ssub.s32 %s19, 1
        %s398 = sand.u32 %s83, 1
        %s399 = sand.u32 %s83, 1
        %s400 = smul.addr %s399, 8
        %s401 = scalar_lea.vmem [#allocation7], %s400
        // Predicated region
        $region148: #{transformer_forward.12} parent=146 // pred_check
          %p402 = pneg %p96
        $region149: #{transformer_forward.12} parent=146 // pred_check_branch
          %404 = sbr.rel (%p402) target = $region151
        $region150: #{transformer_forward.12} parent=146 // pred_region
          _
        $region151: #{transformer_forward.12} parent=146 // pred_fallthru
          _
        %s405 = sand.u32 %s111, 1
        %s406 = sand.u32 %s111, 1
        %s407 = smul.addr %s406, 8
        %s408 = scalar_lea.vmem [#allocation8], %s407
        // Predicated region
        $region152: #{transformer_forward.12} parent=146 // pred_check
          %p409 = pneg %p124
        $region153: #{transformer_forward.12} parent=146 // pred_check_branch
          %411 = sbr.rel (%p409) target = $region155
        $region154: #{transformer_forward.12} parent=146 // pred_region
          _
        $region155: #{transformer_forward.12} parent=146 // pred_fallthru
          _
        %s412 = sand.u32 %s139, 1
        %s413 = sand.u32 %s139, 1
        %s414 = smul.addr %s413, 8
        %s415 = scalar_lea.vmem [#allocation9], %s414
        // Predicated region
        $region156: #{transformer_forward.12} parent=146 // pred_check
          %p416 = pneg %p152
        $region157: #{transformer_forward.12} parent=146 // pred_check_branch
          %418 = sbr.rel (%p416) target = $region159
        $region158: #{transformer_forward.12} parent=146 // pred_region
          _
        $region159: #{transformer_forward.12} parent=146 // pred_fallthru
          _
        %s419 = smul.u32 2, %s30
        %p420 = scmp.lt.s32.totalorder %s29, 1
        %s421 = scalar_select %p420, %s29, 1
        %p422 = scmp.lt.s32.totalorder %s419, 1
        %s423 = scalar_select %p422, %s419, 1
        %p424 = scmp.lt.s32.totalorder %s31, 0
        %s425 = scalar_select %p424, %s31, 0
        %s426 = sadd.s32 %s425, %s423
        %s427 = smul.addr %s421, 2
        %s428 = sadd.s32 %s426, %s427
        %s429 = smul.addr %s428, 2
        %s430 = scalar_lea.vmem %s1, %s429
        %p431 = pneg %p68
        %p432 = pneg %p65
        %s433 = sand.u32 %s83, 1
        %s434 = sand.u32 %s83, 1
        %s435 = smul.addr %s434, 8
        %s436 = scalar_lea.vmem [#allocation7], %s435
        %p437 = pneg %p96
        %p438 = pneg %p93
        %s439 = sand.u32 %s111, 1
        %s440 = sand.u32 %s111, 1
        %s441 = smul.addr %s440, 8
        %s442 = scalar_lea.vmem [#allocation8], %s441
        %p443 = pneg %p124
        %p444 = pneg %p121
        %s445 = sand.u32 %s139, 1
        %s446 = sand.u32 %s139, 1
        %s447 = smul.addr %s446, 8
        %s448 = scalar_lea.vmem [#allocation9], %s447
        %p449 = pneg %p152
        %p450 = pneg %p149
        %p451 = pneg %p180
        %p452 = pneg %p177
        %s453 = smul.u32 2, %s30
        %p454 = scmp.lt.s32.totalorder %s29, 1
        %s455 = scalar_select %p454, %s29, 1
        %p456 = scmp.lt.s32.totalorder %s453, 1
        %s457 = scalar_select %p456, %s453, 1
        %s458 = smul.addr %s455, 2
        %s459 = sadd.s32 %s457, %s458
        %s460 = smul.addr %s459, 4
        %s461 = scalar_lea.vmem %s5, %s460
        %s462 = smul.u32 2, %s30
        %p463 = scmp.lt.s32.totalorder %s29, 1
        %s464 = scalar_select %p463, %s29, 1
        %p465 = scmp.lt.s32.totalorder %s462, 1
        %s466 = scalar_select %p465, %s462, 1
        %p467 = scmp.lt.s32.totalorder %s31, 0
        %s468 = scalar_select %p467, %s31, 0
        %s469 = sadd.s32 %s468, %s466
        %s470 = smul.addr %s464, 2
        %s471 = sadd.s32 %s469, %s470
        %s472 = smul.addr %s471, 2
        %s473 = scalar_lea.vmem %s1, %s472
        %s474 = smul.u32 2, %s30
        %s475 = smul.u32 2, %s30
        %s476 = smul.u32 2, %s31
        %s477 = smul.u32 2, %s31
        %s478 = smul.u32 2, %s30
        %p479 = scmp.lt.s32.totalorder %s29, 1
        %s480 = scalar_select %p479, %s29, 1
        %p481 = scmp.lt.s32.totalorder %s478, 1
        %s482 = scalar_select %p481, %s478, 1
        %s483 = smul.addr %s480, 2
        %s484 = sadd.s32 %s482, %s483
        %s485 = smul.addr %s484, 4
        %s486 = scalar_lea.vmem %s5, %s485
        %s487 = smul.u32 2, %s30
        %p491 = scmp.eq.s32.totalorder %s31, 0
        // Predicated region
        $region160: #{transformer_forward.12} parent=146 // pred_check
          %p492 = pneg %p491
        $region161: #{transformer_forward.12} parent=146 // pred_check_branch
          %494 = sbr.rel (%p492) target = $region163
        $region162: #{transformer_forward.12} parent=146 // pred_region
          %495 = vst [vmem:[#allocation2] sm:$0xff] -1e+30
          %496 = vst [vmem:[#allocation2 + $0x8] sm:$0xff] -1e+30
          %497 = vst [vmem:[#allocation3] sm:$0xff] 0.0
          %498 = vst [vmem:[#allocation3 + $0x8] sm:$0xff] 0.0
          %499 = vst [vmem:[#allocation4] sm:$0xff] 0.0
          %500 = vst [vmem:[#allocation4 + $0x8] sm:$0xff] 0.0
        $region163: #{transformer_forward.12} parent=146 // pred_fallthru
          _
        %s501 = sadd.s32 %s29, %s30
        %s502 = sadd.s32 %s501, %s31
        %s503 = sld [smem:[#allocation6 + %s502]]
        %p504 = scmp.ne.s32.totalorder %s503, 0
        // Predicated region
        $region164: #{transformer_forward.12} parent=146 // pred_check
          %p505 = pneg %p504
        $region165: #{transformer_forward.12} parent=146 // pred_check_branch
          %507 = sbr.rel (%p505) target = $region167
        $region166: #{transformer_forward.12} parent=146 // pred_region
          %v508 = vld [vmem:[%s473] sm:$0x3]
          %v509 = vld [vmem:[%s473 + $0x2] sm:$0x3]
          %vm510 = vnez %v508
          %vm511 = vnez %v509
          %v512 = vld [vmem:[%s401] sm:$0xf]
          %v513 = vld [vmem:[%s401 + $0x4] sm:$0xf]
          %v514 = vld [vmem:[%s408] sm:$0xf]
          %v515 = vld [vmem:[%s408 + $0x4] sm:$0xf]
          %v516 = vld [vmem:[%s415] sm:$0xf]
          %v517 = vld [vmem:[%s415 + $0x4] sm:$0xf]
          %v520 = vunpack.c.l.b16 %v512
          %v521 = vunpack.c.l.b16 %v513
          %v522 = vpack.c.b16 %v521, %v520
          %v525 = vunpack.c.l.b16 %v514
          %v526 = vunpack.c.l.b16 %v515
          %v527 = vpack.c.b16 %v526, %v525
          %vm528 = vcmask 261120
          %v530 = vsel %vm528, %v522, 0
          %v533 = vsel %vm528, %v527, 0
          %535 = vmatpush.bf16.xpose.msra.mxu0 0
          %536 = vmatpush.bf16.xpose.msra.mxu0 0
          %537 = vmatpush.bf16.xpose.msra.mxu0 0
          %538 = vmatpush.bf16.xpose.msra.mxu0 0
          %539 = vmatpush.bf16.xpose.msra.mxu0 0
          %540 = vmatpush.bf16.xpose.msra.mxu0 0
          %541 = vmatpush.bf16.xpose.msra.mxu0 0
          %542 = vmatpush.bf16.xpose.msra.mxu0 %v533
          %543 = vmatmul.bf16.gmra.mxu0 %v530
          %v544 = vpop.f32.mrf.mxu0
          %v545 = vadd.f32 0.0, %v544
          %v546 = vpop.f32.mrf.mxu0
          %v547 = vadd.f32 0.0, %v546
          %548 = vdwg.mxu0
          %v549 = vmul.f32 %v545, 0.17677669
          %v550 = vmul.f32 %v547, 0.17677669
          %v551 = vsel %vm510, 16843009, 0
          %v552 = vsel %vm511, 16843009, 0
          %v553 = vunpack.c.0.s8 %v551
          %v554 = vunpack.c.0.s8 %v552
          %vm555 = vcmp.ne.s32.totalorder %v553, 0
          %vm556 = vcmp.ne.s32.totalorder %v554, 0
          %v557 = vsel %vm555, %v549, -1e+30
          %v558 = vsel %vm556, %v550, -1e+30
          %v559 = vld [vmem:[#allocation2] sm:$0xff]
          %v560 = vld [vmem:[#allocation2 + $0x8] sm:$0xff]
          %vm561 = vcmask 130048
          %v562 = vsel %vm561, %v557, -inf
          %563 = vmax.xlane.f32.xlu0 %v562
          %v564 = vpop.xlane.xlu0 %563
          %v565 = vsel %vm561, %v558, -inf
          %566 = vmax.xlane.f32.xlu0 %v565
          %v567 = vpop.xlane.xlu0 %566
          %v568 = vmax.f32 %v559, %v564
          %v569 = vmax.f32 %v560, %v567
          %v570 = vsub.f32 %v559, %v568
          %v571 = vsub.f32 %v560, %v569
          %v572 = vmul.f32 %v570, 1.442695
          %v573 = vpow.pop %v572
          %v574 = vmul.f32 %v571, 1.442695
          %v575 = vpow.pop %v574
          %577 = vset.pattern.permute.xlu0 0
          %578 = vperm.xlu0 %577, %v568
          %v579 = vpop.permute.xlu0 %578
          %582 = vset.pattern.permute.xlu0 0
          %583 = vperm.xlu0 %582, %v569
          %v584 = vpop.permute.xlu0 %583
          %v586 = vsub.f32 %v557, %v579
          %v587 = vsub.f32 %v558, %v584
          %v588 = vmul.f32 %v586, 1.442695
          %v589 = vpow.pop %v588
          %v590 = vmul.f32 %v587, 1.442695
          %v591 = vpow.pop %v590
          %v592 = vld [vmem:[#allocation3] sm:$0xff]
          %v593 = vld [vmem:[#allocation3 + $0x8] sm:$0xff]
          %v594 = vmul.f32 %v573, %v592
          %v595 = vmul.f32 %v575, %v593
          %v596 = vsel %vm561, %v589, 0.0
          %597 = vadd.xlane.f32.xlu0 %v596
          %v598 = vpop.xlane.xlu0 %597
          %v599 = vsel %vm561, %v591, 0.0
          %600 = vadd.xlane.f32.xlu0 %v599
          %v601 = vpop.xlane.xlu0 %600
          %v602 = vadd.f32 %v594, %v598
          %v603 = vadd.f32 %v595, %v601
          %vm604 = vcmask 7168
          %605 = vst.msk [vmem:[#allocation3] sm:$0xff] %vm604, %v602
          %606 = vst.msk [vmem:[#allocation3 + $0x8] sm:$0xff] %vm604, %v603
          %v607 = vld [vmem:[#allocation4] sm:$0xff]
          %v608 = vld [vmem:[#allocation4 + $0x8] sm:$0xff]
          %610 = vset.pattern.permute.xlu0 0
          %611 = vperm.xlu0 %610, %v573
          %v612 = vpop.permute.xlu0 %611
          %615 = vset.pattern.permute.xlu0 0
          %616 = vperm.xlu0 %615, %v575
          %v617 = vpop.permute.xlu0 %616
          %v619 = vmul.f32 %v612, %v607
          %v620 = vmul.f32 %v617, %v608
          %v621 = vpack.c.bf16 %v591, %v589
          %v624 = vunpack.c.l.b16 %v516
          %v625 = vunpack.c.l.b16 %v517
          %v626 = vpack.c.b16 %v625, %v624
          %v629 = vsel %vm561, %v621, 0
          %631 = vmatpush.bf16.msra.mxu0 0
          %632 = vmatpush.bf16.msra.mxu0 0
          %633 = vmatpush.bf16.msra.mxu0 0
          %634 = vmatpush.bf16.msra.mxu0 0
          %635 = vmatpush.bf16.msra.mxu0 0
          %636 = vmatpush.bf16.msra.mxu0 0
          %637 = vmatpush.bf16.msra.mxu0 0
          %638 = vmatpush.bf16.msra.mxu0 %v626
          %639 = vmatmul.bf16.gmra.mxu0 %v629
          %v640 = vpop.f32.mrf.mxu0
          %v641 = vadd.f32 0.0, %v640
          %v642 = vpop.f32.mrf.mxu0
          %v643 = vadd.f32 0.0, %v642
          %644 = vdwg.mxu0
          %v645 = vadd.f32 %v619, %v641
          %v646 = vadd.f32 %v620, %v643
          %647 = vst.msk [vmem:[#allocation4] sm:$0xff] %vm528, %v645
          %648 = vst.msk [vmem:[#allocation4 + $0x8] sm:$0xff] %vm528, %v646
          %649 = vst.msk [vmem:[#allocation2] sm:$0xff] %vm604, %v568
          %650 = vst.msk [vmem:[#allocation2 + $0x8] sm:$0xff] %vm604, %v569
          %651 = vrot.lane.b32.xlu0 %v522, 96
          %v652 = vpop.permute.xlu0 %651
          %653 = vrot.lane.b32.xlu0 %v527, 96
          %v654 = vpop.permute.xlu0 %653
          %v656 = vsel %vm528, %v652, 0
          %v659 = vsel %vm528, %v654, 0
          %661 = vmatpush.bf16.xpose.msra.mxu0 0
          %662 = vmatpush.bf16.xpose.msra.mxu0 0
          %663 = vmatpush.bf16.xpose.msra.mxu0 0
          %664 = vmatpush.bf16.xpose.msra.mxu0 0
          %665 = vmatpush.bf16.xpose.msra.mxu0 0
          %666 = vmatpush.bf16.xpose.msra.mxu0 0
          %667 = vmatpush.bf16.xpose.msra.mxu0 0
          %668 = vmatpush.bf16.xpose.msra.mxu0 %v659
          %669 = vmatmul.bf16.gmra.mxu0 %v656
          %v670 = vpop.f32.mrf.mxu0
          %v671 = vadd.f32 0.0, %v670
          %v672 = vpop.f32.mrf.mxu0
          %v673 = vadd.f32 0.0, %v672
          %674 = vdwg.mxu0
          %v675 = vmul.f32 %v671, 0.17677669
          %v676 = vmul.f32 %v673, 0.17677669
          %v677 = vsel %vm555, %v675, -1e+30
          %v678 = vsel %vm556, %v676, -1e+30
          %v679 = vld [vmem:[#allocation2] sm:$0xff]
          %v680 = vld [vmem:[#allocation2 + $0x8] sm:$0xff]
          %v681 = vsel %vm561, %v677, -inf
          %682 = vmax.xlane.f32.xlu0 %v681
          %v683 = vpop.xlane.xlu0 %682
          %v684 = vsel %vm561, %v678, -inf
          %685 = vmax.xlane.f32.xlu0 %v684
          %v686 = vpop.xlane.xlu0 %685
          %v687 = vmax.f32 %v679, %v683
          %v688 = vmax.f32 %v680, %v686
          %v689 = vsub.f32 %v679, %v687
          %v690 = vsub.f32 %v680, %v688
          %v691 = vmul.f32 %v689, 1.442695
          %v692 = vpow.pop %v691
          %v693 = vmul.f32 %v690, 1.442695
          %v694 = vpow.pop %v693
          %696 = vset.pattern.permute.xlu0 1
          %697 = vperm.xlu0 %696, %v687
          %v698 = vpop.permute.xlu0 %697
          %701 = vset.pattern.permute.xlu0 1
          %702 = vperm.xlu0 %701, %v688
          %v703 = vpop.permute.xlu0 %702
          %v705 = vsub.f32 %v677, %v698
          %v706 = vsub.f32 %v678, %v703
          %v707 = vmul.f32 %v705, 1.442695
          %v708 = vpow.pop %v707
          %v709 = vmul.f32 %v706, 1.442695
          %v710 = vpow.pop %v709
          %v711 = vld [vmem:[#allocation3] sm:$0xff]
          %v712 = vld [vmem:[#allocation3 + $0x8] sm:$0xff]
          %v713 = vmul.f32 %v692, %v711
          %v714 = vmul.f32 %v694, %v712
          %v715 = vsel %vm561, %v708, 0.0
          %716 = vadd.xlane.f32.xlu0 %v715
          %v717 = vpop.xlane.xlu0 %716
          %v718 = vsel %vm561, %v710, 0.0
          %719 = vadd.xlane.f32.xlu0 %v718
          %v720 = vpop.xlane.xlu0 %719
          %v721 = vadd.f32 %v713, %v717
          %v722 = vadd.f32 %v714, %v720
          %vm723 = vcmask 15368
          %724 = vst.msk [vmem:[#allocation3] sm:$0xff] %vm723, %v721
          %725 = vst.msk [vmem:[#allocation3 + $0x8] sm:$0xff] %vm723, %v722
          %v726 = vld [vmem:[#allocation4] sm:$0xff]
          %v727 = vld [vmem:[#allocation4 + $0x8] sm:$0xff]
          %729 = vset.pattern.permute.xlu0 1
          %730 = vperm.xlu0 %729, %v692
          %v731 = vpop.permute.xlu0 %730
          %734 = vset.pattern.permute.xlu0 1
          %735 = vperm.xlu0 %734, %v694
          %v736 = vpop.permute.xlu0 %735
          %v738 = vmul.f32 %v731, %v726
          %v739 = vmul.f32 %v736, %v727
          %v740 = vpack.c.bf16 %v710, %v708
          %741 = vrot.lane.b32.xlu0 %v626, 96
          %v742 = vpop.permute.xlu0 %741
          %v745 = vsel %vm561, %v740, 0
          %747 = vmatpush.bf16.msra.mxu0 0
          %748 = vmatpush.bf16.msra.mxu0 0
          %749 = vmatpush.bf16.msra.mxu0 0
          %750 = vmatpush.bf16.msra.mxu0 0
          %751 = vmatpush.bf16.msra.mxu0 0
          %752 = vmatpush.bf16.msra.mxu0 0
          %753 = vmatpush.bf16.msra.mxu0 0
          %754 = vmatpush.bf16.msra.mxu0 %v742
          %755 = vmatmul.bf16.gmra.mxu0 %v745
          %v756 = vpop.f32.mrf.mxu0
          %v757 = vadd.f32 0.0, %v756
          %v758 = vpop.f32.mrf.mxu0
          %v759 = vadd.f32 0.0, %v758
          %760 = vdwg.mxu0
          %763 = vrot.lane.b32.xlu0 %v757, 32
          %v764 = vpop.permute.xlu0 %763
          %765 = vrot.lane.b32.xlu0 %v759, 32
          %v766 = vpop.permute.xlu0 %765
          %v769 = vadd.f32 %v738, %v764
          %v770 = vadd.f32 %v739, %v766
          %vm771 = vcmask 523520
          %772 = vst.msk [vmem:[#allocation4] sm:$0xff] %vm771, %v769
          %773 = vst.msk [vmem:[#allocation4 + $0x8] sm:$0xff] %vm771, %v770
          %774 = vst.msk [vmem:[#allocation2] sm:$0xff] %vm723, %v687
          %775 = vst.msk [vmem:[#allocation2 + $0x8] sm:$0xff] %vm723, %v688
          %776 = vrot.lane.b32.xlu0 %v522, 64
          %v777 = vpop.permute.xlu0 %776
          %778 = vrot.lane.b32.xlu0 %v527, 64
          %v779 = vpop.permute.xlu0 %778
          %v781 = vsel %vm528, %v777, 0
          %v784 = vsel %vm528, %v779, 0
          %786 = vmatpush.bf16.xpose.msra.mxu0 0
          %787 = vmatpush.bf16.xpose.msra.mxu0 0
          %788 = vmatpush.bf16.xpose.msra.mxu0 0
          %789 = vmatpush.bf16.xpose.msra.mxu0 0
          %790 = vmatpush.bf16.xpose.msra.mxu0 0
          %791 = vmatpush.bf16.xpose.msra.mxu0 0
          %792 = vmatpush.bf16.xpose.msra.mxu0 0
          %793 = vmatpush.bf16.xpose.msra.mxu0 %v784
          %794 = vmatmul.bf16.gmra.mxu0 %v781
          %v795 = vpop.f32.mrf.mxu0
          %v796 = vadd.f32 0.0, %v795
          %v797 = vpop.f32.mrf.mxu0
          %v798 = vadd.f32 0.0, %v797
          %799 = vdwg.mxu0
          %v800 = vmul.f32 %v796, 0.17677669
          %v801 = vmul.f32 %v798, 0.17677669
          %v802 = vsel %vm555, %v800, -1e+30
          %v803 = vsel %vm556, %v801, -1e+30
          %v804 = vld [vmem:[#allocation2] sm:$0xff]
          %v805 = vld [vmem:[#allocation2 + $0x8] sm:$0xff]
          %v806 = vsel %vm561, %v802, -inf
          %807 = vmax.xlane.f32.xlu0 %v806
          %v808 = vpop.xlane.xlu0 %807
          %v809 = vsel %vm561, %v803, -inf
          %810 = vmax.xlane.f32.xlu0 %v809
          %v811 = vpop.xlane.xlu0 %810
          %v812 = vmax.f32 %v804, %v808
          %v813 = vmax.f32 %v805, %v811
          %v814 = vsub.f32 %v804, %v812
          %v815 = vsub.f32 %v805, %v813
          %v816 = vmul.f32 %v814, 1.442695
          %v817 = vpow.pop %v816
          %v818 = vmul.f32 %v815, 1.442695
          %v819 = vpow.pop %v818
          %821 = vset.pattern.permute.xlu0 2
          %822 = vperm.xlu0 %821, %v812
          %v823 = vpop.permute.xlu0 %822
          %826 = vset.pattern.permute.xlu0 2
          %827 = vperm.xlu0 %826, %v813
          %v828 = vpop.permute.xlu0 %827
          %v830 = vsub.f32 %v802, %v823
          %v831 = vsub.f32 %v803, %v828
          %v832 = vmul.f32 %v830, 1.442695
          %v833 = vpow.pop %v832
          %v834 = vmul.f32 %v831, 1.442695
          %v835 = vpow.pop %v834
          %v836 = vld [vmem:[#allocation3] sm:$0xff]
          %v837 = vld [vmem:[#allocation3 + $0x8] sm:$0xff]
          %v838 = vmul.f32 %v817, %v836
          %v839 = vmul.f32 %v819, %v837
          %v840 = vsel %vm561, %v833, 0.0
          %841 = vadd.xlane.f32.xlu0 %v840
          %v842 = vpop.xlane.xlu0 %841
          %v843 = vsel %vm561, %v835, 0.0
          %844 = vadd.xlane.f32.xlu0 %v843
          %v845 = vpop.xlane.xlu0 %844
          %v846 = vadd.f32 %v838, %v842
          %v847 = vadd.f32 %v839, %v845
          %vm848 = vcmask 23568
          %849 = vst.msk [vmem:[#allocation3] sm:$0xff] %vm848, %v846
          %850 = vst.msk [vmem:[#allocation3 + $0x8] sm:$0xff] %vm848, %v847
          %v851 = vld [vmem:[#allocation4] sm:$0xff]
          %v852 = vld [vmem:[#allocation4 + $0x8] sm:$0xff]
          %854 = vset.pattern.permute.xlu0 2
          %855 = vperm.xlu0 %854, %v817
          %v856 = vpop.permute.xlu0 %855
          %859 = vset.pattern.permute.xlu0 2
          %860 = vperm.xlu0 %859, %v819
          %v861 = vpop.permute.xlu0 %860
          %v863 = vmul.f32 %v856, %v851
          %v864 = vmul.f32 %v861, %v852
          %v865 = vpack.c.bf16 %v835, %v833
          %866 = vrot.lane.b32.xlu0 %v626, 64
          %v867 = vpop.permute.xlu0 %866
          %v870 = vsel %vm561, %v865, 0
          %872 = vmatpush.bf16.msra.mxu0 0
          %873 = vmatpush.bf16.msra.mxu0 0
          %874 = vmatpush.bf16.msra.mxu0 0
          %875 = vmatpush.bf16.msra.mxu0 0
          %876 = vmatpush.bf16.msra.mxu0 0
          %877 = vmatpush.bf16.msra.mxu0 0
          %878 = vmatpush.bf16.msra.mxu0 0
          %879 = vmatpush.bf16.msra.mxu0 %v867
          %880 = vmatmul.bf16.gmra.mxu0 %v870
          %v881 = vpop.f32.mrf.mxu0
          %v882 = vadd.f32 0.0, %v881
          %v883 = vpop.f32.mrf.mxu0
          %v884 = vadd.f32 0.0, %v883
          %885 = vdwg.mxu0
          %888 = vrot.lane.b32.xlu0 %v882, 64
          %v889 = vpop.permute.xlu0 %888
          %890 = vrot.lane.b32.xlu0 %v884, 64
          %v891 = vpop.permute.xlu0 %890
          %v894 = vadd.f32 %v863, %v889
          %v895 = vadd.f32 %v864, %v891
          %vm896 = vcmask 785920
          %897 = vst.msk [vmem:[#allocation4] sm:$0xff] %vm896, %v894
          %898 = vst.msk [vmem:[#allocation4 + $0x8] sm:$0xff] %vm896, %v895
          %899 = vst.msk [vmem:[#allocation2] sm:$0xff] %vm848, %v812
          %900 = vst.msk [vmem:[#allocation2 + $0x8] sm:$0xff] %vm848, %v813
          %901 = vrot.lane.b32.xlu0 %v522, 32
          %v902 = vpop.permute.xlu0 %901
          %903 = vrot.lane.b32.xlu0 %v527, 32
          %v904 = vpop.permute.xlu0 %903
          %v906 = vsel %vm528, %v902, 0
          %v909 = vsel %vm528, %v904, 0
          %911 = vmatpush.bf16.xpose.msra.mxu0 0
          %912 = vmatpush.bf16.xpose.msra.mxu0 0
          %913 = vmatpush.bf16.xpose.msra.mxu0 0
          %914 = vmatpush.bf16.xpose.msra.mxu0 0
          %915 = vmatpush.bf16.xpose.msra.mxu0 0
          %916 = vmatpush.bf16.xpose.msra.mxu0 0
          %917 = vmatpush.bf16.xpose.msra.mxu0 0
          %918 = vmatpush.bf16.xpose.msra.mxu0 %v909
          %919 = vmatmul.bf16.gmra.mxu0 %v906
          %v920 = vpop.f32.mrf.mxu0
          %v921 = vadd.f32 0.0, %v920
          %v922 = vpop.f32.mrf.mxu0
          %v923 = vadd.f32 0.0, %v922
          %924 = vdwg.mxu0
          %v925 = vmul.f32 %v921, 0.17677669
          %v926 = vmul.f32 %v923, 0.17677669
          %v927 = vsel %vm555, %v925, -1e+30
          %v928 = vsel %vm556, %v926, -1e+30
          %v929 = vld [vmem:[#allocation2] sm:$0xff]
          %v930 = vld [vmem:[#allocation2 + $0x8] sm:$0xff]
          %v931 = vsel %vm561, %v927, -inf
          %932 = vmax.xlane.f32.xlu0 %v931
          %v933 = vpop.xlane.xlu0 %932
          %v934 = vsel %vm561, %v928, -inf
          %935 = vmax.xlane.f32.xlu0 %v934
          %v936 = vpop.xlane.xlu0 %935
          %v937 = vmax.f32 %v929, %v933
          %v938 = vmax.f32 %v930, %v936
          %v939 = vsub.f32 %v929, %v937
          %v940 = vsub.f32 %v930, %v938
          %v941 = vmul.f32 %v939, 1.442695
          %v942 = vpow.pop %v941
          %v943 = vmul.f32 %v940, 1.442695
          %v944 = vpow.pop %v943
          %946 = vset.pattern.permute.xlu0 3
          %947 = vperm.xlu0 %946, %v937
          %v948 = vpop.permute.xlu0 %947
          %951 = vset.pattern.permute.xlu0 3
          %952 = vperm.xlu0 %951, %v938
          %v953 = vpop.permute.xlu0 %952
          %v955 = vsub.f32 %v927, %v948
          %v956 = vsub.f32 %v928, %v953
          %v957 = vmul.f32 %v955, 1.442695
          %v958 = vpow.pop %v957
          %v959 = vmul.f32 %v956, 1.442695
          %v960 = vpow.pop %v959
          %v961 = vld [vmem:[#allocation3] sm:$0xff]
          %v962 = vld [vmem:[#allocation3 + $0x8] sm:$0xff]
          %v963 = vmul.f32 %v942, %v961
          %v964 = vmul.f32 %v944, %v962
          %v965 = vsel %vm561, %v958, 0.0
          %966 = vadd.xlane.f32.xlu0 %v965
          %v967 = vpop.xlane.xlu0 %966
          %v968 = vsel %vm561, %v960, 0.0
          %969 = vadd.xlane.f32.xlu0 %v968
          %v970 = vpop.xlane.xlu0 %969
          %v971 = vadd.f32 %v963, %v967
          %v972 = vadd.f32 %v964, %v970
          %vm973 = vcmask 31768
          %974 = vst.msk [vmem:[#allocation3] sm:$0xff] %vm973, %v971
          %975 = vst.msk [vmem:[#allocation3 + $0x8] sm:$0xff] %vm973, %v972
          %v976 = vld [vmem:[#allocation4] sm:$0xff]
          %v977 = vld [vmem:[#allocation4 + $0x8] sm:$0xff]
          %979 = vset.pattern.permute.xlu0 3
          %980 = vperm.xlu0 %979, %v942
          %v981 = vpop.permute.xlu0 %980
          %984 = vset.pattern.permute.xlu0 3
          %985 = vperm.xlu0 %984, %v944
          %v986 = vpop.permute.xlu0 %985
          %v988 = vmul.f32 %v981, %v976
          %v989 = vmul.f32 %v986, %v977
          %v990 = vpack.c.bf16 %v960, %v958
          %991 = vrot.lane.b32.xlu0 %v626, 32
          %v992 = vpop.permute.xlu0 %991
          %v995 = vsel %vm561, %v990, 0
          %997 = vmatpush.bf16.msra.mxu0 0
          %998 = vmatpush.bf16.msra.mxu0 0
          %999 = vmatpush.bf16.msra.mxu0 0
          %1000 = vmatpush.bf16.msra.mxu0 0
          %1001 = vmatpush.bf16.msra.mxu0 0
          %1002 = vmatpush.bf16.msra.mxu0 0
          %1003 = vmatpush.bf16.msra.mxu0 0
          %1004 = vmatpush.bf16.msra.mxu0 %v992
          %1005 = vmatmul.bf16.gmra.mxu0 %v995
          %v1006 = vpop.f32.mrf.mxu0
          %v1007 = vadd.f32 0.0, %v1006
          %v1008 = vpop.f32.mrf.mxu0
          %v1009 = vadd.f32 0.0, %v1008
          %1010 = vdwg.mxu0
          %1013 = vrot.lane.b32.xlu0 %v1007, 96
          %v1014 = vpop.permute.xlu0 %1013
          %1015 = vrot.lane.b32.xlu0 %v1009, 96
          %v1016 = vpop.permute.xlu0 %1015
          %v1019 = vadd.f32 %v988, %v1014
          %v1020 = vadd.f32 %v989, %v1016
          %vm1021 = vcmask 1048320
          %1022 = vst.msk [vmem:[#allocation4] sm:$0xff] %vm1021, %v1019
          %1023 = vst.msk [vmem:[#allocation4 + $0x8] sm:$0xff] %vm1021, %v1020
          %1024 = vst.msk [vmem:[#allocation2] sm:$0xff] %vm973, %v937
          %1025 = vst.msk [vmem:[#allocation2 + $0x8] sm:$0xff] %vm973, %v938
        $region167: #{transformer_forward.12} parent=146 // pred_fallthru
          _
        // Predicated region
        $region168: #{transformer_forward.12} parent=146 // pred_check
          %p1026 = pneg %p491
        $region169: #{transformer_forward.12} parent=146 // pred_check_branch
          %1028 = sbr.rel (%p1026) target = $region171
        $region170: #{transformer_forward.12} parent=146 // pred_region
          %v1029 = vld [vmem:[#allocation3] sm:$0xff]
          %v1030 = vld [vmem:[#allocation3 + $0x8] sm:$0xff]
          %v1031 = vmax.f32 %v1029, 1e-30
          %v1032 = vmax.f32 %v1030, 1e-30
          %v1033 = vrcp.pop %v1031
          %v1034 = vmul.f32 %v1031, %v1033
          %v1035 = vsub.f32 1.0, %v1034
          %v1036 = vmul.f32 %v1033, %v1035
          %v1037 = vadd.f32 %v1033, %v1036
          %vm1038 = vweird.f32 %v1031
          %vm1039 = vweird.f32 %v1033
          %vm1040 = vmor %vm1038, %vm1039
          %v1041 = vsel %vm1040, %v1033, %v1037
          %v1042 = vand.u32 2147483647, %v1031
          %vm1043 = vcmp.eq.f32.partialorder %v1042, 8.507059e+37
          %v1044 = vand.u32 %v1031, 2147483648
          %v1045 = vor.u32 1.1754944e-38, %v1044
          %v1046 = vsel %vm1043, %v1045, %v1041
          %v1047 = vrcp.pop %v1032
          %v1048 = vmul.f32 %v1032, %v1047
          %v1049 = vsub.f32 1.0, %v1048
          %v1050 = vmul.f32 %v1047, %v1049
          %v1051 = vadd.f32 %v1047, %v1050
          %vm1052 = vweird.f32 %v1032
          %vm1053 = vweird.f32 %v1047
          %vm1054 = vmor %vm1052, %vm1053
          %v1055 = vsel %vm1054, %v1047, %v1051
          %v1056 = vand.u32 2147483647, %v1032
          %vm1057 = vcmp.eq.f32.partialorder %v1056, 8.507059e+37
          %v1058 = vand.u32 %v1032, 2147483648
          %v1059 = vor.u32 1.1754944e-38, %v1058
          %v1060 = vsel %vm1057, %v1059, %v1055
          %v1061 = vld [vmem:[#allocation4] sm:$0xff]
          %v1062 = vld [vmem:[#allocation4 + $0x8] sm:$0xff]
          %1064 = vset.pattern.permute.xlu0 0
          %1065 = vperm.xlu0 %1064, %v1046
          %v1066 = vpop.permute.xlu0 %1065
          %1069 = vset.pattern.permute.xlu0 0
          %1070 = vperm.xlu0 %1069, %v1060
          %v1071 = vpop.permute.xlu0 %1070
          %v1073 = vmul.f32 %v1061, %v1066
          %v1074 = vmul.f32 %v1062, %v1071
          %1075 = vset.pattern.permute.xlu0 1
          %1076 = vperm.xlu0 %1075, %v1046
          %v1077 = vpop.permute.xlu0 %1076
          %1079 = vset.pattern.permute.xlu0 1
          %1080 = vperm.xlu0 %1079, %v1060
          %v1081 = vpop.permute.xlu0 %1080
          %v1083 = vmul.f32 %v1061, %v1077
          %v1084 = vmul.f32 %v1062, %v1081
          %1085 = vset.pattern.permute.xlu0 2
          %1086 = vperm.xlu0 %1085, %v1046
          %v1087 = vpop.permute.xlu0 %1086
          %1089 = vset.pattern.permute.xlu0 2
          %1090 = vperm.xlu0 %1089, %v1060
          %v1091 = vpop.permute.xlu0 %1090
          %v1093 = vmul.f32 %v1061, %v1087
          %v1094 = vmul.f32 %v1062, %v1091
          %1095 = vset.pattern.permute.xlu0 3
          %1096 = vperm.xlu0 %1095, %v1046
          %v1097 = vpop.permute.xlu0 %1096
          %1099 = vset.pattern.permute.xlu0 3
          %1100 = vperm.xlu0 %1099, %v1060
          %v1101 = vpop.permute.xlu0 %1100
          %v1103 = vmul.f32 %v1061, %v1097
          %v1104 = vmul.f32 %v1062, %v1101
          %vm1105 = vcmask 261120
          %v1106 = vsel %vm1105, %v1073, %v1083
          %v1107 = vsel %vm1105, %v1074, %v1084
          %vm1108 = vcmask 523264
          %v1109 = vsel %vm1108, %v1106, %v1093
          %v1110 = vsel %vm1108, %v1107, %v1094
          %vm1111 = vcmask 785408
          %v1112 = vsel %vm1111, %v1109, %v1103
          %v1113 = vsel %vm1111, %v1110, %v1104
          %v1114 = vpack.c.bf16 %v1112, %v1112
          %v1115 = vpack.c.bf16 %v1113, %v1113
          %1116 = vst [vmem:[%s486] sm:$0xf] %v1114
          %1117 = vst [vmem:[%s486 + $0x4] sm:$0xf] %v1115
        $region171: #{transformer_forward.12} parent=146 // pred_fallthru
          _
        %s1118 = smul.u32 2, %s30
        %p1119 = scmp.lt.s32.totalorder %s29, 1
        %s1120 = scalar_select %p1119, %s29, 1
        %p1121 = scmp.lt.s32.totalorder %s1118, 1
        %s1122 = scalar_select %p1121, %s1118, 1
        %s1123 = smul.addr %s1120, 2
        %s1124 = sadd.s32 %s1122, %s1123
        %s1125 = smul.addr %s1124, 4
        %s1126 = scalar_lea.vmem %s5, %s1125
        // Predicated region
        $region172: #{transformer_forward.12} parent=146 // pred_check
          %p1127 = pneg %p177
        $region173: #{transformer_forward.12} parent=146 // pred_check_branch
          %1129 = sbr.rel (%p1127) target = $region175
        $region174: #{transformer_forward.12} parent=146 // pred_region
          %s1130 = smul.u32 2, %s30
        $region175: #{transformer_forward.12} parent=146 // pred_fallthru
          _
      $region147: #{transformer_forward.12} parent=5 // pred_fallthru
        _
      %p1131 = scmp.le.s32.totalorder 2, %s19
      // Predicated region
      $region176: #{transformer_forward.12} parent=5 // pred_check
        %p1132 = pneg %p1131
      $region177: #{transformer_forward.12} parent=5 // pred_check_branch
        %1134 = sbr.rel (%p1132) target = $region179
      $region178: #{transformer_forward.12} parent=5 // pred_region
        %s1135 = ssub.s32 %s19, 2
        // Predicated region
        $region180: #{transformer_forward.12} parent=178 // pred_check
          %p1136 = pneg %p183
        $region181: #{transformer_forward.12} parent=178 // pred_check_branch
          %1138 = sbr.rel (%p1136) target = $region183
        $region182: #{transformer_forward.12} parent=178 // pred_region
          %s1139 = smul.u32 2, %s33
          %p1140 = scmp.lt.s32.totalorder %s32, 1
          %s1141 = scalar_select %p1140, %s32, 1
          %p1142 = scmp.lt.s32.totalorder %s1139, 1
          %s1143 = scalar_select %p1142, %s1139, 1
          %s1144 = smul.addr %s1141, 2
          %s1145 = sadd.s32 %s1143, %s1144
          %s1146 = smul.addr %s1145, 4
          %s1147 = scalar_lea.vmem %s5, %s1146
        $region183: #{transformer_forward.12} parent=178 // pred_fallthru
          _
      $region179: #{transformer_forward.12} parent=5 // pred_fallthru
        _
    $region6: #{transformer_forward.12} parent=1 // loop_footer
      %s23 = sadd.s32 1, %s19
    $region7: #{transformer_forward.12} parent=1 // loop_footer_branch
      %18 = sbr.rel target = $region3
    $region8: #{transformer_forward.12} parent=1 // loop_exit
      _

// kernel: transformer_forward.16
$region0: #{transformer_forward.16}
  #allocation0 [shape = 'u32[]', space=smem, size = 0x4, offset = 0x4, fixed_abs, tag = 'smem constant byte address 0x4 - core index']
  #allocation1 [shape = 'u32[72,128]{1,0:T(1,128)}', space=vmem, size = 0x9000, scoped, tag = 'internal scratch']
  #allocation2 [shape = 'f32[16,384]{1,0:T(8,128)}', space=vmem, size = 0x6000, scoped, tag = 'scratch operand']
  %s0 = inlined_call_operand.vmem [shape: bf16[32,128], index: 0, kind: input, shape index: {}]
  %s1 = inlined_call_operand.hbm [shape: bf16[128,384], index: 1, kind: input, shape index: {}]
  %s2 = inlined_call_operand.vmem [shape: f32[1,384], index: 2, kind: input, shape index: {}]
  %s3 = inlined_call_operand.vmem [shape: bf16[32,384], index: 3, kind: output, shape index: {}]
  %s4 = sld [smem:[#allocation0]]
  $region57: #{transformer_forward.16} parent=0
    _
  %s6 = ssub.s32 1, %s4
  %s7 = scalar_select 0, %s6, %s4
  $region1: #{transformer_forward.16} parent=0
    #allocation3 [shape = 'u8[98304]{0}', space=vmem, size = 0x18000, scoped, tag = 'input window, operand 1, single buffered']
    #allocation4 [shape = 's32[2]{0}', space=sflag, size = 0x8, scoped, tag = 'scoped memory for transformer_forward.16']
    %8 = vsyncpa [#allocation4], 0
    loop: start=0, step=1, limit=4
    $region2: #{transformer_forward.16} parent=1 // loop_pre_header
      _
    $region3: #{transformer_forward.16} parent=1 // loop_header
      %s10 = sphi 0, %s14
      %p11 = scmp.ge.s32.totalorder %s10, 4
      %s17 = sphi 0, %s36
      %s18 = sphi 0, %s32
      %s19 = sphi 0, %s28
      %s20 = sphi 0, %s17
      %s21 = sphi 0, %s18
      %s22 = sphi 0, %s19
      %s23 = sphi 0, %s20
      %s24 = sphi 0, %s21
      %s25 = sphi 0, %s22
      %s41 = sphi 0, %s43
      %s44 = sphi 0, %s41
      %s45 = sphi 0, %s44
      %s61 = sphi 0, %s45
      %s69 = sphi 0, %s71
      %s72 = sphi 0, %s69
      %s73 = sphi 0, %s72
      %s89 = sphi 0, %s73
      %s95 = sphi 0, %s97
      %s98 = sphi 0, %s95
      %s99 = sphi 0, %s98
      %s115 = sphi 0, %s99
      %s123 = sphi 0, %s125
      %s126 = sphi 0, %s123
      %s127 = sphi 0, %s126
      %s143 = sphi 0, %s127
    $region4: #{transformer_forward.16} parent=1 // loop_header_branch
      %13 = sbr.rel (%p11) target = $region8
    $region5: #{transformer_forward.16} parent=1 // loop_body
      %s15 = ssub.s32 %s10, 1
      %s16 = ssub.s32 %s10, 2
      %s26 = sadd.s32 1, %s19
      %p27 = scmp.ge.s32.totalorder %s26, 1
      %s28 = scalar_select %p27, 0, %s26
      %s29 = sadd.s32 1, %s18
      %s30 = scalar_select %p27, %s29, %s18
      %p31 = scmp.ge.s32.totalorder %s30, 1
      %s32 = scalar_select %p31, 0, %s30
      %s33 = sadd.s32 1, %s17
      %s34 = scalar_select %p31, %s33, %s17
      %p35 = scmp.ge.s32.totalorder %s34, 2
      %s36 = scalar_select %p35, 0, %s34
      %s37 = ssub.s32 %s17, %s36
      %s38 = ssub.s32 %s19, %s28
      %s39 = sor.u32 %s37, %s38
      %p40 = scmp.eq.s32.totalorder %s39, 0
      %s42 = sadd.s32 %s41, 1
      %s43 = scalar_select %p40, %s41, %s42
      %p46 = pneg %p40
      %p47 = scmp.eq.s32.totalorder %s10, 1
      %p48 = por %p46, %p47
      %p49 = scmp.ne.s32.totalorder %s41, %s44
      %p50 = scmp.eq.s32.totalorder %s10, 0
      %p51 = por %p49, %p50
      %p52 = scmp.ne.s32.totalorder %s41, %s44
      %p53 = scmp.eq.s32.totalorder %s15, 1
      %p54 = por %p52, %p53
      %p55 = scmp.ne.s32.totalorder %s44, %s45
      %p56 = scmp.eq.s32.totalorder %s15, 0
      %p57 = por %p55, %p56
      %p58 = scmp.ne.s32.totalorder %s44, %s45
      %p59 = scmp.eq.s32.totalorder %s16, 1
      %p60 = por %p58, %p59
      %p62 = scmp.ne.s32.totalorder %s45, %s61
      %p63 = scmp.eq.s32.totalorder %s16, 0
      %p64 = por %p62, %p63
      %s65 = ssub.s32 %s19, %s28
      %s66 = ssub.s32 %s18, %s32
      %s67 = sor.u32 %s65, %s66
      %p68 = scmp.eq.s32.totalorder %s67, 0
      %s70 = sadd.s32 %s69, 1
      %s71 = scalar_select %p68, %s69, %s70
      %p74 = pneg %p68
      %p75 = scmp.eq.s32.totalorder %s10, 1
      %p76 = por %p74, %p75
      %p77 = scmp.ne.s32.totalorder %s69, %s72
      %p78 = scmp.eq.s32.totalorder %s10, 0
      %p79 = por %p77, %p78
      %p80 = scmp.ne.s32.totalorder %s69, %s72
      %p81 = scmp.eq.s32.totalorder %s15, 1
      %p82 = por %p80, %p81
      %p83 = scmp.ne.s32.totalorder %s72, %s73
      %p84 = scmp.eq.s32.totalorder %s15, 0
      %p85 = por %p83, %p84
      %p86 = scmp.ne.s32.totalorder %s72, %s73
      %p87 = scmp.eq.s32.totalorder %s16, 1
      %p88 = por %p86, %p87
      %p90 = scmp.ne.s32.totalorder %s73, %s89
      %p91 = scmp.eq.s32.totalorder %s16, 0
      %p92 = por %p90, %p91
      %s93 = ssub.s32 %s18, %s32
      %p94 = scmp.eq.s32.totalorder %s93, 0
      %s96 = sadd.s32 %s95, 1
      %s97 = scalar_select %p94, %s95, %s96
      %p100 = pneg %p94
      %p101 = scmp.eq.s32.totalorder %s10, 1
      %p102 = por %p100, %p101
      %p103 = scmp.ne.s32.totalorder %s95, %s98
      %p104 = scmp.eq.s32.totalorder %s10, 0
      %p105 = por %p103, %p104
      %p106 = scmp.ne.s32.totalorder %s95, %s98
      %p107 = scmp.eq.s32.totalorder %s15, 1
      %p108 = por %p106, %p107
      %p109 = scmp.ne.s32.totalorder %s98, %s99
      %p110 = scmp.eq.s32.totalorder %s15, 0
      %p111 = por %p109, %p110
      %p112 = scmp.ne.s32.totalorder %s98, %s99
      %p113 = scmp.eq.s32.totalorder %s16, 1
      %p114 = por %p112, %p113
      %p116 = scmp.ne.s32.totalorder %s99, %s115
      %p117 = scmp.eq.s32.totalorder %s16, 0
      %p118 = por %p116, %p117
      %s119 = ssub.s32 %s17, %s36
      %s120 = ssub.s32 %s18, %s32
      %s121 = sor.u32 %s119, %s120
      %p122 = scmp.eq.s32.totalorder %s121, 0
      %s124 = sadd.s32 %s123, 1
      %s125 = scalar_select %p122, %s123, %s124
      %p128 = pneg %p122
      %p129 = scmp.eq.s32.totalorder %s10, 1
      %p130 = por %p128, %p129
      %p131 = scmp.ne.s32.totalorder %s123, %s126
      %p132 = scmp.eq.s32.totalorder %s10, 0
      %p133 = por %p131, %p132
      %p134 = scmp.ne.s32.totalorder %s123, %s126
      %p135 = scmp.eq.s32.totalorder %s15, 1
      %p136 = por %p134, %p135
      %p137 = scmp.ne.s32.totalorder %s126, %s127
      %p138 = scmp.eq.s32.totalorder %s15, 0
      %p139 = por %p137, %p138
      %p140 = scmp.ne.s32.totalorder %s126, %s127
      %p141 = scmp.eq.s32.totalorder %s16, 1
      %p142 = por %p140, %p141
      %p144 = scmp.ne.s32.totalorder %s127, %s143
      %p145 = scmp.eq.s32.totalorder %s16, 0
      %p146 = por %p144, %p145
      %p147 = scmp.le.s32.totalorder 1, %s10
      %p148 = scmp.lt.s32.totalorder %s10, 3
      %p149 = pnand %p147, %p148
      %p150 = pneg %p149
      // Predicated region
      $region9: #{transformer_forward.16} parent=5 // pred_check
        _
      $region10: #{transformer_forward.16} parent=5 // pred_check_branch
        %152 = sbr.rel (%p149) target = $region12
      $region11: #{transformer_forward.16} parent=5 // pred_region
        %s153 = ssub.s32 %s10, 1
        // Predicated region
        $region13: #{transformer_forward.16} parent=11 // pred_check
          %p154 = pneg %p85
        $region14: #{transformer_forward.16} parent=11 // pred_check_branch
          %156 = sbr.rel (%p154) target = $region16
        $region15: #{transformer_forward.16} parent=11 // pred_region
          %s157 = smul.u32 16, %s22
          %s158 = smul.u32 3, %s21
          %160 = vsyncadd [#allocation4], 0
          %s161 = smul.addr %s157, 3
          %s162 = sadd.s32 %s158, %s161
          %s163 = smul.addr %s162, 4
          %s164 = scalar_lea.hbm %s1, %s163
          %s165 = sshll.u32 %s164, 4
          %s166 = int_to_ptr.hbm [resolvable:$true] %s165
          %s167 = sshll.u32 [#allocation3], 4
          %s168 = int_to_ptr.vmem [resolvable:$true] %s167
          %173 = dma.hbm_to_vmem [thread:$0]  %s166, 3072, %s168, [#allocation4], 192, 192, 12
        $region16: #{transformer_forward.16} parent=11 // pred_fallthru
          _
        // Predicated region
        $region17: #{transformer_forward.16} parent=11 // pred_check
          %p174 = pneg %p111
        $region18: #{transformer_forward.16} parent=11 // pred_check_branch
          %176 = sbr.rel (%p174) target = $region20
        $region19: #{transformer_forward.16} parent=11 // pred_region
          %s177 = smul.u32 3, %s21
          %p178 = scmp.lt.s32.totalorder %s177, 2
          %s179 = scalar_select %p178, %s177, 2
          %s180 = scalar_lea.vmem %s2, %s179
          %s181 = smul.u32 3, %s21
        $region20: #{transformer_forward.16} parent=11 // pred_fallthru
          _
      $region12: #{transformer_forward.16} parent=5 // pred_fallthru
        _
      %p182 = scmp.lt.s32.totalorder %s10, 2
      // Predicated region
      $region21: #{transformer_forward.16} parent=5 // pred_check
        %p183 = pneg %p182
      $region22: #{transformer_forward.16} parent=5 // pred_check_branch
        %185 = sbr.rel (%p183) target = $region24
      $region23: #{transformer_forward.16} parent=5 // pred_region
        // Predicated region
        $region25: #{transformer_forward.16} parent=23 // pred_check
          %p186 = pneg %p51
        $region26: #{transformer_forward.16} parent=23 // pred_check_branch
          %188 = sbr.rel (%p186) target = $region28
        $region27: #{transformer_forward.16} parent=23 // pred_region
          %s189 = smul.u32 2, %s17
          %p190 = scmp.lt.s32.totalorder %s189, 3
          %s191 = scalar_select %p190, %s189, 3
          %p192 = scmp.lt.s32.totalorder %s19, 0
          %s193 = scalar_select %p192, %s19, 0
          %s194 = sadd.s32 %s193, %s191
          %s195 = smul.addr %s194, 4
          %s196 = scalar_lea.vmem %s0, %s195
          %s197 = smul.u32 2, %s17
        $region28: #{transformer_forward.16} parent=23 // pred_fallthru
          _
      $region24: #{transformer_forward.16} parent=5 // pred_fallthru
        _
      %p198 = scmp.le.s32.totalorder 1, %s10
      %p199 = scmp.lt.s32.totalorder %s10, 3
      %p200 = pnand %p198, %p199
      %p201 = pneg %p200
      // Predicated region
      $region29: #{transformer_forward.16} parent=5 // pred_check
        _
      $region30: #{transformer_forward.16} parent=5 // pred_check_branch
        %203 = sbr.rel (%p200) target = $region32
      $region31: #{transformer_forward.16} parent=5 // pred_region
        %s204 = ssub.s32 %s10, 1
        // Predicated region
        $region33: #{transformer_forward.16} parent=31 // pred_check
          %p205 = pneg %p85
        $region34: #{transformer_forward.16} parent=31 // pred_check_branch
          %207 = sbr.rel (%p205) target = $region36
        $region35: #{transformer_forward.16} parent=31 // pred_region
          %209 = dma.done [#allocation4], 3072
        $region36: #{transformer_forward.16} parent=31 // pred_fallthru
          _
        %s210 = smul.u32 2, %s20
        %p211 = scmp.lt.s32.totalorder %s210, 3
        %s212 = scalar_select %p211, %s210, 3
        %p213 = scmp.lt.s32.totalorder %s22, 0
        %s214 = scalar_select %p213, %s22, 0
        %s215 = sadd.s32 %s214, %s212
        %s216 = smul.addr %s215, 4
        %s217 = scalar_lea.vmem %s0, %s216
        %p218 = pneg %p57
        %p219 = pneg %p54
        %p220 = pneg %p85
        %p221 = pneg %p82
        %s222 = smul.u32 3, %s21
        %p223 = scmp.lt.s32.totalorder %s222, 2
        %s224 = scalar_select %p223, %s222, 2
        %s225 = scalar_lea.vmem %s2, %s224
        %p226 = pneg %p111
        %p227 = pneg %p108
        %p228 = pneg %p139
        %p229 = pneg %p136
        %s230 = smul.u32 2, %s20
        %s231 = smul.u32 3, %s21
        %p232 = scmp.lt.s32.totalorder %s230, 3
        %s233 = scalar_select %p232, %s230, 3
        %p234 = scmp.lt.s32.totalorder %s231, 2
        %s235 = scalar_select %p234, %s231, 2
        %s236 = smul.addr %s233, 3
        %s237 = sadd.s32 %s235, %s236
        %s238 = smul.addr %s237, 4
        %s239 = scalar_lea.vmem %s3, %s238
        %s240 = smul.u32 2, %s20
        %p241 = scmp.lt.s32.totalorder %s240, 3
        %s242 = scalar_select %p241, %s240, 3
        %p243 = scmp.lt.s32.totalorder %s22, 0
        %s244 = scalar_select %p243, %s22, 0
        %s245 = sadd.s32 %s244, %s242
        %s246 = smul.addr %s245, 4
        %s247 = scalar_lea.vmem %s0, %s246
        %s248 = smul.u32 2, %s20
        %s249 = smul.u32 16, %s22
        %s250 = smul.u32 3, %s21
        %s251 = smul.u32 3, %s21
        %p252 = scmp.lt.s32.totalorder %s251, 2
        %s253 = scalar_select %p252, %s251, 2
        %s254 = scalar_lea.vmem %s2, %s253
        %s255 = smul.u32 3, %s21
        %s256 = smul.u32 2, %s20
        %s257 = smul.u32 3, %s21
        %p258 = scmp.lt.s32.totalorder %s256, 3
        %s259 = scalar_select %p258, %s256, 3
        %p260 = scmp.lt.s32.totalorder %s257, 2
        %s261 = scalar_select %p260, %s257, 2
        %s262 = smul.addr %s259, 3
        %s263 = sadd.s32 %s261, %s262
        %s264 = smul.addr %s263, 4
        %s265 = scalar_lea.vmem %s3, %s264
        %s266 = smul.u32 2, %s20
        %s267 = smul.u32 3, %s21
        %p268 = scmp.eq.s32.totalorder %s22, 0
        // Predicated region
        $region37: #{transformer_forward.16} parent=31 // pred_check
          %p269 = pneg %p268
        $region38: #{transformer_forward.16} parent=31 // pred_check_branch
          %271 = sbr.rel (%p269) target = $region40
        $region39: #{transformer_forward.16} parent=31 // pred_region
          %272 = vst [vmem:[#allocation2] sm:$0xff] 0.0
          %273 = vst [vmem:[#allocation2 + $0x8] sm:$0xff] 0.0
          %274 = vst [vmem:[#allocation2 + $0x10] sm:$0xff] 0.0
          %275 = vst [vmem:[#allocation2 + $0x18] sm:$0xff] 0.0
          %276 = vst [vmem:[#allocation2 + $0x20] sm:$0xff] 0.0
          %277 = vst [vmem:[#allocation2 + $0x28] sm:$0xff] 0.0
        $region40: #{transformer_forward.16} parent=31 // pred_fallthru
          _
        %v278 = vld [vmem:[#allocation2] sm:$0xff]
        %v279 = vld [vmem:[#allocation2 + $0x8] sm:$0xff]
        %v280 = vld [vmem:[#allocation2 + $0x10] sm:$0xff]
        %v281 = vld [vmem:[#allocation2 + $0x18] sm:$0xff]
        %v282 = vld [vmem:[#allocation2 + $0x20] sm:$0xff]
        %v283 = vld [vmem:[#allocation2 + $0x28] sm:$0xff]
        %v284 = vld [vmem:[%s247] sm:$0xf]
        %v285 = vld [vmem:[%s247 + $0x4] sm:$0xf]
        %v286 = vld [vmem:[#allocation3] sm:$0xff]
        %v287 = vld [vmem:[#allocation3 + $0x8] sm:$0xf]
        %v288 = vld [vmem:[#allocation3 + $0xc] sm:$0xff]
        %v289 = vld [vmem:[#allocation3 + $0x14] sm:$0xf]
        %v290 = vld [vmem:[#allocation3 + $0x18] sm:$0xff]
        %v291 = vld [vmem:[#allocation3 + $0x20] sm:$0xf]
        %v292 = vld [vmem:[#allocation3 + $0x24] sm:$0xff]
        %v293 = vld [vmem:[#allocation3 + $0x2c] sm:$0xf]
        %v294 = vld [vmem:[#allocation3 + $0x30] sm:$0xff]
        %v295 = vld [vmem:[#allocation3 + $0x38] sm:$0xf]
        %v296 = vld [vmem:[#allocation3 + $0x3c] sm:$0xff]
        %v297 = vld [vmem:[#allocation3 + $0x44] sm:$0xf]
        %v298 = vld [vmem:[#allocation3 + $0x48] sm:$0xff]
        %v299 = vld [vmem:[#allocation3 + $0x50] sm:$0xf]
        %v300 = vld [vmem:[#allocation3 + $0x54] sm:$0xff]
        %v301 = vld [vmem:[#allocation3 + $0x5c] sm:$0xf]
        %v302 = vld [vmem:[#allocation3 + $0x60] sm:$0xff]
        %v303 = vld [vmem:[#allocation3 + $0x68] sm:$0xf]
        %v304 = vld [vmem:[#allocation3 + $0x6c] sm:$0xff]
        %v305 = vld [vmem:[#allocation3 + $0x74] sm:$0xf]
        %v306 = vld [vmem:[#allocation3 + $0x78] sm:$0xff]
        %v307 = vld [vmem:[#allocation3 + $0x80] sm:$0xf]
        %v308 = vld [vmem:[#allocation3 + $0x84] sm:$0xff]
        %v309 = vld [vmem:[#allocation3 + $0x8c] sm:$0xf]
        %v310 = vld [vmem:[#allocation3 + $0x90] sm:$0xff]
        %v311 = vld [vmem:[#allocation3 + $0x98] sm:$0xf]
        %v312 = vld [vmem:[#allocation3 + $0x9c] sm:$0xff]
        %v313 = vld [vmem:[#allocation3 + $0xa4] sm:$0xf]
        %v314 = vld [vmem:[#allocation3 + $0xa8] sm:$0xff]
        %v315 = vld [vmem:[#allocation3 + $0xb0] sm:$0xf]
        %v316 = vld [vmem:[#allocation3 + $0xb4] sm:$0xff]
        %v317 = vld [vmem:[#allocation3 + $0xbc] sm:$0xf]
        %v320 = vunpack.c.l.b16 %v284
        %v321 = vunpack.c.l.b16 %v285
        %v322 = vpack.c.b16 %v321, %v320
        %v356 = vunpack.c.l.b16 %v286
        %v357 = vunpack.c.h.b16 %v286
        %v358 = vunpack.c.l.b16 %v287
        %v359 = vunpack.c.l.b16 %v288
        %v360 = vunpack.c.h.b16 %v288
        %v361 = vunpack.c.l.b16 %v289
        %v362 = vunpack.c.l.b16 %v290
        %v363 = vunpack.c.h.b16 %v290
        %v364 = vunpack.c.l.b16 %v291
        %v365 = vunpack.c.l.b16 %v292
        %v366 = vunpack.c.h.b16 %v292
        %v367 = vunpack.c.l.b16 %v293
        %v368 = vunpack.c.l.b16 %v294
        %v369 = vunpack.c.h.b16 %v294
        %v370 = vunpack.c.l.b16 %v295
        %v371 = vunpack.c.l.b16 %v296
        %v372 = vunpack.c.h.b16 %v296
        %v373 = vunpack.c.l.b16 %v297
        %v374 = vunpack.c.l.b16 %v298
        %v375 = vunpack.c.h.b16 %v298
        %v376 = vunpack.c.l.b16 %v299
        %v377 = vunpack.c.l.b16 %v300
        %v378 = vunpack.c.h.b16 %v300
        %v379 = vunpack.c.l.b16 %v301
        %v380 = vunpack.c.l.b16 %v302
        %v381 = vunpack.c.h.b16 %v302
        %v382 = vunpack.c.l.b16 %v303
        %v383 = vunpack.c.l.b16 %v304
        %v384 = vunpack.c.h.b16 %v304
        %v385 = vunpack.c.l.b16 %v305
        %v386 = vunpack.c.l.b16 %v306
        %v387 = vunpack.c.h.b16 %v306
        %v388 = vunpack.c.l.b16 %v307
        %v389 = vunpack.c.l.b16 %v308
        %v390 = vunpack.c.h.b16 %v308
        %v391 = vunpack.c.l.b16 %v309
        %v392 = vunpack.c.l.b16 %v310
        %v393 = vunpack.c.h.b16 %v310
        %v394 = vunpack.c.l.b16 %v311
        %v395 = vunpack.c.l.b16 %v312
        %v396 = vunpack.c.h.b16 %v312
        %v397 = vunpack.c.l.b16 %v313
        %v398 = vunpack.c.l.b16 %v314
        %v399 = vunpack.c.h.b16 %v314
        %v400 = vunpack.c.l.b16 %v315
        %v401 = vunpack.c.l.b16 %v316
        %v402 = vunpack.c.h.b16 %v316
        %v403 = vunpack.c.l.b16 %v317
        %v404 = vpack.c.b16 %v359, %v356
        %v405 = vpack.c.b16 %v360, %v357
        %v406 = vpack.c.b16 %v361, %v358
        %v407 = vpack.c.b16 %v365, %v362
        %v408 = vpack.c.b16 %v366, %v363
        %v409 = vpack.c.b16 %v367, %v364
        %v410 = vpack.c.b16 %v371, %v368
        %v411 = vpack.c.b16 %v372, %v369
        %v412 = vpack.c.b16 %v373, %v370
        %v413 = vpack.c.b16 %v377, %v374
        %v414 = vpack.c.b16 %v378, %v375
        %v415 = vpack.c.b16 %v379, %v376
        %v416 = vpack.c.b16 %v383, %v380
        %v417 = vpack.c.b16 %v384, %v381
        %v418 = vpack.c.b16 %v385, %v382
        %v419 = vpack.c.b16 %v389, %v386
        %v420 = vpack.c.b16 %v390, %v387
        %v421 = vpack.c.b16 %v391, %v388
        %v422 = vpack.c.b16 %v395, %v392
        %v423 = vpack.c.b16 %v396, %v393
        %v424 = vpack.c.b16 %v397, %v394
        %v425 = vpack.c.b16 %v401, %v398
        %v426 = vpack.c.b16 %v402, %v399
        %v427 = vpack.c.b16 %v403, %v400
        %452 = vmatpush.bf16.msra.mxu0 %v425
        %453 = vmatpush.bf16.msra.mxu0 %v422
        %454 = vmatpush.bf16.msra.mxu0 %v419
        %455 = vmatpush.bf16.msra.mxu0 %v416
        %456 = vmatpush.bf16.msra.mxu0 %v413
        %457 = vmatpush.bf16.msra.mxu0 %v410
        %458 = vmatpush.bf16.msra.mxu0 %v407
        %459 = vmatpush.bf16.msra.mxu0 %v404
        %460 = vmatmul.bf16.gmra.mxu0 %v322
        %v461 = vpop.f32.mrf.mxu0
        %v462 = vadd.f32 0.0, %v461
        %v463 = vpop.f32.mrf.mxu0
        %v464 = vadd.f32 0.0, %v463
        %465 = vdwg.mxu0
        %466 = vmatpush.bf16.msra.mxu0 %v426
        %467 = vmatpush.bf16.msra.mxu0 %v423
        %468 = vmatpush.bf16.msra.mxu0 %v420
        %469 = vmatpush.bf16.msra.mxu0 %v417
        %470 = vmatpush.bf16.msra.mxu0 %v414
        %471 = vmatpush.bf16.msra.mxu0 %v411
        %472 = vmatpush.bf16.msra.mxu0 %v408
        %473 = vmatpush.bf16.msra.mxu0 %v405
        %474 = vmatmul.bf16.gmra.mxu0 %v322
        %v475 = vpop.f32.mrf.mxu0
        %v476 = vadd.f32 0.0, %v475
        %v477 = vpop.f32.mrf.mxu0
        %v478 = vadd.f32 0.0, %v477
        %479 = vdwg.mxu0
        %480 = vmatpush.bf16.msra.mxu0 %v427
        %481 = vmatpush.bf16.msra.mxu0 %v424
        %482 = vmatpush.bf16.msra.mxu0 %v421
        %483 = vmatpush.bf16.msra.mxu0 %v418
        %484 = vmatpush.bf16.msra.mxu0 %v415
        %485 = vmatpush.bf16.msra.mxu0 %v412
        %486 = vmatpush.bf16.msra.mxu0 %v409
        %487 = vmatpush.bf16.msra.mxu0 %v406
        %488 = vmatmul.bf16.gmra.mxu0 %v322
        %v489 = vpop.f32.mrf.mxu0
        %v490 = vadd.f32 0.0, %v489
        %v491 = vpop.f32.mrf.mxu0
        %v492 = vadd.f32 0.0, %v491
        %493 = vdwg.mxu0
        %v494 = vadd.f32 %v278, %v462
        %v495 = vadd.f32 %v279, %v476
        %v496 = vadd.f32 %v280, %v490
        %v497 = vadd.f32 %v281, %v464
        %v498 = vadd.f32 %v282, %v478
        %v499 = vadd.f32 %v283, %v492
        %500 = vst [vmem:[#allocation2] sm:$0xff] %v494
        %501 = vst [vmem:[#allocation2 + $0x8] sm:$0xff] %v495
        %502 = vst [vmem:[#allocation2 + $0x10] sm:$0xff] %v496
        %503 = vst [vmem:[#allocation2 + $0x18] sm:$0xff] %v497
        %504 = vst [vmem:[#allocation2 + $0x20] sm:$0xff] %v498
        %505 = vst [vmem:[#allocation2 + $0x28] sm:$0xff] %v499
        // Predicated region
        $region41: #{transformer_forward.16} parent=31 // pred_check
          %p506 = pneg %p268
        $region42: #{transformer_forward.16} parent=31 // pred_check_branch
          %508 = sbr.rel (%p506) target = $region44
        $region43: #{transformer_forward.16} parent=31 // pred_region
          %v509 = vld [vmem:[#allocation2] sm:$0xff]
          %v510 = vld [vmem:[#allocation2 + $0x8] sm:$0xff]
          %v511 = vld [vmem:[#allocation2 + $0x10] sm:$0xff]
          %v512 = vld [vmem:[#allocation2 + $0x18] sm:$0xff]
          %v513 = vld [vmem:[#allocation2 + $0x20] sm:$0xff]
          %v514 = vld [vmem:[#allocation2 + $0x28] sm:$0xff]
          %v515 = vld [vmem:[%s254] sm:$0x7]
          %v517 = vperm.slane %v515, 0
          %v518 = vperm.slane %v515, 1
          %v519 = vperm.slane %v515, 2
          %v523 = vadd.f32 %v509, %v517
          %v524 = vadd.f32 %v510, %v518
          %v525 = vadd.f32 %v511, %v519
          %v526 = vadd.f32 %v512, %v517
          %v527 = vadd.f32 %v513, %v518
          %v528 = vadd.f32 %v514, %v519
          %v529 = vpack.c.bf16 %v524, %v523
          %v530 = vpack.c.bf16 %v525, %v525
          %v531 = vpack.c.bf16 %v527, %v526
          %v532 = vpack.c.bf16 %v528, %v528
          %533 = vst [vmem:[%s265] sm:$0xff] %v529
          %534 = vst [vmem:[%s265 + $0x8] sm:$0xf] %v530
          %535 = vst [vmem:[%s265 + $0xc] sm:$0xff] %v531
          %536 = vst [vmem:[%s265 + $0x14] sm:$0xf] %v532
        $region44: #{transformer_forward.16} parent=31 // pred_fallthru
          _
        %s537 = smul.u32 2, %s20
        %s538 = smul.u32 3, %s21
        %p539 = scmp.lt.s32.totalorder %s537, 3
        %s540 = scalar_select %p539, %s537, 3
        %p541 = scmp.lt.s32.totalorder %s538, 2
        %s542 = scalar_select %p541, %s538, 2
        %s543 = smul.addr %s540, 3
        %s544 = sadd.s32 %s542, %s543
        %s545 = smul.addr %s544, 4
        %s546 = scalar_lea.vmem %s3, %s545
        // Predicated region
        $region45: #{transformer_forward.16} parent=31 // pred_check
          %p547 = pneg %p136
        $region46: #{transformer_forward.16} parent=31 // pred_check_branch
          %549 = sbr.rel (%p547) target = $region48
        $region47: #{transformer_forward.16} parent=31 // pred_region
          %s550 = smul.u32 2, %s20
          %s551 = smul.u32 3, %s21
        $region48: #{transformer_forward.16} parent=31 // pred_fallthru
          _
      $region32: #{transformer_forward.16} parent=5 // pred_fallthru
        _
      %p552 = scmp.le.s32.totalorder 2, %s10
      // Predicated region
      $region49: #{transformer_forward.16} parent=5 // pred_check
        %p553 = pneg %p552
      $region50: #{transformer_forward.16} parent=5 // pred_check_branch
        %555 = sbr.rel (%p553) target = $region52
      $region51: #{transformer_forward.16} parent=5 // pred_region
        %s556 = ssub.s32 %s10, 2
        // Predicated region
        $region53: #{transformer_forward.16} parent=51 // pred_check
          %p557 = pneg %p142
        $region54: #{transformer_forward.16} parent=51 // pred_check_branch
          %559 = sbr.rel (%p557) target = $region56
        $region55: #{transformer_forward.16} parent=51 // pred_region
          %s560 = smul.u32 2, %s23
          %s561 = smul.u32 3, %s24
          %p562 = scmp.lt.s32.totalorder %s560, 3
          %s563 = scalar_select %p562, %s560, 3
          %p564 = scmp.lt.s32.totalorder %s561, 2
          %s565 = scalar_select %p564, %s561, 2
          %s566 = smul.addr %s563, 3
          %s567 = sadd.s32 %s565, %s566
          %s568 = smul.addr %s567, 4
          %s569 = scalar_lea.vmem %s3, %s568
        $region56: #{transformer_forward.16} parent=51 // pred_fallthru
          _
      $region52: #{transformer_forward.16} parent=5 // pred_fallthru
        _
    $region6: #{transformer_forward.16} parent=1 // loop_footer
      %s14 = sadd.s32 1, %s10
    $region7: #{transformer_forward.16} parent=1 // loop_footer_branch
      %9 = sbr.rel target = $region3
    $region8: #{transformer_forward.16} parent=1 // loop_exit
      _
    %570 = vsyncpa [#allocation4], 1
    %s571 = scalar_lea.sflag [#allocation4], 1
    %572 = vsyncpa %s571, 1

// kernel: transformer_forward.15
$region0: #{transformer_forward.15}
  #allocation0 [shape = 'u32[]', space=smem, size = 0x4, offset = 0x4, fixed_abs, tag = 'smem constant byte address 0x4 - core index']
  #allocation1 [shape = 'u32[72,128]{1,0:T(1,128)}', space=vmem, size = 0x9000, scoped, tag = 'internal scratch']
  #allocation2 [shape = 'f32[16,128]{1,0:T(8,128)}', space=vmem, size = 0x2000, scoped, tag = 'scratch operand']
  %s0 = inlined_call_operand.vmem [shape: bf16[32,256], index: 0, kind: input, shape index: {}]
  %s1 = inlined_call_operand.hbm [shape: bf16[256,128], index: 1, kind: input, shape index: {}]
  %s2 = inlined_call_operand.vmem [shape: f32[1,128], index: 2, kind: input, shape index: {}]
  %s3 = inlined_call_operand.vmem [shape: bf16[32,128], index: 3, kind: input, shape index: {}]
  %s4 = inlined_call_operand.vmem [shape: f32[1,128], index: 4, kind: input, shape index: {}]
  %s5 = inlined_call_operand.vmem [shape: f32[1,128], index: 5, kind: input, shape index: {}]
  %s6 = inlined_call_operand.vmem [shape: bf16[32,128], index: 6, kind: output, shape index: {}]
  %s7 = sld [smem:[#allocation0]]
  $region69: #{transformer_forward.15} parent=0
    _
  %s9 = ssub.s32 1, %s7
  %s10 = scalar_select 0, %s9, %s7
  $region1: #{transformer_forward.15} parent=0
    #allocation3 [shape = 'u8[65536]{0}', space=vmem, size = 0x10000, scoped, tag = 'input window, operand 1, single buffered']
    #allocation4 [shape = 's32[2]{0}', space=sflag, size = 0x8, scoped, tag = 'scoped memory for transformer_forward.15']
    %11 = vsyncpa [#allocation4], 0
    loop: start=0, step=1, limit=4
    $region2: #{transformer_forward.15} parent=1 // loop_pre_header
      _
    $region3: #{transformer_forward.15} parent=1 // loop_header
      %s13 = sphi 0, %s17
      %p14 = scmp.ge.s32.totalorder %s13, 4
      %s20 = sphi 0, %s32
      %s21 = sphi 0, %s28
      %s22 = sphi 0, %s20
      %s23 = sphi 0, %s21
      %s24 = sphi 0, %s22
      %s25 = sphi 0, %s23
      %s37 = sphi 0, %s39
      %s40 = sphi 0, %s37
      %s41 = sphi 0, %s40
      %s57 = sphi 0, %s41
      %s63 = sphi 0, %s65
      %s66 = sphi 0, %s63
      %s67 = sphi 0, %s66
      %s83 = sphi 0, %s67
      %s87 = sphi 0, %s87
      %s89 = sphi 0, %s87
      %s90 = sphi 0, %s89
      %s104 = sphi 0, %s90
      %s110 = sphi 0, %s112
      %s113 = sphi 0, %s110
      %s114 = sphi 0, %s113
      %s130 = sphi 0, %s114
      %s134 = sphi 0, %s134
      %s136 = sphi 0, %s134
      %s137 = sphi 0, %s136
      %s151 = sphi 0, %s137
      %s155 = sphi 0, %s155
      %s157 = sphi 0, %s155
      %s158 = sphi 0, %s157
      %s172 = sphi 0, %s158
      %s178 = sphi 0, %s180
      %s181 = sphi 0, %s178
      %s182 = sphi 0, %s181
      %s198 = sphi 0, %s182
    $region4: #{transformer_forward.15} parent=1 // loop_header_branch
      %16 = sbr.rel (%p14) target = $region8
    $region5: #{transformer_forward.15} parent=1 // loop_body
      %s18 = ssub.s32 %s13, 1
      %s19 = ssub.s32 %s13, 2
      %s26 = sadd.s32 1, %s21
      %p27 = scmp.ge.s32.totalorder %s26, 1
      %s28 = scalar_select %p27, 0, %s26
      %s29 = sadd.s32 1, %s20
      %s30 = scalar_select %p27, %s29, %s20
      %p31 = scmp.ge.s32.totalorder %s30, 2
      %s32 = scalar_select %p31, 0, %s30
      %s33 = ssub.s32 %s20, %s32
      %s34 = ssub.s32 %s21, %s28
      %s35 = sor.u32 %s33, %s34
      %p36 = scmp.eq.s32.totalorder %s35, 0
      %s38 = sadd.s32 %s37, 1
      %s39 = scalar_select %p36, %s37, %s38
      %p42 = pneg %p36
      %p43 = scmp.eq.s32.totalorder %s13, 1
      %p44 = por %p42, %p43
      %p45 = scmp.ne.s32.totalorder %s37, %s40
      %p46 = scmp.eq.s32.totalorder %s13, 0
      %p47 = por %p45, %p46
      %p48 = scmp.ne.s32.totalorder %s37, %s40
      %p49 = scmp.eq.s32.totalorder %s18, 1
      %p50 = por %p48, %p49
      %p51 = scmp.ne.s32.totalorder %s40, %s41
      %p52 = scmp.eq.s32.totalorder %s18, 0
      %p53 = por %p51, %p52
      %p54 = scmp.ne.s32.totalorder %s40, %s41
      %p55 = scmp.eq.s32.totalorder %s19, 1
      %p56 = por %p54, %p55
      %p58 = scmp.ne.s32.totalorder %s41, %s57
      %p59 = scmp.eq.s32.totalorder %s19, 0
      %p60 = por %p58, %p59
      %s61 = ssub.s32 %s21, %s28
      %p62 = scmp.eq.s32.totalorder %s61, 0
      %s64 = sadd.s32 %s63, 1
      %s65 = scalar_select %p62, %s63, %s64
      %p68 = pneg %p62
      %p69 = scmp.eq.s32.totalorder %s13, 1
      %p70 = por %p68, %p69
      %p71 = scmp.ne.s32.totalorder %s63, %s66
      %p72 = scmp.eq.s32.totalorder %s13, 0
      %p73 = por %p71, %p72
      %p74 = scmp.ne.s32.totalorder %s63, %s66
      %p75 = scmp.eq.s32.totalorder %s18, 1
      %p76 = por %p74, %p75
      %p77 = scmp.ne.s32.totalorder %s66, %s67
      %p78 = scmp.eq.s32.totalorder %s18, 0
      %p79 = por %p77, %p78
      %p80 = scmp.ne.s32.totalorder %s66, %s67
      %p81 = scmp.eq.s32.totalorder %s19, 1
      %p82 = por %p80, %p81
      %p84 = scmp.ne.s32.totalorder %s67, %s83
      %p85 = scmp.eq.s32.totalorder %s19, 0
      %p86 = por %p84, %p85
      %s88 = sadd.s32 %s87, 1
      %p91 = scmp.eq.s32.totalorder %s13, 1
      %p92 = scmp.ne.s32.totalorder %s87, %s89
      %p93 = scmp.eq.s32.totalorder %s13, 0
      %p94 = por %p92, %p93
      %p95 = scmp.ne.s32.totalorder %s87, %s89
      %p96 = scmp.eq.s32.totalorder %s18, 1
      %p97 = por %p95, %p96
      %p98 = scmp.ne.s32.totalorder %s89, %s90
      %p99 = scmp.eq.s32.totalorder %s18, 0
      %p100 = por %p98, %p99
      %p101 = scmp.ne.s32.totalorder %s89, %s90
      %p102 = scmp.eq.s32.totalorder %s19, 1
      %p103 = por %p101, %p102
      %p105 = scmp.ne.s32.totalorder %s90, %s104
      %p106 = scmp.eq.s32.totalorder %s19, 0
      %p107 = por %p105, %p106
      %s108 = ssub.s32 %s20, %s32
      %p109 = scmp.eq.s32.totalorder %s108, 0
      %s111 = sadd.s32 %s110, 1
      %s112 = scalar_select %p109, %s110, %s111
      %p115 = pneg %p109
      %p116 = scmp.eq.s32.totalorder %s13, 1
      %p117 = por %p115, %p116
      %p118 = scmp.ne.s32.totalorder %s110, %s113
      %p119 = scmp.eq.s32.totalorder %s13, 0
      %p120 = por %p118, %p119
      %p121 = scmp.ne.s32.totalorder %s110, %s113
      %p122 = scmp.eq.s32.totalorder %s18, 1
      %p123 = por %p121, %p122
      %p124 = scmp.ne.s32.totalorder %s113, %s114
      %p125 = scmp.eq.s32.totalorder %s18, 0
      %p126 = por %p124, %p125
      %p127 = scmp.ne.s32.totalorder %s113, %s114
      %p128 = scmp.eq.s32.totalorder %s19, 1
      %p129 = por %p127, %p128
      %p131 = scmp.ne.s32.totalorder %s114, %s130
      %p132 = scmp.eq.s32.totalorder %s19, 0
      %p133 = por %p131, %p132
      %s135 = sadd.s32 %s134, 1
      %p138 = scmp.eq.s32.totalorder %s13, 1
      %p139 = scmp.ne.s32.totalorder %s134, %s136
      %p140 = scmp.eq.s32.totalorder %s13, 0
      %p141 = por %p139, %p140
      %p142 = scmp.ne.s32.totalorder %s134, %s136
      %p143 = scmp.eq.s32.totalorder %s18, 1
      %p144 = por %p142, %p143
      %p145 = scmp.ne.s32.totalorder %s136, %s137
      %p146 = scmp.eq.s32.totalorder %s18, 0
      %p147 = por %p145, %p146
      %p148 = scmp.ne.s32.totalorder %s136, %s137
      %p149 = scmp.eq.s32.totalorder %s19, 1
      %p150 = por %p148, %p149
      %p152 = scmp.ne.s32.totalorder %s137, %s151
      %p153 = scmp.eq.s32.totalorder %s19, 0
      %p154 = por %p152, %p153
      %s156 = sadd.s32 %s155, 1
      %p159 = scmp.eq.s32.totalorder %s13, 1
      %p160 = scmp.ne.s32.totalorder %s155, %s157
      %p161 = scmp.eq.s32.totalorder %s13, 0
      %p162 = por %p160, %p161
      %p163 = scmp.ne.s32.totalorder %s155, %s157
      %p164 = scmp.eq.s32.totalorder %s18, 1
      %p165 = por %p163, %p164
      %p166 = scmp.ne.s32.totalorder %s157, %s158
      %p167 = scmp.eq.s32.totalorder %s18, 0
      %p168 = por %p166, %p167
      %p169 = scmp.ne.s32.totalorder %s157, %s158
      %p170 = scmp.eq.s32.totalorder %s19, 1
      %p171 = por %p169, %p170
      %p173 = scmp.ne.s32.totalorder %s158, %s172
      %p174 = scmp.eq.s32.totalorder %s19, 0
      %p175 = por %p173, %p174
      %s176 = ssub.s32 %s20, %s32
      %p177 = scmp.eq.s32.totalorder %s176, 0
      %s179 = sadd.s32 %s178, 1
      %s180 = scalar_select %p177, %s178, %s179
      %p183 = pneg %p177
      %p184 = scmp.eq.s32.totalorder %s13, 1
      %p185 = por %p183, %p184
      %p186 = scmp.ne.s32.totalorder %s178, %s181
      %p187 = scmp.eq.s32.totalorder %s13, 0
      %p188 = por %p186, %p187
      %p189 = scmp.ne.s32.totalorder %s178, %s181
      %p190 = scmp.eq.s32.totalorder %s18, 1
      %p191 = por %p189, %p190
      %p192 = scmp.ne.s32.totalorder %s181, %s182
      %p193 = scmp.eq.s32.totalorder %s18, 0
      %p194 = por %p192, %p193
      %p195 = scmp.ne.s32.totalorder %s181, %s182
      %p196 = scmp.eq.s32.totalorder %s19, 1
      %p197 = por %p195, %p196
      %p199 = scmp.ne.s32.totalorder %s182, %s198
      %p200 = scmp.eq.s32.totalorder %s19, 0
      %p201 = por %p199, %p200
      %p202 = scmp.le.s32.totalorder 1, %s13
      %p203 = scmp.lt.s32.totalorder %s13, 3
      %p204 = pnand %p202, %p203
      %p205 = pneg %p204
      // Predicated region
      $region9: #{transformer_forward.15} parent=5 // pred_check
        _
      $region10: #{transformer_forward.15} parent=5 // pred_check_branch
        %207 = sbr.rel (%p204) target = $region12
      $region11: #{transformer_forward.15} parent=5 // pred_region
        %s208 = ssub.s32 %s13, 1
        // Predicated region
        $region13: #{transformer_forward.15} parent=11 // pred_check
          %p209 = pneg %p79
        $region14: #{transformer_forward.15} parent=11 // pred_check_branch
          %211 = sbr.rel (%p209) target = $region16
        $region15: #{transformer_forward.15} parent=11 // pred_region
          %s212 = smul.u32 32, %s23
          %214 = vsyncadd [#allocation4], 0
          %s215 = smul.addr %s212, 4
          %s216 = scalar_lea.hbm %s1, %s215
          %s217 = sshll.u32 %s216, 4
          %s218 = int_to_ptr.hbm [resolvable:$true] %s217
          %s219 = sshll.u32 [#allocation3], 4
          %s220 = int_to_ptr.vmem [resolvable:$true] %s219
          %225 = dma.hbm_to_vmem [thread:$0]  %s218, 2048, %s220, [#allocation4], 64, 64, 4
        $region16: #{transformer_forward.15} parent=11 // pred_fallthru
          _
        // Predicated region
        $region17: #{transformer_forward.15} parent=11 // pred_check
          %p226 = pneg %p100
        $region18: #{transformer_forward.15} parent=11 // pred_check_branch
          %228 = sbr.rel (%p226) target = $region20
        $region19: #{transformer_forward.15} parent=11 // pred_region
          _
        $region20: #{transformer_forward.15} parent=11 // pred_fallthru
          _
        // Predicated region
        $region21: #{transformer_forward.15} parent=11 // pred_check
          %p229 = pneg %p147
        $region22: #{transformer_forward.15} parent=11 // pred_check_branch
          %231 = sbr.rel (%p229) target = $region24
        $region23: #{transformer_forward.15} parent=11 // pred_region
          _
        $region24: #{transformer_forward.15} parent=11 // pred_fallthru
          _
        // Predicated region
        $region25: #{transformer_forward.15} parent=11 // pred_check
          %p232 = pneg %p168
        $region26: #{transformer_forward.15} parent=11 // pred_check_branch
          %234 = sbr.rel (%p232) target = $region28
        $region27: #{transformer_forward.15} parent=11 // pred_region
          _
        $region28: #{transformer_forward.15} parent=11 // pred_fallthru
          _
      $region12: #{transformer_forward.15} parent=5 // pred_fallthru
        _
      %p235 = scmp.lt.s32.totalorder %s13, 2
      // Predicated region
      $region29: #{transformer_forward.15} parent=5 // pred_check
        %p236 = pneg %p235
      $region30: #{transformer_forward.15} parent=5 // pred_check_branch
        %238 = sbr.rel (%p236) target = $region32
      $region31: #{transformer_forward.15} parent=5 // pred_region
        // Predicated region
        $region33: #{transformer_forward.15} parent=31 // pred_check
          %p239 = pneg %p47
        $region34: #{transformer_forward.15} parent=31 // pred_check_branch
          %241 = sbr.rel (%p239) target = $region36
        $region35: #{transformer_forward.15} parent=31 // pred_region
          %s242 = smul.u32 2, %s20
          %s243 = smul.u32 2, %s21
          %p244 = scmp.lt.s32.totalorder %s242, 3
          %s245 = scalar_select %p244, %s242, 3
          %p246 = scmp.lt.s32.totalorder %s243, 1
          %s247 = scalar_select %p246, %s243, 1
          %s248 = smul.addr %s245, 2
          %s249 = sadd.s32 %s247, %s248
          %s250 = smul.addr %s249, 4
          %s251 = scalar_lea.vmem %s0, %s250
          %s252 = smul.u32 2, %s20
          %s253 = smul.u32 2, %s21
        $region36: #{transformer_forward.15} parent=31 // pred_fallthru
          _
        // Predicated region
        $region37: #{transformer_forward.15} parent=31 // pred_check
          %p254 = pneg %p120
        $region38: #{transformer_forward.15} parent=31 // pred_check_branch
          %256 = sbr.rel (%p254) target = $region40
        $region39: #{transformer_forward.15} parent=31 // pred_region
          %s257 = smul.u32 2, %s20
          %p258 = scmp.lt.s32.totalorder %s257, 3
          %s259 = scalar_select %p258, %s257, 3
          %s260 = smul.addr %s259, 4
          %s261 = scalar_lea.vmem %s3, %s260
          %s262 = smul.u32 2, %s20
        $region40: #{transformer_forward.15} parent=31 // pred_fallthru
          _
      $region32: #{transformer_forward.15} parent=5 // pred_fallthru
        _
      %p263 = scmp.le.s32.totalorder 1, %s13
      %p264 = scmp.lt.s32.totalorder %s13, 3
      %p265 = pnand %p263, %p264
      %p266 = pneg %p265
      // Predicated region
      $region41: #{transformer_forward.15} parent=5 // pred_check
        _
      $region42: #{transformer_forward.15} parent=5 // pred_check_branch
        %268 = sbr.rel (%p265) target = $region44
      $region43: #{transformer_forward.15} parent=5 // pred_region
        %s269 = ssub.s32 %s13, 1
        // Predicated region
        $region45: #{transformer_forward.15} parent=43 // pred_check
          %p270 = pneg %p79
        $region46: #{transformer_forward.15} parent=43 // pred_check_branch
          %272 = sbr.rel (%p270) target = $region48
        $region47: #{transformer_forward.15} parent=43 // pred_region
          %274 = dma.done [#allocation4], 2048
        $region48: #{transformer_forward.15} parent=43 // pred_fallthru
          _
        %s275 = smul.u32 2, %s22
        %s276 = smul.u32 2, %s23
        %p277 = scmp.lt.s32.totalorder %s275, 3
        %s278 = scalar_select %p277, %s275, 3
        %p279 = scmp.lt.s32.totalorder %s276, 1
        %s280 = scalar_select %p279, %s276, 1
        %s281 = smul.addr %s278, 2
        %s282 = sadd.s32 %s280, %s281
        %s283 = smul.addr %s282, 4
        %s284 = scalar_lea.vmem %s0, %s283
        %p285 = pneg %p53
        %p286 = pneg %p50
        %p287 = pneg %p79
        %p288 = pneg %p76
        %p289 = pneg %p100
        %p290 = pneg %p97
        %s291 = smul.u32 2, %s22
        %p292 = scmp.lt.s32.totalorder %s291, 3
        %s293 = scalar_select %p292, %s291, 3
        %s294 = smul.addr %s293, 4
        %s295 = scalar_lea.vmem %s3, %s294
        %p296 = pneg %p126
        %p297 = pneg %p123
        %p298 = pneg %p147
        %p299 = pneg %p144
        %p300 = pneg %p168
        %p301 = pneg %p165
        %p302 = pneg %p194
        %p303 = pneg %p191
        %s304 = smul.u32 2, %s22
        %p305 = scmp.lt.s32.totalorder %s304, 3
        %s306 = scalar_select %p305, %s304, 3
        %s307 = smul.addr %s306, 4
        %s308 = scalar_lea.vmem %s6, %s307
        %s309 = smul.u32 2, %s22
        %s310 = smul.u32 2, %s23
        %p311 = scmp.lt.s32.totalorder %s309, 3
        %s312 = scalar_select %p311, %s309, 3
        %p313 = scmp.lt.s32.totalorder %s310, 1
        %s314 = scalar_select %p313, %s310, 1
        %s315 = smul.addr %s312, 2
        %s316 = sadd.s32 %s314, %s315
        %s317 = smul.addr %s316, 4
        %s318 = scalar_lea.vmem %s0, %s317
        %s319 = smul.u32 2, %s22
        %s320 = smul.u32 2, %s23
        %s321 = smul.u32 32, %s23
        %s322 = smul.u32 2, %s22
        %p323 = scmp.lt.s32.totalorder %s322, 3
        %s324 = scalar_select %p323, %s322, 3
        %s325 = smul.addr %s324, 4
        %s326 = scalar_lea.vmem %s3, %s325
        %s327 = smul.u32 2, %s22
        %s328 = smul.u32 2, %s22
        %p329 = scmp.lt.s32.totalorder %s328, 3
        %s330 = scalar_select %p329, %s328, 3
        %s331 = smul.addr %s330, 4
        %s332 = scalar_lea.vmem %s6, %s331
        %s333 = smul.u32 2, %s22
        %p334 = scmp.eq.s32.totalorder %s23, 0
        // Predicated region
        $region49: #{transformer_forward.15} parent=43 // pred_check
          %p335 = pneg %p334
        $region50: #{transformer_forward.15} parent=43 // pred_check_branch
          %337 = sbr.rel (%p335) target = $region52
        $region51: #{transformer_forward.15} parent=43 // pred_region
          %338 = vst [vmem:[#allocation2] sm:$0xff] 0.0
          %339 = vst [vmem:[#allocation2 + $0x8] sm:$0xff] 0.0
        $region52: #{transformer_forward.15} parent=43 // pred_fallthru
          _
        %v340 = vld [vmem:[#allocation2] sm:$0xff]
        %v341 = vld [vmem:[#allocation2 + $0x8] sm:$0xff]
        %v342 = vld [vmem:[%s318] sm:$0xff]
        %v343 = vld [vmem:[%s318 + $0x8] sm:$0xff]
        %v344 = vld [vmem:[#allocation3] sm:$0xf]
        %v345 = vld [vmem:[#allocation3 + $0x4] sm:$0xf]
        %v346 = vld [vmem:[#allocation3 + $0x8] sm:$0xf]
        %v347 = vld [vmem:[#allocation3 + $0xc] sm:$0xf]
        %v348 = vld [vmem:[#allocation3 + $0x10] sm:$0xf]
        %v349 = vld [vmem:[#allocation3 + $0x14] sm:$0xf]
        %v350 = vld [vmem:[#allocation3 + $0x18] sm:$0xf]
        %v351 = vld [vmem:[#allocation3 + $0x1c] sm:$0xf]
        %v352 = vld [vmem:[#allocation3 + $0x20] sm:$0xf]
        %v353 = vld [vmem:[#allocation3 + $0x24] sm:$0xf]
        %v354 = vld [vmem:[#allocation3 + $0x28] sm:$0xf]
        %v355 = vld [vmem:[#allocation3 + $0x2c] sm:$0xf]
        %v356 = vld [vmem:[#allocation3 + $0x30] sm:$0xf]
        %v357 = vld [vmem:[#allocation3 + $0x34] sm:$0xf]
        %v358 = vld [vmem:[#allocation3 + $0x38] sm:$0xf]
        %v359 = vld [vmem:[#allocation3 + $0x3c] sm:$0xf]
        %v360 = vld [vmem:[#allocation3 + $0x40] sm:$0xf]
        %v361 = vld [vmem:[#allocation3 + $0x44] sm:$0xf]
        %v362 = vld [vmem:[#allocation3 + $0x48] sm:$0xf]
        %v363 = vld [vmem:[#allocation3 + $0x4c] sm:$0xf]
        %v364 = vld [vmem:[#allocation3 + $0x50] sm:$0xf]
        %v365 = vld [vmem:[#allocation3 + $0x54] sm:$0xf]
        %v366 = vld [vmem:[#allocation3 + $0x58] sm:$0xf]
        %v367 = vld [vmem:[#allocation3 + $0x5c] sm:$0xf]
        %v368 = vld [vmem:[#allocation3 + $0x60] sm:$0xf]
        %v369 = vld [vmem:[#allocation3 + $0x64] sm:$0xf]
        %v370 = vld [vmem:[#allocation3 + $0x68] sm:$0xf]
        %v371 = vld [vmem:[#allocation3 + $0x6c] sm:$0xf]
        %v372 = vld [vmem:[#allocation3 + $0x70] sm:$0xf]
        %v373 = vld [vmem:[#allocation3 + $0x74] sm:$0xf]
        %v374 = vld [vmem:[#allocation3 + $0x78] sm:$0xf]
        %v375 = vld [vmem:[#allocation3 + $0x7c] sm:$0xf]
        %v378 = vunpack.c.l.b16 %v342
        %v379 = vunpack.c.h.b16 %v342
        %v380 = vunpack.c.l.b16 %v343
        %v381 = vunpack.c.h.b16 %v343
        %v382 = vpack.c.b16 %v380, %v378
        %v383 = vpack.c.b16 %v381, %v379
        %v418 = vunpack.c.l.b16 %v344
        %v419 = vunpack.c.l.b16 %v345
        %v420 = vunpack.c.l.b16 %v346
        %v421 = vunpack.c.l.b16 %v347
        %v422 = vunpack.c.l.b16 %v348
        %v423 = vunpack.c.l.b16 %v349
        %v424 = vunpack.c.l.b16 %v350
        %v425 = vunpack.c.l.b16 %v351
        %v426 = vunpack.c.l.b16 %v352
        %v427 = vunpack.c.l.b16 %v353
        %v428 = vunpack.c.l.b16 %v354
        %v429 = vunpack.c.l.b16 %v355
        %v430 = vunpack.c.l.b16 %v356
        %v431 = vunpack.c.l.b16 %v357
        %v432 = vunpack.c.l.b16 %v358
        %v433 = vunpack.c.l.b16 %v359
        %v434 = vunpack.c.l.b16 %v360
        %v435 = vunpack.c.l.b16 %v361
        %v436 = vunpack.c.l.b16 %v362
        %v437 = vunpack.c.l.b16 %v363
        %v438 = vunpack.c.l.b16 %v364
        %v439 = vunpack.c.l.b16 %v365
        %v440 = vunpack.c.l.b16 %v366
        %v441 = vunpack.c.l.b16 %v367
        %v442 = vunpack.c.l.b16 %v368
        %v443 = vunpack.c.l.b16 %v369
        %v444 = vunpack.c.l.b16 %v370
        %v445 = vunpack.c.l.b16 %v371
        %v446 = vunpack.c.l.b16 %v372
        %v447 = vunpack.c.l.b16 %v373
        %v448 = vunpack.c.l.b16 %v374
        %v449 = vunpack.c.l.b16 %v375
        %v450 = vpack.c.b16 %v419, %v418
        %v451 = vpack.c.b16 %v421, %v420
        %v452 = vpack.c.b16 %v423, %v422
        %v453 = vpack.c.b16 %v425, %v424
        %v454 = vpack.c.b16 %v427, %v426
        %v455 = vpack.c.b16 %v429, %v428
        %v456 = vpack.c.b16 %v431, %v430
        %v457 = vpack.c.b16 %v433, %v432
        %v458 = vpack.c.b16 %v435, %v434
        %v459 = vpack.c.b16 %v437, %v436
        %v460 = vpack.c.b16 %v439, %v438
        %v461 = vpack.c.b16 %v441, %v440
        %v462 = vpack.c.b16 %v443, %v442
        %v463 = vpack.c.b16 %v445, %v444
        %v464 = vpack.c.b16 %v447, %v446
        %v465 = vpack.c.b16 %v449, %v448
        %482 = vmatpush.bf16.msra.mxu0 %v457
        %483 = vmatpush.bf16.msra.mxu0 %v456
        %484 = vmatpush.bf16.msra.mxu0 %v455
        %485 = vmatpush.bf16.msra.mxu0 %v454
        %486 = vmatpush.bf16.msra.mxu0 %v453
        %487 = vmatpush.bf16.msra.mxu0 %v452
        %488 = vmatpush.bf16.msra.mxu0 %v451
        %489 = vmatpush.bf16.msra.mxu0 %v450
        %490 = vmatmul.bf16.gmra.mxu0 %v382
        %v491 = vpop.f32.mrf.mxu0
        %v492 = vadd.f32 0.0, %v491
        %v493 = vpop.f32.mrf.mxu0
        %v494 = vadd.f32 0.0, %v493
        %495 = vdwg.mxu0
        %496 = vmatpush.bf16.msra.mxu0 %v465
        %497 = vmatpush.bf16.msra.mxu0 %v464
        %498 = vmatpush.bf16.msra.mxu0 %v463
        %499 = vmatpush.bf16.msra.mxu0 %v462
        %500 = vmatpush.bf16.msra.mxu0 %v461
        %501 = vmatpush.bf16.msra.mxu0 %v460
        %502 = vmatpush.bf16.msra.mxu0 %v459
        %503 = vmatpush.bf16.msra.mxu0 %v458
        %504 = vmatmul.bf16.gmra.mxu0 %v383
        %v505 = vpop.f32.mrf.mxu0
        %v506 = vadd.f32 %v492, %v505
        %v507 = vpop.f32.mrf.mxu0
        %v508 = vadd.f32 %v494, %v507
        %509 = vdwg.mxu0
        %v510 = vadd.f32 %v340, %v506
        %v511 = vadd.f32 %v341, %v508
        %512 = vst [vmem:[#allocation2] sm:$0xff] %v510
        %513 = vst [vmem:[#allocation2 + $0x8] sm:$0xff] %v511
        // Predicated region
        $region53: #{transformer_forward.15} parent=43 // pred_check
          %p514 = pneg %p334
        $region54: #{transformer_forward.15} parent=43 // pred_check_branch
          %516 = sbr.rel (%p514) target = $region56
        $region55: #{transformer_forward.15} parent=43 // pred_region
          %v517 = vld [vmem:[#allocation2] sm:$0xff]
          %v518 = vld [vmem:[#allocation2 + $0x8] sm:$0xff]
          %v519 = vld [vmem:[%s2] sm:$0x1]
          %v521 = vperm.slane %v519, 0
          %v523 = vadd.f32 %v517, %v521
          %v524 = vadd.f32 %v518, %v521
          %v525 = vld [vmem:[%s326] sm:$0xf]
          %v526 = vld [vmem:[%s326 + $0x4] sm:$0xf]
          %v527 = vunpack.c.l.bf16 %v525
          %v528 = vunpack.c.l.bf16 %v526
          %v529 = vadd.f32 %v523, %v527
          %v530 = vadd.f32 %v524, %v528
          %531 = vadd.xlane.f32.xlu0 %v529
          %v532 = vpop.xlane.xlu0 %531
          %533 = vadd.xlane.f32.xlu0 %v530
          %v534 = vpop.xlane.xlu0 %533
          %v535 = vrcp.pop 128.0
          %v536 = vmul.f32 128.0, %v535
          %v537 = vsub.f32 1.0, %v536
          %v538 = vmul.f32 %v535, %v537
          %v539 = vadd.f32 %v535, %v538
          %vm540 = vweird.f32 %v535
          %v541 = vsel %vm540, %v535, %v539
          %v542 = vmul.f32 %v532, %v541
          %v543 = vmul.f32 %v534, %v541
          %v544 = vsub.f32 %v529, %v542
          %v545 = vsub.f32 %v530, %v543
          %v546 = vmul.f32 %v544, %v544
          %v547 = vmul.f32 %v545, %v545
          %548 = vadd.xlane.f32.xlu0 %v546
          %v549 = vpop.xlane.xlu0 %548
          %550 = vadd.xlane.f32.xlu0 %v547
          %v551 = vpop.xlane.xlu0 %550
          %v552 = vmul.f32 %v549, %v541
          %v553 = vmul.f32 %v551, %v541
          %v554 = vadd.f32 %v552, 1e-05
          %v555 = vadd.f32 %v553, 1e-05
          %v556 = vrsqrt.pop %v554
          %v557 = vmul.f32 %v556, %v554
          %v558 = vmul.f32 %v557, %v556
          %v559 = vmul.f32 0.5, %v558
          %v560 = vsub.f32 1.5, %v559
          %v561 = vmul.f32 %v556, %v560
          %vm562 = vweird.f32 %v554
          %vm563 = vweird.f32 %v556
          %vm564 = vmor %vm562, %vm563
          %v565 = vsel %vm564, %v556, %v561
          %v566 = vrsqrt.pop %v555
          %v567 = vmul.f32 %v566, %v555
          %v568 = vmul.f32 %v567, %v566
          %v569 = vmul.f32 0.5, %v568
          %v570 = vsub.f32 1.5, %v569
          %v571 = vmul.f32 %v566, %v570
          %vm572 = vweird.f32 %v555
          %vm573 = vweird.f32 %v566
          %vm574 = vmor %vm572, %vm573
          %v575 = vsel %vm574, %v566, %v571
          %v576 = vmul.f32 %v544, %v565
          %v577 = vmul.f32 %v545, %v575
          %v578 = vld [vmem:[%s4] sm:$0x1]
          %v580 = vperm.slane %v578, 0
          %v582 = vmul.f32 %v576, %v580
          %v583 = vmul.f32 %v577, %v580
          %v584 = vld [vmem:[%s5] sm:$0x1]
          %v586 = vperm.slane %v584, 0
          %v588 = vadd.f32 %v582, %v586
          %v589 = vadd.f32 %v583, %v586
          %v590 = vpack.c.bf16 %v588, %v588
          %v591 = vpack.c.bf16 %v589, %v589
          %592 = vst [vmem:[%s332] sm:$0xf] %v590
          %593 = vst [vmem:[%s332 + $0x4] sm:$0xf] %v591
        $region56: #{transformer_forward.15} parent=43 // pred_fallthru
          _
        %s594 = smul.u32 2, %s22
        %p595 = scmp.lt.s32.totalorder %s594, 3
        %s596 = scalar_select %p595, %s594, 3
        %s597 = smul.addr %s596, 4
        %s598 = scalar_lea.vmem %s6, %s597
        // Predicated region
        $region57: #{transformer_forward.15} parent=43 // pred_check
          %p599 = pneg %p191
        $region58: #{transformer_forward.15} parent=43 // pred_check_branch
          %601 = sbr.rel (%p599) target = $region60
        $region59: #{transformer_forward.15} parent=43 // pred_region
          %s602 = smul.u32 2, %s22
        $region60: #{transformer_forward.15} parent=43 // pred_fallthru
          _
      $region44: #{transformer_forward.15} parent=5 // pred_fallthru
        _
      %p603 = scmp.le.s32.totalorder 2, %s13
      // Predicated region
      $region61: #{transformer_forward.15} parent=5 // pred_check
        %p604 = pneg %p603
      $region62: #{transformer_forward.15} parent=5 // pred_check_branch
        %606 = sbr.rel (%p604) target = $region64
      $region63: #{transformer_forward.15} parent=5 // pred_region
        %s607 = ssub.s32 %s13, 2
        // Predicated region
        $region65: #{transformer_forward.15} parent=63 // pred_check
          %p608 = pneg %p197
        $region66: #{transformer_forward.15} parent=63 // pred_check_branch
          %610 = sbr.rel (%p608) target = $region68
        $region67: #{transformer_forward.15} parent=63 // pred_region
          %s611 = smul.u32 2, %s24
          %p612 = scmp.lt.s32.totalorder %s611, 3
          %s613 = scalar_select %p612, %s611, 3
          %s614 = smul.addr %s613, 4
          %s615 = scalar_lea.vmem %s6, %s614
        $region68: #{transformer_forward.15} parent=63 // pred_fallthru
          _
      $region64: #{transformer_forward.15} parent=5 // pred_fallthru
        _
    $region6: #{transformer_forward.15} parent=1 // loop_footer
      %s17 = sadd.s32 1, %s13
    $region7: #{transformer_forward.15} parent=1 // loop_footer_branch
      %12 = sbr.rel target = $region3
    $region8: #{transformer_forward.15} parent=1 // loop_exit
      _
    %616 = vsyncpa [#allocation4], 1
    %s617 = scalar_lea.sflag [#allocation4], 1
    %618 = vsyncpa %s617, 1

// kernel: transformer_forward.18
$region0: #{transformer_forward.18}
  #allocation0 [shape = 'u32[]', space=smem, size = 0x4, offset = 0x4, fixed_abs, tag = 'smem constant byte address 0x4 - core index']
  #allocation1 [shape = 'u32[72,128]{1,0:T(1,128)}', space=vmem, size = 0x9000, scoped, tag = 'internal scratch']
  #allocation2 [shape = 'f32[16,128]{1,0:T(8,128)}', space=vmem, size = 0x2000, scoped, tag = 'scratch operand']
  %s0 = inlined_call_operand.vmem [shape: bf16[32,128], index: 0, kind: input, shape index: {}]
  %s1 = inlined_call_operand.hbm [shape: bf16[128,128], index: 1, kind: input, shape index: {}]
  %s2 = inlined_call_operand.vmem [shape: f32[1,128], index: 2, kind: input, shape index: {}]
  %s3 = inlined_call_operand.vmem [shape: bf16[32,128], index: 3, kind: input, shape index: {}]
  %s4 = inlined_call_operand.vmem [shape: f32[1,128], index: 4, kind: input, shape index: {}]
  %s5 = inlined_call_operand.vmem [shape: f32[1,128], index: 5, kind: input, shape index: {}]
  %s6 = inlined_call_operand.vmem [shape: bf16[32,128], index: 6, kind: output, shape index: {}]
  %s7 = sld [smem:[#allocation0]]
  $region69: #{transformer_forward.18} parent=0
    _
  %s9 = ssub.s32 1, %s7
  %s10 = scalar_select 0, %s9, %s7
  $region1: #{transformer_forward.18} parent=0
    #allocation3 [shape = 'u8[32768]{0}', space=vmem, size = 0x8000, scoped, tag = 'input window, operand 1, single buffered']
    #allocation4 [shape = 's32[2]{0}', space=sflag, size = 0x8, scoped, tag = 'scoped memory for transformer_forward.18']
    %11 = vsyncpa [#allocation4], 0
    loop: start=0, step=1, limit=4
    $region2: #{transformer_forward.18} parent=1 // loop_pre_header
      _
    $region3: #{transformer_forward.18} parent=1 // loop_header
      %s13 = sphi 0, %s17
      %p14 = scmp.ge.s32.totalorder %s13, 4
      %s20 = sphi 0, %s32
      %s21 = sphi 0, %s28
      %s22 = sphi 0, %s20
      %s23 = sphi 0, %s21
      %s24 = sphi 0, %s22
      %s25 = sphi 0, %s23
      %s37 = sphi 0, %s39
      %s40 = sphi 0, %s37
      %s41 = sphi 0, %s40
      %s57 = sphi 0, %s41
      %s63 = sphi 0, %s65
      %s66 = sphi 0, %s63
      %s67 = sphi 0, %s66
      %s83 = sphi 0, %s67
      %s87 = sphi 0, %s87
      %s89 = sphi 0, %s87
      %s90 = sphi 0, %s89
      %s104 = sphi 0, %s90
      %s110 = sphi 0, %s112
      %s113 = sphi 0, %s110
      %s114 = sphi 0, %s113
      %s130 = sphi 0, %s114
      %s134 = sphi 0, %s134
      %s136 = sphi 0, %s134
      %s137 = sphi 0, %s136
      %s151 = sphi 0, %s137
      %s155 = sphi 0, %s155
      %s157 = sphi 0, %s155
      %s158 = sphi 0, %s157
      %s172 = sphi 0, %s158
      %s178 = sphi 0, %s180
      %s181 = sphi 0, %s178
      %s182 = sphi 0, %s181
      %s198 = sphi 0, %s182
    $region4: #{transformer_forward.18} parent=1 // loop_header_branch
      %16 = sbr.rel (%p14) target = $region8
    $region5: #{transformer_forward.18} parent=1 // loop_body
      %s18 = ssub.s32 %s13, 1
      %s19 = ssub.s32 %s13, 2
      %s26 = sadd.s32 1, %s21
      %p27 = scmp.ge.s32.totalorder %s26, 1
      %s28 = scalar_select %p27, 0, %s26
      %s29 = sadd.s32 1, %s20
      %s30 = scalar_select %p27, %s29, %s20
      %p31 = scmp.ge.s32.totalorder %s30, 2
      %s32 = scalar_select %p31, 0, %s30
      %s33 = ssub.s32 %s20, %s32
      %s34 = ssub.s32 %s21, %s28
      %s35 = sor.u32 %s33, %s34
      %p36 = scmp.eq.s32.totalorder %s35, 0
      %s38 = sadd.s32 %s37, 1
      %s39 = scalar_select %p36, %s37, %s38
      %p42 = pneg %p36
      %p43 = scmp.eq.s32.totalorder %s13, 1
      %p44 = por %p42, %p43
      %p45 = scmp.ne.s32.totalorder %s37, %s40
      %p46 = scmp.eq.s32.totalorder %s13, 0
      %p47 = por %p45, %p46
      %p48 = scmp.ne.s32.totalorder %s37, %s40
      %p49 = scmp.eq.s32.totalorder %s18, 1
      %p50 = por %p48, %p49
      %p51 = scmp.ne.s32.totalorder %s40, %s41
      %p52 = scmp.eq.s32.totalorder %s18, 0
      %p53 = por %p51, %p52
      %p54 = scmp.ne.s32.totalorder %s40, %s41
      %p55 = scmp.eq.s32.totalorder %s19, 1
      %p56 = por %p54, %p55
      %p58 = scmp.ne.s32.totalorder %s41, %s57
      %p59 = scmp.eq.s32.totalorder %s19, 0
      %p60 = por %p58, %p59
      %s61 = ssub.s32 %s21, %s28
      %p62 = scmp.eq.s32.totalorder %s61, 0
      %s64 = sadd.s32 %s63, 1
      %s65 = scalar_select %p62, %s63, %s64
      %p68 = pneg %p62
      %p69 = scmp.eq.s32.totalorder %s13, 1
      %p70 = por %p68, %p69
      %p71 = scmp.ne.s32.totalorder %s63, %s66
      %p72 = scmp.eq.s32.totalorder %s13, 0
      %p73 = por %p71, %p72
      %p74 = scmp.ne.s32.totalorder %s63, %s66
      %p75 = scmp.eq.s32.totalorder %s18, 1
      %p76 = por %p74, %p75
      %p77 = scmp.ne.s32.totalorder %s66, %s67
      %p78 = scmp.eq.s32.totalorder %s18, 0
      %p79 = por %p77, %p78
      %p80 = scmp.ne.s32.totalorder %s66, %s67
      %p81 = scmp.eq.s32.totalorder %s19, 1
      %p82 = por %p80, %p81
      %p84 = scmp.ne.s32.totalorder %s67, %s83
      %p85 = scmp.eq.s32.totalorder %s19, 0
      %p86 = por %p84, %p85
      %s88 = sadd.s32 %s87, 1
      %p91 = scmp.eq.s32.totalorder %s13, 1
      %p92 = scmp.ne.s32.totalorder %s87, %s89
      %p93 = scmp.eq.s32.totalorder %s13, 0
      %p94 = por %p92, %p93
      %p95 = scmp.ne.s32.totalorder %s87, %s89
      %p96 = scmp.eq.s32.totalorder %s18, 1
      %p97 = por %p95, %p96
      %p98 = scmp.ne.s32.totalorder %s89, %s90
      %p99 = scmp.eq.s32.totalorder %s18, 0
      %p100 = por %p98, %p99
      %p101 = scmp.ne.s32.totalorder %s89, %s90
      %p102 = scmp.eq.s32.totalorder %s19, 1
      %p103 = por %p101, %p102
      %p105 = scmp.ne.s32.totalorder %s90, %s104
      %p106 = scmp.eq.s32.totalorder %s19, 0
      %p107 = por %p105, %p106
      %s108 = ssub.s32 %s20, %s32
      %p109 = scmp.eq.s32.totalorder %s108, 0
      %s111 = sadd.s32 %s110, 1
      %s112 = scalar_select %p109, %s110, %s111
      %p115 = pneg %p109
      %p116 = scmp.eq.s32.totalorder %s13, 1
      %p117 = por %p115, %p116
      %p118 = scmp.ne.s32.totalorder %s110, %s113
      %p119 = scmp.eq.s32.totalorder %s13, 0
      %p120 = por %p118, %p119
      %p121 = scmp.ne.s32.totalorder %s110, %s113
      %p122 = scmp.eq.s32.totalorder %s18, 1
      %p123 = por %p121, %p122
      %p124 = scmp.ne.s32.totalorder %s113, %s114
      %p125 = scmp.eq.s32.totalorder %s18, 0
      %p126 = por %p124, %p125
      %p127 = scmp.ne.s32.totalorder %s113, %s114
      %p128 = scmp.eq.s32.totalorder %s19, 1
      %p129 = por %p127, %p128
      %p131 = scmp.ne.s32.totalorder %s114, %s130
      %p132 = scmp.eq.s32.totalorder %s19, 0
      %p133 = por %p131, %p132
      %s135 = sadd.s32 %s134, 1
      %p138 = scmp.eq.s32.totalorder %s13, 1
      %p139 = scmp.ne.s32.totalorder %s134, %s136
      %p140 = scmp.eq.s32.totalorder %s13, 0
      %p141 = por %p139, %p140
      %p142 = scmp.ne.s32.totalorder %s134, %s136
      %p143 = scmp.eq.s32.totalorder %s18, 1
      %p144 = por %p142, %p143
      %p145 = scmp.ne.s32.totalorder %s136, %s137
      %p146 = scmp.eq.s32.totalorder %s18, 0
      %p147 = por %p145, %p146
      %p148 = scmp.ne.s32.totalorder %s136, %s137
      %p149 = scmp.eq.s32.totalorder %s19, 1
      %p150 = por %p148, %p149
      %p152 = scmp.ne.s32.totalorder %s137, %s151
      %p153 = scmp.eq.s32.totalorder %s19, 0
      %p154 = por %p152, %p153
      %s156 = sadd.s32 %s155, 1
      %p159 = scmp.eq.s32.totalorder %s13, 1
      %p160 = scmp.ne.s32.totalorder %s155, %s157
      %p161 = scmp.eq.s32.totalorder %s13, 0
      %p162 = por %p160, %p161
      %p163 = scmp.ne.s32.totalorder %s155, %s157
      %p164 = scmp.eq.s32.totalorder %s18, 1
      %p165 = por %p163, %p164
      %p166 = scmp.ne.s32.totalorder %s157, %s158
      %p167 = scmp.eq.s32.totalorder %s18, 0
      %p168 = por %p166, %p167
      %p169 = scmp.ne.s32.totalorder %s157, %s158
      %p170 = scmp.eq.s32.totalorder %s19, 1
      %p171 = por %p169, %p170
      %p173 = scmp.ne.s32.totalorder %s158, %s172
      %p174 = scmp.eq.s32.totalorder %s19, 0
      %p175 = por %p173, %p174
      %s176 = ssub.s32 %s20, %s32
      %p177 = scmp.eq.s32.totalorder %s176, 0
      %s179 = sadd.s32 %s178, 1
      %s180 = scalar_select %p177, %s178, %s179
      %p183 = pneg %p177
      %p184 = scmp.eq.s32.totalorder %s13, 1
      %p185 = por %p183, %p184
      %p186 = scmp.ne.s32.totalorder %s178, %s181
      %p187 = scmp.eq.s32.totalorder %s13, 0
      %p188 = por %p186, %p187
      %p189 = scmp.ne.s32.totalorder %s178, %s181
      %p190 = scmp.eq.s32.totalorder %s18, 1
      %p191 = por %p189, %p190
      %p192 = scmp.ne.s32.totalorder %s181, %s182
      %p193 = scmp.eq.s32.totalorder %s18, 0
      %p194 = por %p192, %p193
      %p195 = scmp.ne.s32.totalorder %s181, %s182
      %p196 = scmp.eq.s32.totalorder %s19, 1
      %p197 = por %p195, %p196
      %p199 = scmp.ne.s32.totalorder %s182, %s198
      %p200 = scmp.eq.s32.totalorder %s19, 0
      %p201 = por %p199, %p200
      %p202 = scmp.le.s32.totalorder 1, %s13
      %p203 = scmp.lt.s32.totalorder %s13, 3
      %p204 = pnand %p202, %p203
      %p205 = pneg %p204
      // Predicated region
      $region9: #{transformer_forward.18} parent=5 // pred_check
        _
      $region10: #{transformer_forward.18} parent=5 // pred_check_branch
        %207 = sbr.rel (%p204) target = $region12
      $region11: #{transformer_forward.18} parent=5 // pred_region
        %s208 = ssub.s32 %s13, 1
        // Predicated region
        $region13: #{transformer_forward.18} parent=11 // pred_check
          %p209 = pneg %p79
        $region14: #{transformer_forward.18} parent=11 // pred_check_branch
          %211 = sbr.rel (%p209) target = $region16
        $region15: #{transformer_forward.18} parent=11 // pred_region
          %s212 = smul.u32 16, %s23
          %214 = vsyncadd [#allocation4], 0
          %s215 = smul.addr %s212, 4
          %s216 = scalar_lea.hbm %s1, %s215
          %s217 = sshll.u32 %s216, 4
          %s218 = int_to_ptr.hbm [resolvable:$true] %s217
          %s219 = sshll.u32 [#allocation3], 4
          %s220 = int_to_ptr.vmem [resolvable:$true] %s219
          %225 = dma.hbm_to_vmem [thread:$0]  %s218, 1024, %s220, [#allocation4], 64, 64, 4
        $region16: #{transformer_forward.18} parent=11 // pred_fallthru
          _
        // Predicated region
        $region17: #{transformer_forward.18} parent=11 // pred_check
          %p226 = pneg %p100
        $region18: #{transformer_forward.18} parent=11 // pred_check_branch
          %228 = sbr.rel (%p226) target = $region20
        $region19: #{transformer_forward.18} parent=11 // pred_region
          _
        $region20: #{transformer_forward.18} parent=11 // pred_fallthru
          _
        // Predicated region
        $region21: #{transformer_forward.18} parent=11 // pred_check
          %p229 = pneg %p147
        $region22: #{transformer_forward.18} parent=11 // pred_check_branch
          %231 = sbr.rel (%p229) target = $region24
        $region23: #{transformer_forward.18} parent=11 // pred_region
          _
        $region24: #{transformer_forward.18} parent=11 // pred_fallthru
          _
        // Predicated region
        $region25: #{transformer_forward.18} parent=11 // pred_check
          %p232 = pneg %p168
        $region26: #{transformer_forward.18} parent=11 // pred_check_branch
          %234 = sbr.rel (%p232) target = $region28
        $region27: #{transformer_forward.18} parent=11 // pred_region
          _
        $region28: #{transformer_forward.18} parent=11 // pred_fallthru
          _
      $region12: #{transformer_forward.18} parent=5 // pred_fallthru
        _
      %p235 = scmp.lt.s32.totalorder %s13, 2
      // Predicated region
      $region29: #{transformer_forward.18} parent=5 // pred_check
        %p236 = pneg %p235
      $region30: #{transformer_forward.18} parent=5 // pred_check_branch
        %238 = sbr.rel (%p236) target = $region32
      $region31: #{transformer_forward.18} parent=5 // pred_region
        // Predicated region
        $region33: #{transformer_forward.18} parent=31 // pred_check
          %p239 = pneg %p47
        $region34: #{transformer_forward.18} parent=31 // pred_check_branch
          %241 = sbr.rel (%p239) target = $region36
        $region35: #{transformer_forward.18} parent=31 // pred_region
          %s242 = smul.u32 2, %s20
          %p243 = scmp.lt.s32.totalorder %s242, 3
          %s244 = scalar_select %p243, %s242, 3
          %p245 = scmp.lt.s32.totalorder %s21, 0
          %s246 = scalar_select %p245, %s21, 0
          %s247 = sadd.s32 %s246, %s244
          %s248 = smul.addr %s247, 4
          %s249 = scalar_lea.vmem %s0, %s248
          %s250 = smul.u32 2, %s20
        $region36: #{transformer_forward.18} parent=31 // pred_fallthru
          _
        // Predicated region
        $region37: #{transformer_forward.18} parent=31 // pred_check
          %p251 = pneg %p120
        $region38: #{transformer_forward.18} parent=31 // pred_check_branch
          %253 = sbr.rel (%p251) target = $region40
        $region39: #{transformer_forward.18} parent=31 // pred_region
          %s254 = smul.u32 2, %s20
          %p255 = scmp.lt.s32.totalorder %s254, 3
          %s256 = scalar_select %p255, %s254, 3
          %s257 = smul.addr %s256, 4
          %s258 = scalar_lea.vmem %s3, %s257
          %s259 = smul.u32 2, %s20
        $region40: #{transformer_forward.18} parent=31 // pred_fallthru
          _
      $region32: #{transformer_forward.18} parent=5 // pred_fallthru
        _
      %p260 = scmp.le.s32.totalorder 1, %s13
      %p261 = scmp.lt.s32.totalorder %s13, 3
      %p262 = pnand %p260, %p261
      %p263 = pneg %p262
      // Predicated region
      $region41: #{transformer_forward.18} parent=5 // pred_check
        _
      $region42: #{transformer_forward.18} parent=5 // pred_check_branch
        %265 = sbr.rel (%p262) target = $region44
      $region43: #{transformer_forward.18} parent=5 // pred_region
        %s266 = ssub.s32 %s13, 1
        // Predicated region
        $region45: #{transformer_forward.18} parent=43 // pred_check
          %p267 = pneg %p79
        $region46: #{transformer_forward.18} parent=43 // pred_check_branch
          %269 = sbr.rel (%p267) target = $region48
        $region47: #{transformer_forward.18} parent=43 // pred_region
          %271 = dma.done [#allocation4], 1024
        $region48: #{transformer_forward.18} parent=43 // pred_fallthru
          _
        %s272 = smul.u32 2, %s22
        %p273 = scmp.lt.s32.totalorder %s272, 3
        %s274 = scalar_select %p273, %s272, 3
        %p275 = scmp.lt.s32.totalorder %s23, 0
        %s276 = scalar_select %p275, %s23, 0
        %s277 = sadd.s32 %s276, %s274
        %s278 = smul.addr %s277, 4
        %s279 = scalar_lea.vmem %s0, %s278
        %p280 = pneg %p53
        %p281 = pneg %p50
        %p282 = pneg %p79
        %p283 = pneg %p76
        %p284 = pneg %p100
        %p285 = pneg %p97
        %s286 = smul.u32 2, %s22
        %p287 = scmp.lt.s32.totalorder %s286, 3
        %s288 = scalar_select %p287, %s286, 3
        %s289 = smul.addr %s288, 4
        %s290 = scalar_lea.vmem %s3, %s289
        %p291 = pneg %p126
        %p292 = pneg %p123
        %p293 = pneg %p147
        %p294 = pneg %p144
        %p295 = pneg %p168
        %p296 = pneg %p165
        %p297 = pneg %p194
        %p298 = pneg %p191
        %s299 = smul.u32 2, %s22
        %p300 = scmp.lt.s32.totalorder %s299, 3
        %s301 = scalar_select %p300, %s299, 3
        %s302 = smul.addr %s301, 4
        %s303 = scalar_lea.vmem %s6, %s302
        %s304 = smul.u32 2, %s22
        %p305 = scmp.lt.s32.totalorder %s304, 3
        %s306 = scalar_select %p305, %s304, 3
        %p307 = scmp.lt.s32.totalorder %s23, 0
        %s308 = scalar_select %p307, %s23, 0
        %s309 = sadd.s32 %s308, %s306
        %s310 = smul.addr %s309, 4
        %s311 = scalar_lea.vmem %s0, %s310
        %s312 = smul.u32 2, %s22
        %s313 = smul.u32 16, %s23
        %s314 = smul.u32 2, %s22
        %p315 = scmp.lt.s32.totalorder %s314, 3
        %s316 = scalar_select %p315, %s314, 3
        %s317 = smul.addr %s316, 4
        %s318 = scalar_lea.vmem %s3, %s317
        %s319 = smul.u32 2, %s22
        %s320 = smul.u32 2, %s22
        %p321 = scmp.lt.s32.totalorder %s320, 3
        %s322 = scalar_select %p321, %s320, 3
        %s323 = smul.addr %s322, 4
        %s324 = scalar_lea.vmem %s6, %s323
        %s325 = smul.u32 2, %s22
        %p326 = scmp.eq.s32.totalorder %s23, 0
        // Predicated region
        $region49: #{transformer_forward.18} parent=43 // pred_check
          %p327 = pneg %p326
        $region50: #{transformer_forward.18} parent=43 // pred_check_branch
          %329 = sbr.rel (%p327) target = $region52
        $region51: #{transformer_forward.18} parent=43 // pred_region
          %330 = vst [vmem:[#allocation2] sm:$0xff] 0.0
          %331 = vst [vmem:[#allocation2 + $0x8] sm:$0xff] 0.0
        $region52: #{transformer_forward.18} parent=43 // pred_fallthru
          _
        %v332 = vld [vmem:[#allocation2] sm:$0xff]
        %v333 = vld [vmem:[#allocation2 + $0x8] sm:$0xff]
        %v334 = vld [vmem:[%s311] sm:$0xf]
        %v335 = vld [vmem:[%s311 + $0x4] sm:$0xf]
        %v336 = vld [vmem:[#allocation3] sm:$0xf]
        %v337 = vld [vmem:[#allocation3 + $0x4] sm:$0xf]
        %v338 = vld [vmem:[#allocation3 + $0x8] sm:$0xf]
        %v339 = vld [vmem:[#allocation3 + $0xc] sm:$0xf]
        %v340 = vld [vmem:[#allocation3 + $0x10] sm:$0xf]
        %v341 = vld [vmem:[#allocation3 + $0x14] sm:$0xf]
        %v342 = vld [vmem:[#allocation3 + $0x18] sm:$0xf]
        %v343 = vld [vmem:[#allocation3 + $0x1c] sm:$0xf]
        %v344 = vld [vmem:[#allocation3 + $0x20] sm:$0xf]
        %v345 = vld [vmem:[#allocation3 + $0x24] sm:$0xf]
        %v346 = vld [vmem:[#allocation3 + $0x28] sm:$0xf]
        %v347 = vld [vmem:[#allocation3 + $0x2c] sm:$0xf]
        %v348 = vld [vmem:[#allocation3 + $0x30] sm:$0xf]
        %v349 = vld [vmem:[#allocation3 + $0x34] sm:$0xf]
        %v350 = vld [vmem:[#allocation3 + $0x38] sm:$0xf]
        %v351 = vld [vmem:[#allocation3 + $0x3c] sm:$0xf]
        %v354 = vunpack.c.l.b16 %v334
        %v355 = vunpack.c.l.b16 %v335
        %v356 = vpack.c.b16 %v355, %v354
        %v374 = vunpack.c.l.b16 %v336
        %v375 = vunpack.c.l.b16 %v337
        %v376 = vunpack.c.l.b16 %v338
        %v377 = vunpack.c.l.b16 %v339
        %v378 = vunpack.c.l.b16 %v340
        %v379 = vunpack.c.l.b16 %v341
        %v380 = vunpack.c.l.b16 %v342
        %v381 = vunpack.c.l.b16 %v343
        %v382 = vunpack.c.l.b16 %v344
        %v383 = vunpack.c.l.b16 %v345
        %v384 = vunpack.c.l.b16 %v346
        %v385 = vunpack.c.l.b16 %v347
        %v386 = vunpack.c.l.b16 %v348
        %v387 = vunpack.c.l.b16 %v349
        %v388 = vunpack.c.l.b16 %v350
        %v389 = vunpack.c.l.b16 %v351
        %v390 = vpack.c.b16 %v375, %v374
        %v391 = vpack.c.b16 %v377, %v376
        %v392 = vpack.c.b16 %v379, %v378
        %v393 = vpack.c.b16 %v381, %v380
        %v394 = vpack.c.b16 %v383, %v382
        %v395 = vpack.c.b16 %v385, %v384
        %v396 = vpack.c.b16 %v387, %v386
        %v397 = vpack.c.b16 %v389, %v388
        %406 = vmatpush.bf16.msra.mxu0 %v397
        %407 = vmatpush.bf16.msra.mxu0 %v396
        %408 = vmatpush.bf16.msra.mxu0 %v395
        %409 = vmatpush.bf16.msra.mxu0 %v394
        %410 = vmatpush.bf16.msra.mxu0 %v393
        %411 = vmatpush.bf16.msra.mxu0 %v392
        %412 = vmatpush.bf16.msra.mxu0 %v391
        %413 = vmatpush.bf16.msra.mxu0 %v390
        %414 = vmatmul.bf16.gmra.mxu0 %v356
        %v415 = vpop.f32.mrf.mxu0
        %v416 = vadd.f32 0.0, %v415
        %v417 = vpop.f32.mrf.mxu0
        %v418 = vadd.f32 0.0, %v417
        %419 = vdwg.mxu0
        %v420 = vadd.f32 %v332, %v416
        %v421 = vadd.f32 %v333, %v418
        %422 = vst [vmem:[#allocation2] sm:$0xff] %v420
        %423 = vst [vmem:[#allocation2 + $0x8] sm:$0xff] %v421
        // Predicated region
        $region53: #{transformer_forward.18} parent=43 // pred_check
          %p424 = pneg %p326
        $region54: #{transformer_forward.18} parent=43 // pred_check_branch
          %426 = sbr.rel (%p424) target = $region56
        $region55: #{transformer_forward.18} parent=43 // pred_region
          %v427 = vld [vmem:[#allocation2] sm:$0xff]
          %v428 = vld [vmem:[#allocation2 + $0x8] sm:$0xff]
          %v429 = vld [vmem:[%s2] sm:$0x1]
          %v431 = vperm.slane %v429, 0
          %v433 = vadd.f32 %v427, %v431
          %v434 = vadd.f32 %v428, %v431
          %v435 = vld [vmem:[%s318] sm:$0xf]
          %v436 = vld [vmem:[%s318 + $0x4] sm:$0xf]
          %v437 = vunpack.c.l.bf16 %v435
          %v438 = vunpack.c.l.bf16 %v436
          %v439 = vadd.f32 %v433, %v437
          %v440 = vadd.f32 %v434, %v438
          %441 = vadd.xlane.f32.xlu0 %v439
          %v442 = vpop.xlane.xlu0 %441
          %443 = vadd.xlane.f32.xlu0 %v440
          %v444 = vpop.xlane.xlu0 %443
          %v445 = vrcp.pop 128.0
          %v446 = vmul.f32 128.0, %v445
          %v447 = vsub.f32 1.0, %v446
          %v448 = vmul.f32 %v445, %v447
          %v449 = vadd.f32 %v445, %v448
          %vm450 = vweird.f32 %v445
          %v451 = vsel %vm450, %v445, %v449
          %v452 = vmul.f32 %v442, %v451
          %v453 = vmul.f32 %v444, %v451
          %v454 = vsub.f32 %v439, %v452
          %v455 = vsub.f32 %v440, %v453
          %v456 = vmul.f32 %v454, %v454
          %v457 = vmul.f32 %v455, %v455
          %458 = vadd.xlane.f32.xlu0 %v456
          %v459 = vpop.xlane.xlu0 %458
          %460 = vadd.xlane.f32.xlu0 %v457
          %v461 = vpop.xlane.xlu0 %460
          %v462 = vmul.f32 %v459, %v451
          %v463 = vmul.f32 %v461, %v451
          %v464 = vadd.f32 %v462, 1e-05
          %v465 = vadd.f32 %v463, 1e-05
          %v466 = vrsqrt.pop %v464
          %v467 = vmul.f32 %v466, %v464
          %v468 = vmul.f32 %v467, %v466
          %v469 = vmul.f32 0.5, %v468
          %v470 = vsub.f32 1.5, %v469
          %v471 = vmul.f32 %v466, %v470
          %vm472 = vweird.f32 %v464
          %vm473 = vweird.f32 %v466
          %vm474 = vmor %vm472, %vm473
          %v475 = vsel %vm474, %v466, %v471
          %v476 = vrsqrt.pop %v465
          %v477 = vmul.f32 %v476, %v465
          %v478 = vmul.f32 %v477, %v476
          %v479 = vmul.f32 0.5, %v478
          %v480 = vsub.f32 1.5, %v479
          %v481 = vmul.f32 %v476, %v480
          %vm482 = vweird.f32 %v465
          %vm483 = vweird.f32 %v476
          %vm484 = vmor %vm482, %vm483
          %v485 = vsel %vm484, %v476, %v481
          %v486 = vmul.f32 %v454, %v475
          %v487 = vmul.f32 %v455, %v485
          %v488 = vld [vmem:[%s4] sm:$0x1]
          %v490 = vperm.slane %v488, 0
          %v492 = vmul.f32 %v486, %v490
          %v493 = vmul.f32 %v487, %v490
          %v494 = vld [vmem:[%s5] sm:$0x1]
          %v496 = vperm.slane %v494, 0
          %v498 = vadd.f32 %v492, %v496
          %v499 = vadd.f32 %v493, %v496
          %v500 = vpack.c.bf16 %v498, %v498
          %v501 = vpack.c.bf16 %v499, %v499
          %502 = vst [vmem:[%s324] sm:$0xf] %v500
          %503 = vst [vmem:[%s324 + $0x4] sm:$0xf] %v501
        $region56: #{transformer_forward.18} parent=43 // pred_fallthru
          _
        %s504 = smul.u32 2, %s22
        %p505 = scmp.lt.s32.totalorder %s504, 3
        %s506 = scalar_select %p505, %s504, 3
        %s507 = smul.addr %s506, 4
        %s508 = scalar_lea.vmem %s6, %s507
        // Predicated region
        $region57: #{transformer_forward.18} parent=43 // pred_check
          %p509 = pneg %p191
        $region58: #{transformer_forward.18} parent=43 // pred_check_branch
          %511 = sbr.rel (%p509) target = $region60
        $region59: #{transformer_forward.18} parent=43 // pred_region
          %s512 = smul.u32 2, %s22
        $region60: #{transformer_forward.18} parent=43 // pred_fallthru
          _
      $region44: #{transformer_forward.18} parent=5 // pred_fallthru
        _
      %p513 = scmp.le.s32.totalorder 2, %s13
      // Predicated region
      $region61: #{transformer_forward.18} parent=5 // pred_check
        %p514 = pneg %p513
      $region62: #{transformer_forward.18} parent=5 // pred_check_branch
        %516 = sbr.rel (%p514) target = $region64
      $region63: #{transformer_forward.18} parent=5 // pred_region
        %s517 = ssub.s32 %s13, 2
        // Predicated region
        $region65: #{transformer_forward.18} parent=63 // pred_check
          %p518 = pneg %p197
        $region66: #{transformer_forward.18} parent=63 // pred_check_branch
          %520 = sbr.rel (%p518) target = $region68
        $region67: #{transformer_forward.18} parent=63 // pred_region
          %s521 = smul.u32 2, %s24
          %p522 = scmp.lt.s32.totalorder %s521, 3
          %s523 = scalar_select %p522, %s521, 3
          %s524 = smul.addr %s523, 4
          %s525 = scalar_lea.vmem %s6, %s524
        $region68: #{transformer_forward.18} parent=63 // pred_fallthru
          _
      $region64: #{transformer_forward.18} parent=5 // pred_fallthru
        _
    $region6: #{transformer_forward.18} parent=1 // loop_footer
      %s17 = sadd.s32 1, %s13
    $region7: #{transformer_forward.18} parent=1 // loop_footer_branch
      %12 = sbr.rel target = $region3
    $region8: #{transformer_forward.18} parent=1 // loop_exit
      _
    %526 = vsyncpa [#allocation4], 1
    %s527 = scalar_lea.sflag [#allocation4], 1
    %528 = vsyncpa %s527, 1

// kernel: transformer_forward.21
$region0: #{transformer_forward.21}
  #allocation0 [shape = 'u32[]', space=smem, size = 0x4, offset = 0x4, fixed_abs, tag = 'smem constant byte address 0x4 - core index']
  #allocation1 [shape = 'u32[72,128]{1,0:T(1,128)}', space=vmem, size = 0x9000, scoped, tag = 'internal scratch']
  #allocation2 [shape = 'f32[16,128]{1,0:T(8,128)}', space=vmem, size = 0x2000, scoped, tag = 'scratch operand']
  %s0 = inlined_call_operand.vmem [shape: bf16[32,128], index: 0, kind: input, shape index: {}]
  %s1 = inlined_call_operand.hbm [shape: bf16[128,128], index: 1, kind: input, shape index: {}]
  %s2 = inlined_call_operand.vmem [shape: f32[1,128], index: 2, kind: input, shape index: {}]
  %s3 = inlined_call_operand.hbm [shape: f32[32,128], index: 3, kind: output, shape index: {}]
  %s4 = sld [smem:[#allocation0]]
  $region57: #{transformer_forward.21} parent=0
    _
  %s6 = ssub.s32 1, %s4
  %s7 = scalar_select 0, %s6, %s4
  $region1: #{transformer_forward.21} parent=0
    #allocation3 [shape = 'u8[32768]{0}', space=vmem, size = 0x8000, scoped, tag = 'input window, operand 1, single buffered']
    #allocation4 [shape = 's32[2]{0}', space=sflag, size = 0x8, scoped, tag = 'scoped memory for transformer_forward.21']
    #allocation5 [shape = 's32[2]{0}', space=sflag, size = 0x8, scoped, tag = 'scoped memory for transformer_forward.21']
    #allocation6 [shape = 'u8[16384]{0}', space=vmem, size = 0x4000, scoped, tag = 'output window, operand 0']
    %8 = vsyncpa [#allocation4], 0
    %9 = vsyncpa [#allocation5], 0
    %s10 = scalar_lea.sflag [#allocation5], 1
    %11 = vsyncpa %s10, 0
    loop: start=0, step=1, limit=4
    $region2: #{transformer_forward.21} parent=1 // loop_pre_header
      _
    $region3: #{transformer_forward.21} parent=1 // loop_header
      %s13 = sphi 0, %s17
      %p14 = scmp.ge.s32.totalorder %s13, 4
      %s20 = sphi 0, %s39
      %s21 = sphi 0, %s35
      %s22 = sphi 0, %s31
      %s23 = sphi 0, %s20
      %s24 = sphi 0, %s21
      %s25 = sphi 0, %s22
      %s26 = sphi 0, %s23
      %s27 = sphi 0, %s24
      %s28 = sphi 0, %s25
      %s44 = sphi 0, %s46
      %s47 = sphi 0, %s44
      %s48 = sphi 0, %s47
      %s64 = sphi 0, %s48
      %s72 = sphi 0, %s74
      %s75 = sphi 0, %s72
      %s76 = sphi 0, %s75
      %s92 = sphi 0, %s76
      %s98 = sphi 0, %s100
      %s101 = sphi 0, %s98
      %s102 = sphi 0, %s101
      %s118 = sphi 0, %s102
      %s126 = sphi 0, %s128
      %s129 = sphi 0, %s126
      %s130 = sphi 0, %s129
      %s146 = sphi 0, %s130
    $region4: #{transformer_forward.21} parent=1 // loop_header_branch
      %16 = sbr.rel (%p14) target = $region8
    $region5: #{transformer_forward.21} parent=1 // loop_body
      %s18 = ssub.s32 %s13, 1
      %s19 = ssub.s32 %s13, 2
      %s29 = sadd.s32 1, %s22
      %p30 = scmp.ge.s32.totalorder %s29, 1
      %s31 = scalar_select %p30, 0, %s29
      %s32 = sadd.s32 1, %s21
      %s33 = scalar_select %p30, %s32, %s21
      %p34 = scmp.ge.s32.totalorder %s33, 1
      %s35 = scalar_select %p34, 0, %s33
      %s36 = sadd.s32 1, %s20
      %s37 = scalar_select %p34, %s36, %s20
      %p38 = scmp.ge.s32.totalorder %s37, 2
      %s39 = scalar_select %p38, 0, %s37
      %s40 = ssub.s32 %s20, %s39
      %s41 = ssub.s32 %s22, %s31
      %s42 = sor.u32 %s40, %s41
      %p43 = scmp.eq.s32.totalorder %s42, 0
      %s45 = sadd.s32 %s44, 1
      %s46 = scalar_select %p43, %s44, %s45
      %p49 = pneg %p43
      %p50 = scmp.eq.s32.totalorder %s13, 1
      %p51 = por %p49, %p50
      %p52 = scmp.ne.s32.totalorder %s44, %s47
      %p53 = scmp.eq.s32.totalorder %s13, 0
      %p54 = por %p52, %p53
      %p55 = scmp.ne.s32.totalorder %s44, %s47
      %p56 = scmp.eq.s32.totalorder %s18, 1
      %p57 = por %p55, %p56
      %p58 = scmp.ne.s32.totalorder %s47, %s48
      %p59 = scmp.eq.s32.totalorder %s18, 0
      %p60 = por %p58, %p59
      %p61 = scmp.ne.s32.totalorder %s47, %s48
      %p62 = scmp.eq.s32.totalorder %s19, 1
      %p63 = por %p61, %p62
      %p65 = scmp.ne.s32.totalorder %s48, %s64
      %p66 = scmp.eq.s32.totalorder %s19, 0
      %p67 = por %p65, %p66
      %s68 = ssub.s32 %s22, %s31
      %s69 = ssub.s32 %s21, %s35
      %s70 = sor.u32 %s68, %s69
      %p71 = scmp.eq.s32.totalorder %s70, 0
      %s73 = sadd.s32 %s72, 1
      %s74 = scalar_select %p71, %s72, %s73
      %p77 = pneg %p71
      %p78 = scmp.eq.s32.totalorder %s13, 1
      %p79 = por %p77, %p78
      %p80 = scmp.ne.s32.totalorder %s72, %s75
      %p81 = scmp.eq.s32.totalorder %s13, 0
      %p82 = por %p80, %p81
      %p83 = scmp.ne.s32.totalorder %s72, %s75
      %p84 = scmp.eq.s32.totalorder %s18, 1
      %p85 = por %p83, %p84
      %p86 = scmp.ne.s32.totalorder %s75, %s76
      %p87 = scmp.eq.s32.totalorder %s18, 0
      %p88 = por %p86, %p87
      %p89 = scmp.ne.s32.totalorder %s75, %s76
      %p90 = scmp.eq.s32.totalorder %s19, 1
      %p91 = por %p89, %p90
      %p93 = scmp.ne.s32.totalorder %s76, %s92
      %p94 = scmp.eq.s32.totalorder %s19, 0
      %p95 = por %p93, %p94
      %s96 = ssub.s32 %s21, %s35
      %p97 = scmp.eq.s32.totalorder %s96, 0
      %s99 = sadd.s32 %s98, 1
      %s100 = scalar_select %p97, %s98, %s99
      %p103 = pneg %p97
      %p104 = scmp.eq.s32.totalorder %s13, 1
      %p105 = por %p103, %p104
      %p106 = scmp.ne.s32.totalorder %s98, %s101
      %p107 = scmp.eq.s32.totalorder %s13, 0
      %p108 = por %p106, %p107
      %p109 = scmp.ne.s32.totalorder %s98, %s101
      %p110 = scmp.eq.s32.totalorder %s18, 1
      %p111 = por %p109, %p110
      %p112 = scmp.ne.s32.totalorder %s101, %s102
      %p113 = scmp.eq.s32.totalorder %s18, 0
      %p114 = por %p112, %p113
      %p115 = scmp.ne.s32.totalorder %s101, %s102
      %p116 = scmp.eq.s32.totalorder %s19, 1
      %p117 = por %p115, %p116
      %p119 = scmp.ne.s32.totalorder %s102, %s118
      %p120 = scmp.eq.s32.totalorder %s19, 0
      %p121 = por %p119, %p120
      %s122 = ssub.s32 %s20, %s39
      %s123 = ssub.s32 %s21, %s35
      %s124 = sor.u32 %s122, %s123
      %p125 = scmp.eq.s32.totalorder %s124, 0
      %s127 = sadd.s32 %s126, 1
      %s128 = scalar_select %p125, %s126, %s127
      %p131 = pneg %p125
      %p132 = scmp.eq.s32.totalorder %s13, 1
      %p133 = por %p131, %p132
      %p134 = scmp.ne.s32.totalorder %s126, %s129
      %p135 = scmp.eq.s32.totalorder %s13, 0
      %p136 = por %p134, %p135
      %p137 = scmp.ne.s32.totalorder %s126, %s129
      %p138 = scmp.eq.s32.totalorder %s18, 1
      %p139 = por %p137, %p138
      %p140 = scmp.ne.s32.totalorder %s129, %s130
      %p141 = scmp.eq.s32.totalorder %s18, 0
      %p142 = por %p140, %p141
      %p143 = scmp.ne.s32.totalorder %s129, %s130
      %p144 = scmp.eq.s32.totalorder %s19, 1
      %p145 = por %p143, %p144
      %p147 = scmp.ne.s32.totalorder %s130, %s146
      %p148 = scmp.eq.s32.totalorder %s19, 0
      %p149 = por %p147, %p148
      %p150 = scmp.le.s32.totalorder 1, %s13
      %p151 = scmp.lt.s32.totalorder %s13, 3
      %p152 = pnand %p150, %p151
      %p153 = pneg %p152
      // Predicated region
      $region9: #{transformer_forward.21} parent=5 // pred_check
        _
      $region10: #{transformer_forward.21} parent=5 // pred_check_branch
        %155 = sbr.rel (%p152) target = $region12
      $region11: #{transformer_forward.21} parent=5 // pred_region
        %s156 = ssub.s32 %s13, 1
        // Predicated region
        $region13: #{transformer_forward.21} parent=11 // pred_check
          %p157 = pneg %p88
        $region14: #{transformer_forward.21} parent=11 // pred_check_branch
          %159 = sbr.rel (%p157) target = $region16
        $region15: #{transformer_forward.21} parent=11 // pred_region
          %s160 = smul.u32 16, %s25
          %162 = vsyncadd [#allocation4], 0
          %s163 = sadd.s32 %s24, %s160
          %s164 = smul.addr %s163, 4
          %s165 = scalar_lea.hbm %s1, %s164
          %s166 = sshll.u32 %s165, 4
          %s167 = int_to_ptr.hbm [resolvable:$true] %s166
          %s168 = sshll.u32 [#allocation3], 4
          %s169 = int_to_ptr.vmem [resolvable:$true] %s168
          %174 = dma.hbm_to_vmem [thread:$0]  %s167, 1024, %s169, [#allocation4], 64, 64, 4
        $region16: #{transformer_forward.21} parent=11 // pred_fallthru
          _
        // Predicated region
        $region17: #{transformer_forward.21} parent=11 // pred_check
          %p175 = pneg %p114
        $region18: #{transformer_forward.21} parent=11 // pred_check_branch
          %177 = sbr.rel (%p175) target = $region20
        $region19: #{transformer_forward.21} parent=11 // pred_region
          %p178 = scmp.lt.s32.totalorder %s24, 0
          %s179 = scalar_select %p178, %s24, 0
          %s180 = scalar_lea.vmem %s2, %s179
        $region20: #{transformer_forward.21} parent=11 // pred_fallthru
          _
      $region12: #{transformer_forward.21} parent=5 // pred_fallthru
        _
      %p181 = scmp.lt.s32.totalorder %s13, 2
      // Predicated region
      $region21: #{transformer_forward.21} parent=5 // pred_check
        %p182 = pneg %p181
      $region22: #{transformer_forward.21} parent=5 // pred_check_branch
        %184 = sbr.rel (%p182) target = $region24
      $region23: #{transformer_forward.21} parent=5 // pred_region
        // Predicated region
        $region25: #{transformer_forward.21} parent=23 // pred_check
          %p185 = pneg %p54
        $region26: #{transformer_forward.21} parent=23 // pred_check_branch
          %187 = sbr.rel (%p185) target = $region28
        $region27: #{transformer_forward.21} parent=23 // pred_region
          %s188 = smul.u32 2, %s20
          %p189 = scmp.lt.s32.totalorder %s188, 3
          %s190 = scalar_select %p189, %s188, 3
          %p191 = scmp.lt.s32.totalorder %s22, 0
          %s192 = scalar_select %p191, %s22, 0
          %s193 = sadd.s32 %s192, %s190
          %s194 = smul.addr %s193, 4
          %s195 = scalar_lea.vmem %s0, %s194
          %s196 = smul.u32 2, %s20
        $region28: #{transformer_forward.21} parent=23 // pred_fallthru
          _
      $region24: #{transformer_forward.21} parent=5 // pred_fallthru
        _
      %p197 = scmp.le.s32.totalorder 1, %s13
      %p198 = scmp.lt.s32.totalorder %s13, 3
      %p199 = pnand %p197, %p198
      %p200 = pneg %p199
      // Predicated region
      $region29: #{transformer_forward.21} parent=5 // pred_check
        _
      $region30: #{transformer_forward.21} parent=5 // pred_check_branch
        %202 = sbr.rel (%p199) target = $region32
      $region31: #{transformer_forward.21} parent=5 // pred_region
        %s203 = ssub.s32 %s13, 1
        // Predicated region
        $region33: #{transformer_forward.21} parent=31 // pred_check
          %p204 = pneg %p88
        $region34: #{transformer_forward.21} parent=31 // pred_check_branch
          %206 = sbr.rel (%p204) target = $region36
        $region35: #{transformer_forward.21} parent=31 // pred_region
          %208 = dma.done [#allocation4], 1024
        $region36: #{transformer_forward.21} parent=31 // pred_fallthru
          _
        %s209 = smul.u32 2, %s23
        %p210 = scmp.lt.s32.totalorder %s209, 3
        %s211 = scalar_select %p210, %s209, 3
        %p212 = scmp.lt.s32.totalorder %s25, 0
        %s213 = scalar_select %p212, %s25, 0
        %s214 = sadd.s32 %s213, %s211
        %s215 = smul.addr %s214, 4
        %s216 = scalar_lea.vmem %s0, %s215
        %p217 = pneg %p60
        %p218 = pneg %p57
        %p219 = pneg %p88
        %p220 = pneg %p85
        %p221 = scmp.lt.s32.totalorder %s24, 0
        %s222 = scalar_select %p221, %s24, 0
        %s223 = scalar_lea.vmem %s2, %s222
        %p224 = pneg %p114
        %p225 = pneg %p111
        %p226 = pneg %p142
        %p227 = pneg %p139
        %s228 = sand.u32 %s129, 1
        %s229 = scalar_lea.sflag [#allocation5], %s228
        %s230 = sand.u32 %s129, 1
        %s231 = smul.addr %s230, 16
        %s232 = scalar_lea.vmem [#allocation6], %s231
        %s233 = smul.u32 2, %s23
        %p234 = scmp.lt.s32.totalorder %s233, 3
        %s235 = scalar_select %p234, %s233, 3
        %p236 = scmp.lt.s32.totalorder %s25, 0
        %s237 = scalar_select %p236, %s25, 0
        %s238 = sadd.s32 %s237, %s235
        %s239 = smul.addr %s238, 4
        %s240 = scalar_lea.vmem %s0, %s239
        %s241 = smul.u32 2, %s23
        %s242 = smul.u32 16, %s25
        %p243 = scmp.lt.s32.totalorder %s24, 0
        %s244 = scalar_select %p243, %s24, 0
        %s245 = scalar_lea.vmem %s2, %s244
        %s246 = smul.u32 2, %s23
        %p247 = scmp.eq.s32.totalorder %s25, 0
        // Predicated region
        $region37: #{transformer_forward.21} parent=31 // pred_check
          %p248 = pneg %p247
        $region38: #{transformer_forward.21} parent=31 // pred_check_branch
          %250 = sbr.rel (%p248) target = $region40
        $region39: #{transformer_forward.21} parent=31 // pred_region
          %251 = vst [vmem:[#allocation2] sm:$0xff] 0.0
          %252 = vst [vmem:[#allocation2 + $0x8] sm:$0xff] 0.0
        $region40: #{transformer_forward.21} parent=31 // pred_fallthru
          _
        %v253 = vld [vmem:[#allocation2] sm:$0xff]
        %v254 = vld [vmem:[#allocation2 + $0x8] sm:$0xff]
        %v255 = vld [vmem:[%s240] sm:$0xf]
        %v256 = vld [vmem:[%s240 + $0x4] sm:$0xf]
        %v257 = vld [vmem:[#allocation3] sm:$0xf]
        %v258 = vld [vmem:[#allocation3 + $0x4] sm:$0xf]
        %v259 = vld [vmem:[#allocation3 + $0x8] sm:$0xf]
        %v260 = vld [vmem:[#allocation3 + $0xc] sm:$0xf]
        %v261 = vld [vmem:[#allocation3 + $0x10] sm:$0xf]
        %v262 = vld [vmem:[#allocation3 + $0x14] sm:$0xf]
        %v263 = vld [vmem:[#allocation3 + $0x18] sm:$0xf]
        %v264 = vld [vmem:[#allocation3 + $0x1c] sm:$0xf]
        %v265 = vld [vmem:[#allocation3 + $0x20] sm:$0xf]
        %v266 = vld [vmem:[#allocation3 + $0x24] sm:$0xf]
        %v267 = vld [vmem:[#allocation3 + $0x28] sm:$0xf]
        %v268 = vld [vmem:[#allocation3 + $0x2c] sm:$0xf]
        %v269 = vld [vmem:[#allocation3 + $0x30] sm:$0xf]
        %v270 = vld [vmem:[#allocation3 + $0x34] sm:$0xf]
        %v271 = vld [vmem:[#allocation3 + $0x38] sm:$0xf]
        %v272 = vld [vmem:[#allocation3 + $0x3c] sm:$0xf]
        %v275 = vunpack.c.l.b16 %v255
        %v276 = vunpack.c.l.b16 %v256
        %v277 = vpack.c.b16 %v276, %v275
        %v295 = vunpack.c.l.b16 %v257
        %v296 = vunpack.c.l.b16 %v258
        %v297 = vunpack.c.l.b16 %v259
        %v298 = vunpack.c.l.b16 %v260
        %v299 = vunpack.c.l.b16 %v261
        %v300 = vunpack.c.l.b16 %v262
        %v301 = vunpack.c.l.b16 %v263
        %v302 = vunpack.c.l.b16 %v264
        %v303 = vunpack.c.l.b16 %v265
        %v304 = vunpack.c.l.b16 %v266
        %v305 = vunpack.c.l.b16 %v267
        %v306 = vunpack.c.l.b16 %v268
        %v307 = vunpack.c.l.b16 %v269
        %v308 = vunpack.c.l.b16 %v270
        %v309 = vunpack.c.l.b16 %v271
        %v310 = vunpack.c.l.b16 %v272
        %v311 = vpack.c.b16 %v296, %v295
        %v312 = vpack.c.b16 %v298, %v297
        %v313 = vpack.c.b16 %v300, %v299
        %v314 = vpack.c.b16 %v302, %v301
        %v315 = vpack.c.b16 %v304, %v303
        %v316 = vpack.c.b16 %v306, %v305
        %v317 = vpack.c.b16 %v308, %v307
        %v318 = vpack.c.b16 %v310, %v309
        %327 = vmatpush.bf16.msra.mxu0 %v318
        %328 = vmatpush.bf16.msra.mxu0 %v317
        %329 = vmatpush.bf16.msra.mxu0 %v316
        %330 = vmatpush.bf16.msra.mxu0 %v315
        %331 = vmatpush.bf16.msra.mxu0 %v314
        %332 = vmatpush.bf16.msra.mxu0 %v313
        %333 = vmatpush.bf16.msra.mxu0 %v312
        %334 = vmatpush.bf16.msra.mxu0 %v311
        %335 = vmatmul.bf16.gmra.mxu0 %v277
        %v336 = vpop.f32.mrf.mxu0
        %v337 = vadd.f32 0.0, %v336
        %v338 = vpop.f32.mrf.mxu0
        %v339 = vadd.f32 0.0, %v338
        %340 = vdwg.mxu0
        %v341 = vadd.f32 %v253, %v337
        %v342 = vadd.f32 %v254, %v339
        %343 = vst [vmem:[#allocation2] sm:$0xff] %v341
        %344 = vst [vmem:[#allocation2 + $0x8] sm:$0xff] %v342
        // Predicated region
        $region41: #{transformer_forward.21} parent=31 // pred_check
          %p345 = pneg %p247
        $region42: #{transformer_forward.21} parent=31 // pred_check_branch
          %347 = sbr.rel (%p345) target = $region44
        $region43: #{transformer_forward.21} parent=31 // pred_region
          %v348 = vld [vmem:[#allocation2] sm:$0xff]
          %v349 = vld [vmem:[#allocation2 + $0x8] sm:$0xff]
          %v350 = vld [vmem:[%s245] sm:$0x1]
          %v352 = vperm.slane %v350, 0
          %v354 = vadd.f32 %v348, %v352
          %v355 = vadd.f32 %v349, %v352
          %356 = vst [vmem:[%s232] sm:$0xff] %v354
          %357 = vst [vmem:[%s232 + $0x8] sm:$0xff] %v355
        $region44: #{transformer_forward.21} parent=31 // pred_fallthru
          _
        %s358 = sand.u32 %s129, 1
        %s359 = scalar_lea.sflag [#allocation5], %s358
        %s360 = sand.u32 %s129, 1
        %s361 = smul.addr %s360, 16
        %s362 = scalar_lea.vmem [#allocation6], %s361
        // Predicated region
        $region45: #{transformer_forward.21} parent=31 // pred_check
          %p363 = pneg %p139
        $region46: #{transformer_forward.21} parent=31 // pred_check_branch
          %365 = sbr.rel (%p363) target = $region48
        $region47: #{transformer_forward.21} parent=31 // pred_region
          %s366 = smul.u32 2, %s23
          %368 = vsyncadd %s359, 0
          %s369 = sadd.s32 %s24, %s366
          %s370 = smul.addr %s369, 8
          %s371 = scalar_lea.hbm %s3, %s370
          %s372 = sshll.u32 %s362, 4
          %s373 = int_to_ptr.vmem [resolvable:$true] %s372
          %s374 = sshll.u32 %s371, 4
          %s375 = int_to_ptr.hbm [resolvable:$true] %s374
          %380 = dma.vmem_to_hbm [thread:$0]  %s373, 256, %s375, %s359, 128, 128, 8
        $region48: #{transformer_forward.21} parent=31 // pred_fallthru
          _
      $region32: #{transformer_forward.21} parent=5 // pred_fallthru
        _
      %p381 = scmp.le.s32.totalorder 2, %s13
      // Predicated region
      $region49: #{transformer_forward.21} parent=5 // pred_check
        %p382 = pneg %p381
      $region50: #{transformer_forward.21} parent=5 // pred_check_branch
        %384 = sbr.rel (%p382) target = $region52
      $region51: #{transformer_forward.21} parent=5 // pred_region
        %s385 = ssub.s32 %s13, 2
        // Predicated region
        $region53: #{transformer_forward.21} parent=51 // pred_check
          %p386 = pneg %p145
        $region54: #{transformer_forward.21} parent=51 // pred_check_branch
          %388 = sbr.rel (%p386) target = $region56
        $region55: #{transformer_forward.21} parent=51 // pred_region
          %s389 = sand.u32 %s130, 1
          %s390 = scalar_lea.sflag [#allocation5], %s389
          %s391 = sand.u32 %s130, 1
          %s392 = smul.addr %s391, 16
          %s393 = scalar_lea.vmem [#allocation6], %s392
          %395 = dma.done %s390, 256
        $region56: #{transformer_forward.21} parent=51 // pred_fallthru
          _
      $region52: #{transformer_forward.21} parent=5 // pred_fallthru
        _
    $region6: #{transformer_forward.21} parent=1 // loop_footer
      %s17 = sadd.s32 1, %s13
    $region7: #{transformer_forward.21} parent=1 // loop_footer_branch
      %12 = sbr.rel target = $region3
    $region8: #{transformer_forward.21} parent=1 // loop_exit
      _
    %396 = vsyncpa [#allocation4], 1
    %s397 = scalar_lea.sflag [#allocation4], 1
    %398 = vsyncpa %s397, 1
    %399 = vsyncpa [#allocation5], 1
    %s400 = scalar_lea.sflag [#allocation5], 1
    %401 = vsyncpa %s400, 1

// kernel: transformer_forward.19
$region0: #{transformer_forward.19}
  #allocation0 [shape = 'u32[]', space=smem, size = 0x4, offset = 0x4, fixed_abs, tag = 'smem constant byte address 0x4 - core index']
  #allocation1 [shape = 'u32[72,128]{1,0:T(1,128)}', space=vmem, size = 0x9000, scoped, tag = 'internal scratch']
  #allocation2 [shape = 'f32[16,256]{1,0:T(8,128)}', space=vmem, size = 0x4000, scoped, tag = 'scratch operand']
  %s0 = inlined_call_operand.vmem [shape: bf16[32,128], index: 0, kind: input, shape index: {}]
  %s1 = inlined_call_operand.hbm [shape: bf16[128,256], index: 1, kind: input, shape index: {}]
  %s2 = inlined_call_operand.vmem [shape: f32[1,256], index: 2, kind: input, shape index: {}]
  %s3 = inlined_call_operand.vmem [shape: bf16[32,256], index: 3, kind: output, shape index: {}]
  %s4 = sld [smem:[#allocation0]]
  $region57: #{transformer_forward.19} parent=0
    _
  %s6 = ssub.s32 1, %s4
  %s7 = scalar_select 0, %s6, %s4
  $region1: #{transformer_forward.19} parent=0
    #allocation3 [shape = 'u8[65536]{0}', space=vmem, size = 0x10000, scoped, tag = 'input window, operand 1, single buffered']
    #allocation4 [shape = 's32[2]{0}', space=sflag, size = 0x8, scoped, tag = 'scoped memory for transformer_forward.19']
    %8 = vsyncpa [#allocation4], 0
    loop: start=0, step=1, limit=4
    $region2: #{transformer_forward.19} parent=1 // loop_pre_header
      _
    $region3: #{transformer_forward.19} parent=1 // loop_header
      %s10 = sphi 0, %s14
      %p11 = scmp.ge.s32.totalorder %s10, 4
      %s17 = sphi 0, %s36
      %s18 = sphi 0, %s32
      %s19 = sphi 0, %s28
      %s20 = sphi 0, %s17
      %s21 = sphi 0, %s18
      %s22 = sphi 0, %s19
      %s23 = sphi 0, %s20
      %s24 = sphi 0, %s21
      %s25 = sphi 0, %s22
      %s41 = sphi 0, %s43
      %s44 = sphi 0, %s41
      %s45 = sphi 0, %s44
      %s61 = sphi 0, %s45
      %s69 = sphi 0, %s71
      %s72 = sphi 0, %s69
      %s73 = sphi 0, %s72
      %s89 = sphi 0, %s73
      %s95 = sphi 0, %s97
      %s98 = sphi 0, %s95
      %s99 = sphi 0, %s98
      %s115 = sphi 0, %s99
      %s123 = sphi 0, %s125
      %s126 = sphi 0, %s123
      %s127 = sphi 0, %s126
      %s143 = sphi 0, %s127
    $region4: #{transformer_forward.19} parent=1 // loop_header_branch
      %13 = sbr.rel (%p11) target = $region8
    $region5: #{transformer_forward.19} parent=1 // loop_body
      %s15 = ssub.s32 %s10, 1
      %s16 = ssub.s32 %s10, 2
      %s26 = sadd.s32 1, %s19
      %p27 = scmp.ge.s32.totalorder %s26, 1
      %s28 = scalar_select %p27, 0, %s26
      %s29 = sadd.s32 1, %s18
      %s30 = scalar_select %p27, %s29, %s18
      %p31 = scmp.ge.s32.totalorder %s30, 1
      %s32 = scalar_select %p31, 0, %s30
      %s33 = sadd.s32 1, %s17
      %s34 = scalar_select %p31, %s33, %s17
      %p35 = scmp.ge.s32.totalorder %s34, 2
      %s36 = scalar_select %p35, 0, %s34
      %s37 = ssub.s32 %s17, %s36
      %s38 = ssub.s32 %s19, %s28
      %s39 = sor.u32 %s37, %s38
      %p40 = scmp.eq.s32.totalorder %s39, 0
      %s42 = sadd.s32 %s41, 1
      %s43 = scalar_select %p40, %s41, %s42
      %p46 = pneg %p40
      %p47 = scmp.eq.s32.totalorder %s10, 1
      %p48 = por %p46, %p47
      %p49 = scmp.ne.s32.totalorder %s41, %s44
      %p50 = scmp.eq.s32.totalorder %s10, 0
      %p51 = por %p49, %p50
      %p52 = scmp.ne.s32.totalorder %s41, %s44
      %p53 = scmp.eq.s32.totalorder %s15, 1
      %p54 = por %p52, %p53
      %p55 = scmp.ne.s32.totalorder %s44, %s45
      %p56 = scmp.eq.s32.totalorder %s15, 0
      %p57 = por %p55, %p56
      %p58 = scmp.ne.s32.totalorder %s44, %s45
      %p59 = scmp.eq.s32.totalorder %s16, 1
      %p60 = por %p58, %p59
      %p62 = scmp.ne.s32.totalorder %s45, %s61
      %p63 = scmp.eq.s32.totalorder %s16, 0
      %p64 = por %p62, %p63
      %s65 = ssub.s32 %s19, %s28
      %s66 = ssub.s32 %s18, %s32
      %s67 = sor.u32 %s65, %s66
      %p68 = scmp.eq.s32.totalorder %s67, 0
      %s70 = sadd.s32 %s69, 1
      %s71 = scalar_select %p68, %s69, %s70
      %p74 = pneg %p68
      %p75 = scmp.eq.s32.totalorder %s10, 1
      %p76 = por %p74, %p75
      %p77 = scmp.ne.s32.totalorder %s69, %s72
      %p78 = scmp.eq.s32.totalorder %s10, 0
      %p79 = por %p77, %p78
      %p80 = scmp.ne.s32.totalorder %s69, %s72
      %p81 = scmp.eq.s32.totalorder %s15, 1
      %p82 = por %p80, %p81
      %p83 = scmp.ne.s32.totalorder %s72, %s73
      %p84 = scmp.eq.s32.totalorder %s15, 0
      %p85 = por %p83, %p84
      %p86 = scmp.ne.s32.totalorder %s72, %s73
      %p87 = scmp.eq.s32.totalorder %s16, 1
      %p88 = por %p86, %p87
      %p90 = scmp.ne.s32.totalorder %s73, %s89
      %p91 = scmp.eq.s32.totalorder %s16, 0
      %p92 = por %p90, %p91
      %s93 = ssub.s32 %s18, %s32
      %p94 = scmp.eq.s32.totalorder %s93, 0
      %s96 = sadd.s32 %s95, 1
      %s97 = scalar_select %p94, %s95, %s96
      %p100 = pneg %p94
      %p101 = scmp.eq.s32.totalorder %s10, 1
      %p102 = por %p100, %p101
      %p103 = scmp.ne.s32.totalorder %s95, %s98
      %p104 = scmp.eq.s32.totalorder %s10, 0
      %p105 = por %p103, %p104
      %p106 = scmp.ne.s32.totalorder %s95, %s98
      %p107 = scmp.eq.s32.totalorder %s15, 1
      %p108 = por %p106, %p107
      %p109 = scmp.ne.s32.totalorder %s98, %s99
      %p110 = scmp.eq.s32.totalorder %s15, 0
      %p111 = por %p109, %p110
      %p112 = scmp.ne.s32.totalorder %s98, %s99
      %p113 = scmp.eq.s32.totalorder %s16, 1
      %p114 = por %p112, %p113
      %p116 = scmp.ne.s32.totalorder %s99, %s115
      %p117 = scmp.eq.s32.totalorder %s16, 0
      %p118 = por %p116, %p117
      %s119 = ssub.s32 %s17, %s36
      %s120 = ssub.s32 %s18, %s32
      %s121 = sor.u32 %s119, %s120
      %p122 = scmp.eq.s32.totalorder %s121, 0
      %s124 = sadd.s32 %s123, 1
      %s125 = scalar_select %p122, %s123, %s124
      %p128 = pneg %p122
      %p129 = scmp.eq.s32.totalorder %s10, 1
      %p130 = por %p128, %p129
      %p131 = scmp.ne.s32.totalorder %s123, %s126
      %p132 = scmp.eq.s32.totalorder %s10, 0
      %p133 = por %p131, %p132
      %p134 = scmp.ne.s32.totalorder %s123, %s126
      %p135 = scmp.eq.s32.totalorder %s15, 1
      %p136 = por %p134, %p135
      %p137 = scmp.ne.s32.totalorder %s126, %s127
      %p138 = scmp.eq.s32.totalorder %s15, 0
      %p139 = por %p137, %p138
      %p140 = scmp.ne.s32.totalorder %s126, %s127
      %p141 = scmp.eq.s32.totalorder %s16, 1
      %p142 = por %p140, %p141
      %p144 = scmp.ne.s32.totalorder %s127, %s143
      %p145 = scmp.eq.s32.totalorder %s16, 0
      %p146 = por %p144, %p145
      %p147 = scmp.le.s32.totalorder 1, %s10
      %p148 = scmp.lt.s32.totalorder %s10, 3
      %p149 = pnand %p147, %p148
      %p150 = pneg %p149
      // Predicated region
      $region9: #{transformer_forward.19} parent=5 // pred_check
        _
      $region10: #{transformer_forward.19} parent=5 // pred_check_branch
        %152 = sbr.rel (%p149) target = $region12
      $region11: #{transformer_forward.19} parent=5 // pred_region
        %s153 = ssub.s32 %s10, 1
        // Predicated region
        $region13: #{transformer_forward.19} parent=11 // pred_check
          %p154 = pneg %p85
        $region14: #{transformer_forward.19} parent=11 // pred_check_branch
          %156 = sbr.rel (%p154) target = $region16
        $region15: #{transformer_forward.19} parent=11 // pred_region
          %s157 = smul.u32 16, %s22
          %s158 = smul.u32 2, %s21
          %160 = vsyncadd [#allocation4], 0
          %s161 = smul.addr %s157, 2
          %s162 = sadd.s32 %s158, %s161
          %s163 = smul.addr %s162, 4
          %s164 = scalar_lea.hbm %s1, %s163
          %s165 = sshll.u32 %s164, 4
          %s166 = int_to_ptr.hbm [resolvable:$true] %s165
          %s167 = sshll.u32 [#allocation3], 4
          %s168 = int_to_ptr.vmem [resolvable:$true] %s167
          %173 = dma.hbm_to_vmem [thread:$0]  %s166, 2048, %s168, [#allocation4], 128, 128, 8
        $region16: #{transformer_forward.19} parent=11 // pred_fallthru
          _
        // Predicated region
        $region17: #{transformer_forward.19} parent=11 // pred_check
          %p174 = pneg %p111
        $region18: #{transformer_forward.19} parent=11 // pred_check_branch
          %176 = sbr.rel (%p174) target = $region20
        $region19: #{transformer_forward.19} parent=11 // pred_region
          %s177 = smul.u32 2, %s21
          %p178 = scmp.lt.s32.totalorder %s177, 1
          %s179 = scalar_select %p178, %s177, 1
          %s180 = scalar_lea.vmem %s2, %s179
          %s181 = smul.u32 2, %s21
        $region20: #{transformer_forward.19} parent=11 // pred_fallthru
          _
      $region12: #{transformer_forward.19} parent=5 // pred_fallthru
        _
      %p182 = scmp.lt.s32.totalorder %s10, 2
      // Predicated region
      $region21: #{transformer_forward.19} parent=5 // pred_check
        %p183 = pneg %p182
      $region22: #{transformer_forward.19} parent=5 // pred_check_branch
        %185 = sbr.rel (%p183) target = $region24
      $region23: #{transformer_forward.19} parent=5 // pred_region
        // Predicated region
        $region25: #{transformer_forward.19} parent=23 // pred_check
          %p186 = pneg %p51
        $region26: #{transformer_forward.19} parent=23 // pred_check_branch
          %188 = sbr.rel (%p186) target = $region28
        $region27: #{transformer_forward.19} parent=23 // pred_region
          %s189 = smul.u32 2, %s17
          %p190 = scmp.lt.s32.totalorder %s189, 3
          %s191 = scalar_select %p190, %s189, 3
          %p192 = scmp.lt.s32.totalorder %s19, 0
          %s193 = scalar_select %p192, %s19, 0
          %s194 = sadd.s32 %s193, %s191
          %s195 = smul.addr %s194, 4
          %s196 = scalar_lea.vmem %s0, %s195
          %s197 = smul.u32 2, %s17
        $region28: #{transformer_forward.19} parent=23 // pred_fallthru
          _
      $region24: #{transformer_forward.19} parent=5 // pred_fallthru
        _
      %p198 = scmp.le.s32.totalorder 1, %s10
      %p199 = scmp.lt.s32.totalorder %s10, 3
      %p200 = pnand %p198, %p199
      %p201 = pneg %p200
      // Predicated region
      $region29: #{transformer_forward.19} parent=5 // pred_check
        _
      $region30: #{transformer_forward.19} parent=5 // pred_check_branch
        %203 = sbr.rel (%p200) target = $region32
      $region31: #{transformer_forward.19} parent=5 // pred_region
        %s204 = ssub.s32 %s10, 1
        // Predicated region
        $region33: #{transformer_forward.19} parent=31 // pred_check
          %p205 = pneg %p85
        $region34: #{transformer_forward.19} parent=31 // pred_check_branch
          %207 = sbr.rel (%p205) target = $region36
        $region35: #{transformer_forward.19} parent=31 // pred_region
          %209 = dma.done [#allocation4], 2048
        $region36: #{transformer_forward.19} parent=31 // pred_fallthru
          _
        %s210 = smul.u32 2, %s20
        %p211 = scmp.lt.s32.totalorder %s210, 3
        %s212 = scalar_select %p211, %s210, 3
        %p213 = scmp.lt.s32.totalorder %s22, 0
        %s214 = scalar_select %p213, %s22, 0
        %s215 = sadd.s32 %s214, %s212
        %s216 = smul.addr %s215, 4
        %s217 = scalar_lea.vmem %s0, %s216
        %p218 = pneg %p57
        %p219 = pneg %p54
        %p220 = pneg %p85
        %p221 = pneg %p82
        %s222 = smul.u32 2, %s21
        %p223 = scmp.lt.s32.totalorder %s222, 1
        %s224 = scalar_select %p223, %s222, 1
        %s225 = scalar_lea.vmem %s2, %s224
        %p226 = pneg %p111
        %p227 = pneg %p108
        %p228 = pneg %p139
        %p229 = pneg %p136
        %s230 = smul.u32 2, %s20
        %s231 = smul.u32 2, %s21
        %p232 = scmp.lt.s32.totalorder %s230, 3
        %s233 = scalar_select %p232, %s230, 3
        %p234 = scmp.lt.s32.totalorder %s231, 1
        %s235 = scalar_select %p234, %s231, 1
        %s236 = smul.addr %s233, 2
        %s237 = sadd.s32 %s235, %s236
        %s238 = smul.addr %s237, 4
        %s239 = scalar_lea.vmem %s3, %s238
        %s240 = smul.u32 2, %s20
        %p241 = scmp.lt.s32.totalorder %s240, 3
        %s242 = scalar_select %p241, %s240, 3
        %p243 = scmp.lt.s32.totalorder %s22, 0
        %s244 = scalar_select %p243, %s22, 0
        %s245 = sadd.s32 %s244, %s242
        %s246 = smul.addr %s245, 4
        %s247 = scalar_lea.vmem %s0, %s246
        %s248 = smul.u32 2, %s20
        %s249 = smul.u32 16, %s22
        %s250 = smul.u32 2, %s21
        %s251 = smul.u32 2, %s21
        %p252 = scmp.lt.s32.totalorder %s251, 1
        %s253 = scalar_select %p252, %s251, 1
        %s254 = scalar_lea.vmem %s2, %s253
        %s255 = smul.u32 2, %s21
        %s256 = smul.u32 2, %s20
        %s257 = smul.u32 2, %s21
        %p258 = scmp.lt.s32.totalorder %s256, 3
        %s259 = scalar_select %p258, %s256, 3
        %p260 = scmp.lt.s32.totalorder %s257, 1
        %s261 = scalar_select %p260, %s257, 1
        %s262 = smul.addr %s259, 2
        %s263 = sadd.s32 %s261, %s262
        %s264 = smul.addr %s263, 4
        %s265 = scalar_lea.vmem %s3, %s264
        %s266 = smul.u32 2, %s20
        %s267 = smul.u32 2, %s21
        %p268 = scmp.eq.s32.totalorder %s22, 0
        // Predicated region
        $region37: #{transformer_forward.19} parent=31 // pred_check
          %p269 = pneg %p268
        $region38: #{transformer_forward.19} parent=31 // pred_check_branch
          %271 = sbr.rel (%p269) target = $region40
        $region39: #{transformer_forward.19} parent=31 // pred_region
          %272 = vst [vmem:[#allocation2] sm:$0xff] 0.0
          %273 = vst [vmem:[#allocation2 + $0x8] sm:$0xff] 0.0
          %274 = vst [vmem:[#allocation2 + $0x10] sm:$0xff] 0.0
          %275 = vst [vmem:[#allocation2 + $0x18] sm:$0xff] 0.0
        $region40: #{transformer_forward.19} parent=31 // pred_fallthru
          _
        %v276 = vld [vmem:[#allocation2] sm:$0xff]
        %v277 = vld [vmem:[#allocation2 + $0x8] sm:$0xff]
        %v278 = vld [vmem:[#allocation2 + $0x10] sm:$0xff]
        %v279 = vld [vmem:[#allocation2 + $0x18] sm:$0xff]
        %v280 = vld [vmem:[%s247] sm:$0xf]
        %v281 = vld [vmem:[%s247 + $0x4] sm:$0xf]
        %v282 = vld [vmem:[#allocation3] sm:$0xff]
        %v283 = vld [vmem:[#allocation3 + $0x8] sm:$0xff]
        %v284 = vld [vmem:[#allocation3 + $0x10] sm:$0xff]
        %v285 = vld [vmem:[#allocation3 + $0x18] sm:$0xff]
        %v286 = vld [vmem:[#allocation3 + $0x20] sm:$0xff]
        %v287 = vld [vmem:[#allocation3 + $0x28] sm:$0xff]
        %v288 = vld [vmem:[#allocation3 + $0x30] sm:$0xff]
        %v289 = vld [vmem:[#allocation3 + $0x38] sm:$0xff]
        %v290 = vld [vmem:[#allocation3 + $0x40] sm:$0xff]
        %v291 = vld [vmem:[#allocation3 + $0x48] sm:$0xff]
        %v292 = vld [vmem:[#allocation3 + $0x50] sm:$0xff]
        %v293 = vld [vmem:[#allocation3 + $0x58] sm:$0xff]
        %v294 = vld [vmem:[#allocation3 + $0x60] sm:$0xff]
        %v295 = vld [vmem:[#allocation3 + $0x68] sm:$0xff]
        %v296 = vld [vmem:[#allocation3 + $0x70] sm:$0xff]
        %v297 = vld [vmem:[#allocation3 + $0x78] sm:$0xff]
        %v300 = vunpack.c.l.b16 %v280
        %v301 = vunpack.c.l.b16 %v281
        %v302 = vpack.c.b16 %v301, %v300
        %v320 = vunpack.c.l.b16 %v282
        %v321 = vunpack.c.h.b16 %v282
        %v322 = vunpack.c.l.b16 %v283
        %v323 = vunpack.c.h.b16 %v283
        %v324 = vunpack.c.l.b16 %v284
        %v325 = vunpack.c.h.b16 %v284
        %v326 = vunpack.c.l.b16 %v285
        %v327 = vunpack.c.h.b16 %v285
        %v328 = vunpack.c.l.b16 %v286
        %v329 = vunpack.c.h.b16 %v286
        %v330 = vunpack.c.l.b16 %v287
        %v331 = vunpack.c.h.b16 %v287
        %v332 = vunpack.c.l.b16 %v288
        %v333 = vunpack.c.h.b16 %v288
        %v334 = vunpack.c.l.b16 %v289
        %v335 = vunpack.c.h.b16 %v289
        %v336 = vunpack.c.l.b16 %v290
        %v337 = vunpack.c.h.b16 %v290
        %v338 = vunpack.c.l.b16 %v291
        %v339 = vunpack.c.h.b16 %v291
        %v340 = vunpack.c.l.b16 %v292
        %v341 = vunpack.c.h.b16 %v292
        %v342 = vunpack.c.l.b16 %v293
        %v343 = vunpack.c.h.b16 %v293
        %v344 = vunpack.c.l.b16 %v294
        %v345 = vunpack.c.h.b16 %v294
        %v346 = vunpack.c.l.b16 %v295
        %v347 = vunpack.c.h.b16 %v295
        %v348 = vunpack.c.l.b16 %v296
        %v349 = vunpack.c.h.b16 %v296
        %v350 = vunpack.c.l.b16 %v297
        %v351 = vunpack.c.h.b16 %v297
        %v352 = vpack.c.b16 %v322, %v320
        %v353 = vpack.c.b16 %v323, %v321
        %v354 = vpack.c.b16 %v326, %v324
        %v355 = vpack.c.b16 %v327, %v325
        %v356 = vpack.c.b16 %v330, %v328
        %v357 = vpack.c.b16 %v331, %v329
        %v358 = vpack.c.b16 %v334, %v332
        %v359 = vpack.c.b16 %v335, %v333
        %v360 = vpack.c.b16 %v338, %v336
        %v361 = vpack.c.b16 %v339, %v337
        %v362 = vpack.c.b16 %v342, %v340
        %v363 = vpack.c.b16 %v343, %v341
        %v364 = vpack.c.b16 %v346, %v344
        %v365 = vpack.c.b16 %v347, %v345
        %v366 = vpack.c.b16 %v350, %v348
        %v367 = vpack.c.b16 %v351, %v349
        %384 = vmatpush.bf16.msra.mxu0 %v366
        %385 = vmatpush.bf16.msra.mxu0 %v364
        %386 = vmatpush.bf16.msra.mxu0 %v362
        %387 = vmatpush.bf16.msra.mxu0 %v360
        %388 = vmatpush.bf16.msra.mxu0 %v358
        %389 = vmatpush.bf16.msra.mxu0 %v356
        %390 = vmatpush.bf16.msra.mxu0 %v354
        %391 = vmatpush.bf16.msra.mxu0 %v352
        %392 = vmatmul.bf16.gmra.mxu0 %v302
        %v393 = vpop.f32.mrf.mxu0
        %v394 = vadd.f32 0.0, %v393
        %v395 = vpop.f32.mrf.mxu0
        %v396 = vadd.f32 0.0, %v395
        %397 = vdwg.mxu0
        %398 = vmatpush.bf16.msra.mxu0 %v367
        %399 = vmatpush.bf16.msra.mxu0 %v365
        %400 = vmatpush.bf16.msra.mxu0 %v363
        %401 = vmatpush.bf16.msra.mxu0 %v361
        %402 = vmatpush.bf16.msra.mxu0 %v359
        %403 = vmatpush.bf16.msra.mxu0 %v357
        %404 = vmatpush.bf16.msra.mxu0 %v355
        %405 = vmatpush.bf16.msra.mxu0 %v353
        %406 = vmatmul.bf16.gmra.mxu0 %v302
        %v407 = vpop.f32.mrf.mxu0
        %v408 = vadd.f32 0.0, %v407
        %v409 = vpop.f32.mrf.mxu0
        %v410 = vadd.f32 0.0, %v409
        %411 = vdwg.mxu0
        %v412 = vadd.f32 %v276, %v394
        %v413 = vadd.f32 %v277, %v408
        %v414 = vadd.f32 %v278, %v396
        %v415 = vadd.f32 %v279, %v410
        %416 = vst [vmem:[#allocation2] sm:$0xff] %v412
        %417 = vst [vmem:[#allocation2 + $0x8] sm:$0xff] %v413
        %418 = vst [vmem:[#allocation2 + $0x10] sm:$0xff] %v414
        %419 = vst [vmem:[#allocation2 + $0x18] sm:$0xff] %v415
        // Predicated region
        $region41: #{transformer_forward.19} parent=31 // pred_check
          %p420 = pneg %p268
        $region42: #{transformer_forward.19} parent=31 // pred_check_branch
          %422 = sbr.rel (%p420) target = $region44
        $region43: #{transformer_forward.19} parent=31 // pred_region
          %v423 = vld [vmem:[#allocation2] sm:$0xff]
          %v424 = vld [vmem:[#allocation2 + $0x8] sm:$0xff]
          %v425 = vld [vmem:[#allocation2 + $0x10] sm:$0xff]
          %v426 = vld [vmem:[#allocation2 + $0x18] sm:$0xff]
          %v427 = vld [vmem:[%s254] sm:$0x3]
          %v429 = vperm.slane %v427, 0
          %v430 = vperm.slane %v427, 1
          %v433 = vadd.f32 %v423, %v429
          %v434 = vadd.f32 %v424, %v430
          %v435 = vadd.f32 %v425, %v429
          %v436 = vadd.f32 %v426, %v430
          %v437 = vmax.f32 %v433, 0.0
          %v438 = vmax.f32 %v434, 0.0
          %v439 = vmax.f32 %v435, 0.0
          %v440 = vmax.f32 %v436, 0.0
          %v441 = vpack.c.bf16 %v438, %v437
          %v442 = vpack.c.bf16 %v440, %v439
          %443 = vst [vmem:[%s265] sm:$0xff] %v441
          %444 = vst [vmem:[%s265 + $0x8] sm:$0xff] %v442
        $region44: #{transformer_forward.19} parent=31 // pred_fallthru
          _
        %s445 = smul.u32 2, %s20
        %s446 = smul.u32 2, %s21
        %p447 = scmp.lt.s32.totalorder %s445, 3
        %s448 = scalar_select %p447, %s445, 3
        %p449 = scmp.lt.s32.totalorder %s446, 1
        %s450 = scalar_select %p449, %s446, 1
        %s451 = smul.addr %s448, 2
        %s452 = sadd.s32 %s450, %s451
        %s453 = smul.addr %s452, 4
        %s454 = scalar_lea.vmem %s3, %s453
        // Predicated region
        $region45: #{transformer_forward.19} parent=31 // pred_check
          %p455 = pneg %p136
        $region46: #{transformer_forward.19} parent=31 // pred_check_branch
          %457 = sbr.rel (%p455) target = $region48
        $region47: #{transformer_forward.19} parent=31 // pred_region
          %s458 = smul.u32 2, %s20
          %s459 = smul.u32 2, %s21
        $region48: #{transformer_forward.19} parent=31 // pred_fallthru
          _
      $region32: #{transformer_forward.19} parent=5 // pred_fallthru
        _
      %p460 = scmp.le.s32.totalorder 2, %s10
      // Predicated region
      $region49: #{transformer_forward.19} parent=5 // pred_check
        %p461 = pneg %p460
      $region50: #{transformer_forward.19} parent=5 // pred_check_branch
        %463 = sbr.rel (%p461) target = $region52
      $region51: #{transformer_forward.19} parent=5 // pred_region
        %s464 = ssub.s32 %s10, 2
        // Predicated region
        $region53: #{transformer_forward.19} parent=51 // pred_check
          %p465 = pneg %p142
        $region54: #{transformer_forward.19} parent=51 // pred_check_branch
          %467 = sbr.rel (%p465) target = $region56
        $region55: #{transformer_forward.19} parent=51 // pred_region
          %s468 = smul.u32 2, %s23
          %s469 = smul.u32 2, %s24
          %p470 = scmp.lt.s32.totalorder %s468, 3
          %s471 = scalar_select %p470, %s468, 3
          %p472 = scmp.lt.s32.totalorder %s469, 1
          %s473 = scalar_select %p472, %s469, 1
          %s474 = smul.addr %s471, 2
          %s475 = sadd.s32 %s473, %s474
          %s476 = smul.addr %s475, 4
          %s477 = scalar_lea.vmem %s3, %s476
        $region56: #{transformer_forward.19} parent=51 // pred_fallthru
          _
      $region52: #{transformer_forward.19} parent=5 // pred_fallthru
        _
    $region6: #{transformer_forward.19} parent=1 // loop_footer
      %s14 = sadd.s32 1, %s10
    $region7: #{transformer_forward.19} parent=1 // loop_footer_branch
      %9 = sbr.rel target = $region3
    $region8: #{transformer_forward.19} parent=1 // loop_exit
      _
    %478 = vsyncpa [#allocation4], 1
    %s479 = scalar_lea.sflag [#allocation4], 1
    %480 = vsyncpa %s479, 1

</llo_original>
